<compile_context>
chip_gen: v7x
topology: tpu7x:2x2x1
jax: 0.10.0
libtpu: 0.0.40
codegen_flags: <defaults>
</compile_context>

<pallas_src>
import functools

import jax
import jax.numpy as jnp
from jax.experimental import pallas as pl
from jax.experimental.pallas import tpu as pltpu

EPS = 1e-6          # norm_layer = partial(nn.BatchNorm2d, eps=1e-06)
SRC = 32            # ToC.forward hard-codes reshape(B, C-1, 32, 32)
HW = SRC * SRC      # 1024 flattened source pixels


# ----------------------------- fused Pallas kernel ---------------------------
def _toc_kernel(x_ref, w_ref, bias_ref, gamma_ref, beta_ref, mean_ref, var_ref,
                up_ref, o_ref, y_sc, *, eps):
    """One (batch b, output-column tile t) grid step.

    x_ref   : (1, Cin, HW)  bf16  input feature map, channel-major, flat spatial
    w_ref   : (Cout, Cin)   bf16  1x1-conv weight
    bias/gamma/beta/mean/var : (Cout, 1) f32  conv bias + BN (eval) params
    up_ref  : (HW, TN)      bf16  0/1 nearest-upsample selection columns
    o_ref   : (1, Cout, TN) f32   output tile (lane-dense, TN % 128 == 0)
    y_sc    : (Cout, HW)    bf16  VMEM scratch: ReLU(BN(conv(x))) for batch b
    """
    # conv + BN + ReLU: computed once per batch element (on its first column
    # tile), then cached in VMEM scratch for the remaining output tiles.
    @pl.when(pl.program_id(1) == 0)
    def _():
        z = jnp.dot(w_ref[...], x_ref[0],
                    preferred_element_type=jnp.float32)            # (Cout, HW) f32
        inv = jax.lax.rsqrt(var_ref[...] + eps)                    # (Cout, 1)
        scale = gamma_ref[...] * inv
        shift = beta_ref[...] + (bias_ref[...] - mean_ref[...]) * scale
        y = jnp.maximum(z * scale + shift, 0.0)                    # BN(eval)+ReLU, f32
        y_sc[...] = y.astype(y_sc.dtype)

    # Nearest-neighbour upsample for this tile of output pixels.  Each column
    # of up_ref is one-hot, so the MXU matmul just replicates pixels; f32
    # accumulation, lane-dense store.
    o_ref[0] = jnp.dot(y_sc[...], up_ref[...],
                       preferred_element_type=jnp.float32).astype(o_ref.dtype)


# ----------------------------- wrapper ---------------------------------------
def nearest_upsample_matrix(src, dst, dtype=jnp.bfloat16):
    """U[(h*src+w), (i*dst+j)] = 1 iff (h, w) is the nearest source pixel of (i, j).

    Matches F.interpolate(mode='nearest'): src_idx = floor(dst_idx * src / dst).
    Entries are exactly 0/1, so bf16 storage is exact.
    """
    src_idx = (jnp.arange(dst) * src) // dst                       # (dst,)
    sel = (jnp.arange(src)[:, None] == src_idx[None, :]).astype(jnp.float32)  # (src, dst)
    return jnp.kron(sel, sel).astype(dtype)                        # (src*src, dst*dst)


def toc_forward(x, params, up_mat, *, resize, eps=EPS, col_tile=1024):
    """ToC.forward: (B, C, 1024) -> (B, outplanes, resize, resize)."""
    Bb, C, E = x.shape
    assert E == HW, "ToC.forward hard-codes a 32x32 spatial reshape"
    Cin = C - 1
    Cout = params["w"].shape[0]
    RR = resize * resize
    TN = min(col_tile, RR)
    assert RR % TN == 0 and TN % 128 == 0
    nt = RR // TN

    # x[:, 1:].reshape(B, C-1, 32, 32) -- kept flat as (B, Cin, HW): identical
    # row-major memory layout, zero extra data movement.  bf16 activations and
    # weights for the MXU (f32 accumulation inside the kernel).
    x_r = x[:, 1:, :].astype(jnp.bfloat16)
    w = params["w"].astype(jnp.bfloat16)
    col = lambda v: v.astype(jnp.float32).reshape(Cout, 1)

    out_flat = pl.pallas_call(
        functools.partial(_toc_kernel, eps=eps),
        out_shape=jax.ShapeDtypeStruct((Bb, Cout, RR), jnp.float32),
        grid=(Bb, nt),
        in_specs=[
            pl.BlockSpec((1, Cin, HW), lambda b, t: (b, 0, 0)),    # x (per batch)
            pl.BlockSpec((Cout, Cin), lambda b, t: (0, 0)),        # conv weight
            pl.BlockSpec((Cout, 1), lambda b, t: (0, 0)),          # conv bias
            pl.BlockSpec((Cout, 1), lambda b, t: (0, 0)),          # bn gamma
            pl.BlockSpec((Cout, 1), lambda b, t: (0, 0)),          # bn beta
            pl.BlockSpec((Cout, 1), lambda b, t: (0, 0)),          # bn running_mean
            pl.BlockSpec((Cout, 1), lambda b, t: (0, 0)),          # bn running_var
            pl.BlockSpec((HW, TN), lambda b, t: (0, t)),           # upsample columns
        ],
        out_specs=pl.BlockSpec((1, Cout, TN), lambda b, t: (b, 0, t)),
        scratch_shapes=[pltpu.VMEM((Cout, HW), jnp.bfloat16)],
        compiler_params=pltpu.CompilerParams(
            dimension_semantics=("parallel", "arbitrary"),
            vmem_limit_bytes=32 * 1024 * 1024,
        ),
    )(x_r, w, col(params["b"]), col(params["gamma"]), col(params["beta"]),
      col(params["mean"]), col(params["var"]), up_mat)

    # Trailing-dim split only: free reshape, output stays channel-major (NCHW).
    return out_flat.reshape(Bb, Cout, resize, resize)


# ----------------------------- pure-JAX reference ----------------------------
def toc_reference(x, params, resize, eps=EPS):
    """f32 reference of ToC.forward (eval-mode BatchNorm, nearest interpolate)."""
    Bb, C, _ = x.shape
    xr = x[:, 1:, :].reshape(Bb, C - 1, SRC, SRC)
    z = jnp.einsum("oc,bchw->bohw", params["w"], xr) + params["b"][None, :, None, None]
    inv = jax.lax.rsqrt(params["var"] + eps)
    z = (z - params["mean"][None, :, None, None]) * (params["gamma"] * inv)[None, :, None, None]
    z = z + params["beta"][None, :, None, None]
    z = jnp.maximum(z, 0.0)
    idx = (jnp.arange(resize) * SRC) // resize       # F.interpolate 'nearest' indices
    return z[:, :, idx, :][:, :, :, idx]


# ----------------------------- deterministic params --------------------------
def init_params(key, inplanes, outplanes):
    k = jax.random.split(key, 6)
    return {
        "w": 0.05 * jax.random.normal(k[0], (outplanes, inplanes), jnp.float32),
        "b": 0.02 * jax.random.normal(k[1], (outplanes,), jnp.float32),
        "gamma": 1.0 + 0.1 * jax.random.normal(k[2], (outplanes,), jnp.float32),
        "beta": 0.1 * jax.random.normal(k[3], (outplanes,), jnp.float32),
        "mean": 0.1 * jax.random.normal(k[4], (outplanes,), jnp.float32),
        "var": jax.random.uniform(k[5], (outplanes,), jnp.float32, 0.5, 1.5),
    }


# ----------------------------- main -------------------------------------------
if __name__ == "__main__":
    BATCH, INPLANES, OUTPLANES, RESIZE = 2, 32, 128, 64

    key = jax.random.PRNGKey(0)
    kx, kp = jax.random.split(key)
    x = jax.random.normal(kx, (BATCH, INPLANES + 1, HW), dtype=jnp.float32)
    params = init_params(kp, INPLANES, OUTPLANES)
    up_mat = nearest_upsample_matrix(SRC, RESIZE)        # built once (constant of `resize`)

    fwd = jax.jit(functools.partial(toc_forward, resize=RESIZE))
    out = jax.block_until_ready(fwd(x, params, up_mat))

    assert out.shape == (BATCH, OUTPLANES, RESIZE, RESIZE), out.shape
    assert out.dtype == jnp.float32
    assert bool(jnp.all(jnp.isfinite(out)))

    ref = toc_reference(x, params, RESIZE)
    max_err = float(jnp.max(jnp.abs(out - ref)))
    assert max_err < 1e-1, f"max abs err vs f32 reference: {max_err}"
    print("KERNEL_OK")
</pallas_src>

<mosaic_0001>
module attributes {stable_mosaic.version = 11 : i64} {
  func.func @_toc_kernel(%arg0: i32, %arg1: i32, %arg2: memref<1x32x1024xbf16, #tpu.memory_space<vmem>>, %arg3: memref<128x32xbf16, #tpu.memory_space<vmem>>, %arg4: memref<128x1xf32, #tpu.memory_space<vmem>>, %arg5: memref<128x1xf32, #tpu.memory_space<vmem>>, %arg6: memref<128x1xf32, #tpu.memory_space<vmem>>, %arg7: memref<128x1xf32, #tpu.memory_space<vmem>>, %arg8: memref<128x1xf32, #tpu.memory_space<vmem>>, %arg9: memref<1024x1024xbf16, #tpu.memory_space<vmem>>, %arg10: memref<1x128x1024xf32, #tpu.memory_space<vmem>>, %arg11: memref<128x1024xbf16, #tpu.memory_space<vmem>>) attributes {dimension_semantics = [#tpu.dimension_semantics<parallel>, #tpu.dimension_semantics<arbitrary>], iteration_bounds = array<i64: 2, 4>, scalar_prefetch = 0 : i64, scratch_operands = 1 : i64, tpu.core_type = #tpu.core_type<tc>, window_params = [{transform_indices = @transform_0, window_bounds = array<i64: 1, 32, 1024>}, {pipeline_mode = #tpu.pipeline_mode<synchronous>, transform_indices = @transform_1, window_bounds = array<i64: 128, 32>}, {pipeline_mode = #tpu.pipeline_mode<synchronous>, transform_indices = @transform_2, window_bounds = array<i64: 128, 1>}, {pipeline_mode = #tpu.pipeline_mode<synchronous>, transform_indices = @transform_3, window_bounds = array<i64: 128, 1>}, {pipeline_mode = #tpu.pipeline_mode<synchronous>, transform_indices = @transform_4, window_bounds = array<i64: 128, 1>}, {pipeline_mode = #tpu.pipeline_mode<synchronous>, transform_indices = @transform_5, window_bounds = array<i64: 128, 1>}, {pipeline_mode = #tpu.pipeline_mode<synchronous>, transform_indices = @transform_6, window_bounds = array<i64: 128, 1>}, {transform_indices = @transform_7, window_bounds = array<i64: 1024, 1024>}, {transform_indices = @transform_8, window_bounds = array<i64: 1, 128, 1024>}]} {
    %c0_i32 = arith.constant 0 : i32
    %0 = arith.cmpi eq, %arg1, %c0_i32 : i32
    %1 = arith.extui %0 : i1 to i32
    %c0_i32_0 = arith.constant 0 : i32
    %2 = arith.cmpi ne, %1, %c0_i32_0 : i32
    scf.if %2 {
      %c0_7 = arith.constant 0 : index
      %c0_8 = arith.constant 0 : index
      %9 = vector.load %arg3[%c0_7, %c0_8] : memref<128x32xbf16, #tpu.memory_space<vmem>>, vector<128x32xbf16>
      %c0_9 = arith.constant 0 : index
      %c0_10 = arith.constant 0 : index
      %c0_11 = arith.constant 0 : index
      %10 = vector.load %arg2[%c0_9, %c0_10, %c0_11] : memref<1x32x1024xbf16, #tpu.memory_space<vmem>>, vector<1x32x1024xbf16>
      %11 = vector.shape_cast %10 : vector<1x32x1024xbf16> to vector<32x1024xbf16>
      %cst_12 = arith.constant dense<0.000000e+00> : vector<128x1024xf32>
      %12 = tpu.matmul %9, %11, %cst_12 {dimension_numbers = #tpu.dot_dimension_numbers<[1], [0], [0], [1], [0, 0, 1, 1], [], []>} : vector<128x32xbf16>, vector<32x1024xbf16>, vector<128x1024xf32> -> vector<128x1024xf32>
      %c0_13 = arith.constant 0 : index
      %c0_14 = arith.constant 0 : index
      %13 = vector.load %arg8[%c0_13, %c0_14] : memref<128x1xf32, #tpu.memory_space<vmem>>, vector<128x1xf32>
      %cst_15 = arith.constant 9.99999997E-7 : f32
      %14 = vector.broadcast %cst_15 : f32 to vector<128x1xf32>
      %15 = arith.addf %13, %14 : vector<128x1xf32>
      %16 = math.rsqrt %15 : vector<128x1xf32>
      %c0_16 = arith.constant 0 : index
      %c0_17 = arith.constant 0 : index
      %17 = vector.load %arg5[%c0_16, %c0_17] : memref<128x1xf32, #tpu.memory_space<vmem>>, vector<128x1xf32>
      %18 = arith.mulf %17, %16 : vector<128x1xf32>
      %c0_18 = arith.constant 0 : index
      %c0_19 = arith.constant 0 : index
      %19 = vector.load %arg6[%c0_18, %c0_19] : memref<128x1xf32, #tpu.memory_space<vmem>>, vector<128x1xf32>
      %c0_20 = arith.constant 0 : index
      %c0_21 = arith.constant 0 : index
      %20 = vector.load %arg4[%c0_20, %c0_21] : memref<128x1xf32, #tpu.memory_space<vmem>>, vector<128x1xf32>
      %c0_22 = arith.constant 0 : index
      %c0_23 = arith.constant 0 : index
      %21 = vector.load %arg7[%c0_22, %c0_23] : memref<128x1xf32, #tpu.memory_space<vmem>>, vector<128x1xf32>
      %22 = arith.subf %20, %21 : vector<128x1xf32>
      %23 = arith.mulf %22, %18 : vector<128x1xf32>
      %24 = arith.addf %19, %23 : vector<128x1xf32>
      %25 = vector.broadcast %18 : vector<128x1xf32> to vector<128x1024xf32>
      %26 = arith.mulf %12, %25 : vector<128x1024xf32>
      %27 = vector.broadcast %24 : vector<128x1xf32> to vector<128x1024xf32>
      %28 = arith.addf %26, %27 : vector<128x1024xf32>
      %cst_24 = arith.constant 0.000000e+00 : f32
      %29 = vector.broadcast %cst_24 : f32 to vector<128x1024xf32>
      %30 = arith.maximumf %28, %29 : vector<128x1024xf32>
      %31 = arith.truncf %30 : vector<128x1024xf32> to vector<128x1024xbf16>
      %c0_25 = arith.constant 0 : index
      %c0_26 = arith.constant 0 : index
      %32 = vector.load %arg11[%c0_25, %c0_26] : memref<128x1024xbf16, #tpu.memory_space<vmem>>, vector<128x1024xbf16>
      tpu.vector_store %arg11[%c0_25, %c0_26], %31 {strides = array<i32>} : memref<128x1024xbf16, #tpu.memory_space<vmem>>, vector<128x1024xbf16>,
    } else {
    }
    %c0 = arith.constant 0 : index
    %c0_1 = arith.constant 0 : index
    %3 = vector.load %arg11[%c0, %c0_1] : memref<128x1024xbf16, #tpu.memory_space<vmem>>, vector<128x1024xbf16>
    %c0_2 = arith.constant 0 : index
    %c0_3 = arith.constant 0 : index
    %4 = vector.load %arg9[%c0_2, %c0_3] : memref<1024x1024xbf16, #tpu.memory_space<vmem>>, vector<1024x1024xbf16>
    %cst = arith.constant dense<0.000000e+00> : vector<128x1024xf32>
    %5 = tpu.matmul %3, %4, %cst {dimension_numbers = #tpu.dot_dimension_numbers<[1], [0], [0], [1], [0, 0, 1, 1], [], []>} : vector<128x1024xbf16>, vector<1024x1024xbf16>, vector<128x1024xf32> -> vector<128x1024xf32>
    %c0_4 = arith.constant 0 : index
    %c0_5 = arith.constant 0 : index
    %c0_6 = arith.constant 0 : index
    %6 = vector.load %arg10[%c0_4, %c0_5, %c0_6] : memref<1x128x1024xf32, #tpu.memory_space<vmem>>, vector<1x128x1024xf32>
    %7 = vector.shape_cast %6 : vector<1x128x1024xf32> to vector<128x1024xf32>
    %8 = vector.shape_cast %5 : vector<128x1024xf32> to vector<1x128x1024xf32>
    tpu.vector_store %arg10[%c0_4, %c0_5, %c0_6], %8 {strides = array<i32>} : memref<1x128x1024xf32, #tpu.memory_space<vmem>>, vector<1x128x1024xf32>,
    return
  }
  func.func @transform_0(%arg0: i32, %arg1: i32) -> (i32, i32, i32) {
    %c0_i32 = arith.constant 0 : i32
    %c0_i32_0 = arith.constant 0 : i32
    %c0_i32_1 = arith.constant 0 : i32
    return %arg0, %c0_i32, %c0_i32_0 : i32, i32, i32
  }
  func.func @transform_1(%arg0: i32, %arg1: i32) -> (i32, i32) {
    %c0_i32 = arith.constant 0 : i32
    %c0_i32_0 = arith.constant 0 : i32
    %c0_i32_1 = arith.constant 0 : i32
    return %c0_i32, %c0_i32_0 : i32, i32
  }
  func.func @transform_2(%arg0: i32, %arg1: i32) -> (i32, i32) {
    %c0_i32 = arith.constant 0 : i32
    %c0_i32_0 = arith.constant 0 : i32
    %c0_i32_1 = arith.constant 0 : i32
    return %c0_i32, %c0_i32_0 : i32, i32
  }
  func.func @transform_3(%arg0: i32, %arg1: i32) -> (i32, i32) {
    %c0_i32 = arith.constant 0 : i32
    %c0_i32_0 = arith.constant 0 : i32
    %c0_i32_1 = arith.constant 0 : i32
    return %c0_i32, %c0_i32_0 : i32, i32
  }
  func.func @transform_4(%arg0: i32, %arg1: i32) -> (i32, i32) {
    %c0_i32 = arith.constant 0 : i32
    %c0_i32_0 = arith.constant 0 : i32
    %c0_i32_1 = arith.constant 0 : i32
    return %c0_i32, %c0_i32_0 : i32, i32
  }
  func.func @transform_5(%arg0: i32, %arg1: i32) -> (i32, i32) {
    %c0_i32 = arith.constant 0 : i32
    %c0_i32_0 = arith.constant 0 : i32
    %c0_i32_1 = arith.constant 0 : i32
    return %c0_i32, %c0_i32_0 : i32, i32
  }
  func.func @transform_6(%arg0: i32, %arg1: i32) -> (i32, i32) {
    %c0_i32 = arith.constant 0 : i32
    %c0_i32_0 = arith.constant 0 : i32
    %c0_i32_1 = arith.constant 0 : i32
    return %c0_i32, %c0_i32_0 : i32, i32
  }
  func.func @transform_7(%arg0: i32, %arg1: i32) -> (i32, i32) {
    %c0_i32 = arith.constant 0 : i32
    %c0_i32_0 = arith.constant 0 : i32
    return %c0_i32, %arg1 : i32, i32
  }
  func.func @transform_8(%arg0: i32, %arg1: i32) -> (i32, i32, i32) {
    %c0_i32 = arith.constant 0 : i32
    %c0_i32_0 = arith.constant 0 : i32
    return %arg0, %c0_i32, %arg1 : i32, i32, i32
  }
}

</mosaic_0001>

<llo_original>
// kernel: toc_forward.1
$region0: #{toc_forward.1}
  #allocation0 [shape = 'u32[]', space=smem, size = 0x4, offset = 0x4, fixed_abs, tag = 'smem constant byte address 0x4 - core index']
  #allocation1 [shape = 'u32[144,128]{1,0:T(1,128)}', space=vmem, size = 0x12000, scoped, tag = 'internal scratch']
  #allocation2 [shape = 'bf16[128,1024]{1,0:T(16,128)(2,1)}', space=vmem, size = 0x40000, scoped, tag = 'scratch operand']
  %s0 = inlined_call_operand.vmem [shape: bf16[2,32,1024], index: 0, kind: input, shape index: {}]
  %s1 = inlined_call_operand.vmem [shape: bf16[128,32], index: 1, kind: input, shape index: {}]
  %s2 = inlined_call_operand.vmem [shape: f32[128,1], index: 2, kind: input, shape index: {}]
  %s3 = inlined_call_operand.vmem [shape: f32[128,1], index: 3, kind: input, shape index: {}]
  %s4 = inlined_call_operand.vmem [shape: f32[128,1], index: 4, kind: input, shape index: {}]
  %s5 = inlined_call_operand.vmem [shape: f32[128,1], index: 5, kind: input, shape index: {}]
  %s6 = inlined_call_operand.vmem [shape: f32[128,1], index: 6, kind: input, shape index: {}]
  %s7 = inlined_call_operand.hbm [shape: bf16[1024,4096], index: 7, kind: input, shape index: {}]
  %s8 = inlined_call_operand.vmem [shape: f32[2,128,4096], index: 8, kind: output, shape index: {}]
  %s9 = sld [smem:[#allocation0]]
  $region92: #{toc_forward.1} parent=0
    _
  %s11 = ssub.s32 1, %s9
  %s12 = scalar_select 0, %s11, %s9
  $region1: #{toc_forward.1} parent=0
    #allocation3 [shape = 'u8[4194304]{0}', space=vmem, size = 0x400000, scoped, tag = 'input window, operand 7']
    #allocation4 [shape = 's32[2]{0}', space=sflag, size = 0x8, scoped, tag = 'scoped memory for toc_forward.1']
    #allocation5 [shape = 'u8[1048576]{0}', space=vmem, size = 0x100000, scoped, tag = 'output window, operand 0']
    %13 = vsyncpa [#allocation4], 0
    %s14 = scalar_lea.sflag [#allocation4], 1
    %15 = vsyncpa %s14, 0
    loop: start=0, step=1, limit=10
    $region2: #{toc_forward.1} parent=1 // loop_pre_header
      _
    $region3: #{toc_forward.1} parent=1 // loop_header
      %s17 = sphi 0, %s21
      %p18 = scmp.ge.s32.totalorder %s17, 10
      %s24 = sphi 0, %s36
      %s25 = sphi 0, %s32
      %s26 = sphi 0, %s24
      %s27 = sphi 0, %s25
      %s28 = sphi 0, %s26
      %s29 = sphi 0, %s27
      %s39 = sphi 0, %s41
      %s42 = sphi 0, %s39
      %s43 = sphi 0, %s42
      %s59 = sphi 0, %s43
      %s63 = sphi 0, %s63
      %s65 = sphi 0, %s63
      %s66 = sphi 0, %s65
      %s80 = sphi 0, %s66
      %s84 = sphi 0, %s84
      %s86 = sphi 0, %s84
      %s87 = sphi 0, %s86
      %s101 = sphi 0, %s87
      %s105 = sphi 0, %s105
      %s107 = sphi 0, %s105
      %s108 = sphi 0, %s107
      %s122 = sphi 0, %s108
      %s126 = sphi 0, %s126
      %s128 = sphi 0, %s126
      %s129 = sphi 0, %s128
      %s143 = sphi 0, %s129
      %s147 = sphi 0, %s147
      %s149 = sphi 0, %s147
      %s150 = sphi 0, %s149
      %s164 = sphi 0, %s150
      %s168 = sphi 0, %s168
      %s170 = sphi 0, %s168
      %s171 = sphi 0, %s170
      %s185 = sphi 0, %s171
      %s191 = sphi 0, %s193
      %s194 = sphi 0, %s191
      %s195 = sphi 0, %s194
      %s211 = sphi 0, %s195
      %s219 = sphi 0, %s221
      %s222 = sphi 0, %s219
      %s223 = sphi 0, %s222
      %s239 = sphi 0, %s223
    $region4: #{toc_forward.1} parent=1 // loop_header_branch
      %20 = sbr.rel (%p18) target = $region8
    $region5: #{toc_forward.1} parent=1 // loop_body
      %s22 = ssub.s32 %s17, 1
      %s23 = ssub.s32 %s17, 2
      %s30 = sadd.s32 1, %s25
      %p31 = scmp.ge.s32.totalorder %s30, 4
      %s32 = scalar_select %p31, 0, %s30
      %s33 = sadd.s32 1, %s24
      %s34 = scalar_select %p31, %s33, %s24
      %p35 = scmp.ge.s32.totalorder %s34, 2
      %s36 = scalar_select %p35, 0, %s34
      %s37 = ssub.s32 %s24, %s36
      %p38 = scmp.eq.s32.totalorder %s37, 0
      %s40 = sadd.s32 %s39, 1
      %s41 = scalar_select %p38, %s39, %s40
      %p44 = pneg %p38
      %p45 = scmp.eq.s32.totalorder %s17, 7
      %p46 = por %p44, %p45
      %p47 = scmp.ne.s32.totalorder %s39, %s42
      %p48 = scmp.eq.s32.totalorder %s17, 0
      %p49 = por %p47, %p48
      %p50 = scmp.ne.s32.totalorder %s39, %s42
      %p51 = scmp.eq.s32.totalorder %s22, 7
      %p52 = por %p50, %p51
      %p53 = scmp.ne.s32.totalorder %s42, %s43
      %p54 = scmp.eq.s32.totalorder %s22, 0
      %p55 = por %p53, %p54
      %p56 = scmp.ne.s32.totalorder %s42, %s43
      %p57 = scmp.eq.s32.totalorder %s23, 7
      %p58 = por %p56, %p57
      %p60 = scmp.ne.s32.totalorder %s43, %s59
      %p61 = scmp.eq.s32.totalorder %s23, 0
      %p62 = por %p60, %p61
      %s64 = sadd.s32 %s63, 1
      %p67 = scmp.eq.s32.totalorder %s17, 7
      %p68 = scmp.ne.s32.totalorder %s63, %s65
      %p69 = scmp.eq.s32.totalorder %s17, 0
      %p70 = por %p68, %p69
      %p71 = scmp.ne.s32.totalorder %s63, %s65
      %p72 = scmp.eq.s32.totalorder %s22, 7
      %p73 = por %p71, %p72
      %p74 = scmp.ne.s32.totalorder %s65, %s66
      %p75 = scmp.eq.s32.totalorder %s22, 0
      %p76 = por %p74, %p75
      %p77 = scmp.ne.s32.totalorder %s65, %s66
      %p78 = scmp.eq.s32.totalorder %s23, 7
      %p79 = por %p77, %p78
      %p81 = scmp.ne.s32.totalorder %s66, %s80
      %p82 = scmp.eq.s32.totalorder %s23, 0
      %p83 = por %p81, %p82
      %s85 = sadd.s32 %s84, 1
      %p88 = scmp.eq.s32.totalorder %s17, 7
      %p89 = scmp.ne.s32.totalorder %s84, %s86
      %p90 = scmp.eq.s32.totalorder %s17, 0
      %p91 = por %p89, %p90
      %p92 = scmp.ne.s32.totalorder %s84, %s86
      %p93 = scmp.eq.s32.totalorder %s22, 7
      %p94 = por %p92, %p93
      %p95 = scmp.ne.s32.totalorder %s86, %s87
      %p96 = scmp.eq.s32.totalorder %s22, 0
      %p97 = por %p95, %p96
      %p98 = scmp.ne.s32.totalorder %s86, %s87
      %p99 = scmp.eq.s32.totalorder %s23, 7
      %p100 = por %p98, %p99
      %p102 = scmp.ne.s32.totalorder %s87, %s101
      %p103 = scmp.eq.s32.totalorder %s23, 0
      %p104 = por %p102, %p103
      %s106 = sadd.s32 %s105, 1
      %p109 = scmp.eq.s32.totalorder %s17, 7
      %p110 = scmp.ne.s32.totalorder %s105, %s107
      %p111 = scmp.eq.s32.totalorder %s17, 0
      %p112 = por %p110, %p111
      %p113 = scmp.ne.s32.totalorder %s105, %s107
      %p114 = scmp.eq.s32.totalorder %s22, 7
      %p115 = por %p113, %p114
      %p116 = scmp.ne.s32.totalorder %s107, %s108
      %p117 = scmp.eq.s32.totalorder %s22, 0
      %p118 = por %p116, %p117
      %p119 = scmp.ne.s32.totalorder %s107, %s108
      %p120 = scmp.eq.s32.totalorder %s23, 7
      %p121 = por %p119, %p120
      %p123 = scmp.ne.s32.totalorder %s108, %s122
      %p124 = scmp.eq.s32.totalorder %s23, 0
      %p125 = por %p123, %p124
      %s127 = sadd.s32 %s126, 1
      %p130 = scmp.eq.s32.totalorder %s17, 7
      %p131 = scmp.ne.s32.totalorder %s126, %s128
      %p132 = scmp.eq.s32.totalorder %s17, 0
      %p133 = por %p131, %p132
      %p134 = scmp.ne.s32.totalorder %s126, %s128
      %p135 = scmp.eq.s32.totalorder %s22, 7
      %p136 = por %p134, %p135
      %p137 = scmp.ne.s32.totalorder %s128, %s129
      %p138 = scmp.eq.s32.totalorder %s22, 0
      %p139 = por %p137, %p138
      %p140 = scmp.ne.s32.totalorder %s128, %s129
      %p141 = scmp.eq.s32.totalorder %s23, 7
      %p142 = por %p140, %p141
      %p144 = scmp.ne.s32.totalorder %s129, %s143
      %p145 = scmp.eq.s32.totalorder %s23, 0
      %p146 = por %p144, %p145
      %s148 = sadd.s32 %s147, 1
      %p151 = scmp.eq.s32.totalorder %s17, 7
      %p152 = scmp.ne.s32.totalorder %s147, %s149
      %p153 = scmp.eq.s32.totalorder %s17, 0
      %p154 = por %p152, %p153
      %p155 = scmp.ne.s32.totalorder %s147, %s149
      %p156 = scmp.eq.s32.totalorder %s22, 7
      %p157 = por %p155, %p156
      %p158 = scmp.ne.s32.totalorder %s149, %s150
      %p159 = scmp.eq.s32.totalorder %s22, 0
      %p160 = por %p158, %p159
      %p161 = scmp.ne.s32.totalorder %s149, %s150
      %p162 = scmp.eq.s32.totalorder %s23, 7
      %p163 = por %p161, %p162
      %p165 = scmp.ne.s32.totalorder %s150, %s164
      %p166 = scmp.eq.s32.totalorder %s23, 0
      %p167 = por %p165, %p166
      %s169 = sadd.s32 %s168, 1
      %p172 = scmp.eq.s32.totalorder %s17, 7
      %p173 = scmp.ne.s32.totalorder %s168, %s170
      %p174 = scmp.eq.s32.totalorder %s17, 0
      %p175 = por %p173, %p174
      %p176 = scmp.ne.s32.totalorder %s168, %s170
      %p177 = scmp.eq.s32.totalorder %s22, 7
      %p178 = por %p176, %p177
      %p179 = scmp.ne.s32.totalorder %s170, %s171
      %p180 = scmp.eq.s32.totalorder %s22, 0
      %p181 = por %p179, %p180
      %p182 = scmp.ne.s32.totalorder %s170, %s171
      %p183 = scmp.eq.s32.totalorder %s23, 7
      %p184 = por %p182, %p183
      %p186 = scmp.ne.s32.totalorder %s171, %s185
      %p187 = scmp.eq.s32.totalorder %s23, 0
      %p188 = por %p186, %p187
      %s189 = ssub.s32 %s25, %s32
      %p190 = scmp.eq.s32.totalorder %s189, 0
      %s192 = sadd.s32 %s191, 1
      %s193 = scalar_select %p190, %s191, %s192
      %p196 = pneg %p190
      %p197 = scmp.eq.s32.totalorder %s17, 7
      %p198 = por %p196, %p197
      %p199 = scmp.ne.s32.totalorder %s191, %s194
      %p200 = scmp.eq.s32.totalorder %s17, 0
      %p201 = por %p199, %p200
      %p202 = scmp.ne.s32.totalorder %s191, %s194
      %p203 = scmp.eq.s32.totalorder %s22, 7
      %p204 = por %p202, %p203
      %p205 = scmp.ne.s32.totalorder %s194, %s195
      %p206 = scmp.eq.s32.totalorder %s22, 0
      %p207 = por %p205, %p206
      %p208 = scmp.ne.s32.totalorder %s194, %s195
      %p209 = scmp.eq.s32.totalorder %s23, 7
      %p210 = por %p208, %p209
      %p212 = scmp.ne.s32.totalorder %s195, %s211
      %p213 = scmp.eq.s32.totalorder %s23, 0
      %p214 = por %p212, %p213
      %s215 = ssub.s32 %s24, %s36
      %s216 = ssub.s32 %s25, %s32
      %s217 = sor.u32 %s215, %s216
      %p218 = scmp.eq.s32.totalorder %s217, 0
      %s220 = sadd.s32 %s219, 1
      %s221 = scalar_select %p218, %s219, %s220
      %p224 = pneg %p218
      %p225 = scmp.eq.s32.totalorder %s17, 7
      %p226 = por %p224, %p225
      %p227 = scmp.ne.s32.totalorder %s219, %s222
      %p228 = scmp.eq.s32.totalorder %s17, 0
      %p229 = por %p227, %p228
      %p230 = scmp.ne.s32.totalorder %s219, %s222
      %p231 = scmp.eq.s32.totalorder %s22, 7
      %p232 = por %p230, %p231
      %p233 = scmp.ne.s32.totalorder %s222, %s223
      %p234 = scmp.eq.s32.totalorder %s22, 0
      %p235 = por %p233, %p234
      %p236 = scmp.ne.s32.totalorder %s222, %s223
      %p237 = scmp.eq.s32.totalorder %s23, 7
      %p238 = por %p236, %p237
      %p240 = scmp.ne.s32.totalorder %s223, %s239
      %p241 = scmp.eq.s32.totalorder %s23, 0
      %p242 = por %p240, %p241
      %p243 = scmp.le.s32.totalorder 1, %s17
      %p244 = scmp.lt.s32.totalorder %s17, 9
      %p245 = pnand %p243, %p244
      %p246 = pneg %p245
      // Predicated region
      $region9: #{toc_forward.1} parent=5 // pred_check
        _
      $region10: #{toc_forward.1} parent=5 // pred_check_branch
        %248 = sbr.rel (%p245) target = $region12
      $region11: #{toc_forward.1} parent=5 // pred_region
        %s249 = ssub.s32 %s17, 1
        // Predicated region
        $region13: #{toc_forward.1} parent=11 // pred_check
          %p250 = pneg %p76
        $region14: #{toc_forward.1} parent=11 // pred_check_branch
          %252 = sbr.rel (%p250) target = $region16
        $region15: #{toc_forward.1} parent=11 // pred_region
          _
        $region16: #{toc_forward.1} parent=11 // pred_fallthru
          _
        // Predicated region
        $region17: #{toc_forward.1} parent=11 // pred_check
          %p253 = pneg %p97
        $region18: #{toc_forward.1} parent=11 // pred_check_branch
          %255 = sbr.rel (%p253) target = $region20
        $region19: #{toc_forward.1} parent=11 // pred_region
          _
        $region20: #{toc_forward.1} parent=11 // pred_fallthru
          _
        // Predicated region
        $region21: #{toc_forward.1} parent=11 // pred_check
          %p256 = pneg %p118
        $region22: #{toc_forward.1} parent=11 // pred_check_branch
          %258 = sbr.rel (%p256) target = $region24
        $region23: #{toc_forward.1} parent=11 // pred_region
          _
        $region24: #{toc_forward.1} parent=11 // pred_fallthru
          _
        // Predicated region
        $region25: #{toc_forward.1} parent=11 // pred_check
          %p259 = pneg %p139
        $region26: #{toc_forward.1} parent=11 // pred_check_branch
          %261 = sbr.rel (%p259) target = $region28
        $region27: #{toc_forward.1} parent=11 // pred_region
          _
        $region28: #{toc_forward.1} parent=11 // pred_fallthru
          _
        // Predicated region
        $region29: #{toc_forward.1} parent=11 // pred_check
          %p262 = pneg %p160
        $region30: #{toc_forward.1} parent=11 // pred_check_branch
          %264 = sbr.rel (%p262) target = $region32
        $region31: #{toc_forward.1} parent=11 // pred_region
          _
        $region32: #{toc_forward.1} parent=11 // pred_fallthru
          _
        // Predicated region
        $region33: #{toc_forward.1} parent=11 // pred_check
          %p265 = pneg %p181
        $region34: #{toc_forward.1} parent=11 // pred_check_branch
          %267 = sbr.rel (%p265) target = $region36
        $region35: #{toc_forward.1} parent=11 // pred_region
          _
        $region36: #{toc_forward.1} parent=11 // pred_fallthru
          _
      $region12: #{toc_forward.1} parent=5 // pred_fallthru
        _
      %p268 = scmp.lt.s32.totalorder %s17, 8
      // Predicated region
      $region37: #{toc_forward.1} parent=5 // pred_check
        %p269 = pneg %p268
      $region38: #{toc_forward.1} parent=5 // pred_check_branch
        %271 = sbr.rel (%p269) target = $region40
      $region39: #{toc_forward.1} parent=5 // pred_region
        // Predicated region
        $region41: #{toc_forward.1} parent=39 // pred_check
          %p272 = pneg %p49
        $region42: #{toc_forward.1} parent=39 // pred_check_branch
          %274 = sbr.rel (%p272) target = $region44
        $region43: #{toc_forward.1} parent=39 // pred_region
          %p275 = scmp.lt.s32.totalorder %s24, 1
          %s276 = scalar_select %p275, %s24, 1
          %s277 = smul.addr %s276, 32
          %s278 = smul.addr %s277, 4
          %s279 = scalar_lea.vmem %s0, %s278
        $region44: #{toc_forward.1} parent=39 // pred_fallthru
          _
        // Predicated region
        $region45: #{toc_forward.1} parent=39 // pred_check
          %p280 = pneg %p201
        $region46: #{toc_forward.1} parent=39 // pred_check_branch
          %282 = sbr.rel (%p280) target = $region48
        $region47: #{toc_forward.1} parent=39 // pred_region
          %s283 = sand.u32 %s191, 1
          %s284 = scalar_lea.sflag [#allocation4], %s283
          %s285 = sand.u32 %s191, 1
          %s286 = smul.addr %s285, 4096
          %s287 = scalar_lea.vmem [#allocation3], %s286
          %s288 = smul.u32 8, %s25
          %s290 = ssub.s32 65536, 65536
          %291 = vsyncadd %s284, %s290
          %s292 = smul.addr %s288, 64
          %s293 = scalar_lea.hbm %s7, %s292
          %s294 = sshll.u32 %s287, 4
          %s295 = int_to_ptr.vmem [resolvable:$true] %s294
          %300 = dma.hbm_to_vmem [thread:$0]  %s293, 65536, %s295, %s284, 2048, 512, 32
        $region48: #{toc_forward.1} parent=39 // pred_fallthru
          _
      $region40: #{toc_forward.1} parent=5 // pred_fallthru
        _
      %p301 = scmp.le.s32.totalorder 1, %s17
      %p302 = scmp.lt.s32.totalorder %s17, 9
      %p303 = pnand %p301, %p302
      %p304 = pneg %p303
      // Predicated region
      $region49: #{toc_forward.1} parent=5 // pred_check
        _
      $region50: #{toc_forward.1} parent=5 // pred_check_branch
        %306 = sbr.rel (%p303) target = $region52
      $region51: #{toc_forward.1} parent=5 // pred_region
        %s307 = ssub.s32 %s17, 1
        %s308 = sand.u32 %s194, 1
        %s309 = scalar_lea.sflag [#allocation4], %s308
        %s310 = sand.u32 %s194, 1
        %s311 = smul.addr %s310, 4096
        %s312 = scalar_lea.vmem [#allocation3], %s311
        // Predicated region
        $region53: #{toc_forward.1} parent=51 // pred_check
          %p313 = pneg %p207
        $region54: #{toc_forward.1} parent=51 // pred_check_branch
          %315 = sbr.rel (%p313) target = $region56
        $region55: #{toc_forward.1} parent=51 // pred_region
          %316 = dma.done %s309, 65536
        $region56: #{toc_forward.1} parent=51 // pred_fallthru
          _
        %p317 = scmp.lt.s32.totalorder %s26, 1
        %s318 = scalar_select %p317, %s26, 1
        %s319 = smul.addr %s318, 32
        %s320 = smul.addr %s319, 4
        %s321 = scalar_lea.vmem %s0, %s320
        %p322 = pneg %p55
        %p323 = pneg %p52
        %p324 = pneg %p76
        %p325 = pneg %p73
        %p326 = pneg %p97
        %p327 = pneg %p94
        %p328 = pneg %p118
        %p329 = pneg %p115
        %p330 = pneg %p139
        %p331 = pneg %p136
        %p332 = pneg %p160
        %p333 = pneg %p157
        %p334 = pneg %p181
        %p335 = pneg %p178
        %s336 = sand.u32 %s194, 1
        %s337 = scalar_lea.sflag [#allocation4], %s336
        %s338 = sand.u32 %s194, 1
        %s339 = smul.addr %s338, 4096
        %s340 = scalar_lea.vmem [#allocation3], %s339
        %p341 = pneg %p207
        %p342 = pneg %p204
        %p343 = pneg %p235
        %p344 = pneg %p232
        %s345 = sand.u32 %s222, 1
        %s346 = sand.u32 %s222, 1
        %s347 = smul.addr %s346, 1024
        %s348 = scalar_lea.vmem [#allocation5], %s347
        %p349 = scmp.lt.s32.totalorder %s26, 1
        %s350 = scalar_select %p349, %s26, 1
        %s351 = smul.addr %s350, 32
        %s352 = smul.addr %s351, 4
        %s353 = scalar_lea.vmem %s0, %s352
        %s354 = smul.u32 8, %s27
        %s355 = smul.u32 8, %s27
        %p357 = scmp.eq.s32.totalorder %s27, 0
        // Predicated region
        $region57: #{toc_forward.1} parent=51 // pred_check
          %p358 = pneg %p357
        $region58: #{toc_forward.1} parent=51 // pred_check_branch
          %360 = sbr.rel (%p358) target = $region60
        $region59: #{toc_forward.1} parent=51 // pred_region
          %v361 = vld [vmem:[%s1] sm:$0xf]
          %v362 = vld [vmem:[%s1 + $0x4] sm:$0xf]
          %v363 = vld [vmem:[%s1 + $0x8] sm:$0xf]
          %v364 = vld [vmem:[%s1 + $0xc] sm:$0xf]
          %v365 = vld [vmem:[%s1 + $0x10] sm:$0xf]
          %v366 = vld [vmem:[%s1 + $0x14] sm:$0xf]
          %v367 = vld [vmem:[%s1 + $0x18] sm:$0xf]
          %v368 = vld [vmem:[%s1 + $0x1c] sm:$0xf]
          %v369 = vld [vmem:[%s1 + $0x20] sm:$0xf]
          %v370 = vld [vmem:[%s1 + $0x24] sm:$0xf]
          %v371 = vld [vmem:[%s1 + $0x28] sm:$0xf]
          %v372 = vld [vmem:[%s1 + $0x2c] sm:$0xf]
          %v373 = vld [vmem:[%s1 + $0x30] sm:$0xf]
          %v374 = vld [vmem:[%s1 + $0x34] sm:$0xf]
          %v375 = vld [vmem:[%s1 + $0x38] sm:$0xf]
          %v376 = vld [vmem:[%s1 + $0x3c] sm:$0xf]
          %v377 = vld [vmem:[%s353] sm:$0xff]
          %v378 = vld [vmem:[%s353 + $0x8] sm:$0xff]
          %v379 = vld [vmem:[%s353 + $0x10] sm:$0xff]
          %v380 = vld [vmem:[%s353 + $0x18] sm:$0xff]
          %v381 = vld [vmem:[%s353 + $0x20] sm:$0xff]
          %v382 = vld [vmem:[%s353 + $0x28] sm:$0xff]
          %v383 = vld [vmem:[%s353 + $0x30] sm:$0xff]
          %v384 = vld [vmem:[%s353 + $0x38] sm:$0xff]
          %v385 = vld [vmem:[%s353 + $0x40] sm:$0xff]
          %v386 = vld [vmem:[%s353 + $0x48] sm:$0xff]
          %v387 = vld [vmem:[%s353 + $0x50] sm:$0xff]
          %v388 = vld [vmem:[%s353 + $0x58] sm:$0xff]
          %v389 = vld [vmem:[%s353 + $0x60] sm:$0xff]
          %v390 = vld [vmem:[%s353 + $0x68] sm:$0xff]
          %v391 = vld [vmem:[%s353 + $0x70] sm:$0xff]
          %v392 = vld [vmem:[%s353 + $0x78] sm:$0xff]
          %v409 = vunpack.c.l.b16 %v361
          %v410 = vunpack.c.l.b16 %v362
          %v411 = vunpack.c.l.b16 %v363
          %v412 = vunpack.c.l.b16 %v364
          %v413 = vunpack.c.l.b16 %v365
          %v414 = vunpack.c.l.b16 %v366
          %v415 = vunpack.c.l.b16 %v367
          %v416 = vunpack.c.l.b16 %v368
          %v417 = vunpack.c.l.b16 %v369
          %v418 = vunpack.c.l.b16 %v370
          %v419 = vunpack.c.l.b16 %v371
          %v420 = vunpack.c.l.b16 %v372
          %v421 = vunpack.c.l.b16 %v373
          %v422 = vunpack.c.l.b16 %v374
          %v423 = vunpack.c.l.b16 %v375
          %v424 = vunpack.c.l.b16 %v376
          %v425 = vpack.c.b16 %v410, %v409
          %v426 = vpack.c.b16 %v412, %v411
          %v427 = vpack.c.b16 %v414, %v413
          %v428 = vpack.c.b16 %v416, %v415
          %v429 = vpack.c.b16 %v418, %v417
          %v430 = vpack.c.b16 %v420, %v419
          %v431 = vpack.c.b16 %v422, %v421
          %v432 = vpack.c.b16 %v424, %v423
          %v449 = vunpack.c.l.b16 %v377
          %v450 = vunpack.c.h.b16 %v377
          %v451 = vunpack.c.l.b16 %v378
          %v452 = vunpack.c.h.b16 %v378
          %v453 = vunpack.c.l.b16 %v379
          %v454 = vunpack.c.h.b16 %v379
          %v455 = vunpack.c.l.b16 %v380
          %v456 = vunpack.c.h.b16 %v380
          %v457 = vunpack.c.l.b16 %v381
          %v458 = vunpack.c.h.b16 %v381
          %v459 = vunpack.c.l.b16 %v382
          %v460 = vunpack.c.h.b16 %v382
          %v461 = vunpack.c.l.b16 %v383
          %v462 = vunpack.c.h.b16 %v383
          %v463 = vunpack.c.l.b16 %v384
          %v464 = vunpack.c.h.b16 %v384
          %v465 = vunpack.c.l.b16 %v385
          %v466 = vunpack.c.h.b16 %v385
          %v467 = vunpack.c.l.b16 %v386
          %v468 = vunpack.c.h.b16 %v386
          %v469 = vunpack.c.l.b16 %v387
          %v470 = vunpack.c.h.b16 %v387
          %v471 = vunpack.c.l.b16 %v388
          %v472 = vunpack.c.h.b16 %v388
          %v473 = vunpack.c.l.b16 %v389
          %v474 = vunpack.c.h.b16 %v389
          %v475 = vunpack.c.l.b16 %v390
          %v476 = vunpack.c.h.b16 %v390
          %v477 = vunpack.c.l.b16 %v391
          %v478 = vunpack.c.h.b16 %v391
          %v479 = vunpack.c.l.b16 %v392
          %v480 = vunpack.c.h.b16 %v392
          %v481 = vpack.c.b16 %v457, %v449
          %v482 = vpack.c.b16 %v458, %v450
          %v483 = vpack.c.b16 %v459, %v451
          %v484 = vpack.c.b16 %v460, %v452
          %v485 = vpack.c.b16 %v461, %v453
          %v486 = vpack.c.b16 %v462, %v454
          %v487 = vpack.c.b16 %v463, %v455
          %v488 = vpack.c.b16 %v464, %v456
          %v489 = vpack.c.b16 %v473, %v465
          %v490 = vpack.c.b16 %v474, %v466
          %v491 = vpack.c.b16 %v475, %v467
          %v492 = vpack.c.b16 %v476, %v468
          %v493 = vpack.c.b16 %v477, %v469
          %v494 = vpack.c.b16 %v478, %v470
          %v495 = vpack.c.b16 %v479, %v471
          %v496 = vpack.c.b16 %v480, %v472
          %vm513 = vcmask 261120
          %v515 = vsel %vm513, %v425, 0
          %v518 = vsel %vm513, %v426, 0
          %v521 = vsel %vm513, %v427, 0
          %v524 = vsel %vm513, %v428, 0
          %v527 = vsel %vm513, %v429, 0
          %v530 = vsel %vm513, %v430, 0
          %v533 = vsel %vm513, %v431, 0
          %v536 = vsel %vm513, %v432, 0
          %538 = vmatprep.subr.bf16.mxu0 %v482
          %539 = vmatpush1.bf16.msra.mxu0 %v481
          %540 = vmatprep.subr.bf16.mxu0 %v490
          %541 = vmatpush1.bf16.msra.mxu0 %v489
          %542 = vmatprep.subr.bf16.mxu0 0
          %543 = vmatpush1.bf16.msra.mxu0 0
          %544 = vmatprep.subr.bf16.mxu0 0
          %545 = vmatpush1.bf16.msra.mxu0 0
          %546 = vmatprep.subr.bf16.mxu0 0
          %547 = vmatpush1.bf16.msra.mxu0 0
          %548 = vmatprep.subr.bf16.mxu0 0
          %549 = vmatpush1.bf16.msra.mxu0 0
          %550 = vmatprep.subr.bf16.mxu0 0
          %551 = vmatpush1.bf16.msra.mxu0 0
          %552 = vmatprep.subr.bf16.mxu0 0
          %553 = vmatpush1.bf16.msra.mxu0 0
          %554 = vmatprep.subr.bf16.mxu0 0
          %555 = vmatpush1.bf16.msra.mxu0 0
          %556 = vmatprep.subr.bf16.mxu0 0
          %557 = vmatpush1.bf16.msra.mxu0 0
          %558 = vmatprep.subr.bf16.mxu0 0
          %559 = vmatpush1.bf16.msra.mxu0 0
          %560 = vmatprep.subr.bf16.mxu0 0
          %561 = vmatpush1.bf16.msra.mxu0 0
          %562 = vmatprep.subr.bf16.mxu0 0
          %563 = vmatpush1.bf16.msra.mxu0 0
          %564 = vmatprep.subr.bf16.mxu0 0
          %565 = vmatpush1.bf16.msra.mxu0 0
          %566 = vmatprep.subr.bf16.mxu0 0
          %567 = vmatpush1.bf16.msra.mxu0 0
          %568 = vmatprep.subr.bf16.mxu0 0
          %569 = vmatpush1.bf16.msra.mxu0 0
          %570 = vmatprep.mubr.bf16.mxu0 0
          %571 = vmatmul.mubr.bf16.gmra.mrb[0].mxu0 %v515
          %v572 = vpop.f32.mrb[0].mxu0
          %v573 = vadd.f32 0.0, %v572
          %v574 = vpop.f32.mrb[0].mxu0
          %v575 = vadd.f32 0.0, %v574
          %v576 = vpop.f32.mrb[0].mxu0
          %v577 = vadd.f32 0.0, %v576
          %v578 = vpop.f32.mrb[0].mxu0
          %v579 = vadd.f32 0.0, %v578
          %580 = vmatprep.mubr.bf16.mxu0 0
          %581 = vmatmul.mubr.bf16.gmra.mrb[0].mxu0 %v518
          %v582 = vpop.f32.mrb[0].mxu0
          %v583 = vadd.f32 0.0, %v582
          %v584 = vpop.f32.mrb[0].mxu0
          %v585 = vadd.f32 0.0, %v584
          %v586 = vpop.f32.mrb[0].mxu0
          %v587 = vadd.f32 0.0, %v586
          %v588 = vpop.f32.mrb[0].mxu0
          %v589 = vadd.f32 0.0, %v588
          %590 = vmatprep.mubr.bf16.mxu0 0
          %591 = vmatmul.mubr.bf16.gmra.mrb[0].mxu0 %v521
          %v592 = vpop.f32.mrb[0].mxu0
          %v593 = vadd.f32 0.0, %v592
          %v594 = vpop.f32.mrb[0].mxu0
          %v595 = vadd.f32 0.0, %v594
          %v596 = vpop.f32.mrb[0].mxu0
          %v597 = vadd.f32 0.0, %v596
          %v598 = vpop.f32.mrb[0].mxu0
          %v599 = vadd.f32 0.0, %v598
          %600 = vmatprep.mubr.bf16.mxu0 0
          %601 = vmatmul.mubr.bf16.gmra.mrb[0].mxu0 %v524
          %v602 = vpop.f32.mrb[0].mxu0
          %v603 = vadd.f32 0.0, %v602
          %v604 = vpop.f32.mrb[0].mxu0
          %v605 = vadd.f32 0.0, %v604
          %v606 = vpop.f32.mrb[0].mxu0
          %v607 = vadd.f32 0.0, %v606
          %v608 = vpop.f32.mrb[0].mxu0
          %v609 = vadd.f32 0.0, %v608
          %610 = vmatprep.mubr.bf16.mxu0 0
          %611 = vmatmul.mubr.bf16.gmra.mrb[0].mxu0 %v527
          %v612 = vpop.f32.mrb[0].mxu0
          %v613 = vadd.f32 0.0, %v612
          %v614 = vpop.f32.mrb[0].mxu0
          %v615 = vadd.f32 0.0, %v614
          %v616 = vpop.f32.mrb[0].mxu0
          %v617 = vadd.f32 0.0, %v616
          %v618 = vpop.f32.mrb[0].mxu0
          %v619 = vadd.f32 0.0, %v618
          %620 = vmatprep.mubr.bf16.mxu0 0
          %621 = vmatmul.mubr.bf16.gmra.mrb[0].mxu0 %v530
          %v622 = vpop.f32.mrb[0].mxu0
          %v623 = vadd.f32 0.0, %v622
          %v624 = vpop.f32.mrb[0].mxu0
          %v625 = vadd.f32 0.0, %v624
          %v626 = vpop.f32.mrb[0].mxu0
          %v627 = vadd.f32 0.0, %v626
          %v628 = vpop.f32.mrb[0].mxu0
          %v629 = vadd.f32 0.0, %v628
          %630 = vmatprep.mubr.bf16.mxu0 0
          %631 = vmatmul.mubr.bf16.gmra.mrb[0].mxu0 %v533
          %v632 = vpop.f32.mrb[0].mxu0
          %v633 = vadd.f32 0.0, %v632
          %v634 = vpop.f32.mrb[0].mxu0
          %v635 = vadd.f32 0.0, %v634
          %v636 = vpop.f32.mrb[0].mxu0
          %v637 = vadd.f32 0.0, %v636
          %v638 = vpop.f32.mrb[0].mxu0
          %v639 = vadd.f32 0.0, %v638
          %640 = vmatprep.mubr.bf16.mxu0 0
          %641 = vmatmul.mubr.bf16.gmra.mrb[0].mxu0 %v536
          %v642 = vpop.f32.mrb[0].mxu0
          %v643 = vadd.f32 0.0, %v642
          %v644 = vpop.f32.mrb[0].mxu0
          %v645 = vadd.f32 0.0, %v644
          %v646 = vpop.f32.mrb[0].mxu0
          %v647 = vadd.f32 0.0, %v646
          %v648 = vpop.f32.mrb[0].mxu0
          %v649 = vadd.f32 0.0, %v648
          %650 = vdwg.mxu0
          %651 = vmatprep.subr.bf16.mxu0 %v484
          %652 = vmatpush1.bf16.msra.mxu0 %v483
          %653 = vmatprep.subr.bf16.mxu0 %v492
          %654 = vmatpush1.bf16.msra.mxu0 %v491
          %655 = vmatprep.subr.bf16.mxu0 0
          %656 = vmatpush1.bf16.msra.mxu0 0
          %657 = vmatprep.subr.bf16.mxu0 0
          %658 = vmatpush1.bf16.msra.mxu0 0
          %659 = vmatprep.subr.bf16.mxu0 0
          %660 = vmatpush1.bf16.msra.mxu0 0
          %661 = vmatprep.subr.bf16.mxu0 0
          %662 = vmatpush1.bf16.msra.mxu0 0
          %663 = vmatprep.subr.bf16.mxu0 0
          %664 = vmatpush1.bf16.msra.mxu0 0
          %665 = vmatprep.subr.bf16.mxu0 0
          %666 = vmatpush1.bf16.msra.mxu0 0
          %667 = vmatprep.subr.bf16.mxu0 0
          %668 = vmatpush1.bf16.msra.mxu0 0
          %669 = vmatprep.subr.bf16.mxu0 0
          %670 = vmatpush1.bf16.msra.mxu0 0
          %671 = vmatprep.subr.bf16.mxu0 0
          %672 = vmatpush1.bf16.msra.mxu0 0
          %673 = vmatprep.subr.bf16.mxu0 0
          %674 = vmatpush1.bf16.msra.mxu0 0
          %675 = vmatprep.subr.bf16.mxu0 0
          %676 = vmatpush1.bf16.msra.mxu0 0
          %677 = vmatprep.subr.bf16.mxu0 0
          %678 = vmatpush1.bf16.msra.mxu0 0
          %679 = vmatprep.subr.bf16.mxu0 0
          %680 = vmatpush1.bf16.msra.mxu0 0
          %681 = vmatprep.subr.bf16.mxu0 0
          %682 = vmatpush1.bf16.msra.mxu0 0
          %683 = vmatprep.mubr.bf16.mxu0 0
          %684 = vmatmul.mubr.bf16.gmra.mrb[0].mxu0 %v515
          %v685 = vpop.f32.mrb[0].mxu0
          %v686 = vadd.f32 0.0, %v685
          %v687 = vpop.f32.mrb[0].mxu0
          %v688 = vadd.f32 0.0, %v687
          %v689 = vpop.f32.mrb[0].mxu0
          %v690 = vadd.f32 0.0, %v689
          %v691 = vpop.f32.mrb[0].mxu0
          %v692 = vadd.f32 0.0, %v691
          %693 = vmatprep.mubr.bf16.mxu0 0
          %694 = vmatmul.mubr.bf16.gmra.mrb[0].mxu0 %v518
          %v695 = vpop.f32.mrb[0].mxu0
          %v696 = vadd.f32 0.0, %v695
          %v697 = vpop.f32.mrb[0].mxu0
          %v698 = vadd.f32 0.0, %v697
          %v699 = vpop.f32.mrb[0].mxu0
          %v700 = vadd.f32 0.0, %v699
          %v701 = vpop.f32.mrb[0].mxu0
          %v702 = vadd.f32 0.0, %v701
          %703 = vmatprep.mubr.bf16.mxu0 0
          %704 = vmatmul.mubr.bf16.gmra.mrb[0].mxu0 %v521
          %v705 = vpop.f32.mrb[0].mxu0
          %v706 = vadd.f32 0.0, %v705
          %v707 = vpop.f32.mrb[0].mxu0
          %v708 = vadd.f32 0.0, %v707
          %v709 = vpop.f32.mrb[0].mxu0
          %v710 = vadd.f32 0.0, %v709
          %v711 = vpop.f32.mrb[0].mxu0
          %v712 = vadd.f32 0.0, %v711
          %713 = vmatprep.mubr.bf16.mxu0 0
          %714 = vmatmul.mubr.bf16.gmra.mrb[0].mxu0 %v524
          %v715 = vpop.f32.mrb[0].mxu0
          %v716 = vadd.f32 0.0, %v715
          %v717 = vpop.f32.mrb[0].mxu0
          %v718 = vadd.f32 0.0, %v717
          %v719 = vpop.f32.mrb[0].mxu0
          %v720 = vadd.f32 0.0, %v719
          %v721 = vpop.f32.mrb[0].mxu0
          %v722 = vadd.f32 0.0, %v721
          %723 = vmatprep.mubr.bf16.mxu0 0
          %724 = vmatmul.mubr.bf16.gmra.mrb[0].mxu0 %v527
          %v725 = vpop.f32.mrb[0].mxu0
          %v726 = vadd.f32 0.0, %v725
          %v727 = vpop.f32.mrb[0].mxu0
          %v728 = vadd.f32 0.0, %v727
          %v729 = vpop.f32.mrb[0].mxu0
          %v730 = vadd.f32 0.0, %v729
          %v731 = vpop.f32.mrb[0].mxu0
          %v732 = vadd.f32 0.0, %v731
          %733 = vmatprep.mubr.bf16.mxu0 0
          %734 = vmatmul.mubr.bf16.gmra.mrb[0].mxu0 %v530
          %v735 = vpop.f32.mrb[0].mxu0
          %v736 = vadd.f32 0.0, %v735
          %v737 = vpop.f32.mrb[0].mxu0
          %v738 = vadd.f32 0.0, %v737
          %v739 = vpop.f32.mrb[0].mxu0
          %v740 = vadd.f32 0.0, %v739
          %v741 = vpop.f32.mrb[0].mxu0
          %v742 = vadd.f32 0.0, %v741
          %743 = vmatprep.mubr.bf16.mxu0 0
          %744 = vmatmul.mubr.bf16.gmra.mrb[0].mxu0 %v533
          %v745 = vpop.f32.mrb[0].mxu0
          %v746 = vadd.f32 0.0, %v745
          %v747 = vpop.f32.mrb[0].mxu0
          %v748 = vadd.f32 0.0, %v747
          %v749 = vpop.f32.mrb[0].mxu0
          %v750 = vadd.f32 0.0, %v749
          %v751 = vpop.f32.mrb[0].mxu0
          %v752 = vadd.f32 0.0, %v751
          %753 = vmatprep.mubr.bf16.mxu0 0
          %754 = vmatmul.mubr.bf16.gmra.mrb[0].mxu0 %v536
          %v755 = vpop.f32.mrb[0].mxu0
          %v756 = vadd.f32 0.0, %v755
          %v757 = vpop.f32.mrb[0].mxu0
          %v758 = vadd.f32 0.0, %v757
          %v759 = vpop.f32.mrb[0].mxu0
          %v760 = vadd.f32 0.0, %v759
          %v761 = vpop.f32.mrb[0].mxu0
          %v762 = vadd.f32 0.0, %v761
          %763 = vdwg.mxu0
          %764 = vmatprep.subr.bf16.mxu0 %v486
          %765 = vmatpush1.bf16.msra.mxu0 %v485
          %766 = vmatprep.subr.bf16.mxu0 %v494
          %767 = vmatpush1.bf16.msra.mxu0 %v493
          %768 = vmatprep.subr.bf16.mxu0 0
          %769 = vmatpush1.bf16.msra.mxu0 0
          %770 = vmatprep.subr.bf16.mxu0 0
          %771 = vmatpush1.bf16.msra.mxu0 0
          %772 = vmatprep.subr.bf16.mxu0 0
          %773 = vmatpush1.bf16.msra.mxu0 0
          %774 = vmatprep.subr.bf16.mxu0 0
          %775 = vmatpush1.bf16.msra.mxu0 0
          %776 = vmatprep.subr.bf16.mxu0 0
          %777 = vmatpush1.bf16.msra.mxu0 0
          %778 = vmatprep.subr.bf16.mxu0 0
          %779 = vmatpush1.bf16.msra.mxu0 0
          %780 = vmatprep.subr.bf16.mxu0 0
          %781 = vmatpush1.bf16.msra.mxu0 0
          %782 = vmatprep.subr.bf16.mxu0 0
          %783 = vmatpush1.bf16.msra.mxu0 0
          %784 = vmatprep.subr.bf16.mxu0 0
          %785 = vmatpush1.bf16.msra.mxu0 0
          %786 = vmatprep.subr.bf16.mxu0 0
          %787 = vmatpush1.bf16.msra.mxu0 0
          %788 = vmatprep.subr.bf16.mxu0 0
          %789 = vmatpush1.bf16.msra.mxu0 0
          %790 = vmatprep.subr.bf16.mxu0 0
          %791 = vmatpush1.bf16.msra.mxu0 0
          %792 = vmatprep.subr.bf16.mxu0 0
          %793 = vmatpush1.bf16.msra.mxu0 0
          %794 = vmatprep.subr.bf16.mxu0 0
          %795 = vmatpush1.bf16.msra.mxu0 0
          %796 = vmatprep.mubr.bf16.mxu0 0
          %797 = vmatmul.mubr.bf16.gmra.mrb[0].mxu0 %v515
          %v798 = vpop.f32.mrb[0].mxu0
          %v799 = vadd.f32 0.0, %v798
          %v800 = vpop.f32.mrb[0].mxu0
          %v801 = vadd.f32 0.0, %v800
          %v802 = vpop.f32.mrb[0].mxu0
          %v803 = vadd.f32 0.0, %v802
          %v804 = vpop.f32.mrb[0].mxu0
          %v805 = vadd.f32 0.0, %v804
          %806 = vmatprep.mubr.bf16.mxu0 0
          %807 = vmatmul.mubr.bf16.gmra.mrb[0].mxu0 %v518
          %v808 = vpop.f32.mrb[0].mxu0
          %v809 = vadd.f32 0.0, %v808
          %v810 = vpop.f32.mrb[0].mxu0
          %v811 = vadd.f32 0.0, %v810
          %v812 = vpop.f32.mrb[0].mxu0
          %v813 = vadd.f32 0.0, %v812
          %v814 = vpop.f32.mrb[0].mxu0
          %v815 = vadd.f32 0.0, %v814
          %816 = vmatprep.mubr.bf16.mxu0 0
          %817 = vmatmul.mubr.bf16.gmra.mrb[0].mxu0 %v521
          %v818 = vpop.f32.mrb[0].mxu0
          %v819 = vadd.f32 0.0, %v818
          %v820 = vpop.f32.mrb[0].mxu0
          %v821 = vadd.f32 0.0, %v820
          %v822 = vpop.f32.mrb[0].mxu0
          %v823 = vadd.f32 0.0, %v822
          %v824 = vpop.f32.mrb[0].mxu0
          %v825 = vadd.f32 0.0, %v824
          %826 = vmatprep.mubr.bf16.mxu0 0
          %827 = vmatmul.mubr.bf16.gmra.mrb[0].mxu0 %v524
          %v828 = vpop.f32.mrb[0].mxu0
          %v829 = vadd.f32 0.0, %v828
          %v830 = vpop.f32.mrb[0].mxu0
          %v831 = vadd.f32 0.0, %v830
          %v832 = vpop.f32.mrb[0].mxu0
          %v833 = vadd.f32 0.0, %v832
          %v834 = vpop.f32.mrb[0].mxu0
          %v835 = vadd.f32 0.0, %v834
          %836 = vmatprep.mubr.bf16.mxu0 0
          %837 = vmatmul.mubr.bf16.gmra.mrb[0].mxu0 %v527
          %v838 = vpop.f32.mrb[0].mxu0
          %v839 = vadd.f32 0.0, %v838
          %v840 = vpop.f32.mrb[0].mxu0
          %v841 = vadd.f32 0.0, %v840
          %v842 = vpop.f32.mrb[0].mxu0
          %v843 = vadd.f32 0.0, %v842
          %v844 = vpop.f32.mrb[0].mxu0
          %v845 = vadd.f32 0.0, %v844
          %846 = vmatprep.mubr.bf16.mxu0 0
          %847 = vmatmul.mubr.bf16.gmra.mrb[0].mxu0 %v530
          %v848 = vpop.f32.mrb[0].mxu0
          %v849 = vadd.f32 0.0, %v848
          %v850 = vpop.f32.mrb[0].mxu0
          %v851 = vadd.f32 0.0, %v850
          %v852 = vpop.f32.mrb[0].mxu0
          %v853 = vadd.f32 0.0, %v852
          %v854 = vpop.f32.mrb[0].mxu0
          %v855 = vadd.f32 0.0, %v854
          %856 = vmatprep.mubr.bf16.mxu0 0
          %857 = vmatmul.mubr.bf16.gmra.mrb[0].mxu0 %v533
          %v858 = vpop.f32.mrb[0].mxu0
          %v859 = vadd.f32 0.0, %v858
          %v860 = vpop.f32.mrb[0].mxu0
          %v861 = vadd.f32 0.0, %v860
          %v862 = vpop.f32.mrb[0].mxu0
          %v863 = vadd.f32 0.0, %v862
          %v864 = vpop.f32.mrb[0].mxu0
          %v865 = vadd.f32 0.0, %v864
          %866 = vmatprep.mubr.bf16.mxu0 0
          %867 = vmatmul.mubr.bf16.gmra.mrb[0].mxu0 %v536
          %v868 = vpop.f32.mrb[0].mxu0
          %v869 = vadd.f32 0.0, %v868
          %v870 = vpop.f32.mrb[0].mxu0
          %v871 = vadd.f32 0.0, %v870
          %v872 = vpop.f32.mrb[0].mxu0
          %v873 = vadd.f32 0.0, %v872
          %v874 = vpop.f32.mrb[0].mxu0
          %v875 = vadd.f32 0.0, %v874
          %876 = vdwg.mxu0
          %877 = vmatprep.subr.bf16.mxu0 %v488
          %878 = vmatpush1.bf16.msra.mxu0 %v487
          %879 = vmatprep.subr.bf16.mxu0 %v496
          %880 = vmatpush1.bf16.msra.mxu0 %v495
          %881 = vmatprep.subr.bf16.mxu0 0
          %882 = vmatpush1.bf16.msra.mxu0 0
          %883 = vmatprep.subr.bf16.mxu0 0
          %884 = vmatpush1.bf16.msra.mxu0 0
          %885 = vmatprep.subr.bf16.mxu0 0
          %886 = vmatpush1.bf16.msra.mxu0 0
          %887 = vmatprep.subr.bf16.mxu0 0
          %888 = vmatpush1.bf16.msra.mxu0 0
          %889 = vmatprep.subr.bf16.mxu0 0
          %890 = vmatpush1.bf16.msra.mxu0 0
          %891 = vmatprep.subr.bf16.mxu0 0
          %892 = vmatpush1.bf16.msra.mxu0 0
          %893 = vmatprep.subr.bf16.mxu0 0
          %894 = vmatpush1.bf16.msra.mxu0 0
          %895 = vmatprep.subr.bf16.mxu0 0
          %896 = vmatpush1.bf16.msra.mxu0 0
          %897 = vmatprep.subr.bf16.mxu0 0
          %898 = vmatpush1.bf16.msra.mxu0 0
          %899 = vmatprep.subr.bf16.mxu0 0
          %900 = vmatpush1.bf16.msra.mxu0 0
          %901 = vmatprep.subr.bf16.mxu0 0
          %902 = vmatpush1.bf16.msra.mxu0 0
          %903 = vmatprep.subr.bf16.mxu0 0
          %904 = vmatpush1.bf16.msra.mxu0 0
          %905 = vmatprep.subr.bf16.mxu0 0
          %906 = vmatpush1.bf16.msra.mxu0 0
          %907 = vmatprep.subr.bf16.mxu0 0
          %908 = vmatpush1.bf16.msra.mxu0 0
          %909 = vmatprep.mubr.bf16.mxu0 0
          %910 = vmatmul.mubr.bf16.gmra.mrb[0].mxu0 %v515
          %v911 = vpop.f32.mrb[0].mxu0
          %v912 = vadd.f32 0.0, %v911
          %v913 = vpop.f32.mrb[0].mxu0
          %v914 = vadd.f32 0.0, %v913
          %v915 = vpop.f32.mrb[0].mxu0
          %v916 = vadd.f32 0.0, %v915
          %v917 = vpop.f32.mrb[0].mxu0
          %v918 = vadd.f32 0.0, %v917
          %919 = vmatprep.mubr.bf16.mxu0 0
          %920 = vmatmul.mubr.bf16.gmra.mrb[0].mxu0 %v518
          %v921 = vpop.f32.mrb[0].mxu0
          %v922 = vadd.f32 0.0, %v921
          %v923 = vpop.f32.mrb[0].mxu0
          %v924 = vadd.f32 0.0, %v923
          %v925 = vpop.f32.mrb[0].mxu0
          %v926 = vadd.f32 0.0, %v925
          %v927 = vpop.f32.mrb[0].mxu0
          %v928 = vadd.f32 0.0, %v927
          %929 = vmatprep.mubr.bf16.mxu0 0
          %930 = vmatmul.mubr.bf16.gmra.mrb[0].mxu0 %v521
          %v931 = vpop.f32.mrb[0].mxu0
          %v932 = vadd.f32 0.0, %v931
          %v933 = vpop.f32.mrb[0].mxu0
          %v934 = vadd.f32 0.0, %v933
          %v935 = vpop.f32.mrb[0].mxu0
          %v936 = vadd.f32 0.0, %v935
          %v937 = vpop.f32.mrb[0].mxu0
          %v938 = vadd.f32 0.0, %v937
          %939 = vmatprep.mubr.bf16.mxu0 0
          %940 = vmatmul.mubr.bf16.gmra.mrb[0].mxu0 %v524
          %v941 = vpop.f32.mrb[0].mxu0
          %v942 = vadd.f32 0.0, %v941
          %v943 = vpop.f32.mrb[0].mxu0
          %v944 = vadd.f32 0.0, %v943
          %v945 = vpop.f32.mrb[0].mxu0
          %v946 = vadd.f32 0.0, %v945
          %v947 = vpop.f32.mrb[0].mxu0
          %v948 = vadd.f32 0.0, %v947
          %949 = vmatprep.mubr.bf16.mxu0 0
          %950 = vmatmul.mubr.bf16.gmra.mrb[0].mxu0 %v527
          %v951 = vpop.f32.mrb[0].mxu0
          %v952 = vadd.f32 0.0, %v951
          %v953 = vpop.f32.mrb[0].mxu0
          %v954 = vadd.f32 0.0, %v953
          %v955 = vpop.f32.mrb[0].mxu0
          %v956 = vadd.f32 0.0, %v955
          %v957 = vpop.f32.mrb[0].mxu0
          %v958 = vadd.f32 0.0, %v957
          %959 = vmatprep.mubr.bf16.mxu0 0
          %960 = vmatmul.mubr.bf16.gmra.mrb[0].mxu0 %v530
          %v961 = vpop.f32.mrb[0].mxu0
          %v962 = vadd.f32 0.0, %v961
          %v963 = vpop.f32.mrb[0].mxu0
          %v964 = vadd.f32 0.0, %v963
          %v965 = vpop.f32.mrb[0].mxu0
          %v966 = vadd.f32 0.0, %v965
          %v967 = vpop.f32.mrb[0].mxu0
          %v968 = vadd.f32 0.0, %v967
          %969 = vmatprep.mubr.bf16.mxu0 0
          %970 = vmatmul.mubr.bf16.gmra.mrb[0].mxu0 %v533
          %v971 = vpop.f32.mrb[0].mxu0
          %v972 = vadd.f32 0.0, %v971
          %v973 = vpop.f32.mrb[0].mxu0
          %v974 = vadd.f32 0.0, %v973
          %v975 = vpop.f32.mrb[0].mxu0
          %v976 = vadd.f32 0.0, %v975
          %v977 = vpop.f32.mrb[0].mxu0
          %v978 = vadd.f32 0.0, %v977
          %979 = vmatprep.mubr.bf16.mxu0 0
          %980 = vmatmul.mubr.bf16.gmra.mrb[0].mxu0 %v536
          %v981 = vpop.f32.mrb[0].mxu0
          %v982 = vadd.f32 0.0, %v981
          %v983 = vpop.f32.mrb[0].mxu0
          %v984 = vadd.f32 0.0, %v983
          %v985 = vpop.f32.mrb[0].mxu0
          %v986 = vadd.f32 0.0, %v985
          %v987 = vpop.f32.mrb[0].mxu0
          %v988 = vadd.f32 0.0, %v987
          %989 = vdwg.mxu0
          %v990 = vld [vmem:[%s6] sm:$0xff]
          %v991 = vld [vmem:[%s6 + $0x8] sm:$0xff]
          %v992 = vld [vmem:[%s6 + $0x10] sm:$0xff]
          %v993 = vld [vmem:[%s6 + $0x18] sm:$0xff]
          %v994 = vld [vmem:[%s6 + $0x20] sm:$0xff]
          %v995 = vld [vmem:[%s6 + $0x28] sm:$0xff]
          %v996 = vld [vmem:[%s6 + $0x30] sm:$0xff]
          %v997 = vld [vmem:[%s6 + $0x38] sm:$0xff]
          %v998 = vld [vmem:[%s6 + $0x40] sm:$0xff]
          %v999 = vld [vmem:[%s6 + $0x48] sm:$0xff]
          %v1000 = vld [vmem:[%s6 + $0x50] sm:$0xff]
          %v1001 = vld [vmem:[%s6 + $0x58] sm:$0xff]
          %v1002 = vld [vmem:[%s6 + $0x60] sm:$0xff]
          %v1003 = vld [vmem:[%s6 + $0x68] sm:$0xff]
          %v1004 = vld [vmem:[%s6 + $0x70] sm:$0xff]
          %v1005 = vld [vmem:[%s6 + $0x78] sm:$0xff]
          %v1006 = vadd.f32 %v990, 1e-06
          %v1007 = vadd.f32 %v991, 1e-06
          %v1008 = vadd.f32 %v992, 1e-06
          %v1009 = vadd.f32 %v993, 1e-06
          %v1010 = vadd.f32 %v994, 1e-06
          %v1011 = vadd.f32 %v995, 1e-06
          %v1012 = vadd.f32 %v996, 1e-06
          %v1013 = vadd.f32 %v997, 1e-06
          %v1014 = vadd.f32 %v998, 1e-06
          %v1015 = vadd.f32 %v999, 1e-06
          %v1016 = vadd.f32 %v1000, 1e-06
          %v1017 = vadd.f32 %v1001, 1e-06
          %v1018 = vadd.f32 %v1002, 1e-06
          %v1019 = vadd.f32 %v1003, 1e-06
          %v1020 = vadd.f32 %v1004, 1e-06
          %v1021 = vadd.f32 %v1005, 1e-06
          %v1022 = vrsqrt.pop %v1006
          %v1023 = vrsqrt.pop %v1007
          %v1024 = vrsqrt.pop %v1008
          %v1025 = vrsqrt.pop %v1009
          %v1026 = vrsqrt.pop %v1010
          %v1027 = vrsqrt.pop %v1011
          %v1028 = vrsqrt.pop %v1012
          %v1029 = vrsqrt.pop %v1013
          %v1030 = vrsqrt.pop %v1014
          %v1031 = vrsqrt.pop %v1015
          %v1032 = vrsqrt.pop %v1016
          %v1033 = vrsqrt.pop %v1017
          %v1034 = vrsqrt.pop %v1018
          %v1035 = vrsqrt.pop %v1019
          %v1036 = vrsqrt.pop %v1020
          %v1037 = vrsqrt.pop %v1021
          %v1038 = vld [vmem:[%s3] sm:$0xff]
          %v1039 = vld [vmem:[%s3 + $0x8] sm:$0xff]
          %v1040 = vld [vmem:[%s3 + $0x10] sm:$0xff]
          %v1041 = vld [vmem:[%s3 + $0x18] sm:$0xff]
          %v1042 = vld [vmem:[%s3 + $0x20] sm:$0xff]
          %v1043 = vld [vmem:[%s3 + $0x28] sm:$0xff]
          %v1044 = vld [vmem:[%s3 + $0x30] sm:$0xff]
          %v1045 = vld [vmem:[%s3 + $0x38] sm:$0xff]
          %v1046 = vld [vmem:[%s3 + $0x40] sm:$0xff]
          %v1047 = vld [vmem:[%s3 + $0x48] sm:$0xff]
          %v1048 = vld [vmem:[%s3 + $0x50] sm:$0xff]
          %v1049 = vld [vmem:[%s3 + $0x58] sm:$0xff]
          %v1050 = vld [vmem:[%s3 + $0x60] sm:$0xff]
          %v1051 = vld [vmem:[%s3 + $0x68] sm:$0xff]
          %v1052 = vld [vmem:[%s3 + $0x70] sm:$0xff]
          %v1053 = vld [vmem:[%s3 + $0x78] sm:$0xff]
          %v1054 = vmul.f32 %v1038, %v1022
          %v1055 = vmul.f32 %v1039, %v1023
          %v1056 = vmul.f32 %v1040, %v1024
          %v1057 = vmul.f32 %v1041, %v1025
          %v1058 = vmul.f32 %v1042, %v1026
          %v1059 = vmul.f32 %v1043, %v1027
          %v1060 = vmul.f32 %v1044, %v1028
          %v1061 = vmul.f32 %v1045, %v1029
          %v1062 = vmul.f32 %v1046, %v1030
          %v1063 = vmul.f32 %v1047, %v1031
          %v1064 = vmul.f32 %v1048, %v1032
          %v1065 = vmul.f32 %v1049, %v1033
          %v1066 = vmul.f32 %v1050, %v1034
          %v1067 = vmul.f32 %v1051, %v1035
          %v1068 = vmul.f32 %v1052, %v1036
          %v1069 = vmul.f32 %v1053, %v1037
          %v1070 = vld [vmem:[%s4] sm:$0xff]
          %v1071 = vld [vmem:[%s4 + $0x8] sm:$0xff]
          %v1072 = vld [vmem:[%s4 + $0x10] sm:$0xff]
          %v1073 = vld [vmem:[%s4 + $0x18] sm:$0xff]
          %v1074 = vld [vmem:[%s4 + $0x20] sm:$0xff]
          %v1075 = vld [vmem:[%s4 + $0x28] sm:$0xff]
          %v1076 = vld [vmem:[%s4 + $0x30] sm:$0xff]
          %v1077 = vld [vmem:[%s4 + $0x38] sm:$0xff]
          %v1078 = vld [vmem:[%s4 + $0x40] sm:$0xff]
          %v1079 = vld [vmem:[%s4 + $0x48] sm:$0xff]
          %v1080 = vld [vmem:[%s4 + $0x50] sm:$0xff]
          %v1081 = vld [vmem:[%s4 + $0x58] sm:$0xff]
          %v1082 = vld [vmem:[%s4 + $0x60] sm:$0xff]
          %v1083 = vld [vmem:[%s4 + $0x68] sm:$0xff]
          %v1084 = vld [vmem:[%s4 + $0x70] sm:$0xff]
          %v1085 = vld [vmem:[%s4 + $0x78] sm:$0xff]
          %v1086 = vld [vmem:[%s2] sm:$0xff]
          %v1087 = vld [vmem:[%s2 + $0x8] sm:$0xff]
          %v1088 = vld [vmem:[%s2 + $0x10] sm:$0xff]
          %v1089 = vld [vmem:[%s2 + $0x18] sm:$0xff]
          %v1090 = vld [vmem:[%s2 + $0x20] sm:$0xff]
          %v1091 = vld [vmem:[%s2 + $0x28] sm:$0xff]
          %v1092 = vld [vmem:[%s2 + $0x30] sm:$0xff]
          %v1093 = vld [vmem:[%s2 + $0x38] sm:$0xff]
          %v1094 = vld [vmem:[%s2 + $0x40] sm:$0xff]
          %v1095 = vld [vmem:[%s2 + $0x48] sm:$0xff]
          %v1096 = vld [vmem:[%s2 + $0x50] sm:$0xff]
          %v1097 = vld [vmem:[%s2 + $0x58] sm:$0xff]
          %v1098 = vld [vmem:[%s2 + $0x60] sm:$0xff]
          %v1099 = vld [vmem:[%s2 + $0x68] sm:$0xff]
          %v1100 = vld [vmem:[%s2 + $0x70] sm:$0xff]
          %v1101 = vld [vmem:[%s2 + $0x78] sm:$0xff]
          %v1102 = vld [vmem:[%s5] sm:$0xff]
          %v1103 = vld [vmem:[%s5 + $0x8] sm:$0xff]
          %v1104 = vld [vmem:[%s5 + $0x10] sm:$0xff]
          %v1105 = vld [vmem:[%s5 + $0x18] sm:$0xff]
          %v1106 = vld [vmem:[%s5 + $0x20] sm:$0xff]
          %v1107 = vld [vmem:[%s5 + $0x28] sm:$0xff]
          %v1108 = vld [vmem:[%s5 + $0x30] sm:$0xff]
          %v1109 = vld [vmem:[%s5 + $0x38] sm:$0xff]
          %v1110 = vld [vmem:[%s5 + $0x40] sm:$0xff]
          %v1111 = vld [vmem:[%s5 + $0x48] sm:$0xff]
          %v1112 = vld [vmem:[%s5 + $0x50] sm:$0xff]
          %v1113 = vld [vmem:[%s5 + $0x58] sm:$0xff]
          %v1114 = vld [vmem:[%s5 + $0x60] sm:$0xff]
          %v1115 = vld [vmem:[%s5 + $0x68] sm:$0xff]
          %v1116 = vld [vmem:[%s5 + $0x70] sm:$0xff]
          %v1117 = vld [vmem:[%s5 + $0x78] sm:$0xff]
          %v1118 = vsub.f32 %v1086, %v1102
          %v1119 = vsub.f32 %v1087, %v1103
          %v1120 = vsub.f32 %v1088, %v1104
          %v1121 = vsub.f32 %v1089, %v1105
          %v1122 = vsub.f32 %v1090, %v1106
          %v1123 = vsub.f32 %v1091, %v1107
          %v1124 = vsub.f32 %v1092, %v1108
          %v1125 = vsub.f32 %v1093, %v1109
          %v1126 = vsub.f32 %v1094, %v1110
          %v1127 = vsub.f32 %v1095, %v1111
          %v1128 = vsub.f32 %v1096, %v1112
          %v1129 = vsub.f32 %v1097, %v1113
          %v1130 = vsub.f32 %v1098, %v1114
          %v1131 = vsub.f32 %v1099, %v1115
          %v1132 = vsub.f32 %v1100, %v1116
          %v1133 = vsub.f32 %v1101, %v1117
          %v1134 = vmul.f32 %v1118, %v1054
          %v1135 = vmul.f32 %v1119, %v1055
          %v1136 = vmul.f32 %v1120, %v1056
          %v1137 = vmul.f32 %v1121, %v1057
          %v1138 = vmul.f32 %v1122, %v1058
          %v1139 = vmul.f32 %v1123, %v1059
          %v1140 = vmul.f32 %v1124, %v1060
          %v1141 = vmul.f32 %v1125, %v1061
          %v1142 = vmul.f32 %v1126, %v1062
          %v1143 = vmul.f32 %v1127, %v1063
          %v1144 = vmul.f32 %v1128, %v1064
          %v1145 = vmul.f32 %v1129, %v1065
          %v1146 = vmul.f32 %v1130, %v1066
          %v1147 = vmul.f32 %v1131, %v1067
          %v1148 = vmul.f32 %v1132, %v1068
          %v1149 = vmul.f32 %v1133, %v1069
          %v1150 = vadd.f32 %v1070, %v1134
          %v1151 = vadd.f32 %v1071, %v1135
          %v1152 = vadd.f32 %v1072, %v1136
          %v1153 = vadd.f32 %v1073, %v1137
          %v1154 = vadd.f32 %v1074, %v1138
          %v1155 = vadd.f32 %v1075, %v1139
          %v1156 = vadd.f32 %v1076, %v1140
          %v1157 = vadd.f32 %v1077, %v1141
          %v1158 = vadd.f32 %v1078, %v1142
          %v1159 = vadd.f32 %v1079, %v1143
          %v1160 = vadd.f32 %v1080, %v1144
          %v1161 = vadd.f32 %v1081, %v1145
          %v1162 = vadd.f32 %v1082, %v1146
          %v1163 = vadd.f32 %v1083, %v1147
          %v1164 = vadd.f32 %v1084, %v1148
          %v1165 = vadd.f32 %v1085, %v1149
          %1167 = vset.pattern.permute.xlu0 0
          %1168 = vperm.xlu0 %1167, %v1054
          %v1169 = vpop.permute.xlu0 %1168
          %1172 = vset.pattern.permute.xlu0 0
          %1173 = vperm.xlu0 %1172, %v1055
          %v1174 = vpop.permute.xlu0 %1173
          %1177 = vset.pattern.permute.xlu0 0
          %1178 = vperm.xlu0 %1177, %v1056
          %v1179 = vpop.permute.xlu0 %1178
          %1182 = vset.pattern.permute.xlu0 0
          %1183 = vperm.xlu0 %1182, %v1057
          %v1184 = vpop.permute.xlu0 %1183
          %1187 = vset.pattern.permute.xlu0 0
          %1188 = vperm.xlu0 %1187, %v1058
          %v1189 = vpop.permute.xlu0 %1188
          %1192 = vset.pattern.permute.xlu0 0
          %1193 = vperm.xlu0 %1192, %v1059
          %v1194 = vpop.permute.xlu0 %1193
          %1197 = vset.pattern.permute.xlu0 0
          %1198 = vperm.xlu0 %1197, %v1060
          %v1199 = vpop.permute.xlu0 %1198
          %1202 = vset.pattern.permute.xlu0 0
          %1203 = vperm.xlu0 %1202, %v1061
          %v1204 = vpop.permute.xlu0 %1203
          %1207 = vset.pattern.permute.xlu0 0
          %1208 = vperm.xlu0 %1207, %v1062
          %v1209 = vpop.permute.xlu0 %1208
          %1212 = vset.pattern.permute.xlu0 0
          %1213 = vperm.xlu0 %1212, %v1063
          %v1214 = vpop.permute.xlu0 %1213
          %1217 = vset.pattern.permute.xlu0 0
          %1218 = vperm.xlu0 %1217, %v1064
          %v1219 = vpop.permute.xlu0 %1218
          %1222 = vset.pattern.permute.xlu0 0
          %1223 = vperm.xlu0 %1222, %v1065
          %v1224 = vpop.permute.xlu0 %1223
          %1227 = vset.pattern.permute.xlu0 0
          %1228 = vperm.xlu0 %1227, %v1066
          %v1229 = vpop.permute.xlu0 %1228
          %1232 = vset.pattern.permute.xlu0 0
          %1233 = vperm.xlu0 %1232, %v1067
          %v1234 = vpop.permute.xlu0 %1233
          %1237 = vset.pattern.permute.xlu0 0
          %1238 = vperm.xlu0 %1237, %v1068
          %v1239 = vpop.permute.xlu0 %1238
          %1242 = vset.pattern.permute.xlu0 0
          %1243 = vperm.xlu0 %1242, %v1069
          %v1244 = vpop.permute.xlu0 %1243
          %v1246 = vmul.f32 %v573, %v1169
          %v1247 = vmul.f32 %v575, %v1169
          %v1248 = vmul.f32 %v686, %v1169
          %v1249 = vmul.f32 %v688, %v1169
          %v1250 = vmul.f32 %v799, %v1169
          %v1251 = vmul.f32 %v801, %v1169
          %v1252 = vmul.f32 %v912, %v1169
          %v1253 = vmul.f32 %v914, %v1169
          %v1254 = vmul.f32 %v577, %v1174
          %v1255 = vmul.f32 %v579, %v1174
          %v1256 = vmul.f32 %v690, %v1174
          %v1257 = vmul.f32 %v692, %v1174
          %v1258 = vmul.f32 %v803, %v1174
          %v1259 = vmul.f32 %v805, %v1174
          %v1260 = vmul.f32 %v916, %v1174
          %v1261 = vmul.f32 %v918, %v1174
          %v1262 = vmul.f32 %v583, %v1179
          %v1263 = vmul.f32 %v585, %v1179
          %v1264 = vmul.f32 %v696, %v1179
          %v1265 = vmul.f32 %v698, %v1179
          %v1266 = vmul.f32 %v809, %v1179
          %v1267 = vmul.f32 %v811, %v1179
          %v1268 = vmul.f32 %v922, %v1179
          %v1269 = vmul.f32 %v924, %v1179
          %v1270 = vmul.f32 %v587, %v1184
          %v1271 = vmul.f32 %v589, %v1184
          %v1272 = vmul.f32 %v700, %v1184
          %v1273 = vmul.f32 %v702, %v1184
          %v1274 = vmul.f32 %v813, %v1184
          %v1275 = vmul.f32 %v815, %v1184
          %v1276 = vmul.f32 %v926, %v1184
          %v1277 = vmul.f32 %v928, %v1184
          %v1278 = vmul.f32 %v593, %v1189
          %v1279 = vmul.f32 %v595, %v1189
          %v1280 = vmul.f32 %v706, %v1189
          %v1281 = vmul.f32 %v708, %v1189
          %v1282 = vmul.f32 %v819, %v1189
          %v1283 = vmul.f32 %v821, %v1189
          %v1284 = vmul.f32 %v932, %v1189
          %v1285 = vmul.f32 %v934, %v1189
          %v1286 = vmul.f32 %v597, %v1194
          %v1287 = vmul.f32 %v599, %v1194
          %v1288 = vmul.f32 %v710, %v1194
          %v1289 = vmul.f32 %v712, %v1194
          %v1290 = vmul.f32 %v823, %v1194
          %v1291 = vmul.f32 %v825, %v1194
          %v1292 = vmul.f32 %v936, %v1194
          %v1293 = vmul.f32 %v938, %v1194
          %v1294 = vmul.f32 %v603, %v1199
          %v1295 = vmul.f32 %v605, %v1199
          %v1296 = vmul.f32 %v716, %v1199
          %v1297 = vmul.f32 %v718, %v1199
          %v1298 = vmul.f32 %v829, %v1199
          %v1299 = vmul.f32 %v831, %v1199
          %v1300 = vmul.f32 %v942, %v1199
          %v1301 = vmul.f32 %v944, %v1199
          %v1302 = vmul.f32 %v607, %v1204
          %v1303 = vmul.f32 %v609, %v1204
          %v1304 = vmul.f32 %v720, %v1204
          %v1305 = vmul.f32 %v722, %v1204
          %v1306 = vmul.f32 %v833, %v1204
          %v1307 = vmul.f32 %v835, %v1204
          %v1308 = vmul.f32 %v946, %v1204
          %v1309 = vmul.f32 %v948, %v1204
          %v1310 = vmul.f32 %v613, %v1209
          %v1311 = vmul.f32 %v615, %v1209
          %v1312 = vmul.f32 %v726, %v1209
          %v1313 = vmul.f32 %v728, %v1209
          %v1314 = vmul.f32 %v839, %v1209
          %v1315 = vmul.f32 %v841, %v1209
          %v1316 = vmul.f32 %v952, %v1209
          %v1317 = vmul.f32 %v954, %v1209
          %v1318 = vmul.f32 %v617, %v1214
          %v1319 = vmul.f32 %v619, %v1214
          %v1320 = vmul.f32 %v730, %v1214
          %v1321 = vmul.f32 %v732, %v1214
          %v1322 = vmul.f32 %v843, %v1214
          %v1323 = vmul.f32 %v845, %v1214
          %v1324 = vmul.f32 %v956, %v1214
          %v1325 = vmul.f32 %v958, %v1214
          %v1326 = vmul.f32 %v623, %v1219
          %v1327 = vmul.f32 %v625, %v1219
          %v1328 = vmul.f32 %v736, %v1219
          %v1329 = vmul.f32 %v738, %v1219
          %v1330 = vmul.f32 %v849, %v1219
          %v1331 = vmul.f32 %v851, %v1219
          %v1332 = vmul.f32 %v962, %v1219
          %v1333 = vmul.f32 %v964, %v1219
          %v1334 = vmul.f32 %v627, %v1224
          %v1335 = vmul.f32 %v629, %v1224
          %v1336 = vmul.f32 %v740, %v1224
          %v1337 = vmul.f32 %v742, %v1224
          %v1338 = vmul.f32 %v853, %v1224
          %v1339 = vmul.f32 %v855, %v1224
          %v1340 = vmul.f32 %v966, %v1224
          %v1341 = vmul.f32 %v968, %v1224
          %v1342 = vmul.f32 %v633, %v1229
          %v1343 = vmul.f32 %v635, %v1229
          %v1344 = vmul.f32 %v746, %v1229
          %v1345 = vmul.f32 %v748, %v1229
          %v1346 = vmul.f32 %v859, %v1229
          %v1347 = vmul.f32 %v861, %v1229
          %v1348 = vmul.f32 %v972, %v1229
          %v1349 = vmul.f32 %v974, %v1229
          %v1350 = vmul.f32 %v637, %v1234
          %v1351 = vmul.f32 %v639, %v1234
          %v1352 = vmul.f32 %v750, %v1234
          %v1353 = vmul.f32 %v752, %v1234
          %v1354 = vmul.f32 %v863, %v1234
          %v1355 = vmul.f32 %v865, %v1234
          %v1356 = vmul.f32 %v976, %v1234
          %v1357 = vmul.f32 %v978, %v1234
          %v1358 = vmul.f32 %v643, %v1239
          %v1359 = vmul.f32 %v645, %v1239
          %v1360 = vmul.f32 %v756, %v1239
          %v1361 = vmul.f32 %v758, %v1239
          %v1362 = vmul.f32 %v869, %v1239
          %v1363 = vmul.f32 %v871, %v1239
          %v1364 = vmul.f32 %v982, %v1239
          %v1365 = vmul.f32 %v984, %v1239
          %v1366 = vmul.f32 %v647, %v1244
          %v1367 = vmul.f32 %v649, %v1244
          %v1368 = vmul.f32 %v760, %v1244
          %v1369 = vmul.f32 %v762, %v1244
          %v1370 = vmul.f32 %v873, %v1244
          %v1371 = vmul.f32 %v875, %v1244
          %v1372 = vmul.f32 %v986, %v1244
          %v1373 = vmul.f32 %v988, %v1244
          %1375 = vset.pattern.permute.xlu0 0
          %1376 = vperm.xlu0 %1375, %v1150
          %v1377 = vpop.permute.xlu0 %1376
          %1380 = vset.pattern.permute.xlu0 0
          %1381 = vperm.xlu0 %1380, %v1151
          %v1382 = vpop.permute.xlu0 %1381
          %1385 = vset.pattern.permute.xlu0 0
          %1386 = vperm.xlu0 %1385, %v1152
          %v1387 = vpop.permute.xlu0 %1386
          %1390 = vset.pattern.permute.xlu0 0
          %1391 = vperm.xlu0 %1390, %v1153
          %v1392 = vpop.permute.xlu0 %1391
          %1395 = vset.pattern.permute.xlu0 0
          %1396 = vperm.xlu0 %1395, %v1154
          %v1397 = vpop.permute.xlu0 %1396
          %1400 = vset.pattern.permute.xlu0 0
          %1401 = vperm.xlu0 %1400, %v1155
          %v1402 = vpop.permute.xlu0 %1401
          %1405 = vset.pattern.permute.xlu0 0
          %1406 = vperm.xlu0 %1405, %v1156
          %v1407 = vpop.permute.xlu0 %1406
          %1410 = vset.pattern.permute.xlu0 0
          %1411 = vperm.xlu0 %1410, %v1157
          %v1412 = vpop.permute.xlu0 %1411
          %1415 = vset.pattern.permute.xlu0 0
          %1416 = vperm.xlu0 %1415, %v1158
          %v1417 = vpop.permute.xlu0 %1416
          %1420 = vset.pattern.permute.xlu0 0
          %1421 = vperm.xlu0 %1420, %v1159
          %v1422 = vpop.permute.xlu0 %1421
          %1425 = vset.pattern.permute.xlu0 0
          %1426 = vperm.xlu0 %1425, %v1160
          %v1427 = vpop.permute.xlu0 %1426
          %1430 = vset.pattern.permute.xlu0 0
          %1431 = vperm.xlu0 %1430, %v1161
          %v1432 = vpop.permute.xlu0 %1431
          %1435 = vset.pattern.permute.xlu0 0
          %1436 = vperm.xlu0 %1435, %v1162
          %v1437 = vpop.permute.xlu0 %1436
          %1440 = vset.pattern.permute.xlu0 0
          %1441 = vperm.xlu0 %1440, %v1163
          %v1442 = vpop.permute.xlu0 %1441
          %1445 = vset.pattern.permute.xlu0 0
          %1446 = vperm.xlu0 %1445, %v1164
          %v1447 = vpop.permute.xlu0 %1446
          %1450 = vset.pattern.permute.xlu0 0
          %1451 = vperm.xlu0 %1450, %v1165
          %v1452 = vpop.permute.xlu0 %1451
          %v1454 = vadd.f32 %v1246, %v1377
          %v1455 = vadd.f32 %v1247, %v1377
          %v1456 = vadd.f32 %v1248, %v1377
          %v1457 = vadd.f32 %v1249, %v1377
          %v1458 = vadd.f32 %v1250, %v1377
          %v1459 = vadd.f32 %v1251, %v1377
          %v1460 = vadd.f32 %v1252, %v1377
          %v1461 = vadd.f32 %v1253, %v1377
          %v1462 = vadd.f32 %v1254, %v1382
          %v1463 = vadd.f32 %v1255, %v1382
          %v1464 = vadd.f32 %v1256, %v1382
          %v1465 = vadd.f32 %v1257, %v1382
          %v1466 = vadd.f32 %v1258, %v1382
          %v1467 = vadd.f32 %v1259, %v1382
          %v1468 = vadd.f32 %v1260, %v1382
          %v1469 = vadd.f32 %v1261, %v1382
          %v1470 = vadd.f32 %v1262, %v1387
          %v1471 = vadd.f32 %v1263, %v1387
          %v1472 = vadd.f32 %v1264, %v1387
          %v1473 = vadd.f32 %v1265, %v1387
          %v1474 = vadd.f32 %v1266, %v1387
          %v1475 = vadd.f32 %v1267, %v1387
          %v1476 = vadd.f32 %v1268, %v1387
          %v1477 = vadd.f32 %v1269, %v1387
          %v1478 = vadd.f32 %v1270, %v1392
          %v1479 = vadd.f32 %v1271, %v1392
          %v1480 = vadd.f32 %v1272, %v1392
          %v1481 = vadd.f32 %v1273, %v1392
          %v1482 = vadd.f32 %v1274, %v1392
          %v1483 = vadd.f32 %v1275, %v1392
          %v1484 = vadd.f32 %v1276, %v1392
          %v1485 = vadd.f32 %v1277, %v1392
          %v1486 = vadd.f32 %v1278, %v1397
          %v1487 = vadd.f32 %v1279, %v1397
          %v1488 = vadd.f32 %v1280, %v1397
          %v1489 = vadd.f32 %v1281, %v1397
          %v1490 = vadd.f32 %v1282, %v1397
          %v1491 = vadd.f32 %v1283, %v1397
          %v1492 = vadd.f32 %v1284, %v1397
          %v1493 = vadd.f32 %v1285, %v1397
          %v1494 = vadd.f32 %v1286, %v1402
          %v1495 = vadd.f32 %v1287, %v1402
          %v1496 = vadd.f32 %v1288, %v1402
          %v1497 = vadd.f32 %v1289, %v1402
          %v1498 = vadd.f32 %v1290, %v1402
          %v1499 = vadd.f32 %v1291, %v1402
          %v1500 = vadd.f32 %v1292, %v1402
          %v1501 = vadd.f32 %v1293, %v1402
          %v1502 = vadd.f32 %v1294, %v1407
          %v1503 = vadd.f32 %v1295, %v1407
          %v1504 = vadd.f32 %v1296, %v1407
          %v1505 = vadd.f32 %v1297, %v1407
          %v1506 = vadd.f32 %v1298, %v1407
          %v1507 = vadd.f32 %v1299, %v1407
          %v1508 = vadd.f32 %v1300, %v1407
          %v1509 = vadd.f32 %v1301, %v1407
          %v1510 = vadd.f32 %v1302, %v1412
          %v1511 = vadd.f32 %v1303, %v1412
          %v1512 = vadd.f32 %v1304, %v1412
          %v1513 = vadd.f32 %v1305, %v1412
          %v1514 = vadd.f32 %v1306, %v1412
          %v1515 = vadd.f32 %v1307, %v1412
          %v1516 = vadd.f32 %v1308, %v1412
          %v1517 = vadd.f32 %v1309, %v1412
          %v1518 = vadd.f32 %v1310, %v1417
          %v1519 = vadd.f32 %v1311, %v1417
          %v1520 = vadd.f32 %v1312, %v1417
          %v1521 = vadd.f32 %v1313, %v1417
          %v1522 = vadd.f32 %v1314, %v1417
          %v1523 = vadd.f32 %v1315, %v1417
          %v1524 = vadd.f32 %v1316, %v1417
          %v1525 = vadd.f32 %v1317, %v1417
          %v1526 = vadd.f32 %v1318, %v1422
          %v1527 = vadd.f32 %v1319, %v1422
          %v1528 = vadd.f32 %v1320, %v1422
          %v1529 = vadd.f32 %v1321, %v1422
          %v1530 = vadd.f32 %v1322, %v1422
          %v1531 = vadd.f32 %v1323, %v1422
          %v1532 = vadd.f32 %v1324, %v1422
          %v1533 = vadd.f32 %v1325, %v1422
          %v1534 = vadd.f32 %v1326, %v1427
          %v1535 = vadd.f32 %v1327, %v1427
          %v1536 = vadd.f32 %v1328, %v1427
          %v1537 = vadd.f32 %v1329, %v1427
          %v1538 = vadd.f32 %v1330, %v1427
          %v1539 = vadd.f32 %v1331, %v1427
          %v1540 = vadd.f32 %v1332, %v1427
          %v1541 = vadd.f32 %v1333, %v1427
          %v1542 = vadd.f32 %v1334, %v1432
          %v1543 = vadd.f32 %v1335, %v1432
          %v1544 = vadd.f32 %v1336, %v1432
          %v1545 = vadd.f32 %v1337, %v1432
          %v1546 = vadd.f32 %v1338, %v1432
          %v1547 = vadd.f32 %v1339, %v1432
          %v1548 = vadd.f32 %v1340, %v1432
          %v1549 = vadd.f32 %v1341, %v1432
          %v1550 = vadd.f32 %v1342, %v1437
          %v1551 = vadd.f32 %v1343, %v1437
          %v1552 = vadd.f32 %v1344, %v1437
          %v1553 = vadd.f32 %v1345, %v1437
          %v1554 = vadd.f32 %v1346, %v1437
          %v1555 = vadd.f32 %v1347, %v1437
          %v1556 = vadd.f32 %v1348, %v1437
          %v1557 = vadd.f32 %v1349, %v1437
          %v1558 = vadd.f32 %v1350, %v1442
          %v1559 = vadd.f32 %v1351, %v1442
          %v1560 = vadd.f32 %v1352, %v1442
          %v1561 = vadd.f32 %v1353, %v1442
          %v1562 = vadd.f32 %v1354, %v1442
          %v1563 = vadd.f32 %v1355, %v1442
          %v1564 = vadd.f32 %v1356, %v1442
          %v1565 = vadd.f32 %v1357, %v1442
          %v1566 = vadd.f32 %v1358, %v1447
          %v1567 = vadd.f32 %v1359, %v1447
          %v1568 = vadd.f32 %v1360, %v1447
          %v1569 = vadd.f32 %v1361, %v1447
          %v1570 = vadd.f32 %v1362, %v1447
          %v1571 = vadd.f32 %v1363, %v1447
          %v1572 = vadd.f32 %v1364, %v1447
          %v1573 = vadd.f32 %v1365, %v1447
          %v1574 = vadd.f32 %v1366, %v1452
          %v1575 = vadd.f32 %v1367, %v1452
          %v1576 = vadd.f32 %v1368, %v1452
          %v1577 = vadd.f32 %v1369, %v1452
          %v1578 = vadd.f32 %v1370, %v1452
          %v1579 = vadd.f32 %v1371, %v1452
          %v1580 = vadd.f32 %v1372, %v1452
          %v1581 = vadd.f32 %v1373, %v1452
          %v1582 = vmax.f32 %v1454, 0.0
          %v1583 = vmax.f32 %v1455, 0.0
          %v1584 = vmax.f32 %v1456, 0.0
          %v1585 = vmax.f32 %v1457, 0.0
          %v1586 = vmax.f32 %v1458, 0.0
          %v1587 = vmax.f32 %v1459, 0.0
          %v1588 = vmax.f32 %v1460, 0.0
          %v1589 = vmax.f32 %v1461, 0.0
          %v1590 = vmax.f32 %v1462, 0.0
          %v1591 = vmax.f32 %v1463, 0.0
          %v1592 = vmax.f32 %v1464, 0.0
          %v1593 = vmax.f32 %v1465, 0.0
          %v1594 = vmax.f32 %v1466, 0.0
          %v1595 = vmax.f32 %v1467, 0.0
          %v1596 = vmax.f32 %v1468, 0.0
          %v1597 = vmax.f32 %v1469, 0.0
          %v1598 = vmax.f32 %v1470, 0.0
          %v1599 = vmax.f32 %v1471, 0.0
          %v1600 = vmax.f32 %v1472, 0.0
          %v1601 = vmax.f32 %v1473, 0.0
          %v1602 = vmax.f32 %v1474, 0.0
          %v1603 = vmax.f32 %v1475, 0.0
          %v1604 = vmax.f32 %v1476, 0.0
          %v1605 = vmax.f32 %v1477, 0.0
          %v1606 = vmax.f32 %v1478, 0.0
          %v1607 = vmax.f32 %v1479, 0.0
          %v1608 = vmax.f32 %v1480, 0.0
          %v1609 = vmax.f32 %v1481, 0.0
          %v1610 = vmax.f32 %v1482, 0.0
          %v1611 = vmax.f32 %v1483, 0.0
          %v1612 = vmax.f32 %v1484, 0.0
          %v1613 = vmax.f32 %v1485, 0.0
          %v1614 = vmax.f32 %v1486, 0.0
          %v1615 = vmax.f32 %v1487, 0.0
          %v1616 = vmax.f32 %v1488, 0.0
          %v1617 = vmax.f32 %v1489, 0.0
          %v1618 = vmax.f32 %v1490, 0.0
          %v1619 = vmax.f32 %v1491, 0.0
          %v1620 = vmax.f32 %v1492, 0.0
          %v1621 = vmax.f32 %v1493, 0.0
          %v1622 = vmax.f32 %v1494, 0.0
          %v1623 = vmax.f32 %v1495, 0.0
          %v1624 = vmax.f32 %v1496, 0.0
          %v1625 = vmax.f32 %v1497, 0.0
          %v1626 = vmax.f32 %v1498, 0.0
          %v1627 = vmax.f32 %v1499, 0.0
          %v1628 = vmax.f32 %v1500, 0.0
          %v1629 = vmax.f32 %v1501, 0.0
          %v1630 = vmax.f32 %v1502, 0.0
          %v1631 = vmax.f32 %v1503, 0.0
          %v1632 = vmax.f32 %v1504, 0.0
          %v1633 = vmax.f32 %v1505, 0.0
          %v1634 = vmax.f32 %v1506, 0.0
          %v1635 = vmax.f32 %v1507, 0.0
          %v1636 = vmax.f32 %v1508, 0.0
          %v1637 = vmax.f32 %v1509, 0.0
          %v1638 = vmax.f32 %v1510, 0.0
          %v1639 = vmax.f32 %v1511, 0.0
          %v1640 = vmax.f32 %v1512, 0.0
          %v1641 = vmax.f32 %v1513, 0.0
          %v1642 = vmax.f32 %v1514, 0.0
          %v1643 = vmax.f32 %v1515, 0.0
          %v1644 = vmax.f32 %v1516, 0.0
          %v1645 = vmax.f32 %v1517, 0.0
          %v1646 = vmax.f32 %v1518, 0.0
          %v1647 = vmax.f32 %v1519, 0.0
          %v1648 = vmax.f32 %v1520, 0.0
          %v1649 = vmax.f32 %v1521, 0.0
          %v1650 = vmax.f32 %v1522, 0.0
          %v1651 = vmax.f32 %v1523, 0.0
          %v1652 = vmax.f32 %v1524, 0.0
          %v1653 = vmax.f32 %v1525, 0.0
          %v1654 = vmax.f32 %v1526, 0.0
          %v1655 = vmax.f32 %v1527, 0.0
          %v1656 = vmax.f32 %v1528, 0.0
          %v1657 = vmax.f32 %v1529, 0.0
          %v1658 = vmax.f32 %v1530, 0.0
          %v1659 = vmax.f32 %v1531, 0.0
          %v1660 = vmax.f32 %v1532, 0.0
          %v1661 = vmax.f32 %v1533, 0.0
          %v1662 = vmax.f32 %v1534, 0.0
          %v1663 = vmax.f32 %v1535, 0.0
          %v1664 = vmax.f32 %v1536, 0.0
          %v1665 = vmax.f32 %v1537, 0.0
          %v1666 = vmax.f32 %v1538, 0.0
          %v1667 = vmax.f32 %v1539, 0.0
          %v1668 = vmax.f32 %v1540, 0.0
          %v1669 = vmax.f32 %v1541, 0.0
          %v1670 = vmax.f32 %v1542, 0.0
          %v1671 = vmax.f32 %v1543, 0.0
          %v1672 = vmax.f32 %v1544, 0.0
          %v1673 = vmax.f32 %v1545, 0.0
          %v1674 = vmax.f32 %v1546, 0.0
          %v1675 = vmax.f32 %v1547, 0.0
          %v1676 = vmax.f32 %v1548, 0.0
          %v1677 = vmax.f32 %v1549, 0.0
          %v1678 = vmax.f32 %v1550, 0.0
          %v1679 = vmax.f32 %v1551, 0.0
          %v1680 = vmax.f32 %v1552, 0.0
          %v1681 = vmax.f32 %v1553, 0.0
          %v1682 = vmax.f32 %v1554, 0.0
          %v1683 = vmax.f32 %v1555, 0.0
          %v1684 = vmax.f32 %v1556, 0.0
          %v1685 = vmax.f32 %v1557, 0.0
          %v1686 = vmax.f32 %v1558, 0.0
          %v1687 = vmax.f32 %v1559, 0.0
          %v1688 = vmax.f32 %v1560, 0.0
          %v1689 = vmax.f32 %v1561, 0.0
          %v1690 = vmax.f32 %v1562, 0.0
          %v1691 = vmax.f32 %v1563, 0.0
          %v1692 = vmax.f32 %v1564, 0.0
          %v1693 = vmax.f32 %v1565, 0.0
          %v1694 = vmax.f32 %v1566, 0.0
          %v1695 = vmax.f32 %v1567, 0.0
          %v1696 = vmax.f32 %v1568, 0.0
          %v1697 = vmax.f32 %v1569, 0.0
          %v1698 = vmax.f32 %v1570, 0.0
          %v1699 = vmax.f32 %v1571, 0.0
          %v1700 = vmax.f32 %v1572, 0.0
          %v1701 = vmax.f32 %v1573, 0.0
          %v1702 = vmax.f32 %v1574, 0.0
          %v1703 = vmax.f32 %v1575, 0.0
          %v1704 = vmax.f32 %v1576, 0.0
          %v1705 = vmax.f32 %v1577, 0.0
          %v1706 = vmax.f32 %v1578, 0.0
          %v1707 = vmax.f32 %v1579, 0.0
          %v1708 = vmax.f32 %v1580, 0.0
          %v1709 = vmax.f32 %v1581, 0.0
          %v1710 = vpack.c.bf16 %v1590, %v1582
          %v1711 = vpack.c.bf16 %v1591, %v1583
          %v1712 = vpack.c.bf16 %v1592, %v1584
          %v1713 = vpack.c.bf16 %v1593, %v1585
          %v1714 = vpack.c.bf16 %v1594, %v1586
          %v1715 = vpack.c.bf16 %v1595, %v1587
          %v1716 = vpack.c.bf16 %v1596, %v1588
          %v1717 = vpack.c.bf16 %v1597, %v1589
          %v1718 = vpack.c.bf16 %v1606, %v1598
          %v1719 = vpack.c.bf16 %v1607, %v1599
          %v1720 = vpack.c.bf16 %v1608, %v1600
          %v1721 = vpack.c.bf16 %v1609, %v1601
          %v1722 = vpack.c.bf16 %v1610, %v1602
          %v1723 = vpack.c.bf16 %v1611, %v1603
          %v1724 = vpack.c.bf16 %v1612, %v1604
          %v1725 = vpack.c.bf16 %v1613, %v1605
          %v1726 = vpack.c.bf16 %v1622, %v1614
          %v1727 = vpack.c.bf16 %v1623, %v1615
          %v1728 = vpack.c.bf16 %v1624, %v1616
          %v1729 = vpack.c.bf16 %v1625, %v1617
          %v1730 = vpack.c.bf16 %v1626, %v1618
          %v1731 = vpack.c.bf16 %v1627, %v1619
          %v1732 = vpack.c.bf16 %v1628, %v1620
          %v1733 = vpack.c.bf16 %v1629, %v1621
          %v1734 = vpack.c.bf16 %v1638, %v1630
          %v1735 = vpack.c.bf16 %v1639, %v1631
          %v1736 = vpack.c.bf16 %v1640, %v1632
          %v1737 = vpack.c.bf16 %v1641, %v1633
          %v1738 = vpack.c.bf16 %v1642, %v1634
          %v1739 = vpack.c.bf16 %v1643, %v1635
          %v1740 = vpack.c.bf16 %v1644, %v1636
          %v1741 = vpack.c.bf16 %v1645, %v1637
          %v1742 = vpack.c.bf16 %v1654, %v1646
          %v1743 = vpack.c.bf16 %v1655, %v1647
          %v1744 = vpack.c.bf16 %v1656, %v1648
          %v1745 = vpack.c.bf16 %v1657, %v1649
          %v1746 = vpack.c.bf16 %v1658, %v1650
          %v1747 = vpack.c.bf16 %v1659, %v1651
          %v1748 = vpack.c.bf16 %v1660, %v1652
          %v1749 = vpack.c.bf16 %v1661, %v1653
          %v1750 = vpack.c.bf16 %v1670, %v1662
          %v1751 = vpack.c.bf16 %v1671, %v1663
          %v1752 = vpack.c.bf16 %v1672, %v1664
          %v1753 = vpack.c.bf16 %v1673, %v1665
          %v1754 = vpack.c.bf16 %v1674, %v1666
          %v1755 = vpack.c.bf16 %v1675, %v1667
          %v1756 = vpack.c.bf16 %v1676, %v1668
          %v1757 = vpack.c.bf16 %v1677, %v1669
          %v1758 = vpack.c.bf16 %v1686, %v1678
          %v1759 = vpack.c.bf16 %v1687, %v1679
          %v1760 = vpack.c.bf16 %v1688, %v1680
          %v1761 = vpack.c.bf16 %v1689, %v1681
          %v1762 = vpack.c.bf16 %v1690, %v1682
          %v1763 = vpack.c.bf16 %v1691, %v1683
          %v1764 = vpack.c.bf16 %v1692, %v1684
          %v1765 = vpack.c.bf16 %v1693, %v1685
          %v1766 = vpack.c.bf16 %v1702, %v1694
          %v1767 = vpack.c.bf16 %v1703, %v1695
          %v1768 = vpack.c.bf16 %v1704, %v1696
          %v1769 = vpack.c.bf16 %v1705, %v1697
          %v1770 = vpack.c.bf16 %v1706, %v1698
          %v1771 = vpack.c.bf16 %v1707, %v1699
          %v1772 = vpack.c.bf16 %v1708, %v1700
          %v1773 = vpack.c.bf16 %v1709, %v1701
          %1774 = vst [vmem:[#allocation2] sm:$0xff] %v1710
          %1775 = vst [vmem:[#allocation2 + $0x8] sm:$0xff] %v1711
          %1776 = vst [vmem:[#allocation2 + $0x10] sm:$0xff] %v1712
          %1777 = vst [vmem:[#allocation2 + $0x18] sm:$0xff] %v1713
          %1778 = vst [vmem:[#allocation2 + $0x20] sm:$0xff] %v1714
          %1779 = vst [vmem:[#allocation2 + $0x28] sm:$0xff] %v1715
          %1780 = vst [vmem:[#allocation2 + $0x30] sm:$0xff] %v1716
          %1781 = vst [vmem:[#allocation2 + $0x38] sm:$0xff] %v1717
          %1782 = vst [vmem:[#allocation2 + $0x40] sm:$0xff] %v1718
          %1783 = vst [vmem:[#allocation2 + $0x48] sm:$0xff] %v1719
          %1784 = vst [vmem:[#allocation2 + $0x50] sm:$0xff] %v1720
          %1785 = vst [vmem:[#allocation2 + $0x58] sm:$0xff] %v1721
          %1786 = vst [vmem:[#allocation2 + $0x60] sm:$0xff] %v1722
          %1787 = vst [vmem:[#allocation2 + $0x68] sm:$0xff] %v1723
          %1788 = vst [vmem:[#allocation2 + $0x70] sm:$0xff] %v1724
          %1789 = vst [vmem:[#allocation2 + $0x78] sm:$0xff] %v1725
          %1790 = vst [vmem:[#allocation2 + $0x80] sm:$0xff] %v1726
          %1791 = vst [vmem:[#allocation2 + $0x88] sm:$0xff] %v1727
          %1792 = vst [vmem:[#allocation2 + $0x90] sm:$0xff] %v1728
          %1793 = vst [vmem:[#allocation2 + $0x98] sm:$0xff] %v1729
          %1794 = vst [vmem:[#allocation2 + $0xa0] sm:$0xff] %v1730
          %1795 = vst [vmem:[#allocation2 + $0xa8] sm:$0xff] %v1731
          %1796 = vst [vmem:[#allocation2 + $0xb0] sm:$0xff] %v1732
          %1797 = vst [vmem:[#allocation2 + $0xb8] sm:$0xff] %v1733
          %1798 = vst [vmem:[#allocation2 + $0xc0] sm:$0xff] %v1734
          %1799 = vst [vmem:[#allocation2 + $0xc8] sm:$0xff] %v1735
          %1800 = vst [vmem:[#allocation2 + $0xd0] sm:$0xff] %v1736
          %1801 = vst [vmem:[#allocation2 + $0xd8] sm:$0xff] %v1737
          %1802 = vst [vmem:[#allocation2 + $0xe0] sm:$0xff] %v1738
          %1803 = vst [vmem:[#allocation2 + $0xe8] sm:$0xff] %v1739
          %1804 = vst [vmem:[#allocation2 + $0xf0] sm:$0xff] %v1740
          %1805 = vst [vmem:[#allocation2 + $0xf8] sm:$0xff] %v1741
          %1806 = vst [vmem:[#allocation2 + $0x100] sm:$0xff] %v1742
          %1807 = vst [vmem:[#allocation2 + $0x108] sm:$0xff] %v1743
          %1808 = vst [vmem:[#allocation2 + $0x110] sm:$0xff] %v1744
          %1809 = vst [vmem:[#allocation2 + $0x118] sm:$0xff] %v1745
          %1810 = vst [vmem:[#allocation2 + $0x120] sm:$0xff] %v1746
          %1811 = vst [vmem:[#allocation2 + $0x128] sm:$0xff] %v1747
          %1812 = vst [vmem:[#allocation2 + $0x130] sm:$0xff] %v1748
          %1813 = vst [vmem:[#allocation2 + $0x138] sm:$0xff] %v1749
          %1814 = vst [vmem:[#allocation2 + $0x140] sm:$0xff] %v1750
          %1815 = vst [vmem:[#allocation2 + $0x148] sm:$0xff] %v1751
          %1816 = vst [vmem:[#allocation2 + $0x150] sm:$0xff] %v1752
          %1817 = vst [vmem:[#allocation2 + $0x158] sm:$0xff] %v1753
          %1818 = vst [vmem:[#allocation2 + $0x160] sm:$0xff] %v1754
          %1819 = vst [vmem:[#allocation2 + $0x168] sm:$0xff] %v1755
          %1820 = vst [vmem:[#allocation2 + $0x170] sm:$0xff] %v1756
          %1821 = vst [vmem:[#allocation2 + $0x178] sm:$0xff] %v1757
          %1822 = vst [vmem:[#allocation2 + $0x180] sm:$0xff] %v1758
          %1823 = vst [vmem:[#allocation2 + $0x188] sm:$0xff] %v1759
          %1824 = vst [vmem:[#allocation2 + $0x190] sm:$0xff] %v1760
          %1825 = vst [vmem:[#allocation2 + $0x198] sm:$0xff] %v1761
          %1826 = vst [vmem:[#allocation2 + $0x1a0] sm:$0xff] %v1762
          %1827 = vst [vmem:[#allocation2 + $0x1a8] sm:$0xff] %v1763
          %1828 = vst [vmem:[#allocation2 + $0x1b0] sm:$0xff] %v1764
          %1829 = vst [vmem:[#allocation2 + $0x1b8] sm:$0xff] %v1765
          %1830 = vst [vmem:[#allocation2 + $0x1c0] sm:$0xff] %v1766
          %1831 = vst [vmem:[#allocation2 + $0x1c8] sm:$0xff] %v1767
          %1832 = vst [vmem:[#allocation2 + $0x1d0] sm:$0xff] %v1768
          %1833 = vst [vmem:[#allocation2 + $0x1d8] sm:$0xff] %v1769
          %1834 = vst [vmem:[#allocation2 + $0x1e0] sm:$0xff] %v1770
          %1835 = vst [vmem:[#allocation2 + $0x1e8] sm:$0xff] %v1771
          %1836 = vst [vmem:[#allocation2 + $0x1f0] sm:$0xff] %v1772
          %1837 = vst [vmem:[#allocation2 + $0x1f8] sm:$0xff] %v1773
        $region60: #{toc_forward.1} parent=51 // pred_fallthru
          _
        %v1838 = vld [vmem:[#allocation2] sm:$0xff]
        %v1839 = vld [vmem:[#allocation2 + $0x8] sm:$0xff]
        %v1840 = vld [vmem:[#allocation2 + $0x10] sm:$0xff]
        %v1841 = vld [vmem:[#allocation2 + $0x18] sm:$0xff]
        %v1842 = vld [vmem:[#allocation2 + $0x20] sm:$0xff]
        %v1843 = vld [vmem:[#allocation2 + $0x28] sm:$0xff]
        %v1844 = vld [vmem:[#allocation2 + $0x30] sm:$0xff]
        %v1845 = vld [vmem:[#allocation2 + $0x38] sm:$0xff]
        %v1846 = vld [vmem:[#allocation2 + $0x40] sm:$0xff]
        %v1847 = vld [vmem:[#allocation2 + $0x48] sm:$0xff]
        %v1848 = vld [vmem:[#allocation2 + $0x50] sm:$0xff]
        %v1849 = vld [vmem:[#allocation2 + $0x58] sm:$0xff]
        %v1850 = vld [vmem:[#allocation2 + $0x60] sm:$0xff]
        %v1851 = vld [vmem:[#allocation2 + $0x68] sm:$0xff]
        %v1852 = vld [vmem:[#allocation2 + $0x70] sm:$0xff]
        %v1853 = vld [vmem:[#allocation2 + $0x78] sm:$0xff]
        %v1854 = vld [vmem:[#allocation2 + $0x80] sm:$0xff]
        %v1855 = vld [vmem:[#allocation2 + $0x88] sm:$0xff]
        %v1856 = vld [vmem:[#allocation2 + $0x90] sm:$0xff]
        %v1857 = vld [vmem:[#allocation2 + $0x98] sm:$0xff]
        %v1858 = vld [vmem:[#allocation2 + $0xa0] sm:$0xff]
        %v1859 = vld [vmem:[#allocation2 + $0xa8] sm:$0xff]
        %v1860 = vld [vmem:[#allocation2 + $0xb0] sm:$0xff]
        %v1861 = vld [vmem:[#allocation2 + $0xb8] sm:$0xff]
        %v1862 = vld [vmem:[#allocation2 + $0xc0] sm:$0xff]
        %v1863 = vld [vmem:[#allocation2 + $0xc8] sm:$0xff]
        %v1864 = vld [vmem:[#allocation2 + $0xd0] sm:$0xff]
        %v1865 = vld [vmem:[#allocation2 + $0xd8] sm:$0xff]
        %v1866 = vld [vmem:[#allocation2 + $0xe0] sm:$0xff]
        %v1867 = vld [vmem:[#allocation2 + $0xe8] sm:$0xff]
        %v1868 = vld [vmem:[#allocation2 + $0xf0] sm:$0xff]
        %v1869 = vld [vmem:[#allocation2 + $0xf8] sm:$0xff]
        %v1870 = vld [vmem:[#allocation2 + $0x100] sm:$0xff]
        %v1871 = vld [vmem:[#allocation2 + $0x108] sm:$0xff]
        %v1872 = vld [vmem:[#allocation2 + $0x110] sm:$0xff]
        %v1873 = vld [vmem:[#allocation2 + $0x118] sm:$0xff]
        %v1874 = vld [vmem:[#allocation2 + $0x120] sm:$0xff]
        %v1875 = vld [vmem:[#allocation2 + $0x128] sm:$0xff]
        %v1876 = vld [vmem:[#allocation2 + $0x130] sm:$0xff]
        %v1877 = vld [vmem:[#allocation2 + $0x138] sm:$0xff]
        %v1878 = vld [vmem:[#allocation2 + $0x140] sm:$0xff]
        %v1879 = vld [vmem:[#allocation2 + $0x148] sm:$0xff]
        %v1880 = vld [vmem:[#allocation2 + $0x150] sm:$0xff]
        %v1881 = vld [vmem:[#allocation2 + $0x158] sm:$0xff]
        %v1882 = vld [vmem:[#allocation2 + $0x160] sm:$0xff]
        %v1883 = vld [vmem:[#allocation2 + $0x168] sm:$0xff]
        %v1884 = vld [vmem:[#allocation2 + $0x170] sm:$0xff]
        %v1885 = vld [vmem:[#allocation2 + $0x178] sm:$0xff]
        %v1886 = vld [vmem:[#allocation2 + $0x180] sm:$0xff]
        %v1887 = vld [vmem:[#allocation2 + $0x188] sm:$0xff]
        %v1888 = vld [vmem:[#allocation2 + $0x190] sm:$0xff]
        %v1889 = vld [vmem:[#allocation2 + $0x198] sm:$0xff]
        %v1890 = vld [vmem:[#allocation2 + $0x1a0] sm:$0xff]
        %v1891 = vld [vmem:[#allocation2 + $0x1a8] sm:$0xff]
        %v1892 = vld [vmem:[#allocation2 + $0x1b0] sm:$0xff]
        %v1893 = vld [vmem:[#allocation2 + $0x1b8] sm:$0xff]
        %v1894 = vld [vmem:[#allocation2 + $0x1c0] sm:$0xff]
        %v1895 = vld [vmem:[#allocation2 + $0x1c8] sm:$0xff]
        %v1896 = vld [vmem:[#allocation2 + $0x1d0] sm:$0xff]
        %v1897 = vld [vmem:[#allocation2 + $0x1d8] sm:$0xff]
        %v1898 = vld [vmem:[#allocation2 + $0x1e0] sm:$0xff]
        %v1899 = vld [vmem:[#allocation2 + $0x1e8] sm:$0xff]
        %v1900 = vld [vmem:[#allocation2 + $0x1f0] sm:$0xff]
        %v1901 = vld [vmem:[#allocation2 + $0x1f8] sm:$0xff]
        %v1902 = vld [vmem:[%s312] sm:$0xff]
        %v1903 = vld [vmem:[%s312 + $0x8] sm:$0xff]
        %v1904 = vld [vmem:[%s312 + $0x10] sm:$0xff]
        %v1905 = vld [vmem:[%s312 + $0x18] sm:$0xff]
        %v1906 = vld [vmem:[%s312 + $0x20] sm:$0xff]
        %v1907 = vld [vmem:[%s312 + $0x28] sm:$0xff]
        %v1908 = vld [vmem:[%s312 + $0x30] sm:$0xff]
        %v1909 = vld [vmem:[%s312 + $0x38] sm:$0xff]
        %v1910 = vld [vmem:[%s312 + $0x40] sm:$0xff]
        %v1911 = vld [vmem:[%s312 + $0x48] sm:$0xff]
        %v1912 = vld [vmem:[%s312 + $0x50] sm:$0xff]
        %v1913 = vld [vmem:[%s312 + $0x58] sm:$0xff]
        %v1914 = vld [vmem:[%s312 + $0x60] sm:$0xff]
        %v1915 = vld [vmem:[%s312 + $0x68] sm:$0xff]
        %v1916 = vld [vmem:[%s312 + $0x70] sm:$0xff]
        %v1917 = vld [vmem:[%s312 + $0x78] sm:$0xff]
        %v1918 = vld [vmem:[%s312 + $0x80] sm:$0xff]
        %v1919 = vld [vmem:[%s312 + $0x88] sm:$0xff]
        %v1920 = vld [vmem:[%s312 + $0x90] sm:$0xff]
        %v1921 = vld [vmem:[%s312 + $0x98] sm:$0xff]
        %v1922 = vld [vmem:[%s312 + $0xa0] sm:$0xff]
        %v1923 = vld [vmem:[%s312 + $0xa8] sm:$0xff]
        %v1924 = vld [vmem:[%s312 + $0xb0] sm:$0xff]
        %v1925 = vld [vmem:[%s312 + $0xb8] sm:$0xff]
        %v1926 = vld [vmem:[%s312 + $0xc0] sm:$0xff]
        %v1927 = vld [vmem:[%s312 + $0xc8] sm:$0xff]
        %v1928 = vld [vmem:[%s312 + $0xd0] sm:$0xff]
        %v1929 = vld [vmem:[%s312 + $0xd8] sm:$0xff]
        %v1930 = vld [vmem:[%s312 + $0xe0] sm:$0xff]
        %v1931 = vld [vmem:[%s312 + $0xe8] sm:$0xff]
        %v1932 = vld [vmem:[%s312 + $0xf0] sm:$0xff]
        %v1933 = vld [vmem:[%s312 + $0xf8] sm:$0xff]
        %v1934 = vld [vmem:[%s312 + $0x100] sm:$0xff]
        %v1935 = vld [vmem:[%s312 + $0x108] sm:$0xff]
        %v1936 = vld [vmem:[%s312 + $0x110] sm:$0xff]
        %v1937 = vld [vmem:[%s312 + $0x118] sm:$0xff]
        %v1938 = vld [vmem:[%s312 + $0x120] sm:$0xff]
        %v1939 = vld [vmem:[%s312 + $0x128] sm:$0xff]
        %v1940 = vld [vmem:[%s312 + $0x130] sm:$0xff]
        %v1941 = vld [vmem:[%s312 + $0x138] sm:$0xff]
        %v1942 = vld [vmem:[%s312 + $0x140] sm:$0xff]
        %v1943 = vld [vmem:[%s312 + $0x148] sm:$0xff]
        %v1944 = vld [vmem:[%s312 + $0x150] sm:$0xff]
        %v1945 = vld [vmem:[%s312 + $0x158] sm:$0xff]
        %v1946 = vld [vmem:[%s312 + $0x160] sm:$0xff]
        %v1947 = vld [vmem:[%s312 + $0x168] sm:$0xff]
        %v1948 = vld [vmem:[%s312 + $0x170] sm:$0xff]
        %v1949 = vld [vmem:[%s312 + $0x178] sm:$0xff]
        %v1950 = vld [vmem:[%s312 + $0x180] sm:$0xff]
        %v1951 = vld [vmem:[%s312 + $0x188] sm:$0xff]
        %v1952 = vld [vmem:[%s312 + $0x190] sm:$0xff]
        %v1953 = vld [vmem:[%s312 + $0x198] sm:$0xff]
        %v1954 = vld [vmem:[%s312 + $0x1a0] sm:$0xff]
        %v1955 = vld [vmem:[%s312 + $0x1a8] sm:$0xff]
        %v1956 = vld [vmem:[%s312 + $0x1b0] sm:$0xff]
        %v1957 = vld [vmem:[%s312 + $0x1b8] sm:$0xff]
        %v1958 = vld [vmem:[%s312 + $0x1c0] sm:$0xff]
        %v1959 = vld [vmem:[%s312 + $0x1c8] sm:$0xff]
        %v1960 = vld [vmem:[%s312 + $0x1d0] sm:$0xff]
        %v1961 = vld [vmem:[%s312 + $0x1d8] sm:$0xff]
        %v1962 = vld [vmem:[%s312 + $0x1e0] sm:$0xff]
        %v1963 = vld [vmem:[%s312 + $0x1e8] sm:$0xff]
        %v1964 = vld [vmem:[%s312 + $0x1f0] sm:$0xff]
        %v1965 = vld [vmem:[%s312 + $0x1f8] sm:$0xff]
        %v1966 = vld [vmem:[%s312 + $0x200] sm:$0xff]
        %v1967 = vld [vmem:[%s312 + $0x208] sm:$0xff]
        %v1968 = vld [vmem:[%s312 + $0x210] sm:$0xff]
        %v1969 = vld [vmem:[%s312 + $0x218] sm:$0xff]
        %v1970 = vld [vmem:[%s312 + $0x220] sm:$0xff]
        %v1971 = vld [vmem:[%s312 + $0x228] sm:$0xff]
        %v1972 = vld [vmem:[%s312 + $0x230] sm:$0xff]
        %v1973 = vld [vmem:[%s312 + $0x238] sm:$0xff]
        %v1974 = vld [vmem:[%s312 + $0x240] sm:$0xff]
        %v1975 = vld [vmem:[%s312 + $0x248] sm:$0xff]
        %v1976 = vld [vmem:[%s312 + $0x250] sm:$0xff]
        %v1977 = vld [vmem:[%s312 + $0x258] sm:$0xff]
        %v1978 = vld [vmem:[%s312 + $0x260] sm:$0xff]
        %v1979 = vld [vmem:[%s312 + $0x268] sm:$0xff]
        %v1980 = vld [vmem:[%s312 + $0x270] sm:$0xff]
        %v1981 = vld [vmem:[%s312 + $0x278] sm:$0xff]
        %v1982 = vld [vmem:[%s312 + $0x280] sm:$0xff]
        %v1983 = vld [vmem:[%s312 + $0x288] sm:$0xff]
        %v1984 = vld [vmem:[%s312 + $0x290] sm:$0xff]
        %v1985 = vld [vmem:[%s312 + $0x298] sm:$0xff]
        %v1986 = vld [vmem:[%s312 + $0x2a0] sm:$0xff]
        %v1987 = vld [vmem:[%s312 + $0x2a8] sm:$0xff]
        %v1988 = vld [vmem:[%s312 + $0x2b0] sm:$0xff]
        %v1989 = vld [vmem:[%s312 + $0x2b8] sm:$0xff]
        %v1990 = vld [vmem:[%s312 + $0x2c0] sm:$0xff]
        %v1991 = vld [vmem:[%s312 + $0x2c8] sm:$0xff]
        %v1992 = vld [vmem:[%s312 + $0x2d0] sm:$0xff]
        %v1993 = vld [vmem:[%s312 + $0x2d8] sm:$0xff]
        %v1994 = vld [vmem:[%s312 + $0x2e0] sm:$0xff]
        %v1995 = vld [vmem:[%s312 + $0x2e8] sm:$0xff]
        %v1996 = vld [vmem:[%s312 + $0x2f0] sm:$0xff]
        %v1997 = vld [vmem:[%s312 + $0x2f8] sm:$0xff]
        %v1998 = vld [vmem:[%s312 + $0x300] sm:$0xff]
        %v1999 = vld [vmem:[%s312 + $0x308] sm:$0xff]
        %v2000 = vld [vmem:[%s312 + $0x310] sm:$0xff]
        %v2001 = vld [vmem:[%s312 + $0x318] sm:$0xff]
        %v2002 = vld [vmem:[%s312 + $0x320] sm:$0xff]
        %v2003 = vld [vmem:[%s312 + $0x328] sm:$0xff]
        %v2004 = vld [vmem:[%s312 + $0x330] sm:$0xff]
        %v2005 = vld [vmem:[%s312 + $0x338] sm:$0xff]
        %v2006 = vld [vmem:[%s312 + $0x340] sm:$0xff]
        %v2007 = vld [vmem:[%s312 + $0x348] sm:$0xff]
        %v2008 = vld [vmem:[%s312 + $0x350] sm:$0xff]
        %v2009 = vld [vmem:[%s312 + $0x358] sm:$0xff]
        %v2010 = vld [vmem:[%s312 + $0x360] sm:$0xff]
        %v2011 = vld [vmem:[%s312 + $0x368] sm:$0xff]
        %v2012 = vld [vmem:[%s312 + $0x370] sm:$0xff]
        %v2013 = vld [vmem:[%s312 + $0x378] sm:$0xff]
        %v2014 = vld [vmem:[%s312 + $0x380] sm:$0xff]
        %v2015 = vld [vmem:[%s312 + $0x388] sm:$0xff]
        %v2016 = vld [vmem:[%s312 + $0x390] sm:$0xff]
        %v2017 = vld [vmem:[%s312 + $0x398] sm:$0xff]
        %v2018 = vld [vmem:[%s312 + $0x3a0] sm:$0xff]
        %v2019 = vld [vmem:[%s312 + $0x3a8] sm:$0xff]
        %v2020 = vld [vmem:[%s312 + $0x3b0] sm:$0xff]
        %v2021 = vld [vmem:[%s312 + $0x3b8] sm:$0xff]
        %v2022 = vld [vmem:[%s312 + $0x3c0] sm:$0xff]
        %v2023 = vld [vmem:[%s312 + $0x3c8] sm:$0xff]
        %v2024 = vld [vmem:[%s312 + $0x3d0] sm:$0xff]
        %v2025 = vld [vmem:[%s312 + $0x3d8] sm:$0xff]
        %v2026 = vld [vmem:[%s312 + $0x3e0] sm:$0xff]
        %v2027 = vld [vmem:[%s312 + $0x3e8] sm:$0xff]
        %v2028 = vld [vmem:[%s312 + $0x3f0] sm:$0xff]
        %v2029 = vld [vmem:[%s312 + $0x3f8] sm:$0xff]
        %v2030 = vld [vmem:[%s312 + $0x400] sm:$0xff]
        %v2031 = vld [vmem:[%s312 + $0x408] sm:$0xff]
        %v2032 = vld [vmem:[%s312 + $0x410] sm:$0xff]
        %v2033 = vld [vmem:[%s312 + $0x418] sm:$0xff]
        %v2034 = vld [vmem:[%s312 + $0x420] sm:$0xff]
        %v2035 = vld [vmem:[%s312 + $0x428] sm:$0xff]
        %v2036 = vld [vmem:[%s312 + $0x430] sm:$0xff]
        %v2037 = vld [vmem:[%s312 + $0x438] sm:$0xff]
        %v2038 = vld [vmem:[%s312 + $0x440] sm:$0xff]
        %v2039 = vld [vmem:[%s312 + $0x448] sm:$0xff]
        %v2040 = vld [vmem:[%s312 + $0x450] sm:$0xff]
        %v2041 = vld [vmem:[%s312 + $0x458] sm:$0xff]
        %v2042 = vld [vmem:[%s312 + $0x460] sm:$0xff]
        %v2043 = vld [vmem:[%s312 + $0x468] sm:$0xff]
        %v2044 = vld [vmem:[%s312 + $0x470] sm:$0xff]
        %v2045 = vld [vmem:[%s312 + $0x478] sm:$0xff]
        %v2046 = vld [vmem:[%s312 + $0x480] sm:$0xff]
        %v2047 = vld [vmem:[%s312 + $0x488] sm:$0xff]
        %v2048 = vld [vmem:[%s312 + $0x490] sm:$0xff]
        %v2049 = vld [vmem:[%s312 + $0x498] sm:$0xff]
        %v2050 = vld [vmem:[%s312 + $0x4a0] sm:$0xff]
        %v2051 = vld [vmem:[%s312 + $0x4a8] sm:$0xff]
        %v2052 = vld [vmem:[%s312 + $0x4b0] sm:$0xff]
        %v2053 = vld [vmem:[%s312 + $0x4b8] sm:$0xff]
        %v2054 = vld [vmem:[%s312 + $0x4c0] sm:$0xff]
        %v2055 = vld [vmem:[%s312 + $0x4c8] sm:$0xff]
        %v2056 = vld [vmem:[%s312 + $0x4d0] sm:$0xff]
        %v2057 = vld [vmem:[%s312 + $0x4d8] sm:$0xff]
        %v2058 = vld [vmem:[%s312 + $0x4e0] sm:$0xff]
        %v2059 = vld [vmem:[%s312 + $0x4e8] sm:$0xff]
        %v2060 = vld [vmem:[%s312 + $0x4f0] sm:$0xff]
        %v2061 = vld [vmem:[%s312 + $0x4f8] sm:$0xff]
        %v2062 = vld [vmem:[%s312 + $0x500] sm:$0xff]
        %v2063 = vld [vmem:[%s312 + $0x508] sm:$0xff]
        %v2064 = vld [vmem:[%s312 + $0x510] sm:$0xff]
        %v2065 = vld [vmem:[%s312 + $0x518] sm:$0xff]
        %v2066 = vld [vmem:[%s312 + $0x520] sm:$0xff]
        %v2067 = vld [vmem:[%s312 + $0x528] sm:$0xff]
        %v2068 = vld [vmem:[%s312 + $0x530] sm:$0xff]
        %v2069 = vld [vmem:[%s312 + $0x538] sm:$0xff]
        %v2070 = vld [vmem:[%s312 + $0x540] sm:$0xff]
        %v2071 = vld [vmem:[%s312 + $0x548] sm:$0xff]
        %v2072 = vld [vmem:[%s312 + $0x550] sm:$0xff]
        %v2073 = vld [vmem:[%s312 + $0x558] sm:$0xff]
        %v2074 = vld [vmem:[%s312 + $0x560] sm:$0xff]
        %v2075 = vld [vmem:[%s312 + $0x568] sm:$0xff]
        %v2076 = vld [vmem:[%s312 + $0x570] sm:$0xff]
        %v2077 = vld [vmem:[%s312 + $0x578] sm:$0xff]
        %v2078 = vld [vmem:[%s312 + $0x580] sm:$0xff]
        %v2079 = vld [vmem:[%s312 + $0x588] sm:$0xff]
        %v2080 = vld [vmem:[%s312 + $0x590] sm:$0xff]
        %v2081 = vld [vmem:[%s312 + $0x598] sm:$0xff]
        %v2082 = vld [vmem:[%s312 + $0x5a0] sm:$0xff]
        %v2083 = vld [vmem:[%s312 + $0x5a8] sm:$0xff]
        %v2084 = vld [vmem:[%s312 + $0x5b0] sm:$0xff]
        %v2085 = vld [vmem:[%s312 + $0x5b8] sm:$0xff]
        %v2086 = vld [vmem:[%s312 + $0x5c0] sm:$0xff]
        %v2087 = vld [vmem:[%s312 + $0x5c8] sm:$0xff]
        %v2088 = vld [vmem:[%s312 + $0x5d0] sm:$0xff]
        %v2089 = vld [vmem:[%s312 + $0x5d8] sm:$0xff]
        %v2090 = vld [vmem:[%s312 + $0x5e0] sm:$0xff]
        %v2091 = vld [vmem:[%s312 + $0x5e8] sm:$0xff]
        %v2092 = vld [vmem:[%s312 + $0x5f0] sm:$0xff]
        %v2093 = vld [vmem:[%s312 + $0x5f8] sm:$0xff]
        %v2094 = vld [vmem:[%s312 + $0x600] sm:$0xff]
        %v2095 = vld [vmem:[%s312 + $0x608] sm:$0xff]
        %v2096 = vld [vmem:[%s312 + $0x610] sm:$0xff]
        %v2097 = vld [vmem:[%s312 + $0x618] sm:$0xff]
        %v2098 = vld [vmem:[%s312 + $0x620] sm:$0xff]
        %v2099 = vld [vmem:[%s312 + $0x628] sm:$0xff]
        %v2100 = vld [vmem:[%s312 + $0x630] sm:$0xff]
        %v2101 = vld [vmem:[%s312 + $0x638] sm:$0xff]
        %v2102 = vld [vmem:[%s312 + $0x640] sm:$0xff]
        %v2103 = vld [vmem:[%s312 + $0x648] sm:$0xff]
        %v2104 = vld [vmem:[%s312 + $0x650] sm:$0xff]
        %v2105 = vld [vmem:[%s312 + $0x658] sm:$0xff]
        %v2106 = vld [vmem:[%s312 + $0x660] sm:$0xff]
        %v2107 = vld [vmem:[%s312 + $0x668] sm:$0xff]
        %v2108 = vld [vmem:[%s312 + $0x670] sm:$0xff]
        %v2109 = vld [vmem:[%s312 + $0x678] sm:$0xff]
        %v2110 = vld [vmem:[%s312 + $0x680] sm:$0xff]
        %v2111 = vld [vmem:[%s312 + $0x688] sm:$0xff]
        %v2112 = vld [vmem:[%s312 + $0x690] sm:$0xff]
        %v2113 = vld [vmem:[%s312 + $0x698] sm:$0xff]
        %v2114 = vld [vmem:[%s312 + $0x6a0] sm:$0xff]
        %v2115 = vld [vmem:[%s312 + $0x6a8] sm:$0xff]
        %v2116 = vld [vmem:[%s312 + $0x6b0] sm:$0xff]
        %v2117 = vld [vmem:[%s312 + $0x6b8] sm:$0xff]
        %v2118 = vld [vmem:[%s312 + $0x6c0] sm:$0xff]
        %v2119 = vld [vmem:[%s312 + $0x6c8] sm:$0xff]
        %v2120 = vld [vmem:[%s312 + $0x6d0] sm:$0xff]
        %v2121 = vld [vmem:[%s312 + $0x6d8] sm:$0xff]
        %v2122 = vld [vmem:[%s312 + $0x6e0] sm:$0xff]
        %v2123 = vld [vmem:[%s312 + $0x6e8] sm:$0xff]
        %v2124 = vld [vmem:[%s312 + $0x6f0] sm:$0xff]
        %v2125 = vld [vmem:[%s312 + $0x6f8] sm:$0xff]
        %v2126 = vld [vmem:[%s312 + $0x700] sm:$0xff]
        %v2127 = vld [vmem:[%s312 + $0x708] sm:$0xff]
        %v2128 = vld [vmem:[%s312 + $0x710] sm:$0xff]
        %v2129 = vld [vmem:[%s312 + $0x718] sm:$0xff]
        %v2130 = vld [vmem:[%s312 + $0x720] sm:$0xff]
        %v2131 = vld [vmem:[%s312 + $0x728] sm:$0xff]
        %v2132 = vld [vmem:[%s312 + $0x730] sm:$0xff]
        %v2133 = vld [vmem:[%s312 + $0x738] sm:$0xff]
        %v2134 = vld [vmem:[%s312 + $0x740] sm:$0xff]
        %v2135 = vld [vmem:[%s312 + $0x748] sm:$0xff]
        %v2136 = vld [vmem:[%s312 + $0x750] sm:$0xff]
        %v2137 = vld [vmem:[%s312 + $0x758] sm:$0xff]
        %v2138 = vld [vmem:[%s312 + $0x760] sm:$0xff]
        %v2139 = vld [vmem:[%s312 + $0x768] sm:$0xff]
        %v2140 = vld [vmem:[%s312 + $0x770] sm:$0xff]
        %v2141 = vld [vmem:[%s312 + $0x778] sm:$0xff]
        %v2142 = vld [vmem:[%s312 + $0x780] sm:$0xff]
        %v2143 = vld [vmem:[%s312 + $0x788] sm:$0xff]
        %v2144 = vld [vmem:[%s312 + $0x790] sm:$0xff]
        %v2145 = vld [vmem:[%s312 + $0x798] sm:$0xff]
        %v2146 = vld [vmem:[%s312 + $0x7a0] sm:$0xff]
        %v2147 = vld [vmem:[%s312 + $0x7a8] sm:$0xff]
        %v2148 = vld [vmem:[%s312 + $0x7b0] sm:$0xff]
        %v2149 = vld [vmem:[%s312 + $0x7b8] sm:$0xff]
        %v2150 = vld [vmem:[%s312 + $0x7c0] sm:$0xff]
        %v2151 = vld [vmem:[%s312 + $0x7c8] sm:$0xff]
        %v2152 = vld [vmem:[%s312 + $0x7d0] sm:$0xff]
        %v2153 = vld [vmem:[%s312 + $0x7d8] sm:$0xff]
        %v2154 = vld [vmem:[%s312 + $0x7e0] sm:$0xff]
        %v2155 = vld [vmem:[%s312 + $0x7e8] sm:$0xff]
        %v2156 = vld [vmem:[%s312 + $0x7f0] sm:$0xff]
        %v2157 = vld [vmem:[%s312 + $0x7f8] sm:$0xff]
        %v2158 = vld [vmem:[%s312 + $0x800] sm:$0xff]
        %v2159 = vld [vmem:[%s312 + $0x808] sm:$0xff]
        %v2160 = vld [vmem:[%s312 + $0x810] sm:$0xff]
        %v2161 = vld [vmem:[%s312 + $0x818] sm:$0xff]
        %v2162 = vld [vmem:[%s312 + $0x820] sm:$0xff]
        %v2163 = vld [vmem:[%s312 + $0x828] sm:$0xff]
        %v2164 = vld [vmem:[%s312 + $0x830] sm:$0xff]
        %v2165 = vld [vmem:[%s312 + $0x838] sm:$0xff]
        %v2166 = vld [vmem:[%s312 + $0x840] sm:$0xff]
        %v2167 = vld [vmem:[%s312 + $0x848] sm:$0xff]
        %v2168 = vld [vmem:[%s312 + $0x850] sm:$0xff]
        %v2169 = vld [vmem:[%s312 + $0x858] sm:$0xff]
        %v2170 = vld [vmem:[%s312 + $0x860] sm:$0xff]
        %v2171 = vld [vmem:[%s312 + $0x868] sm:$0xff]
        %v2172 = vld [vmem:[%s312 + $0x870] sm:$0xff]
        %v2173 = vld [vmem:[%s312 + $0x878] sm:$0xff]
        %v2174 = vld [vmem:[%s312 + $0x880] sm:$0xff]
        %v2175 = vld [vmem:[%s312 + $0x888] sm:$0xff]
        %v2176 = vld [vmem:[%s312 + $0x890] sm:$0xff]
        %v2177 = vld [vmem:[%s312 + $0x898] sm:$0xff]
        %v2178 = vld [vmem:[%s312 + $0x8a0] sm:$0xff]
        %v2179 = vld [vmem:[%s312 + $0x8a8] sm:$0xff]
        %v2180 = vld [vmem:[%s312 + $0x8b0] sm:$0xff]
        %v2181 = vld [vmem:[%s312 + $0x8b8] sm:$0xff]
        %v2182 = vld [vmem:[%s312 + $0x8c0] sm:$0xff]
        %v2183 = vld [vmem:[%s312 + $0x8c8] sm:$0xff]
        %v2184 = vld [vmem:[%s312 + $0x8d0] sm:$0xff]
        %v2185 = vld [vmem:[%s312 + $0x8d8] sm:$0xff]
        %v2186 = vld [vmem:[%s312 + $0x8e0] sm:$0xff]
        %v2187 = vld [vmem:[%s312 + $0x8e8] sm:$0xff]
        %v2188 = vld [vmem:[%s312 + $0x8f0] sm:$0xff]
        %v2189 = vld [vmem:[%s312 + $0x8f8] sm:$0xff]
        %v2190 = vld [vmem:[%s312 + $0x900] sm:$0xff]
        %v2191 = vld [vmem:[%s312 + $0x908] sm:$0xff]
        %v2192 = vld [vmem:[%s312 + $0x910] sm:$0xff]
        %v2193 = vld [vmem:[%s312 + $0x918] sm:$0xff]
        %v2194 = vld [vmem:[%s312 + $0x920] sm:$0xff]
        %v2195 = vld [vmem:[%s312 + $0x928] sm:$0xff]
        %v2196 = vld [vmem:[%s312 + $0x930] sm:$0xff]
        %v2197 = vld [vmem:[%s312 + $0x938] sm:$0xff]
        %v2198 = vld [vmem:[%s312 + $0x940] sm:$0xff]
        %v2199 = vld [vmem:[%s312 + $0x948] sm:$0xff]
        %v2200 = vld [vmem:[%s312 + $0x950] sm:$0xff]
        %v2201 = vld [vmem:[%s312 + $0x958] sm:$0xff]
        %v2202 = vld [vmem:[%s312 + $0x960] sm:$0xff]
        %v2203 = vld [vmem:[%s312 + $0x968] sm:$0xff]
        %v2204 = vld [vmem:[%s312 + $0x970] sm:$0xff]
        %v2205 = vld [vmem:[%s312 + $0x978] sm:$0xff]
        %v2206 = vld [vmem:[%s312 + $0x980] sm:$0xff]
        %v2207 = vld [vmem:[%s312 + $0x988] sm:$0xff]
        %v2208 = vld [vmem:[%s312 + $0x990] sm:$0xff]
        %v2209 = vld [vmem:[%s312 + $0x998] sm:$0xff]
        %v2210 = vld [vmem:[%s312 + $0x9a0] sm:$0xff]
        %v2211 = vld [vmem:[%s312 + $0x9a8] sm:$0xff]
        %v2212 = vld [vmem:[%s312 + $0x9b0] sm:$0xff]
        %v2213 = vld [vmem:[%s312 + $0x9b8] sm:$0xff]
        %v2214 = vld [vmem:[%s312 + $0x9c0] sm:$0xff]
        %v2215 = vld [vmem:[%s312 + $0x9c8] sm:$0xff]
        %v2216 = vld [vmem:[%s312 + $0x9d0] sm:$0xff]
        %v2217 = vld [vmem:[%s312 + $0x9d8] sm:$0xff]
        %v2218 = vld [vmem:[%s312 + $0x9e0] sm:$0xff]
        %v2219 = vld [vmem:[%s312 + $0x9e8] sm:$0xff]
        %v2220 = vld [vmem:[%s312 + $0x9f0] sm:$0xff]
        %v2221 = vld [vmem:[%s312 + $0x9f8] sm:$0xff]
        %v2222 = vld [vmem:[%s312 + $0xa00] sm:$0xff]
        %v2223 = vld [vmem:[%s312 + $0xa08] sm:$0xff]
        %v2224 = vld [vmem:[%s312 + $0xa10] sm:$0xff]
        %v2225 = vld [vmem:[%s312 + $0xa18] sm:$0xff]
        %v2226 = vld [vmem:[%s312 + $0xa20] sm:$0xff]
        %v2227 = vld [vmem:[%s312 + $0xa28] sm:$0xff]
        %v2228 = vld [vmem:[%s312 + $0xa30] sm:$0xff]
        %v2229 = vld [vmem:[%s312 + $0xa38] sm:$0xff]
        %v2230 = vld [vmem:[%s312 + $0xa40] sm:$0xff]
        %v2231 = vld [vmem:[%s312 + $0xa48] sm:$0xff]
        %v2232 = vld [vmem:[%s312 + $0xa50] sm:$0xff]
        %v2233 = vld [vmem:[%s312 + $0xa58] sm:$0xff]
        %v2234 = vld [vmem:[%s312 + $0xa60] sm:$0xff]
        %v2235 = vld [vmem:[%s312 + $0xa68] sm:$0xff]
        %v2236 = vld [vmem:[%s312 + $0xa70] sm:$0xff]
        %v2237 = vld [vmem:[%s312 + $0xa78] sm:$0xff]
        %v2238 = vld [vmem:[%s312 + $0xa80] sm:$0xff]
        %v2239 = vld [vmem:[%s312 + $0xa88] sm:$0xff]
        %v2240 = vld [vmem:[%s312 + $0xa90] sm:$0xff]
        %v2241 = vld [vmem:[%s312 + $0xa98] sm:$0xff]
        %v2242 = vld [vmem:[%s312 + $0xaa0] sm:$0xff]
        %v2243 = vld [vmem:[%s312 + $0xaa8] sm:$0xff]
        %v2244 = vld [vmem:[%s312 + $0xab0] sm:$0xff]
        %v2245 = vld [vmem:[%s312 + $0xab8] sm:$0xff]
        %v2246 = vld [vmem:[%s312 + $0xac0] sm:$0xff]
        %v2247 = vld [vmem:[%s312 + $0xac8] sm:$0xff]
        %v2248 = vld [vmem:[%s312 + $0xad0] sm:$0xff]
        %v2249 = vld [vmem:[%s312 + $0xad8] sm:$0xff]
        %v2250 = vld [vmem:[%s312 + $0xae0] sm:$0xff]
        %v2251 = vld [vmem:[%s312 + $0xae8] sm:$0xff]
        %v2252 = vld [vmem:[%s312 + $0xaf0] sm:$0xff]
        %v2253 = vld [vmem:[%s312 + $0xaf8] sm:$0xff]
        %v2254 = vld [vmem:[%s312 + $0xb00] sm:$0xff]
        %v2255 = vld [vmem:[%s312 + $0xb08] sm:$0xff]
        %v2256 = vld [vmem:[%s312 + $0xb10] sm:$0xff]
        %v2257 = vld [vmem:[%s312 + $0xb18] sm:$0xff]
        %v2258 = vld [vmem:[%s312 + $0xb20] sm:$0xff]
        %v2259 = vld [vmem:[%s312 + $0xb28] sm:$0xff]
        %v2260 = vld [vmem:[%s312 + $0xb30] sm:$0xff]
        %v2261 = vld [vmem:[%s312 + $0xb38] sm:$0xff]
        %v2262 = vld [vmem:[%s312 + $0xb40] sm:$0xff]
        %v2263 = vld [vmem:[%s312 + $0xb48] sm:$0xff]
        %v2264 = vld [vmem:[%s312 + $0xb50] sm:$0xff]
        %v2265 = vld [vmem:[%s312 + $0xb58] sm:$0xff]
        %v2266 = vld [vmem:[%s312 + $0xb60] sm:$0xff]
        %v2267 = vld [vmem:[%s312 + $0xb68] sm:$0xff]
        %v2268 = vld [vmem:[%s312 + $0xb70] sm:$0xff]
        %v2269 = vld [vmem:[%s312 + $0xb78] sm:$0xff]
        %v2270 = vld [vmem:[%s312 + $0xb80] sm:$0xff]
        %v2271 = vld [vmem:[%s312 + $0xb88] sm:$0xff]
        %v2272 = vld [vmem:[%s312 + $0xb90] sm:$0xff]
        %v2273 = vld [vmem:[%s312 + $0xb98] sm:$0xff]
        %v2274 = vld [vmem:[%s312 + $0xba0] sm:$0xff]
        %v2275 = vld [vmem:[%s312 + $0xba8] sm:$0xff]
        %v2276 = vld [vmem:[%s312 + $0xbb0] sm:$0xff]
        %v2277 = vld [vmem:[%s312 + $0xbb8] sm:$0xff]
        %v2278 = vld [vmem:[%s312 + $0xbc0] sm:$0xff]
        %v2279 = vld [vmem:[%s312 + $0xbc8] sm:$0xff]
        %v2280 = vld [vmem:[%s312 + $0xbd0] sm:$0xff]
        %v2281 = vld [vmem:[%s312 + $0xbd8] sm:$0xff]
        %v2282 = vld [vmem:[%s312 + $0xbe0] sm:$0xff]
        %v2283 = vld [vmem:[%s312 + $0xbe8] sm:$0xff]
        %v2284 = vld [vmem:[%s312 + $0xbf0] sm:$0xff]
        %v2285 = vld [vmem:[%s312 + $0xbf8] sm:$0xff]
        %v2286 = vld [vmem:[%s312 + $0xc00] sm:$0xff]
        %v2287 = vld [vmem:[%s312 + $0xc08] sm:$0xff]
        %v2288 = vld [vmem:[%s312 + $0xc10] sm:$0xff]
        %v2289 = vld [vmem:[%s312 + $0xc18] sm:$0xff]
        %v2290 = vld [vmem:[%s312 + $0xc20] sm:$0xff]
        %v2291 = vld [vmem:[%s312 + $0xc28] sm:$0xff]
        %v2292 = vld [vmem:[%s312 + $0xc30] sm:$0xff]
        %v2293 = vld [vmem:[%s312 + $0xc38] sm:$0xff]
        %v2294 = vld [vmem:[%s312 + $0xc40] sm:$0xff]
        %v2295 = vld [vmem:[%s312 + $0xc48] sm:$0xff]
        %v2296 = vld [vmem:[%s312 + $0xc50] sm:$0xff]
        %v2297 = vld [vmem:[%s312 + $0xc58] sm:$0xff]
        %v2298 = vld [vmem:[%s312 + $0xc60] sm:$0xff]
        %v2299 = vld [vmem:[%s312 + $0xc68] sm:$0xff]
        %v2300 = vld [vmem:[%s312 + $0xc70] sm:$0xff]
        %v2301 = vld [vmem:[%s312 + $0xc78] sm:$0xff]
        %v2302 = vld [vmem:[%s312 + $0xc80] sm:$0xff]
        %v2303 = vld [vmem:[%s312 + $0xc88] sm:$0xff]
        %v2304 = vld [vmem:[%s312 + $0xc90] sm:$0xff]
        %v2305 = vld [vmem:[%s312 + $0xc98] sm:$0xff]
        %v2306 = vld [vmem:[%s312 + $0xca0] sm:$0xff]
        %v2307 = vld [vmem:[%s312 + $0xca8] sm:$0xff]
        %v2308 = vld [vmem:[%s312 + $0xcb0] sm:$0xff]
        %v2309 = vld [vmem:[%s312 + $0xcb8] sm:$0xff]
        %v2310 = vld [vmem:[%s312 + $0xcc0] sm:$0xff]
        %v2311 = vld [vmem:[%s312 + $0xcc8] sm:$0xff]
        %v2312 = vld [vmem:[%s312 + $0xcd0] sm:$0xff]
        %v2313 = vld [vmem:[%s312 + $0xcd8] sm:$0xff]
        %v2314 = vld [vmem:[%s312 + $0xce0] sm:$0xff]
        %v2315 = vld [vmem:[%s312 + $0xce8] sm:$0xff]
        %v2316 = vld [vmem:[%s312 + $0xcf0] sm:$0xff]
        %v2317 = vld [vmem:[%s312 + $0xcf8] sm:$0xff]
        %v2318 = vld [vmem:[%s312 + $0xd00] sm:$0xff]
        %v2319 = vld [vmem:[%s312 + $0xd08] sm:$0xff]
        %v2320 = vld [vmem:[%s312 + $0xd10] sm:$0xff]
        %v2321 = vld [vmem:[%s312 + $0xd18] sm:$0xff]
        %v2322 = vld [vmem:[%s312 + $0xd20] sm:$0xff]
        %v2323 = vld [vmem:[%s312 + $0xd28] sm:$0xff]
        %v2324 = vld [vmem:[%s312 + $0xd30] sm:$0xff]
        %v2325 = vld [vmem:[%s312 + $0xd38] sm:$0xff]
        %v2326 = vld [vmem:[%s312 + $0xd40] sm:$0xff]
        %v2327 = vld [vmem:[%s312 + $0xd48] sm:$0xff]
        %v2328 = vld [vmem:[%s312 + $0xd50] sm:$0xff]
        %v2329 = vld [vmem:[%s312 + $0xd58] sm:$0xff]
        %v2330 = vld [vmem:[%s312 + $0xd60] sm:$0xff]
        %v2331 = vld [vmem:[%s312 + $0xd68] sm:$0xff]
        %v2332 = vld [vmem:[%s312 + $0xd70] sm:$0xff]
        %v2333 = vld [vmem:[%s312 + $0xd78] sm:$0xff]
        %v2334 = vld [vmem:[%s312 + $0xd80] sm:$0xff]
        %v2335 = vld [vmem:[%s312 + $0xd88] sm:$0xff]
        %v2336 = vld [vmem:[%s312 + $0xd90] sm:$0xff]
        %v2337 = vld [vmem:[%s312 + $0xd98] sm:$0xff]
        %v2338 = vld [vmem:[%s312 + $0xda0] sm:$0xff]
        %v2339 = vld [vmem:[%s312 + $0xda8] sm:$0xff]
        %v2340 = vld [vmem:[%s312 + $0xdb0] sm:$0xff]
        %v2341 = vld [vmem:[%s312 + $0xdb8] sm:$0xff]
        %v2342 = vld [vmem:[%s312 + $0xdc0] sm:$0xff]
        %v2343 = vld [vmem:[%s312 + $0xdc8] sm:$0xff]
        %v2344 = vld [vmem:[%s312 + $0xdd0] sm:$0xff]
        %v2345 = vld [vmem:[%s312 + $0xdd8] sm:$0xff]
        %v2346 = vld [vmem:[%s312 + $0xde0] sm:$0xff]
        %v2347 = vld [vmem:[%s312 + $0xde8] sm:$0xff]
        %v2348 = vld [vmem:[%s312 + $0xdf0] sm:$0xff]
        %v2349 = vld [vmem:[%s312 + $0xdf8] sm:$0xff]
        %v2350 = vld [vmem:[%s312 + $0xe00] sm:$0xff]
        %v2351 = vld [vmem:[%s312 + $0xe08] sm:$0xff]
        %v2352 = vld [vmem:[%s312 + $0xe10] sm:$0xff]
        %v2353 = vld [vmem:[%s312 + $0xe18] sm:$0xff]
        %v2354 = vld [vmem:[%s312 + $0xe20] sm:$0xff]
        %v2355 = vld [vmem:[%s312 + $0xe28] sm:$0xff]
        %v2356 = vld [vmem:[%s312 + $0xe30] sm:$0xff]
        %v2357 = vld [vmem:[%s312 + $0xe38] sm:$0xff]
        %v2358 = vld [vmem:[%s312 + $0xe40] sm:$0xff]
        %v2359 = vld [vmem:[%s312 + $0xe48] sm:$0xff]
        %v2360 = vld [vmem:[%s312 + $0xe50] sm:$0xff]
        %v2361 = vld [vmem:[%s312 + $0xe58] sm:$0xff]
        %v2362 = vld [vmem:[%s312 + $0xe60] sm:$0xff]
        %v2363 = vld [vmem:[%s312 + $0xe68] sm:$0xff]
        %v2364 = vld [vmem:[%s312 + $0xe70] sm:$0xff]
        %v2365 = vld [vmem:[%s312 + $0xe78] sm:$0xff]
        %v2366 = vld [vmem:[%s312 + $0xe80] sm:$0xff]
        %v2367 = vld [vmem:[%s312 + $0xe88] sm:$0xff]
        %v2368 = vld [vmem:[%s312 + $0xe90] sm:$0xff]
        %v2369 = vld [vmem:[%s312 + $0xe98] sm:$0xff]
        %v2370 = vld [vmem:[%s312 + $0xea0] sm:$0xff]
        %v2371 = vld [vmem:[%s312 + $0xea8] sm:$0xff]
        %v2372 = vld [vmem:[%s312 + $0xeb0] sm:$0xff]
        %v2373 = vld [vmem:[%s312 + $0xeb8] sm:$0xff]
        %v2374 = vld [vmem:[%s312 + $0xec0] sm:$0xff]
        %v2375 = vld [vmem:[%s312 + $0xec8] sm:$0xff]
        %v2376 = vld [vmem:[%s312 + $0xed0] sm:$0xff]
        %v2377 = vld [vmem:[%s312 + $0xed8] sm:$0xff]
        %v2378 = vld [vmem:[%s312 + $0xee0] sm:$0xff]
        %v2379 = vld [vmem:[%s312 + $0xee8] sm:$0xff]
        %v2380 = vld [vmem:[%s312 + $0xef0] sm:$0xff]
        %v2381 = vld [vmem:[%s312 + $0xef8] sm:$0xff]
        %v2382 = vld [vmem:[%s312 + $0xf00] sm:$0xff]
        %v2383 = vld [vmem:[%s312 + $0xf08] sm:$0xff]
        %v2384 = vld [vmem:[%s312 + $0xf10] sm:$0xff]
        %v2385 = vld [vmem:[%s312 + $0xf18] sm:$0xff]
        %v2386 = vld [vmem:[%s312 + $0xf20] sm:$0xff]
        %v2387 = vld [vmem:[%s312 + $0xf28] sm:$0xff]
        %v2388 = vld [vmem:[%s312 + $0xf30] sm:$0xff]
        %v2389 = vld [vmem:[%s312 + $0xf38] sm:$0xff]
        %v2390 = vld [vmem:[%s312 + $0xf40] sm:$0xff]
        %v2391 = vld [vmem:[%s312 + $0xf48] sm:$0xff]
        %v2392 = vld [vmem:[%s312 + $0xf50] sm:$0xff]
        %v2393 = vld [vmem:[%s312 + $0xf58] sm:$0xff]
        %v2394 = vld [vmem:[%s312 + $0xf60] sm:$0xff]
        %v2395 = vld [vmem:[%s312 + $0xf68] sm:$0xff]
        %v2396 = vld [vmem:[%s312 + $0xf70] sm:$0xff]
        %v2397 = vld [vmem:[%s312 + $0xf78] sm:$0xff]
        %v2398 = vld [vmem:[%s312 + $0xf80] sm:$0xff]
        %v2399 = vld [vmem:[%s312 + $0xf88] sm:$0xff]
        %v2400 = vld [vmem:[%s312 + $0xf90] sm:$0xff]
        %v2401 = vld [vmem:[%s312 + $0xf98] sm:$0xff]
        %v2402 = vld [vmem:[%s312 + $0xfa0] sm:$0xff]
        %v2403 = vld [vmem:[%s312 + $0xfa8] sm:$0xff]
        %v2404 = vld [vmem:[%s312 + $0xfb0] sm:$0xff]
        %v2405 = vld [vmem:[%s312 + $0xfb8] sm:$0xff]
        %v2406 = vld [vmem:[%s312 + $0xfc0] sm:$0xff]
        %v2407 = vld [vmem:[%s312 + $0xfc8] sm:$0xff]
        %v2408 = vld [vmem:[%s312 + $0xfd0] sm:$0xff]
        %v2409 = vld [vmem:[%s312 + $0xfd8] sm:$0xff]
        %v2410 = vld [vmem:[%s312 + $0xfe0] sm:$0xff]
        %v2411 = vld [vmem:[%s312 + $0xfe8] sm:$0xff]
        %v2412 = vld [vmem:[%s312 + $0xff0] sm:$0xff]
        %v2413 = vld [vmem:[%s312 + $0xff8] sm:$0xff]
        %v2926 = vunpack.c.l.b16 %v1902
        %v2927 = vunpack.c.h.b16 %v1902
        %v2928 = vunpack.c.l.b16 %v1903
        %v2929 = vunpack.c.h.b16 %v1903
        %v2930 = vunpack.c.l.b16 %v1904
        %v2931 = vunpack.c.h.b16 %v1904
        %v2932 = vunpack.c.l.b16 %v1905
        %v2933 = vunpack.c.h.b16 %v1905
        %v2934 = vunpack.c.l.b16 %v1906
        %v2935 = vunpack.c.h.b16 %v1906
        %v2936 = vunpack.c.l.b16 %v1907
        %v2937 = vunpack.c.h.b16 %v1907
        %v2938 = vunpack.c.l.b16 %v1908
        %v2939 = vunpack.c.h.b16 %v1908
        %v2940 = vunpack.c.l.b16 %v1909
        %v2941 = vunpack.c.h.b16 %v1909
        %v2942 = vunpack.c.l.b16 %v1910
        %v2943 = vunpack.c.h.b16 %v1910
        %v2944 = vunpack.c.l.b16 %v1911
        %v2945 = vunpack.c.h.b16 %v1911
        %v2946 = vunpack.c.l.b16 %v1912
        %v2947 = vunpack.c.h.b16 %v1912
        %v2948 = vunpack.c.l.b16 %v1913
        %v2949 = vunpack.c.h.b16 %v1913
        %v2950 = vunpack.c.l.b16 %v1914
        %v2951 = vunpack.c.h.b16 %v1914
        %v2952 = vunpack.c.l.b16 %v1915
        %v2953 = vunpack.c.h.b16 %v1915
        %v2954 = vunpack.c.l.b16 %v1916
        %v2955 = vunpack.c.h.b16 %v1916
        %v2956 = vunpack.c.l.b16 %v1917
        %v2957 = vunpack.c.h.b16 %v1917
        %v2958 = vunpack.c.l.b16 %v1918
        %v2959 = vunpack.c.h.b16 %v1918
        %v2960 = vunpack.c.l.b16 %v1919
        %v2961 = vunpack.c.h.b16 %v1919
        %v2962 = vunpack.c.l.b16 %v1920
        %v2963 = vunpack.c.h.b16 %v1920
        %v2964 = vunpack.c.l.b16 %v1921
        %v2965 = vunpack.c.h.b16 %v1921
        %v2966 = vunpack.c.l.b16 %v1922
        %v2967 = vunpack.c.h.b16 %v1922
        %v2968 = vunpack.c.l.b16 %v1923
        %v2969 = vunpack.c.h.b16 %v1923
        %v2970 = vunpack.c.l.b16 %v1924
        %v2971 = vunpack.c.h.b16 %v1924
        %v2972 = vunpack.c.l.b16 %v1925
        %v2973 = vunpack.c.h.b16 %v1925
        %v2974 = vunpack.c.l.b16 %v1926
        %v2975 = vunpack.c.h.b16 %v1926
        %v2976 = vunpack.c.l.b16 %v1927
        %v2977 = vunpack.c.h.b16 %v1927
        %v2978 = vunpack.c.l.b16 %v1928
        %v2979 = vunpack.c.h.b16 %v1928
        %v2980 = vunpack.c.l.b16 %v1929
        %v2981 = vunpack.c.h.b16 %v1929
        %v2982 = vunpack.c.l.b16 %v1930
        %v2983 = vunpack.c.h.b16 %v1930
        %v2984 = vunpack.c.l.b16 %v1931
        %v2985 = vunpack.c.h.b16 %v1931
        %v2986 = vunpack.c.l.b16 %v1932
        %v2987 = vunpack.c.h.b16 %v1932
        %v2988 = vunpack.c.l.b16 %v1933
        %v2989 = vunpack.c.h.b16 %v1933
        %v2990 = vunpack.c.l.b16 %v1934
        %v2991 = vunpack.c.h.b16 %v1934
        %v2992 = vunpack.c.l.b16 %v1935
        %v2993 = vunpack.c.h.b16 %v1935
        %v2994 = vunpack.c.l.b16 %v1936
        %v2995 = vunpack.c.h.b16 %v1936
        %v2996 = vunpack.c.l.b16 %v1937
        %v2997 = vunpack.c.h.b16 %v1937
        %v2998 = vunpack.c.l.b16 %v1938
        %v2999 = vunpack.c.h.b16 %v1938
        %v3000 = vunpack.c.l.b16 %v1939
        %v3001 = vunpack.c.h.b16 %v1939
        %v3002 = vunpack.c.l.b16 %v1940
        %v3003 = vunpack.c.h.b16 %v1940
        %v3004 = vunpack.c.l.b16 %v1941
        %v3005 = vunpack.c.h.b16 %v1941
        %v3006 = vunpack.c.l.b16 %v1942
        %v3007 = vunpack.c.h.b16 %v1942
        %v3008 = vunpack.c.l.b16 %v1943
        %v3009 = vunpack.c.h.b16 %v1943
        %v3010 = vunpack.c.l.b16 %v1944
        %v3011 = vunpack.c.h.b16 %v1944
        %v3012 = vunpack.c.l.b16 %v1945
        %v3013 = vunpack.c.h.b16 %v1945
        %v3014 = vunpack.c.l.b16 %v1946
        %v3015 = vunpack.c.h.b16 %v1946
        %v3016 = vunpack.c.l.b16 %v1947
        %v3017 = vunpack.c.h.b16 %v1947
        %v3018 = vunpack.c.l.b16 %v1948
        %v3019 = vunpack.c.h.b16 %v1948
        %v3020 = vunpack.c.l.b16 %v1949
        %v3021 = vunpack.c.h.b16 %v1949
        %v3022 = vunpack.c.l.b16 %v1950
        %v3023 = vunpack.c.h.b16 %v1950
        %v3024 = vunpack.c.l.b16 %v1951
        %v3025 = vunpack.c.h.b16 %v1951
        %v3026 = vunpack.c.l.b16 %v1952
        %v3027 = vunpack.c.h.b16 %v1952
        %v3028 = vunpack.c.l.b16 %v1953
        %v3029 = vunpack.c.h.b16 %v1953
        %v3030 = vunpack.c.l.b16 %v1954
        %v3031 = vunpack.c.h.b16 %v1954
        %v3032 = vunpack.c.l.b16 %v1955
        %v3033 = vunpack.c.h.b16 %v1955
        %v3034 = vunpack.c.l.b16 %v1956
        %v3035 = vunpack.c.h.b16 %v1956
        %v3036 = vunpack.c.l.b16 %v1957
        %v3037 = vunpack.c.h.b16 %v1957
        %v3038 = vunpack.c.l.b16 %v1958
        %v3039 = vunpack.c.h.b16 %v1958
        %v3040 = vunpack.c.l.b16 %v1959
        %v3041 = vunpack.c.h.b16 %v1959
        %v3042 = vunpack.c.l.b16 %v1960
        %v3043 = vunpack.c.h.b16 %v1960
        %v3044 = vunpack.c.l.b16 %v1961
        %v3045 = vunpack.c.h.b16 %v1961
        %v3046 = vunpack.c.l.b16 %v1962
        %v3047 = vunpack.c.h.b16 %v1962
        %v3048 = vunpack.c.l.b16 %v1963
        %v3049 = vunpack.c.h.b16 %v1963
        %v3050 = vunpack.c.l.b16 %v1964
        %v3051 = vunpack.c.h.b16 %v1964
        %v3052 = vunpack.c.l.b16 %v1965
        %v3053 = vunpack.c.h.b16 %v1965
        %v3054 = vunpack.c.l.b16 %v1966
        %v3055 = vunpack.c.h.b16 %v1966
        %v3056 = vunpack.c.l.b16 %v1967
        %v3057 = vunpack.c.h.b16 %v1967
        %v3058 = vunpack.c.l.b16 %v1968
        %v3059 = vunpack.c.h.b16 %v1968
        %v3060 = vunpack.c.l.b16 %v1969
        %v3061 = vunpack.c.h.b16 %v1969
        %v3062 = vunpack.c.l.b16 %v1970
        %v3063 = vunpack.c.h.b16 %v1970
        %v3064 = vunpack.c.l.b16 %v1971
        %v3065 = vunpack.c.h.b16 %v1971
        %v3066 = vunpack.c.l.b16 %v1972
        %v3067 = vunpack.c.h.b16 %v1972
        %v3068 = vunpack.c.l.b16 %v1973
        %v3069 = vunpack.c.h.b16 %v1973
        %v3070 = vunpack.c.l.b16 %v1974
        %v3071 = vunpack.c.h.b16 %v1974
        %v3072 = vunpack.c.l.b16 %v1975
        %v3073 = vunpack.c.h.b16 %v1975
        %v3074 = vunpack.c.l.b16 %v1976
        %v3075 = vunpack.c.h.b16 %v1976
        %v3076 = vunpack.c.l.b16 %v1977
        %v3077 = vunpack.c.h.b16 %v1977
        %v3078 = vunpack.c.l.b16 %v1978
        %v3079 = vunpack.c.h.b16 %v1978
        %v3080 = vunpack.c.l.b16 %v1979
        %v3081 = vunpack.c.h.b16 %v1979
        %v3082 = vunpack.c.l.b16 %v1980
        %v3083 = vunpack.c.h.b16 %v1980
        %v3084 = vunpack.c.l.b16 %v1981
        %v3085 = vunpack.c.h.b16 %v1981
        %v3086 = vunpack.c.l.b16 %v1982
        %v3087 = vunpack.c.h.b16 %v1982
        %v3088 = vunpack.c.l.b16 %v1983
        %v3089 = vunpack.c.h.b16 %v1983
        %v3090 = vunpack.c.l.b16 %v1984
        %v3091 = vunpack.c.h.b16 %v1984
        %v3092 = vunpack.c.l.b16 %v1985
        %v3093 = vunpack.c.h.b16 %v1985
        %v3094 = vunpack.c.l.b16 %v1986
        %v3095 = vunpack.c.h.b16 %v1986
        %v3096 = vunpack.c.l.b16 %v1987
        %v3097 = vunpack.c.h.b16 %v1987
        %v3098 = vunpack.c.l.b16 %v1988
        %v3099 = vunpack.c.h.b16 %v1988
        %v3100 = vunpack.c.l.b16 %v1989
        %v3101 = vunpack.c.h.b16 %v1989
        %v3102 = vunpack.c.l.b16 %v1990
        %v3103 = vunpack.c.h.b16 %v1990
        %v3104 = vunpack.c.l.b16 %v1991
        %v3105 = vunpack.c.h.b16 %v1991
        %v3106 = vunpack.c.l.b16 %v1992
        %v3107 = vunpack.c.h.b16 %v1992
        %v3108 = vunpack.c.l.b16 %v1993
        %v3109 = vunpack.c.h.b16 %v1993
        %v3110 = vunpack.c.l.b16 %v1994
        %v3111 = vunpack.c.h.b16 %v1994
        %v3112 = vunpack.c.l.b16 %v1995
        %v3113 = vunpack.c.h.b16 %v1995
        %v3114 = vunpack.c.l.b16 %v1996
        %v3115 = vunpack.c.h.b16 %v1996
        %v3116 = vunpack.c.l.b16 %v1997
        %v3117 = vunpack.c.h.b16 %v1997
        %v3118 = vunpack.c.l.b16 %v1998
        %v3119 = vunpack.c.h.b16 %v1998
        %v3120 = vunpack.c.l.b16 %v1999
        %v3121 = vunpack.c.h.b16 %v1999
        %v3122 = vunpack.c.l.b16 %v2000
        %v3123 = vunpack.c.h.b16 %v2000
        %v3124 = vunpack.c.l.b16 %v2001
        %v3125 = vunpack.c.h.b16 %v2001
        %v3126 = vunpack.c.l.b16 %v2002
        %v3127 = vunpack.c.h.b16 %v2002
        %v3128 = vunpack.c.l.b16 %v2003
        %v3129 = vunpack.c.h.b16 %v2003
        %v3130 = vunpack.c.l.b16 %v2004
        %v3131 = vunpack.c.h.b16 %v2004
        %v3132 = vunpack.c.l.b16 %v2005
        %v3133 = vunpack.c.h.b16 %v2005
        %v3134 = vunpack.c.l.b16 %v2006
        %v3135 = vunpack.c.h.b16 %v2006
        %v3136 = vunpack.c.l.b16 %v2007
        %v3137 = vunpack.c.h.b16 %v2007
        %v3138 = vunpack.c.l.b16 %v2008
        %v3139 = vunpack.c.h.b16 %v2008
        %v3140 = vunpack.c.l.b16 %v2009
        %v3141 = vunpack.c.h.b16 %v2009
        %v3142 = vunpack.c.l.b16 %v2010
        %v3143 = vunpack.c.h.b16 %v2010
        %v3144 = vunpack.c.l.b16 %v2011
        %v3145 = vunpack.c.h.b16 %v2011
        %v3146 = vunpack.c.l.b16 %v2012
        %v3147 = vunpack.c.h.b16 %v2012
        %v3148 = vunpack.c.l.b16 %v2013
        %v3149 = vunpack.c.h.b16 %v2013
        %v3150 = vunpack.c.l.b16 %v2014
        %v3151 = vunpack.c.h.b16 %v2014
        %v3152 = vunpack.c.l.b16 %v2015
        %v3153 = vunpack.c.h.b16 %v2015
        %v3154 = vunpack.c.l.b16 %v2016
        %v3155 = vunpack.c.h.b16 %v2016
        %v3156 = vunpack.c.l.b16 %v2017
        %v3157 = vunpack.c.h.b16 %v2017
        %v3158 = vunpack.c.l.b16 %v2018
        %v3159 = vunpack.c.h.b16 %v2018
        %v3160 = vunpack.c.l.b16 %v2019
        %v3161 = vunpack.c.h.b16 %v2019
        %v3162 = vunpack.c.l.b16 %v2020
        %v3163 = vunpack.c.h.b16 %v2020
        %v3164 = vunpack.c.l.b16 %v2021
        %v3165 = vunpack.c.h.b16 %v2021
        %v3166 = vunpack.c.l.b16 %v2022
        %v3167 = vunpack.c.h.b16 %v2022
        %v3168 = vunpack.c.l.b16 %v2023
        %v3169 = vunpack.c.h.b16 %v2023
        %v3170 = vunpack.c.l.b16 %v2024
        %v3171 = vunpack.c.h.b16 %v2024
        %v3172 = vunpack.c.l.b16 %v2025
        %v3173 = vunpack.c.h.b16 %v2025
        %v3174 = vunpack.c.l.b16 %v2026
        %v3175 = vunpack.c.h.b16 %v2026
        %v3176 = vunpack.c.l.b16 %v2027
        %v3177 = vunpack.c.h.b16 %v2027
        %v3178 = vunpack.c.l.b16 %v2028
        %v3179 = vunpack.c.h.b16 %v2028
        %v3180 = vunpack.c.l.b16 %v2029
        %v3181 = vunpack.c.h.b16 %v2029
        %v3182 = vunpack.c.l.b16 %v2030
        %v3183 = vunpack.c.h.b16 %v2030
        %v3184 = vunpack.c.l.b16 %v2031
        %v3185 = vunpack.c.h.b16 %v2031
        %v3186 = vunpack.c.l.b16 %v2032
        %v3187 = vunpack.c.h.b16 %v2032
        %v3188 = vunpack.c.l.b16 %v2033
        %v3189 = vunpack.c.h.b16 %v2033
        %v3190 = vunpack.c.l.b16 %v2034
        %v3191 = vunpack.c.h.b16 %v2034
        %v3192 = vunpack.c.l.b16 %v2035
        %v3193 = vunpack.c.h.b16 %v2035
        %v3194 = vunpack.c.l.b16 %v2036
        %v3195 = vunpack.c.h.b16 %v2036
        %v3196 = vunpack.c.l.b16 %v2037
        %v3197 = vunpack.c.h.b16 %v2037
        %v3198 = vunpack.c.l.b16 %v2038
        %v3199 = vunpack.c.h.b16 %v2038
        %v3200 = vunpack.c.l.b16 %v2039
        %v3201 = vunpack.c.h.b16 %v2039
        %v3202 = vunpack.c.l.b16 %v2040
        %v3203 = vunpack.c.h.b16 %v2040
        %v3204 = vunpack.c.l.b16 %v2041
        %v3205 = vunpack.c.h.b16 %v2041
        %v3206 = vunpack.c.l.b16 %v2042
        %v3207 = vunpack.c.h.b16 %v2042
        %v3208 = vunpack.c.l.b16 %v2043
        %v3209 = vunpack.c.h.b16 %v2043
        %v3210 = vunpack.c.l.b16 %v2044
        %v3211 = vunpack.c.h.b16 %v2044
        %v3212 = vunpack.c.l.b16 %v2045
        %v3213 = vunpack.c.h.b16 %v2045
        %v3214 = vunpack.c.l.b16 %v2046
        %v3215 = vunpack.c.h.b16 %v2046
        %v3216 = vunpack.c.l.b16 %v2047
        %v3217 = vunpack.c.h.b16 %v2047
        %v3218 = vunpack.c.l.b16 %v2048
        %v3219 = vunpack.c.h.b16 %v2048
        %v3220 = vunpack.c.l.b16 %v2049
        %v3221 = vunpack.c.h.b16 %v2049
        %v3222 = vunpack.c.l.b16 %v2050
        %v3223 = vunpack.c.h.b16 %v2050
        %v3224 = vunpack.c.l.b16 %v2051
        %v3225 = vunpack.c.h.b16 %v2051
        %v3226 = vunpack.c.l.b16 %v2052
        %v3227 = vunpack.c.h.b16 %v2052
        %v3228 = vunpack.c.l.b16 %v2053
        %v3229 = vunpack.c.h.b16 %v2053
        %v3230 = vunpack.c.l.b16 %v2054
        %v3231 = vunpack.c.h.b16 %v2054
        %v3232 = vunpack.c.l.b16 %v2055
        %v3233 = vunpack.c.h.b16 %v2055
        %v3234 = vunpack.c.l.b16 %v2056
        %v3235 = vunpack.c.h.b16 %v2056
        %v3236 = vunpack.c.l.b16 %v2057
        %v3237 = vunpack.c.h.b16 %v2057
        %v3238 = vunpack.c.l.b16 %v2058
        %v3239 = vunpack.c.h.b16 %v2058
        %v3240 = vunpack.c.l.b16 %v2059
        %v3241 = vunpack.c.h.b16 %v2059
        %v3242 = vunpack.c.l.b16 %v2060
        %v3243 = vunpack.c.h.b16 %v2060
        %v3244 = vunpack.c.l.b16 %v2061
        %v3245 = vunpack.c.h.b16 %v2061
        %v3246 = vunpack.c.l.b16 %v2062
        %v3247 = vunpack.c.h.b16 %v2062
        %v3248 = vunpack.c.l.b16 %v2063
        %v3249 = vunpack.c.h.b16 %v2063
        %v3250 = vunpack.c.l.b16 %v2064
        %v3251 = vunpack.c.h.b16 %v2064
        %v3252 = vunpack.c.l.b16 %v2065
        %v3253 = vunpack.c.h.b16 %v2065
        %v3254 = vunpack.c.l.b16 %v2066
        %v3255 = vunpack.c.h.b16 %v2066
        %v3256 = vunpack.c.l.b16 %v2067
        %v3257 = vunpack.c.h.b16 %v2067
        %v3258 = vunpack.c.l.b16 %v2068
        %v3259 = vunpack.c.h.b16 %v2068
        %v3260 = vunpack.c.l.b16 %v2069
        %v3261 = vunpack.c.h.b16 %v2069
        %v3262 = vunpack.c.l.b16 %v2070
        %v3263 = vunpack.c.h.b16 %v2070
        %v3264 = vunpack.c.l.b16 %v2071
        %v3265 = vunpack.c.h.b16 %v2071
        %v3266 = vunpack.c.l.b16 %v2072
        %v3267 = vunpack.c.h.b16 %v2072
        %v3268 = vunpack.c.l.b16 %v2073
        %v3269 = vunpack.c.h.b16 %v2073
        %v3270 = vunpack.c.l.b16 %v2074
        %v3271 = vunpack.c.h.b16 %v2074
        %v3272 = vunpack.c.l.b16 %v2075
        %v3273 = vunpack.c.h.b16 %v2075
        %v3274 = vunpack.c.l.b16 %v2076
        %v3275 = vunpack.c.h.b16 %v2076
        %v3276 = vunpack.c.l.b16 %v2077
        %v3277 = vunpack.c.h.b16 %v2077
        %v3278 = vunpack.c.l.b16 %v2078
        %v3279 = vunpack.c.h.b16 %v2078
        %v3280 = vunpack.c.l.b16 %v2079
        %v3281 = vunpack.c.h.b16 %v2079
        %v3282 = vunpack.c.l.b16 %v2080
        %v3283 = vunpack.c.h.b16 %v2080
        %v3284 = vunpack.c.l.b16 %v2081
        %v3285 = vunpack.c.h.b16 %v2081
        %v3286 = vunpack.c.l.b16 %v2082
        %v3287 = vunpack.c.h.b16 %v2082
        %v3288 = vunpack.c.l.b16 %v2083
        %v3289 = vunpack.c.h.b16 %v2083
        %v3290 = vunpack.c.l.b16 %v2084
        %v3291 = vunpack.c.h.b16 %v2084
        %v3292 = vunpack.c.l.b16 %v2085
        %v3293 = vunpack.c.h.b16 %v2085
        %v3294 = vunpack.c.l.b16 %v2086
        %v3295 = vunpack.c.h.b16 %v2086
        %v3296 = vunpack.c.l.b16 %v2087
        %v3297 = vunpack.c.h.b16 %v2087
        %v3298 = vunpack.c.l.b16 %v2088
        %v3299 = vunpack.c.h.b16 %v2088
        %v3300 = vunpack.c.l.b16 %v2089
        %v3301 = vunpack.c.h.b16 %v2089
        %v3302 = vunpack.c.l.b16 %v2090
        %v3303 = vunpack.c.h.b16 %v2090
        %v3304 = vunpack.c.l.b16 %v2091
        %v3305 = vunpack.c.h.b16 %v2091
        %v3306 = vunpack.c.l.b16 %v2092
        %v3307 = vunpack.c.h.b16 %v2092
        %v3308 = vunpack.c.l.b16 %v2093
        %v3309 = vunpack.c.h.b16 %v2093
        %v3310 = vunpack.c.l.b16 %v2094
        %v3311 = vunpack.c.h.b16 %v2094
        %v3312 = vunpack.c.l.b16 %v2095
        %v3313 = vunpack.c.h.b16 %v2095
        %v3314 = vunpack.c.l.b16 %v2096
        %v3315 = vunpack.c.h.b16 %v2096
        %v3316 = vunpack.c.l.b16 %v2097
        %v3317 = vunpack.c.h.b16 %v2097
        %v3318 = vunpack.c.l.b16 %v2098
        %v3319 = vunpack.c.h.b16 %v2098
        %v3320 = vunpack.c.l.b16 %v2099
        %v3321 = vunpack.c.h.b16 %v2099
        %v3322 = vunpack.c.l.b16 %v2100
        %v3323 = vunpack.c.h.b16 %v2100
        %v3324 = vunpack.c.l.b16 %v2101
        %v3325 = vunpack.c.h.b16 %v2101
        %v3326 = vunpack.c.l.b16 %v2102
        %v3327 = vunpack.c.h.b16 %v2102
        %v3328 = vunpack.c.l.b16 %v2103
        %v3329 = vunpack.c.h.b16 %v2103
        %v3330 = vunpack.c.l.b16 %v2104
        %v3331 = vunpack.c.h.b16 %v2104
        %v3332 = vunpack.c.l.b16 %v2105
        %v3333 = vunpack.c.h.b16 %v2105
        %v3334 = vunpack.c.l.b16 %v2106
        %v3335 = vunpack.c.h.b16 %v2106
        %v3336 = vunpack.c.l.b16 %v2107
        %v3337 = vunpack.c.h.b16 %v2107
        %v3338 = vunpack.c.l.b16 %v2108
        %v3339 = vunpack.c.h.b16 %v2108
        %v3340 = vunpack.c.l.b16 %v2109
        %v3341 = vunpack.c.h.b16 %v2109
        %v3342 = vunpack.c.l.b16 %v2110
        %v3343 = vunpack.c.h.b16 %v2110
        %v3344 = vunpack.c.l.b16 %v2111
        %v3345 = vunpack.c.h.b16 %v2111
        %v3346 = vunpack.c.l.b16 %v2112
        %v3347 = vunpack.c.h.b16 %v2112
        %v3348 = vunpack.c.l.b16 %v2113
        %v3349 = vunpack.c.h.b16 %v2113
        %v3350 = vunpack.c.l.b16 %v2114
        %v3351 = vunpack.c.h.b16 %v2114
        %v3352 = vunpack.c.l.b16 %v2115
        %v3353 = vunpack.c.h.b16 %v2115
        %v3354 = vunpack.c.l.b16 %v2116
        %v3355 = vunpack.c.h.b16 %v2116
        %v3356 = vunpack.c.l.b16 %v2117
        %v3357 = vunpack.c.h.b16 %v2117
        %v3358 = vunpack.c.l.b16 %v2118
        %v3359 = vunpack.c.h.b16 %v2118
        %v3360 = vunpack.c.l.b16 %v2119
        %v3361 = vunpack.c.h.b16 %v2119
        %v3362 = vunpack.c.l.b16 %v2120
        %v3363 = vunpack.c.h.b16 %v2120
        %v3364 = vunpack.c.l.b16 %v2121
        %v3365 = vunpack.c.h.b16 %v2121
        %v3366 = vunpack.c.l.b16 %v2122
        %v3367 = vunpack.c.h.b16 %v2122
        %v3368 = vunpack.c.l.b16 %v2123
        %v3369 = vunpack.c.h.b16 %v2123
        %v3370 = vunpack.c.l.b16 %v2124
        %v3371 = vunpack.c.h.b16 %v2124
        %v3372 = vunpack.c.l.b16 %v2125
        %v3373 = vunpack.c.h.b16 %v2125
        %v3374 = vunpack.c.l.b16 %v2126
        %v3375 = vunpack.c.h.b16 %v2126
        %v3376 = vunpack.c.l.b16 %v2127
        %v3377 = vunpack.c.h.b16 %v2127
        %v3378 = vunpack.c.l.b16 %v2128
        %v3379 = vunpack.c.h.b16 %v2128
        %v3380 = vunpack.c.l.b16 %v2129
        %v3381 = vunpack.c.h.b16 %v2129
        %v3382 = vunpack.c.l.b16 %v2130
        %v3383 = vunpack.c.h.b16 %v2130
        %v3384 = vunpack.c.l.b16 %v2131
        %v3385 = vunpack.c.h.b16 %v2131
        %v3386 = vunpack.c.l.b16 %v2132
        %v3387 = vunpack.c.h.b16 %v2132
        %v3388 = vunpack.c.l.b16 %v2133
        %v3389 = vunpack.c.h.b16 %v2133
        %v3390 = vunpack.c.l.b16 %v2134
        %v3391 = vunpack.c.h.b16 %v2134
        %v3392 = vunpack.c.l.b16 %v2135
        %v3393 = vunpack.c.h.b16 %v2135
        %v3394 = vunpack.c.l.b16 %v2136
        %v3395 = vunpack.c.h.b16 %v2136
        %v3396 = vunpack.c.l.b16 %v2137
        %v3397 = vunpack.c.h.b16 %v2137
        %v3398 = vunpack.c.l.b16 %v2138
        %v3399 = vunpack.c.h.b16 %v2138
        %v3400 = vunpack.c.l.b16 %v2139
        %v3401 = vunpack.c.h.b16 %v2139
        %v3402 = vunpack.c.l.b16 %v2140
        %v3403 = vunpack.c.h.b16 %v2140
        %v3404 = vunpack.c.l.b16 %v2141
        %v3405 = vunpack.c.h.b16 %v2141
        %v3406 = vunpack.c.l.b16 %v2142
        %v3407 = vunpack.c.h.b16 %v2142
        %v3408 = vunpack.c.l.b16 %v2143
        %v3409 = vunpack.c.h.b16 %v2143
        %v3410 = vunpack.c.l.b16 %v2144
        %v3411 = vunpack.c.h.b16 %v2144
        %v3412 = vunpack.c.l.b16 %v2145
        %v3413 = vunpack.c.h.b16 %v2145
        %v3414 = vunpack.c.l.b16 %v2146
        %v3415 = vunpack.c.h.b16 %v2146
        %v3416 = vunpack.c.l.b16 %v2147
        %v3417 = vunpack.c.h.b16 %v2147
        %v3418 = vunpack.c.l.b16 %v2148
        %v3419 = vunpack.c.h.b16 %v2148
        %v3420 = vunpack.c.l.b16 %v2149
        %v3421 = vunpack.c.h.b16 %v2149
        %v3422 = vunpack.c.l.b16 %v2150
        %v3423 = vunpack.c.h.b16 %v2150
        %v3424 = vunpack.c.l.b16 %v2151
        %v3425 = vunpack.c.h.b16 %v2151
        %v3426 = vunpack.c.l.b16 %v2152
        %v3427 = vunpack.c.h.b16 %v2152
        %v3428 = vunpack.c.l.b16 %v2153
        %v3429 = vunpack.c.h.b16 %v2153
        %v3430 = vunpack.c.l.b16 %v2154
        %v3431 = vunpack.c.h.b16 %v2154
        %v3432 = vunpack.c.l.b16 %v2155
        %v3433 = vunpack.c.h.b16 %v2155
        %v3434 = vunpack.c.l.b16 %v2156
        %v3435 = vunpack.c.h.b16 %v2156
        %v3436 = vunpack.c.l.b16 %v2157
        %v3437 = vunpack.c.h.b16 %v2157
        %v3438 = vunpack.c.l.b16 %v2158
        %v3439 = vunpack.c.h.b16 %v2158
        %v3440 = vunpack.c.l.b16 %v2159
        %v3441 = vunpack.c.h.b16 %v2159
        %v3442 = vunpack.c.l.b16 %v2160
        %v3443 = vunpack.c.h.b16 %v2160
        %v3444 = vunpack.c.l.b16 %v2161
        %v3445 = vunpack.c.h.b16 %v2161
        %v3446 = vunpack.c.l.b16 %v2162
        %v3447 = vunpack.c.h.b16 %v2162
        %v3448 = vunpack.c.l.b16 %v2163
        %v3449 = vunpack.c.h.b16 %v2163
        %v3450 = vunpack.c.l.b16 %v2164
        %v3451 = vunpack.c.h.b16 %v2164
        %v3452 = vunpack.c.l.b16 %v2165
        %v3453 = vunpack.c.h.b16 %v2165
        %v3454 = vunpack.c.l.b16 %v2166
        %v3455 = vunpack.c.h.b16 %v2166
        %v3456 = vunpack.c.l.b16 %v2167
        %v3457 = vunpack.c.h.b16 %v2167
        %v3458 = vunpack.c.l.b16 %v2168
        %v3459 = vunpack.c.h.b16 %v2168
        %v3460 = vunpack.c.l.b16 %v2169
        %v3461 = vunpack.c.h.b16 %v2169
        %v3462 = vunpack.c.l.b16 %v2170
        %v3463 = vunpack.c.h.b16 %v2170
        %v3464 = vunpack.c.l.b16 %v2171
        %v3465 = vunpack.c.h.b16 %v2171
        %v3466 = vunpack.c.l.b16 %v2172
        %v3467 = vunpack.c.h.b16 %v2172
        %v3468 = vunpack.c.l.b16 %v2173
        %v3469 = vunpack.c.h.b16 %v2173
        %v3470 = vunpack.c.l.b16 %v2174
        %v3471 = vunpack.c.h.b16 %v2174
        %v3472 = vunpack.c.l.b16 %v2175
        %v3473 = vunpack.c.h.b16 %v2175
        %v3474 = vunpack.c.l.b16 %v2176
        %v3475 = vunpack.c.h.b16 %v2176
        %v3476 = vunpack.c.l.b16 %v2177
        %v3477 = vunpack.c.h.b16 %v2177
        %v3478 = vunpack.c.l.b16 %v2178
        %v3479 = vunpack.c.h.b16 %v2178
        %v3480 = vunpack.c.l.b16 %v2179
        %v3481 = vunpack.c.h.b16 %v2179
        %v3482 = vunpack.c.l.b16 %v2180
        %v3483 = vunpack.c.h.b16 %v2180
        %v3484 = vunpack.c.l.b16 %v2181
        %v3485 = vunpack.c.h.b16 %v2181
        %v3486 = vunpack.c.l.b16 %v2182
        %v3487 = vunpack.c.h.b16 %v2182
        %v3488 = vunpack.c.l.b16 %v2183
        %v3489 = vunpack.c.h.b16 %v2183
        %v3490 = vunpack.c.l.b16 %v2184
        %v3491 = vunpack.c.h.b16 %v2184
        %v3492 = vunpack.c.l.b16 %v2185
        %v3493 = vunpack.c.h.b16 %v2185
        %v3494 = vunpack.c.l.b16 %v2186
        %v3495 = vunpack.c.h.b16 %v2186
        %v3496 = vunpack.c.l.b16 %v2187
        %v3497 = vunpack.c.h.b16 %v2187
        %v3498 = vunpack.c.l.b16 %v2188
        %v3499 = vunpack.c.h.b16 %v2188
        %v3500 = vunpack.c.l.b16 %v2189
        %v3501 = vunpack.c.h.b16 %v2189
        %v3502 = vunpack.c.l.b16 %v2190
        %v3503 = vunpack.c.h.b16 %v2190
        %v3504 = vunpack.c.l.b16 %v2191
        %v3505 = vunpack.c.h.b16 %v2191
        %v3506 = vunpack.c.l.b16 %v2192
        %v3507 = vunpack.c.h.b16 %v2192
        %v3508 = vunpack.c.l.b16 %v2193
        %v3509 = vunpack.c.h.b16 %v2193
        %v3510 = vunpack.c.l.b16 %v2194
        %v3511 = vunpack.c.h.b16 %v2194
        %v3512 = vunpack.c.l.b16 %v2195
        %v3513 = vunpack.c.h.b16 %v2195
        %v3514 = vunpack.c.l.b16 %v2196
        %v3515 = vunpack.c.h.b16 %v2196
        %v3516 = vunpack.c.l.b16 %v2197
        %v3517 = vunpack.c.h.b16 %v2197
        %v3518 = vunpack.c.l.b16 %v2198
        %v3519 = vunpack.c.h.b16 %v2198
        %v3520 = vunpack.c.l.b16 %v2199
        %v3521 = vunpack.c.h.b16 %v2199
        %v3522 = vunpack.c.l.b16 %v2200
        %v3523 = vunpack.c.h.b16 %v2200
        %v3524 = vunpack.c.l.b16 %v2201
        %v3525 = vunpack.c.h.b16 %v2201
        %v3526 = vunpack.c.l.b16 %v2202
        %v3527 = vunpack.c.h.b16 %v2202
        %v3528 = vunpack.c.l.b16 %v2203
        %v3529 = vunpack.c.h.b16 %v2203
        %v3530 = vunpack.c.l.b16 %v2204
        %v3531 = vunpack.c.h.b16 %v2204
        %v3532 = vunpack.c.l.b16 %v2205
        %v3533 = vunpack.c.h.b16 %v2205
        %v3534 = vunpack.c.l.b16 %v2206
        %v3535 = vunpack.c.h.b16 %v2206
        %v3536 = vunpack.c.l.b16 %v2207
        %v3537 = vunpack.c.h.b16 %v2207
        %v3538 = vunpack.c.l.b16 %v2208
        %v3539 = vunpack.c.h.b16 %v2208
        %v3540 = vunpack.c.l.b16 %v2209
        %v3541 = vunpack.c.h.b16 %v2209
        %v3542 = vunpack.c.l.b16 %v2210
        %v3543 = vunpack.c.h.b16 %v2210
        %v3544 = vunpack.c.l.b16 %v2211
        %v3545 = vunpack.c.h.b16 %v2211
        %v3546 = vunpack.c.l.b16 %v2212
        %v3547 = vunpack.c.h.b16 %v2212
        %v3548 = vunpack.c.l.b16 %v2213
        %v3549 = vunpack.c.h.b16 %v2213
        %v3550 = vunpack.c.l.b16 %v2214
        %v3551 = vunpack.c.h.b16 %v2214
        %v3552 = vunpack.c.l.b16 %v2215
        %v3553 = vunpack.c.h.b16 %v2215
        %v3554 = vunpack.c.l.b16 %v2216
        %v3555 = vunpack.c.h.b16 %v2216
        %v3556 = vunpack.c.l.b16 %v2217
        %v3557 = vunpack.c.h.b16 %v2217
        %v3558 = vunpack.c.l.b16 %v2218
        %v3559 = vunpack.c.h.b16 %v2218
        %v3560 = vunpack.c.l.b16 %v2219
        %v3561 = vunpack.c.h.b16 %v2219
        %v3562 = vunpack.c.l.b16 %v2220
        %v3563 = vunpack.c.h.b16 %v2220
        %v3564 = vunpack.c.l.b16 %v2221
        %v3565 = vunpack.c.h.b16 %v2221
        %v3566 = vunpack.c.l.b16 %v2222
        %v3567 = vunpack.c.h.b16 %v2222
        %v3568 = vunpack.c.l.b16 %v2223
        %v3569 = vunpack.c.h.b16 %v2223
        %v3570 = vunpack.c.l.b16 %v2224
        %v3571 = vunpack.c.h.b16 %v2224
        %v3572 = vunpack.c.l.b16 %v2225
        %v3573 = vunpack.c.h.b16 %v2225
        %v3574 = vunpack.c.l.b16 %v2226
        %v3575 = vunpack.c.h.b16 %v2226
        %v3576 = vunpack.c.l.b16 %v2227
        %v3577 = vunpack.c.h.b16 %v2227
        %v3578 = vunpack.c.l.b16 %v2228
        %v3579 = vunpack.c.h.b16 %v2228
        %v3580 = vunpack.c.l.b16 %v2229
        %v3581 = vunpack.c.h.b16 %v2229
        %v3582 = vunpack.c.l.b16 %v2230
        %v3583 = vunpack.c.h.b16 %v2230
        %v3584 = vunpack.c.l.b16 %v2231
        %v3585 = vunpack.c.h.b16 %v2231
        %v3586 = vunpack.c.l.b16 %v2232
        %v3587 = vunpack.c.h.b16 %v2232
        %v3588 = vunpack.c.l.b16 %v2233
        %v3589 = vunpack.c.h.b16 %v2233
        %v3590 = vunpack.c.l.b16 %v2234
        %v3591 = vunpack.c.h.b16 %v2234
        %v3592 = vunpack.c.l.b16 %v2235
        %v3593 = vunpack.c.h.b16 %v2235
        %v3594 = vunpack.c.l.b16 %v2236
        %v3595 = vunpack.c.h.b16 %v2236
        %v3596 = vunpack.c.l.b16 %v2237
        %v3597 = vunpack.c.h.b16 %v2237
        %v3598 = vunpack.c.l.b16 %v2238
        %v3599 = vunpack.c.h.b16 %v2238
        %v3600 = vunpack.c.l.b16 %v2239
        %v3601 = vunpack.c.h.b16 %v2239
        %v3602 = vunpack.c.l.b16 %v2240
        %v3603 = vunpack.c.h.b16 %v2240
        %v3604 = vunpack.c.l.b16 %v2241
        %v3605 = vunpack.c.h.b16 %v2241
        %v3606 = vunpack.c.l.b16 %v2242
        %v3607 = vunpack.c.h.b16 %v2242
        %v3608 = vunpack.c.l.b16 %v2243
        %v3609 = vunpack.c.h.b16 %v2243
        %v3610 = vunpack.c.l.b16 %v2244
        %v3611 = vunpack.c.h.b16 %v2244
        %v3612 = vunpack.c.l.b16 %v2245
        %v3613 = vunpack.c.h.b16 %v2245
        %v3614 = vunpack.c.l.b16 %v2246
        %v3615 = vunpack.c.h.b16 %v2246
        %v3616 = vunpack.c.l.b16 %v2247
        %v3617 = vunpack.c.h.b16 %v2247
        %v3618 = vunpack.c.l.b16 %v2248
        %v3619 = vunpack.c.h.b16 %v2248
        %v3620 = vunpack.c.l.b16 %v2249
        %v3621 = vunpack.c.h.b16 %v2249
        %v3622 = vunpack.c.l.b16 %v2250
        %v3623 = vunpack.c.h.b16 %v2250
        %v3624 = vunpack.c.l.b16 %v2251
        %v3625 = vunpack.c.h.b16 %v2251
        %v3626 = vunpack.c.l.b16 %v2252
        %v3627 = vunpack.c.h.b16 %v2252
        %v3628 = vunpack.c.l.b16 %v2253
        %v3629 = vunpack.c.h.b16 %v2253
        %v3630 = vunpack.c.l.b16 %v2254
        %v3631 = vunpack.c.h.b16 %v2254
        %v3632 = vunpack.c.l.b16 %v2255
        %v3633 = vunpack.c.h.b16 %v2255
        %v3634 = vunpack.c.l.b16 %v2256
        %v3635 = vunpack.c.h.b16 %v2256
        %v3636 = vunpack.c.l.b16 %v2257
        %v3637 = vunpack.c.h.b16 %v2257
        %v3638 = vunpack.c.l.b16 %v2258
        %v3639 = vunpack.c.h.b16 %v2258
        %v3640 = vunpack.c.l.b16 %v2259
        %v3641 = vunpack.c.h.b16 %v2259
        %v3642 = vunpack.c.l.b16 %v2260
        %v3643 = vunpack.c.h.b16 %v2260
        %v3644 = vunpack.c.l.b16 %v2261
        %v3645 = vunpack.c.h.b16 %v2261
        %v3646 = vunpack.c.l.b16 %v2262
        %v3647 = vunpack.c.h.b16 %v2262
        %v3648 = vunpack.c.l.b16 %v2263
        %v3649 = vunpack.c.h.b16 %v2263
        %v3650 = vunpack.c.l.b16 %v2264
        %v3651 = vunpack.c.h.b16 %v2264
        %v3652 = vunpack.c.l.b16 %v2265
        %v3653 = vunpack.c.h.b16 %v2265
        %v3654 = vunpack.c.l.b16 %v2266
        %v3655 = vunpack.c.h.b16 %v2266
        %v3656 = vunpack.c.l.b16 %v2267
        %v3657 = vunpack.c.h.b16 %v2267
        %v3658 = vunpack.c.l.b16 %v2268
        %v3659 = vunpack.c.h.b16 %v2268
        %v3660 = vunpack.c.l.b16 %v2269
        %v3661 = vunpack.c.h.b16 %v2269
        %v3662 = vunpack.c.l.b16 %v2270
        %v3663 = vunpack.c.h.b16 %v2270
        %v3664 = vunpack.c.l.b16 %v2271
        %v3665 = vunpack.c.h.b16 %v2271
        %v3666 = vunpack.c.l.b16 %v2272
        %v3667 = vunpack.c.h.b16 %v2272
        %v3668 = vunpack.c.l.b16 %v2273
        %v3669 = vunpack.c.h.b16 %v2273
        %v3670 = vunpack.c.l.b16 %v2274
        %v3671 = vunpack.c.h.b16 %v2274
        %v3672 = vunpack.c.l.b16 %v2275
        %v3673 = vunpack.c.h.b16 %v2275
        %v3674 = vunpack.c.l.b16 %v2276
        %v3675 = vunpack.c.h.b16 %v2276
        %v3676 = vunpack.c.l.b16 %v2277
        %v3677 = vunpack.c.h.b16 %v2277
        %v3678 = vunpack.c.l.b16 %v2278
        %v3679 = vunpack.c.h.b16 %v2278
        %v3680 = vunpack.c.l.b16 %v2279
        %v3681 = vunpack.c.h.b16 %v2279
        %v3682 = vunpack.c.l.b16 %v2280
        %v3683 = vunpack.c.h.b16 %v2280
        %v3684 = vunpack.c.l.b16 %v2281
        %v3685 = vunpack.c.h.b16 %v2281
        %v3686 = vunpack.c.l.b16 %v2282
        %v3687 = vunpack.c.h.b16 %v2282
        %v3688 = vunpack.c.l.b16 %v2283
        %v3689 = vunpack.c.h.b16 %v2283
        %v3690 = vunpack.c.l.b16 %v2284
        %v3691 = vunpack.c.h.b16 %v2284
        %v3692 = vunpack.c.l.b16 %v2285
        %v3693 = vunpack.c.h.b16 %v2285
        %v3694 = vunpack.c.l.b16 %v2286
        %v3695 = vunpack.c.h.b16 %v2286
        %v3696 = vunpack.c.l.b16 %v2287
        %v3697 = vunpack.c.h.b16 %v2287
        %v3698 = vunpack.c.l.b16 %v2288
        %v3699 = vunpack.c.h.b16 %v2288
        %v3700 = vunpack.c.l.b16 %v2289
        %v3701 = vunpack.c.h.b16 %v2289
        %v3702 = vunpack.c.l.b16 %v2290
        %v3703 = vunpack.c.h.b16 %v2290
        %v3704 = vunpack.c.l.b16 %v2291
        %v3705 = vunpack.c.h.b16 %v2291
        %v3706 = vunpack.c.l.b16 %v2292
        %v3707 = vunpack.c.h.b16 %v2292
        %v3708 = vunpack.c.l.b16 %v2293
        %v3709 = vunpack.c.h.b16 %v2293
        %v3710 = vunpack.c.l.b16 %v2294
        %v3711 = vunpack.c.h.b16 %v2294
        %v3712 = vunpack.c.l.b16 %v2295
        %v3713 = vunpack.c.h.b16 %v2295
        %v3714 = vunpack.c.l.b16 %v2296
        %v3715 = vunpack.c.h.b16 %v2296
        %v3716 = vunpack.c.l.b16 %v2297
        %v3717 = vunpack.c.h.b16 %v2297
        %v3718 = vunpack.c.l.b16 %v2298
        %v3719 = vunpack.c.h.b16 %v2298
        %v3720 = vunpack.c.l.b16 %v2299
        %v3721 = vunpack.c.h.b16 %v2299
        %v3722 = vunpack.c.l.b16 %v2300
        %v3723 = vunpack.c.h.b16 %v2300
        %v3724 = vunpack.c.l.b16 %v2301
        %v3725 = vunpack.c.h.b16 %v2301
        %v3726 = vunpack.c.l.b16 %v2302
        %v3727 = vunpack.c.h.b16 %v2302
        %v3728 = vunpack.c.l.b16 %v2303
        %v3729 = vunpack.c.h.b16 %v2303
        %v3730 = vunpack.c.l.b16 %v2304
        %v3731 = vunpack.c.h.b16 %v2304
        %v3732 = vunpack.c.l.b16 %v2305
        %v3733 = vunpack.c.h.b16 %v2305
        %v3734 = vunpack.c.l.b16 %v2306
        %v3735 = vunpack.c.h.b16 %v2306
        %v3736 = vunpack.c.l.b16 %v2307
        %v3737 = vunpack.c.h.b16 %v2307
        %v3738 = vunpack.c.l.b16 %v2308
        %v3739 = vunpack.c.h.b16 %v2308
        %v3740 = vunpack.c.l.b16 %v2309
        %v3741 = vunpack.c.h.b16 %v2309
        %v3742 = vunpack.c.l.b16 %v2310
        %v3743 = vunpack.c.h.b16 %v2310
        %v3744 = vunpack.c.l.b16 %v2311
        %v3745 = vunpack.c.h.b16 %v2311
        %v3746 = vunpack.c.l.b16 %v2312
        %v3747 = vunpack.c.h.b16 %v2312
        %v3748 = vunpack.c.l.b16 %v2313
        %v3749 = vunpack.c.h.b16 %v2313
        %v3750 = vunpack.c.l.b16 %v2314
        %v3751 = vunpack.c.h.b16 %v2314
        %v3752 = vunpack.c.l.b16 %v2315
        %v3753 = vunpack.c.h.b16 %v2315
        %v3754 = vunpack.c.l.b16 %v2316
        %v3755 = vunpack.c.h.b16 %v2316
        %v3756 = vunpack.c.l.b16 %v2317
        %v3757 = vunpack.c.h.b16 %v2317
        %v3758 = vunpack.c.l.b16 %v2318
        %v3759 = vunpack.c.h.b16 %v2318
        %v3760 = vunpack.c.l.b16 %v2319
        %v3761 = vunpack.c.h.b16 %v2319
        %v3762 = vunpack.c.l.b16 %v2320
        %v3763 = vunpack.c.h.b16 %v2320
        %v3764 = vunpack.c.l.b16 %v2321
        %v3765 = vunpack.c.h.b16 %v2321
        %v3766 = vunpack.c.l.b16 %v2322
        %v3767 = vunpack.c.h.b16 %v2322
        %v3768 = vunpack.c.l.b16 %v2323
        %v3769 = vunpack.c.h.b16 %v2323
        %v3770 = vunpack.c.l.b16 %v2324
        %v3771 = vunpack.c.h.b16 %v2324
        %v3772 = vunpack.c.l.b16 %v2325
        %v3773 = vunpack.c.h.b16 %v2325
        %v3774 = vunpack.c.l.b16 %v2326
        %v3775 = vunpack.c.h.b16 %v2326
        %v3776 = vunpack.c.l.b16 %v2327
        %v3777 = vunpack.c.h.b16 %v2327
        %v3778 = vunpack.c.l.b16 %v2328
        %v3779 = vunpack.c.h.b16 %v2328
        %v3780 = vunpack.c.l.b16 %v2329
        %v3781 = vunpack.c.h.b16 %v2329
        %v3782 = vunpack.c.l.b16 %v2330
        %v3783 = vunpack.c.h.b16 %v2330
        %v3784 = vunpack.c.l.b16 %v2331
        %v3785 = vunpack.c.h.b16 %v2331
        %v3786 = vunpack.c.l.b16 %v2332
        %v3787 = vunpack.c.h.b16 %v2332
        %v3788 = vunpack.c.l.b16 %v2333
        %v3789 = vunpack.c.h.b16 %v2333
        %v3790 = vunpack.c.l.b16 %v2334
        %v3791 = vunpack.c.h.b16 %v2334
        %v3792 = vunpack.c.l.b16 %v2335
        %v3793 = vunpack.c.h.b16 %v2335
        %v3794 = vunpack.c.l.b16 %v2336
        %v3795 = vunpack.c.h.b16 %v2336
        %v3796 = vunpack.c.l.b16 %v2337
        %v3797 = vunpack.c.h.b16 %v2337
        %v3798 = vunpack.c.l.b16 %v2338
        %v3799 = vunpack.c.h.b16 %v2338
        %v3800 = vunpack.c.l.b16 %v2339
        %v3801 = vunpack.c.h.b16 %v2339
        %v3802 = vunpack.c.l.b16 %v2340
        %v3803 = vunpack.c.h.b16 %v2340
        %v3804 = vunpack.c.l.b16 %v2341
        %v3805 = vunpack.c.h.b16 %v2341
        %v3806 = vunpack.c.l.b16 %v2342
        %v3807 = vunpack.c.h.b16 %v2342
        %v3808 = vunpack.c.l.b16 %v2343
        %v3809 = vunpack.c.h.b16 %v2343
        %v3810 = vunpack.c.l.b16 %v2344
        %v3811 = vunpack.c.h.b16 %v2344
        %v3812 = vunpack.c.l.b16 %v2345
        %v3813 = vunpack.c.h.b16 %v2345
        %v3814 = vunpack.c.l.b16 %v2346
        %v3815 = vunpack.c.h.b16 %v2346
        %v3816 = vunpack.c.l.b16 %v2347
        %v3817 = vunpack.c.h.b16 %v2347
        %v3818 = vunpack.c.l.b16 %v2348
        %v3819 = vunpack.c.h.b16 %v2348
        %v3820 = vunpack.c.l.b16 %v2349
        %v3821 = vunpack.c.h.b16 %v2349
        %v3822 = vunpack.c.l.b16 %v2350
        %v3823 = vunpack.c.h.b16 %v2350
        %v3824 = vunpack.c.l.b16 %v2351
        %v3825 = vunpack.c.h.b16 %v2351
        %v3826 = vunpack.c.l.b16 %v2352
        %v3827 = vunpack.c.h.b16 %v2352
        %v3828 = vunpack.c.l.b16 %v2353
        %v3829 = vunpack.c.h.b16 %v2353
        %v3830 = vunpack.c.l.b16 %v2354
        %v3831 = vunpack.c.h.b16 %v2354
        %v3832 = vunpack.c.l.b16 %v2355
        %v3833 = vunpack.c.h.b16 %v2355
        %v3834 = vunpack.c.l.b16 %v2356
        %v3835 = vunpack.c.h.b16 %v2356
        %v3836 = vunpack.c.l.b16 %v2357
        %v3837 = vunpack.c.h.b16 %v2357
        %v3838 = vunpack.c.l.b16 %v2358
        %v3839 = vunpack.c.h.b16 %v2358
        %v3840 = vunpack.c.l.b16 %v2359
        %v3841 = vunpack.c.h.b16 %v2359
        %v3842 = vunpack.c.l.b16 %v2360
        %v3843 = vunpack.c.h.b16 %v2360
        %v3844 = vunpack.c.l.b16 %v2361
        %v3845 = vunpack.c.h.b16 %v2361
        %v3846 = vunpack.c.l.b16 %v2362
        %v3847 = vunpack.c.h.b16 %v2362
        %v3848 = vunpack.c.l.b16 %v2363
        %v3849 = vunpack.c.h.b16 %v2363
        %v3850 = vunpack.c.l.b16 %v2364
        %v3851 = vunpack.c.h.b16 %v2364
        %v3852 = vunpack.c.l.b16 %v2365
        %v3853 = vunpack.c.h.b16 %v2365
        %v3854 = vunpack.c.l.b16 %v2366
        %v3855 = vunpack.c.h.b16 %v2366
        %v3856 = vunpack.c.l.b16 %v2367
        %v3857 = vunpack.c.h.b16 %v2367
        %v3858 = vunpack.c.l.b16 %v2368
        %v3859 = vunpack.c.h.b16 %v2368
        %v3860 = vunpack.c.l.b16 %v2369
        %v3861 = vunpack.c.h.b16 %v2369
        %v3862 = vunpack.c.l.b16 %v2370
        %v3863 = vunpack.c.h.b16 %v2370
        %v3864 = vunpack.c.l.b16 %v2371
        %v3865 = vunpack.c.h.b16 %v2371
        %v3866 = vunpack.c.l.b16 %v2372
        %v3867 = vunpack.c.h.b16 %v2372
        %v3868 = vunpack.c.l.b16 %v2373
        %v3869 = vunpack.c.h.b16 %v2373
        %v3870 = vunpack.c.l.b16 %v2374
        %v3871 = vunpack.c.h.b16 %v2374
        %v3872 = vunpack.c.l.b16 %v2375
        %v3873 = vunpack.c.h.b16 %v2375
        %v3874 = vunpack.c.l.b16 %v2376
        %v3875 = vunpack.c.h.b16 %v2376
        %v3876 = vunpack.c.l.b16 %v2377
        %v3877 = vunpack.c.h.b16 %v2377
        %v3878 = vunpack.c.l.b16 %v2378
        %v3879 = vunpack.c.h.b16 %v2378
        %v3880 = vunpack.c.l.b16 %v2379
        %v3881 = vunpack.c.h.b16 %v2379
        %v3882 = vunpack.c.l.b16 %v2380
        %v3883 = vunpack.c.h.b16 %v2380
        %v3884 = vunpack.c.l.b16 %v2381
        %v3885 = vunpack.c.h.b16 %v2381
        %v3886 = vunpack.c.l.b16 %v2382
        %v3887 = vunpack.c.h.b16 %v2382
        %v3888 = vunpack.c.l.b16 %v2383
        %v3889 = vunpack.c.h.b16 %v2383
        %v3890 = vunpack.c.l.b16 %v2384
        %v3891 = vunpack.c.h.b16 %v2384
        %v3892 = vunpack.c.l.b16 %v2385
        %v3893 = vunpack.c.h.b16 %v2385
        %v3894 = vunpack.c.l.b16 %v2386
        %v3895 = vunpack.c.h.b16 %v2386
        %v3896 = vunpack.c.l.b16 %v2387
        %v3897 = vunpack.c.h.b16 %v2387
        %v3898 = vunpack.c.l.b16 %v2388
        %v3899 = vunpack.c.h.b16 %v2388
        %v3900 = vunpack.c.l.b16 %v2389
        %v3901 = vunpack.c.h.b16 %v2389
        %v3902 = vunpack.c.l.b16 %v2390
        %v3903 = vunpack.c.h.b16 %v2390
        %v3904 = vunpack.c.l.b16 %v2391
        %v3905 = vunpack.c.h.b16 %v2391
        %v3906 = vunpack.c.l.b16 %v2392
        %v3907 = vunpack.c.h.b16 %v2392
        %v3908 = vunpack.c.l.b16 %v2393
        %v3909 = vunpack.c.h.b16 %v2393
        %v3910 = vunpack.c.l.b16 %v2394
        %v3911 = vunpack.c.h.b16 %v2394
        %v3912 = vunpack.c.l.b16 %v2395
        %v3913 = vunpack.c.h.b16 %v2395
        %v3914 = vunpack.c.l.b16 %v2396
        %v3915 = vunpack.c.h.b16 %v2396
        %v3916 = vunpack.c.l.b16 %v2397
        %v3917 = vunpack.c.h.b16 %v2397
        %v3918 = vunpack.c.l.b16 %v2398
        %v3919 = vunpack.c.h.b16 %v2398
        %v3920 = vunpack.c.l.b16 %v2399
        %v3921 = vunpack.c.h.b16 %v2399
        %v3922 = vunpack.c.l.b16 %v2400
        %v3923 = vunpack.c.h.b16 %v2400
        %v3924 = vunpack.c.l.b16 %v2401
        %v3925 = vunpack.c.h.b16 %v2401
        %v3926 = vunpack.c.l.b16 %v2402
        %v3927 = vunpack.c.h.b16 %v2402
        %v3928 = vunpack.c.l.b16 %v2403
        %v3929 = vunpack.c.h.b16 %v2403
        %v3930 = vunpack.c.l.b16 %v2404
        %v3931 = vunpack.c.h.b16 %v2404
        %v3932 = vunpack.c.l.b16 %v2405
        %v3933 = vunpack.c.h.b16 %v2405
        %v3934 = vunpack.c.l.b16 %v2406
        %v3935 = vunpack.c.h.b16 %v2406
        %v3936 = vunpack.c.l.b16 %v2407
        %v3937 = vunpack.c.h.b16 %v2407
        %v3938 = vunpack.c.l.b16 %v2408
        %v3939 = vunpack.c.h.b16 %v2408
        %v3940 = vunpack.c.l.b16 %v2409
        %v3941 = vunpack.c.h.b16 %v2409
        %v3942 = vunpack.c.l.b16 %v2410
        %v3943 = vunpack.c.h.b16 %v2410
        %v3944 = vunpack.c.l.b16 %v2411
        %v3945 = vunpack.c.h.b16 %v2411
        %v3946 = vunpack.c.l.b16 %v2412
        %v3947 = vunpack.c.h.b16 %v2412
        %v3948 = vunpack.c.l.b16 %v2413
        %v3949 = vunpack.c.h.b16 %v2413
        %v3950 = vpack.c.b16 %v2934, %v2926
        %v3951 = vpack.c.b16 %v2935, %v2927
        %v3952 = vpack.c.b16 %v2936, %v2928
        %v3953 = vpack.c.b16 %v2937, %v2929
        %v3954 = vpack.c.b16 %v2938, %v2930
        %v3955 = vpack.c.b16 %v2939, %v2931
        %v3956 = vpack.c.b16 %v2940, %v2932
        %v3957 = vpack.c.b16 %v2941, %v2933
        %v3958 = vpack.c.b16 %v2950, %v2942
        %v3959 = vpack.c.b16 %v2951, %v2943
        %v3960 = vpack.c.b16 %v2952, %v2944
        %v3961 = vpack.c.b16 %v2953, %v2945
        %v3962 = vpack.c.b16 %v2954, %v2946
        %v3963 = vpack.c.b16 %v2955, %v2947
        %v3964 = vpack.c.b16 %v2956, %v2948
        %v3965 = vpack.c.b16 %v2957, %v2949
        %v3966 = vpack.c.b16 %v2966, %v2958
        %v3967 = vpack.c.b16 %v2967, %v2959
        %v3968 = vpack.c.b16 %v2968, %v2960
        %v3969 = vpack.c.b16 %v2969, %v2961
        %v3970 = vpack.c.b16 %v2970, %v2962
        %v3971 = vpack.c.b16 %v2971, %v2963
        %v3972 = vpack.c.b16 %v2972, %v2964
        %v3973 = vpack.c.b16 %v2973, %v2965
        %v3974 = vpack.c.b16 %v2982, %v2974
        %v3975 = vpack.c.b16 %v2983, %v2975
        %v3976 = vpack.c.b16 %v2984, %v2976
        %v3977 = vpack.c.b16 %v2985, %v2977
        %v3978 = vpack.c.b16 %v2986, %v2978
        %v3979 = vpack.c.b16 %v2987, %v2979
        %v3980 = vpack.c.b16 %v2988, %v2980
        %v3981 = vpack.c.b16 %v2989, %v2981
        %v3982 = vpack.c.b16 %v2998, %v2990
        %v3983 = vpack.c.b16 %v2999, %v2991
        %v3984 = vpack.c.b16 %v3000, %v2992
        %v3985 = vpack.c.b16 %v3001, %v2993
        %v3986 = vpack.c.b16 %v3002, %v2994
        %v3987 = vpack.c.b16 %v3003, %v2995
        %v3988 = vpack.c.b16 %v3004, %v2996
        %v3989 = vpack.c.b16 %v3005, %v2997
        %v3990 = vpack.c.b16 %v3014, %v3006
        %v3991 = vpack.c.b16 %v3015, %v3007
        %v3992 = vpack.c.b16 %v3016, %v3008
        %v3993 = vpack.c.b16 %v3017, %v3009
        %v3994 = vpack.c.b16 %v3018, %v3010
        %v3995 = vpack.c.b16 %v3019, %v3011
        %v3996 = vpack.c.b16 %v3020, %v3012
        %v3997 = vpack.c.b16 %v3021, %v3013
        %v3998 = vpack.c.b16 %v3030, %v3022
        %v3999 = vpack.c.b16 %v3031, %v3023
        %v4000 = vpack.c.b16 %v3032, %v3024
        %v4001 = vpack.c.b16 %v3033, %v3025
        %v4002 = vpack.c.b16 %v3034, %v3026
        %v4003 = vpack.c.b16 %v3035, %v3027
        %v4004 = vpack.c.b16 %v3036, %v3028
        %v4005 = vpack.c.b16 %v3037, %v3029
        %v4006 = vpack.c.b16 %v3046, %v3038
        %v4007 = vpack.c.b16 %v3047, %v3039
        %v4008 = vpack.c.b16 %v3048, %v3040
        %v4009 = vpack.c.b16 %v3049, %v3041
        %v4010 = vpack.c.b16 %v3050, %v3042
        %v4011 = vpack.c.b16 %v3051, %v3043
        %v4012 = vpack.c.b16 %v3052, %v3044
        %v4013 = vpack.c.b16 %v3053, %v3045
        %v4014 = vpack.c.b16 %v3062, %v3054
        %v4015 = vpack.c.b16 %v3063, %v3055
        %v4016 = vpack.c.b16 %v3064, %v3056
        %v4017 = vpack.c.b16 %v3065, %v3057
        %v4018 = vpack.c.b16 %v3066, %v3058
        %v4019 = vpack.c.b16 %v3067, %v3059
        %v4020 = vpack.c.b16 %v3068, %v3060
        %v4021 = vpack.c.b16 %v3069, %v3061
        %v4022 = vpack.c.b16 %v3078, %v3070
        %v4023 = vpack.c.b16 %v3079, %v3071
        %v4024 = vpack.c.b16 %v3080, %v3072
        %v4025 = vpack.c.b16 %v3081, %v3073
        %v4026 = vpack.c.b16 %v3082, %v3074
        %v4027 = vpack.c.b16 %v3083, %v3075
        %v4028 = vpack.c.b16 %v3084, %v3076
        %v4029 = vpack.c.b16 %v3085, %v3077
        %v4030 = vpack.c.b16 %v3094, %v3086
        %v4031 = vpack.c.b16 %v3095, %v3087
        %v4032 = vpack.c.b16 %v3096, %v3088
        %v4033 = vpack.c.b16 %v3097, %v3089
        %v4034 = vpack.c.b16 %v3098, %v3090
        %v4035 = vpack.c.b16 %v3099, %v3091
        %v4036 = vpack.c.b16 %v3100, %v3092
        %v4037 = vpack.c.b16 %v3101, %v3093
        %v4038 = vpack.c.b16 %v3110, %v3102
        %v4039 = vpack.c.b16 %v3111, %v3103
        %v4040 = vpack.c.b16 %v3112, %v3104
        %v4041 = vpack.c.b16 %v3113, %v3105
        %v4042 = vpack.c.b16 %v3114, %v3106
        %v4043 = vpack.c.b16 %v3115, %v3107
        %v4044 = vpack.c.b16 %v3116, %v3108
        %v4045 = vpack.c.b16 %v3117, %v3109
        %v4046 = vpack.c.b16 %v3126, %v3118
        %v4047 = vpack.c.b16 %v3127, %v3119
        %v4048 = vpack.c.b16 %v3128, %v3120
        %v4049 = vpack.c.b16 %v3129, %v3121
        %v4050 = vpack.c.b16 %v3130, %v3122
        %v4051 = vpack.c.b16 %v3131, %v3123
        %v4052 = vpack.c.b16 %v3132, %v3124
        %v4053 = vpack.c.b16 %v3133, %v3125
        %v4054 = vpack.c.b16 %v3142, %v3134
        %v4055 = vpack.c.b16 %v3143, %v3135
        %v4056 = vpack.c.b16 %v3144, %v3136
        %v4057 = vpack.c.b16 %v3145, %v3137
        %v4058 = vpack.c.b16 %v3146, %v3138
        %v4059 = vpack.c.b16 %v3147, %v3139
        %v4060 = vpack.c.b16 %v3148, %v3140
        %v4061 = vpack.c.b16 %v3149, %v3141
        %v4062 = vpack.c.b16 %v3158, %v3150
        %v4063 = vpack.c.b16 %v3159, %v3151
        %v4064 = vpack.c.b16 %v3160, %v3152
        %v4065 = vpack.c.b16 %v3161, %v3153
        %v4066 = vpack.c.b16 %v3162, %v3154
        %v4067 = vpack.c.b16 %v3163, %v3155
        %v4068 = vpack.c.b16 %v3164, %v3156
        %v4069 = vpack.c.b16 %v3165, %v3157
        %v4070 = vpack.c.b16 %v3174, %v3166
        %v4071 = vpack.c.b16 %v3175, %v3167
        %v4072 = vpack.c.b16 %v3176, %v3168
        %v4073 = vpack.c.b16 %v3177, %v3169
        %v4074 = vpack.c.b16 %v3178, %v3170
        %v4075 = vpack.c.b16 %v3179, %v3171
        %v4076 = vpack.c.b16 %v3180, %v3172
        %v4077 = vpack.c.b16 %v3181, %v3173
        %v4078 = vpack.c.b16 %v3190, %v3182
        %v4079 = vpack.c.b16 %v3191, %v3183
        %v4080 = vpack.c.b16 %v3192, %v3184
        %v4081 = vpack.c.b16 %v3193, %v3185
        %v4082 = vpack.c.b16 %v3194, %v3186
        %v4083 = vpack.c.b16 %v3195, %v3187
        %v4084 = vpack.c.b16 %v3196, %v3188
        %v4085 = vpack.c.b16 %v3197, %v3189
        %v4086 = vpack.c.b16 %v3206, %v3198
        %v4087 = vpack.c.b16 %v3207, %v3199
        %v4088 = vpack.c.b16 %v3208, %v3200
        %v4089 = vpack.c.b16 %v3209, %v3201
        %v4090 = vpack.c.b16 %v3210, %v3202
        %v4091 = vpack.c.b16 %v3211, %v3203
        %v4092 = vpack.c.b16 %v3212, %v3204
        %v4093 = vpack.c.b16 %v3213, %v3205
        %v4094 = vpack.c.b16 %v3222, %v3214
        %v4095 = vpack.c.b16 %v3223, %v3215
        %v4096 = vpack.c.b16 %v3224, %v3216
        %v4097 = vpack.c.b16 %v3225, %v3217
        %v4098 = vpack.c.b16 %v3226, %v3218
        %v4099 = vpack.c.b16 %v3227, %v3219
        %v4100 = vpack.c.b16 %v3228, %v3220
        %v4101 = vpack.c.b16 %v3229, %v3221
        %v4102 = vpack.c.b16 %v3238, %v3230
        %v4103 = vpack.c.b16 %v3239, %v3231
        %v4104 = vpack.c.b16 %v3240, %v3232
        %v4105 = vpack.c.b16 %v3241, %v3233
        %v4106 = vpack.c.b16 %v3242, %v3234
        %v4107 = vpack.c.b16 %v3243, %v3235
        %v4108 = vpack.c.b16 %v3244, %v3236
        %v4109 = vpack.c.b16 %v3245, %v3237
        %v4110 = vpack.c.b16 %v3254, %v3246
        %v4111 = vpack.c.b16 %v3255, %v3247
        %v4112 = vpack.c.b16 %v3256, %v3248
        %v4113 = vpack.c.b16 %v3257, %v3249
        %v4114 = vpack.c.b16 %v3258, %v3250
        %v4115 = vpack.c.b16 %v3259, %v3251
        %v4116 = vpack.c.b16 %v3260, %v3252
        %v4117 = vpack.c.b16 %v3261, %v3253
        %v4118 = vpack.c.b16 %v3270, %v3262
        %v4119 = vpack.c.b16 %v3271, %v3263
        %v4120 = vpack.c.b16 %v3272, %v3264
        %v4121 = vpack.c.b16 %v3273, %v3265
        %v4122 = vpack.c.b16 %v3274, %v3266
        %v4123 = vpack.c.b16 %v3275, %v3267
        %v4124 = vpack.c.b16 %v3276, %v3268
        %v4125 = vpack.c.b16 %v3277, %v3269
        %v4126 = vpack.c.b16 %v3286, %v3278
        %v4127 = vpack.c.b16 %v3287, %v3279
        %v4128 = vpack.c.b16 %v3288, %v3280
        %v4129 = vpack.c.b16 %v3289, %v3281
        %v4130 = vpack.c.b16 %v3290, %v3282
        %v4131 = vpack.c.b16 %v3291, %v3283
        %v4132 = vpack.c.b16 %v3292, %v3284
        %v4133 = vpack.c.b16 %v3293, %v3285
        %v4134 = vpack.c.b16 %v3302, %v3294
        %v4135 = vpack.c.b16 %v3303, %v3295
        %v4136 = vpack.c.b16 %v3304, %v3296
        %v4137 = vpack.c.b16 %v3305, %v3297
        %v4138 = vpack.c.b16 %v3306, %v3298
        %v4139 = vpack.c.b16 %v3307, %v3299
        %v4140 = vpack.c.b16 %v3308, %v3300
        %v4141 = vpack.c.b16 %v3309, %v3301
        %v4142 = vpack.c.b16 %v3318, %v3310
        %v4143 = vpack.c.b16 %v3319, %v3311
        %v4144 = vpack.c.b16 %v3320, %v3312
        %v4145 = vpack.c.b16 %v3321, %v3313
        %v4146 = vpack.c.b16 %v3322, %v3314
        %v4147 = vpack.c.b16 %v3323, %v3315
        %v4148 = vpack.c.b16 %v3324, %v3316
        %v4149 = vpack.c.b16 %v3325, %v3317
        %v4150 = vpack.c.b16 %v3334, %v3326
        %v4151 = vpack.c.b16 %v3335, %v3327
        %v4152 = vpack.c.b16 %v3336, %v3328
        %v4153 = vpack.c.b16 %v3337, %v3329
        %v4154 = vpack.c.b16 %v3338, %v3330
        %v4155 = vpack.c.b16 %v3339, %v3331
        %v4156 = vpack.c.b16 %v3340, %v3332
        %v4157 = vpack.c.b16 %v3341, %v3333
        %v4158 = vpack.c.b16 %v3350, %v3342
        %v4159 = vpack.c.b16 %v3351, %v3343
        %v4160 = vpack.c.b16 %v3352, %v3344
        %v4161 = vpack.c.b16 %v3353, %v3345
        %v4162 = vpack.c.b16 %v3354, %v3346
        %v4163 = vpack.c.b16 %v3355, %v3347
        %v4164 = vpack.c.b16 %v3356, %v3348
        %v4165 = vpack.c.b16 %v3357, %v3349
        %v4166 = vpack.c.b16 %v3366, %v3358
        %v4167 = vpack.c.b16 %v3367, %v3359
        %v4168 = vpack.c.b16 %v3368, %v3360
        %v4169 = vpack.c.b16 %v3369, %v3361
        %v4170 = vpack.c.b16 %v3370, %v3362
        %v4171 = vpack.c.b16 %v3371, %v3363
        %v4172 = vpack.c.b16 %v3372, %v3364
        %v4173 = vpack.c.b16 %v3373, %v3365
        %v4174 = vpack.c.b16 %v3382, %v3374
        %v4175 = vpack.c.b16 %v3383, %v3375
        %v4176 = vpack.c.b16 %v3384, %v3376
        %v4177 = vpack.c.b16 %v3385, %v3377
        %v4178 = vpack.c.b16 %v3386, %v3378
        %v4179 = vpack.c.b16 %v3387, %v3379
        %v4180 = vpack.c.b16 %v3388, %v3380
        %v4181 = vpack.c.b16 %v3389, %v3381
        %v4182 = vpack.c.b16 %v3398, %v3390
        %v4183 = vpack.c.b16 %v3399, %v3391
        %v4184 = vpack.c.b16 %v3400, %v3392
        %v4185 = vpack.c.b16 %v3401, %v3393
        %v4186 = vpack.c.b16 %v3402, %v3394
        %v4187 = vpack.c.b16 %v3403, %v3395
        %v4188 = vpack.c.b16 %v3404, %v3396
        %v4189 = vpack.c.b16 %v3405, %v3397
        %v4190 = vpack.c.b16 %v3414, %v3406
        %v4191 = vpack.c.b16 %v3415, %v3407
        %v4192 = vpack.c.b16 %v3416, %v3408
        %v4193 = vpack.c.b16 %v3417, %v3409
        %v4194 = vpack.c.b16 %v3418, %v3410
        %v4195 = vpack.c.b16 %v3419, %v3411
        %v4196 = vpack.c.b16 %v3420, %v3412
        %v4197 = vpack.c.b16 %v3421, %v3413
        %v4198 = vpack.c.b16 %v3430, %v3422
        %v4199 = vpack.c.b16 %v3431, %v3423
        %v4200 = vpack.c.b16 %v3432, %v3424
        %v4201 = vpack.c.b16 %v3433, %v3425
        %v4202 = vpack.c.b16 %v3434, %v3426
        %v4203 = vpack.c.b16 %v3435, %v3427
        %v4204 = vpack.c.b16 %v3436, %v3428
        %v4205 = vpack.c.b16 %v3437, %v3429
        %v4206 = vpack.c.b16 %v3446, %v3438
        %v4207 = vpack.c.b16 %v3447, %v3439
        %v4208 = vpack.c.b16 %v3448, %v3440
        %v4209 = vpack.c.b16 %v3449, %v3441
        %v4210 = vpack.c.b16 %v3450, %v3442
        %v4211 = vpack.c.b16 %v3451, %v3443
        %v4212 = vpack.c.b16 %v3452, %v3444
        %v4213 = vpack.c.b16 %v3453, %v3445
        %v4214 = vpack.c.b16 %v3462, %v3454
        %v4215 = vpack.c.b16 %v3463, %v3455
        %v4216 = vpack.c.b16 %v3464, %v3456
        %v4217 = vpack.c.b16 %v3465, %v3457
        %v4218 = vpack.c.b16 %v3466, %v3458
        %v4219 = vpack.c.b16 %v3467, %v3459
        %v4220 = vpack.c.b16 %v3468, %v3460
        %v4221 = vpack.c.b16 %v3469, %v3461
        %v4222 = vpack.c.b16 %v3478, %v3470
        %v4223 = vpack.c.b16 %v3479, %v3471
        %v4224 = vpack.c.b16 %v3480, %v3472
        %v4225 = vpack.c.b16 %v3481, %v3473
        %v4226 = vpack.c.b16 %v3482, %v3474
        %v4227 = vpack.c.b16 %v3483, %v3475
        %v4228 = vpack.c.b16 %v3484, %v3476
        %v4229 = vpack.c.b16 %v3485, %v3477
        %v4230 = vpack.c.b16 %v3494, %v3486
        %v4231 = vpack.c.b16 %v3495, %v3487
        %v4232 = vpack.c.b16 %v3496, %v3488
        %v4233 = vpack.c.b16 %v3497, %v3489
        %v4234 = vpack.c.b16 %v3498, %v3490
        %v4235 = vpack.c.b16 %v3499, %v3491
        %v4236 = vpack.c.b16 %v3500, %v3492
        %v4237 = vpack.c.b16 %v3501, %v3493
        %v4238 = vpack.c.b16 %v3510, %v3502
        %v4239 = vpack.c.b16 %v3511, %v3503
        %v4240 = vpack.c.b16 %v3512, %v3504
        %v4241 = vpack.c.b16 %v3513, %v3505
        %v4242 = vpack.c.b16 %v3514, %v3506
        %v4243 = vpack.c.b16 %v3515, %v3507
        %v4244 = vpack.c.b16 %v3516, %v3508
        %v4245 = vpack.c.b16 %v3517, %v3509
        %v4246 = vpack.c.b16 %v3526, %v3518
        %v4247 = vpack.c.b16 %v3527, %v3519
        %v4248 = vpack.c.b16 %v3528, %v3520
        %v4249 = vpack.c.b16 %v3529, %v3521
        %v4250 = vpack.c.b16 %v3530, %v3522
        %v4251 = vpack.c.b16 %v3531, %v3523
        %v4252 = vpack.c.b16 %v3532, %v3524
        %v4253 = vpack.c.b16 %v3533, %v3525
        %v4254 = vpack.c.b16 %v3542, %v3534
        %v4255 = vpack.c.b16 %v3543, %v3535
        %v4256 = vpack.c.b16 %v3544, %v3536
        %v4257 = vpack.c.b16 %v3545, %v3537
        %v4258 = vpack.c.b16 %v3546, %v3538
        %v4259 = vpack.c.b16 %v3547, %v3539
        %v4260 = vpack.c.b16 %v3548, %v3540
        %v4261 = vpack.c.b16 %v3549, %v3541
        %v4262 = vpack.c.b16 %v3558, %v3550
        %v4263 = vpack.c.b16 %v3559, %v3551
        %v4264 = vpack.c.b16 %v3560, %v3552
        %v4265 = vpack.c.b16 %v3561, %v3553
        %v4266 = vpack.c.b16 %v3562, %v3554
        %v4267 = vpack.c.b16 %v3563, %v3555
        %v4268 = vpack.c.b16 %v3564, %v3556
        %v4269 = vpack.c.b16 %v3565, %v3557
        %v4270 = vpack.c.b16 %v3574, %v3566
        %v4271 = vpack.c.b16 %v3575, %v3567
        %v4272 = vpack.c.b16 %v3576, %v3568
        %v4273 = vpack.c.b16 %v3577, %v3569
        %v4274 = vpack.c.b16 %v3578, %v3570
        %v4275 = vpack.c.b16 %v3579, %v3571
        %v4276 = vpack.c.b16 %v3580, %v3572
        %v4277 = vpack.c.b16 %v3581, %v3573
        %v4278 = vpack.c.b16 %v3590, %v3582
        %v4279 = vpack.c.b16 %v3591, %v3583
        %v4280 = vpack.c.b16 %v3592, %v3584
        %v4281 = vpack.c.b16 %v3593, %v3585
        %v4282 = vpack.c.b16 %v3594, %v3586
        %v4283 = vpack.c.b16 %v3595, %v3587
        %v4284 = vpack.c.b16 %v3596, %v3588
        %v4285 = vpack.c.b16 %v3597, %v3589
        %v4286 = vpack.c.b16 %v3606, %v3598
        %v4287 = vpack.c.b16 %v3607, %v3599
        %v4288 = vpack.c.b16 %v3608, %v3600
        %v4289 = vpack.c.b16 %v3609, %v3601
        %v4290 = vpack.c.b16 %v3610, %v3602
        %v4291 = vpack.c.b16 %v3611, %v3603
        %v4292 = vpack.c.b16 %v3612, %v3604
        %v4293 = vpack.c.b16 %v3613, %v3605
        %v4294 = vpack.c.b16 %v3622, %v3614
        %v4295 = vpack.c.b16 %v3623, %v3615
        %v4296 = vpack.c.b16 %v3624, %v3616
        %v4297 = vpack.c.b16 %v3625, %v3617
        %v4298 = vpack.c.b16 %v3626, %v3618
        %v4299 = vpack.c.b16 %v3627, %v3619
        %v4300 = vpack.c.b16 %v3628, %v3620
        %v4301 = vpack.c.b16 %v3629, %v3621
        %v4302 = vpack.c.b16 %v3638, %v3630
        %v4303 = vpack.c.b16 %v3639, %v3631
        %v4304 = vpack.c.b16 %v3640, %v3632
        %v4305 = vpack.c.b16 %v3641, %v3633
        %v4306 = vpack.c.b16 %v3642, %v3634
        %v4307 = vpack.c.b16 %v3643, %v3635
        %v4308 = vpack.c.b16 %v3644, %v3636
        %v4309 = vpack.c.b16 %v3645, %v3637
        %v4310 = vpack.c.b16 %v3654, %v3646
        %v4311 = vpack.c.b16 %v3655, %v3647
        %v4312 = vpack.c.b16 %v3656, %v3648
        %v4313 = vpack.c.b16 %v3657, %v3649
        %v4314 = vpack.c.b16 %v3658, %v3650
        %v4315 = vpack.c.b16 %v3659, %v3651
        %v4316 = vpack.c.b16 %v3660, %v3652
        %v4317 = vpack.c.b16 %v3661, %v3653
        %v4318 = vpack.c.b16 %v3670, %v3662
        %v4319 = vpack.c.b16 %v3671, %v3663
        %v4320 = vpack.c.b16 %v3672, %v3664
        %v4321 = vpack.c.b16 %v3673, %v3665
        %v4322 = vpack.c.b16 %v3674, %v3666
        %v4323 = vpack.c.b16 %v3675, %v3667
        %v4324 = vpack.c.b16 %v3676, %v3668
        %v4325 = vpack.c.b16 %v3677, %v3669
        %v4326 = vpack.c.b16 %v3686, %v3678
        %v4327 = vpack.c.b16 %v3687, %v3679
        %v4328 = vpack.c.b16 %v3688, %v3680
        %v4329 = vpack.c.b16 %v3689, %v3681
        %v4330 = vpack.c.b16 %v3690, %v3682
        %v4331 = vpack.c.b16 %v3691, %v3683
        %v4332 = vpack.c.b16 %v3692, %v3684
        %v4333 = vpack.c.b16 %v3693, %v3685
        %v4334 = vpack.c.b16 %v3702, %v3694
        %v4335 = vpack.c.b16 %v3703, %v3695
        %v4336 = vpack.c.b16 %v3704, %v3696
        %v4337 = vpack.c.b16 %v3705, %v3697
        %v4338 = vpack.c.b16 %v3706, %v3698
        %v4339 = vpack.c.b16 %v3707, %v3699
        %v4340 = vpack.c.b16 %v3708, %v3700
        %v4341 = vpack.c.b16 %v3709, %v3701
        %v4342 = vpack.c.b16 %v3718, %v3710
        %v4343 = vpack.c.b16 %v3719, %v3711
        %v4344 = vpack.c.b16 %v3720, %v3712
        %v4345 = vpack.c.b16 %v3721, %v3713
        %v4346 = vpack.c.b16 %v3722, %v3714
        %v4347 = vpack.c.b16 %v3723, %v3715
        %v4348 = vpack.c.b16 %v3724, %v3716
        %v4349 = vpack.c.b16 %v3725, %v3717
        %v4350 = vpack.c.b16 %v3734, %v3726
        %v4351 = vpack.c.b16 %v3735, %v3727
        %v4352 = vpack.c.b16 %v3736, %v3728
        %v4353 = vpack.c.b16 %v3737, %v3729
        %v4354 = vpack.c.b16 %v3738, %v3730
        %v4355 = vpack.c.b16 %v3739, %v3731
        %v4356 = vpack.c.b16 %v3740, %v3732
        %v4357 = vpack.c.b16 %v3741, %v3733
        %v4358 = vpack.c.b16 %v3750, %v3742
        %v4359 = vpack.c.b16 %v3751, %v3743
        %v4360 = vpack.c.b16 %v3752, %v3744
        %v4361 = vpack.c.b16 %v3753, %v3745
        %v4362 = vpack.c.b16 %v3754, %v3746
        %v4363 = vpack.c.b16 %v3755, %v3747
        %v4364 = vpack.c.b16 %v3756, %v3748
        %v4365 = vpack.c.b16 %v3757, %v3749
        %v4366 = vpack.c.b16 %v3766, %v3758
        %v4367 = vpack.c.b16 %v3767, %v3759
        %v4368 = vpack.c.b16 %v3768, %v3760
        %v4369 = vpack.c.b16 %v3769, %v3761
        %v4370 = vpack.c.b16 %v3770, %v3762
        %v4371 = vpack.c.b16 %v3771, %v3763
        %v4372 = vpack.c.b16 %v3772, %v3764
        %v4373 = vpack.c.b16 %v3773, %v3765
        %v4374 = vpack.c.b16 %v3782, %v3774
        %v4375 = vpack.c.b16 %v3783, %v3775
        %v4376 = vpack.c.b16 %v3784, %v3776
        %v4377 = vpack.c.b16 %v3785, %v3777
        %v4378 = vpack.c.b16 %v3786, %v3778
        %v4379 = vpack.c.b16 %v3787, %v3779
        %v4380 = vpack.c.b16 %v3788, %v3780
        %v4381 = vpack.c.b16 %v3789, %v3781
        %v4382 = vpack.c.b16 %v3798, %v3790
        %v4383 = vpack.c.b16 %v3799, %v3791
        %v4384 = vpack.c.b16 %v3800, %v3792
        %v4385 = vpack.c.b16 %v3801, %v3793
        %v4386 = vpack.c.b16 %v3802, %v3794
        %v4387 = vpack.c.b16 %v3803, %v3795
        %v4388 = vpack.c.b16 %v3804, %v3796
        %v4389 = vpack.c.b16 %v3805, %v3797
        %v4390 = vpack.c.b16 %v3814, %v3806
        %v4391 = vpack.c.b16 %v3815, %v3807
        %v4392 = vpack.c.b16 %v3816, %v3808
        %v4393 = vpack.c.b16 %v3817, %v3809
        %v4394 = vpack.c.b16 %v3818, %v3810
        %v4395 = vpack.c.b16 %v3819, %v3811
        %v4396 = vpack.c.b16 %v3820, %v3812
        %v4397 = vpack.c.b16 %v3821, %v3813
        %v4398 = vpack.c.b16 %v3830, %v3822
        %v4399 = vpack.c.b16 %v3831, %v3823
        %v4400 = vpack.c.b16 %v3832, %v3824
        %v4401 = vpack.c.b16 %v3833, %v3825
        %v4402 = vpack.c.b16 %v3834, %v3826
        %v4403 = vpack.c.b16 %v3835, %v3827
        %v4404 = vpack.c.b16 %v3836, %v3828
        %v4405 = vpack.c.b16 %v3837, %v3829
        %v4406 = vpack.c.b16 %v3846, %v3838
        %v4407 = vpack.c.b16 %v3847, %v3839
        %v4408 = vpack.c.b16 %v3848, %v3840
        %v4409 = vpack.c.b16 %v3849, %v3841
        %v4410 = vpack.c.b16 %v3850, %v3842
        %v4411 = vpack.c.b16 %v3851, %v3843
        %v4412 = vpack.c.b16 %v3852, %v3844
        %v4413 = vpack.c.b16 %v3853, %v3845
        %v4414 = vpack.c.b16 %v3862, %v3854
        %v4415 = vpack.c.b16 %v3863, %v3855
        %v4416 = vpack.c.b16 %v3864, %v3856
        %v4417 = vpack.c.b16 %v3865, %v3857
        %v4418 = vpack.c.b16 %v3866, %v3858
        %v4419 = vpack.c.b16 %v3867, %v3859
        %v4420 = vpack.c.b16 %v3868, %v3860
        %v4421 = vpack.c.b16 %v3869, %v3861
        %v4422 = vpack.c.b16 %v3878, %v3870
        %v4423 = vpack.c.b16 %v3879, %v3871
        %v4424 = vpack.c.b16 %v3880, %v3872
        %v4425 = vpack.c.b16 %v3881, %v3873
        %v4426 = vpack.c.b16 %v3882, %v3874
        %v4427 = vpack.c.b16 %v3883, %v3875
        %v4428 = vpack.c.b16 %v3884, %v3876
        %v4429 = vpack.c.b16 %v3885, %v3877
        %v4430 = vpack.c.b16 %v3894, %v3886
        %v4431 = vpack.c.b16 %v3895, %v3887
        %v4432 = vpack.c.b16 %v3896, %v3888
        %v4433 = vpack.c.b16 %v3897, %v3889
        %v4434 = vpack.c.b16 %v3898, %v3890
        %v4435 = vpack.c.b16 %v3899, %v3891
        %v4436 = vpack.c.b16 %v3900, %v3892
        %v4437 = vpack.c.b16 %v3901, %v3893
        %v4438 = vpack.c.b16 %v3910, %v3902
        %v4439 = vpack.c.b16 %v3911, %v3903
        %v4440 = vpack.c.b16 %v3912, %v3904
        %v4441 = vpack.c.b16 %v3913, %v3905
        %v4442 = vpack.c.b16 %v3914, %v3906
        %v4443 = vpack.c.b16 %v3915, %v3907
        %v4444 = vpack.c.b16 %v3916, %v3908
        %v4445 = vpack.c.b16 %v3917, %v3909
        %v4446 = vpack.c.b16 %v3926, %v3918
        %v4447 = vpack.c.b16 %v3927, %v3919
        %v4448 = vpack.c.b16 %v3928, %v3920
        %v4449 = vpack.c.b16 %v3929, %v3921
        %v4450 = vpack.c.b16 %v3930, %v3922
        %v4451 = vpack.c.b16 %v3931, %v3923
        %v4452 = vpack.c.b16 %v3932, %v3924
        %v4453 = vpack.c.b16 %v3933, %v3925
        %v4454 = vpack.c.b16 %v3942, %v3934
        %v4455 = vpack.c.b16 %v3943, %v3935
        %v4456 = vpack.c.b16 %v3944, %v3936
        %v4457 = vpack.c.b16 %v3945, %v3937
        %v4458 = vpack.c.b16 %v3946, %v3938
        %v4459 = vpack.c.b16 %v3947, %v3939
        %v4460 = vpack.c.b16 %v3948, %v3940
        %v4461 = vpack.c.b16 %v3949, %v3941
        %4974 = vmatprep.subr.bf16.mxu0 %v3951
        %4975 = vmatpush1.bf16.msra.mxu0 %v3950
        %4976 = vmatprep.subr.bf16.mxu0 %v3959
        %4977 = vmatpush1.bf16.msra.mxu0 %v3958
        %4978 = vmatprep.subr.bf16.mxu0 %v3967
        %4979 = vmatpush1.bf16.msra.mxu0 %v3966
        %4980 = vmatprep.subr.bf16.mxu0 %v3975
        %4981 = vmatpush1.bf16.msra.mxu0 %v3974
        %4982 = vmatprep.subr.bf16.mxu0 %v3983
        %4983 = vmatpush1.bf16.msra.mxu0 %v3982
        %4984 = vmatprep.subr.bf16.mxu0 %v3991
        %4985 = vmatpush1.bf16.msra.mxu0 %v3990
        %4986 = vmatprep.subr.bf16.mxu0 %v3999
        %4987 = vmatpush1.bf16.msra.mxu0 %v3998
        %4988 = vmatprep.subr.bf16.mxu0 %v4007
        %4989 = vmatpush1.bf16.msra.mxu0 %v4006
        %4990 = vmatprep.subr.bf16.mxu0 %v4015
        %4991 = vmatpush1.bf16.msra.mxu0 %v4014
        %4992 = vmatprep.subr.bf16.mxu0 %v4023
        %4993 = vmatpush1.bf16.msra.mxu0 %v4022
        %4994 = vmatprep.subr.bf16.mxu0 %v4031
        %4995 = vmatpush1.bf16.msra.mxu0 %v4030
        %4996 = vmatprep.subr.bf16.mxu0 %v4039
        %4997 = vmatpush1.bf16.msra.mxu0 %v4038
        %4998 = vmatprep.subr.bf16.mxu0 %v4047
        %4999 = vmatpush1.bf16.msra.mxu0 %v4046
        %5000 = vmatprep.subr.bf16.mxu0 %v4055
        %5001 = vmatpush1.bf16.msra.mxu0 %v4054
        %5002 = vmatprep.subr.bf16.mxu0 %v4063
        %5003 = vmatpush1.bf16.msra.mxu0 %v4062
        %5004 = vmatprep.subr.bf16.mxu0 %v4071
        %5005 = vmatpush1.bf16.msra.mxu0 %v4070
        %5006 = vmatprep.mubr.bf16.mxu0 %v1839
        %5007 = vmatmul.mubr.bf16.gmra.mrb[0].mxu0 %v1838
        %v5008 = vpop.f32.mrb[0].mxu0
        %v5009 = vadd.f32 0.0, %v5008
        %v5010 = vpop.f32.mrb[0].mxu0
        %v5011 = vadd.f32 0.0, %v5010
        %v5012 = vpop.f32.mrb[0].mxu0
        %v5013 = vadd.f32 0.0, %v5012
        %v5014 = vpop.f32.mrb[0].mxu0
        %v5015 = vadd.f32 0.0, %v5014
        %5016 = vmatprep.mubr.bf16.mxu0 %v1847
        %5017 = vmatmul.mubr.bf16.gmra.mrb[0].mxu0 %v1846
        %v5018 = vpop.f32.mrb[0].mxu0
        %v5019 = vadd.f32 0.0, %v5018
        %v5020 = vpop.f32.mrb[0].mxu0
        %v5021 = vadd.f32 0.0, %v5020
        %v5022 = vpop.f32.mrb[0].mxu0
        %v5023 = vadd.f32 0.0, %v5022
        %v5024 = vpop.f32.mrb[0].mxu0
        %v5025 = vadd.f32 0.0, %v5024
        %5026 = vmatprep.mubr.bf16.mxu0 %v1855
        %5027 = vmatmul.mubr.bf16.gmra.mrb[0].mxu0 %v1854
        %v5028 = vpop.f32.mrb[0].mxu0
        %v5029 = vadd.f32 0.0, %v5028
        %v5030 = vpop.f32.mrb[0].mxu0
        %v5031 = vadd.f32 0.0, %v5030
        %v5032 = vpop.f32.mrb[0].mxu0
        %v5033 = vadd.f32 0.0, %v5032
        %v5034 = vpop.f32.mrb[0].mxu0
        %v5035 = vadd.f32 0.0, %v5034
        %5036 = vmatprep.mubr.bf16.mxu0 %v1863
        %5037 = vmatmul.mubr.bf16.gmra.mrb[0].mxu0 %v1862
        %v5038 = vpop.f32.mrb[0].mxu0
        %v5039 = vadd.f32 0.0, %v5038
        %v5040 = vpop.f32.mrb[0].mxu0
        %v5041 = vadd.f32 0.0, %v5040
        %v5042 = vpop.f32.mrb[0].mxu0
        %v5043 = vadd.f32 0.0, %v5042
        %v5044 = vpop.f32.mrb[0].mxu0
        %v5045 = vadd.f32 0.0, %v5044
        %5046 = vmatprep.mubr.bf16.mxu0 %v1871
        %5047 = vmatmul.mubr.bf16.gmra.mrb[0].mxu0 %v1870
        %v5048 = vpop.f32.mrb[0].mxu0
        %v5049 = vadd.f32 0.0, %v5048
        %v5050 = vpop.f32.mrb[0].mxu0
        %v5051 = vadd.f32 0.0, %v5050
        %v5052 = vpop.f32.mrb[0].mxu0
        %v5053 = vadd.f32 0.0, %v5052
        %v5054 = vpop.f32.mrb[0].mxu0
        %v5055 = vadd.f32 0.0, %v5054
        %5056 = vmatprep.mubr.bf16.mxu0 %v1879
        %5057 = vmatmul.mubr.bf16.gmra.mrb[0].mxu0 %v1878
        %v5058 = vpop.f32.mrb[0].mxu0
        %v5059 = vadd.f32 0.0, %v5058
        %v5060 = vpop.f32.mrb[0].mxu0
        %v5061 = vadd.f32 0.0, %v5060
        %v5062 = vpop.f32.mrb[0].mxu0
        %v5063 = vadd.f32 0.0, %v5062
        %v5064 = vpop.f32.mrb[0].mxu0
        %v5065 = vadd.f32 0.0, %v5064
        %5066 = vmatprep.mubr.bf16.mxu0 %v1887
        %5067 = vmatmul.mubr.bf16.gmra.mrb[0].mxu0 %v1886
        %v5068 = vpop.f32.mrb[0].mxu0
        %v5069 = vadd.f32 0.0, %v5068
        %v5070 = vpop.f32.mrb[0].mxu0
        %v5071 = vadd.f32 0.0, %v5070
        %v5072 = vpop.f32.mrb[0].mxu0
        %v5073 = vadd.f32 0.0, %v5072
        %v5074 = vpop.f32.mrb[0].mxu0
        %v5075 = vadd.f32 0.0, %v5074
        %5076 = vmatprep.mubr.bf16.mxu0 %v1895
        %5077 = vmatmul.mubr.bf16.gmra.mrb[0].mxu0 %v1894
        %v5078 = vpop.f32.mrb[0].mxu0
        %v5079 = vadd.f32 0.0, %v5078
        %v5080 = vpop.f32.mrb[0].mxu0
        %v5081 = vadd.f32 0.0, %v5080
        %v5082 = vpop.f32.mrb[0].mxu0
        %v5083 = vadd.f32 0.0, %v5082
        %v5084 = vpop.f32.mrb[0].mxu0
        %v5085 = vadd.f32 0.0, %v5084
        %5086 = vdwg.mxu0
        %5087 = vmatprep.subr.bf16.mxu0 %v4079
        %5088 = vmatpush1.bf16.msra.mxu0 %v4078
        %5089 = vmatprep.subr.bf16.mxu0 %v4087
        %5090 = vmatpush1.bf16.msra.mxu0 %v4086
        %5091 = vmatprep.subr.bf16.mxu0 %v4095
        %5092 = vmatpush1.bf16.msra.mxu0 %v4094
        %5093 = vmatprep.subr.bf16.mxu0 %v4103
        %5094 = vmatpush1.bf16.msra.mxu0 %v4102
        %5095 = vmatprep.subr.bf16.mxu0 %v4111
        %5096 = vmatpush1.bf16.msra.mxu0 %v4110
        %5097 = vmatprep.subr.bf16.mxu0 %v4119
        %5098 = vmatpush1.bf16.msra.mxu0 %v4118
        %5099 = vmatprep.subr.bf16.mxu0 %v4127
        %5100 = vmatpush1.bf16.msra.mxu0 %v4126
        %5101 = vmatprep.subr.bf16.mxu0 %v4135
        %5102 = vmatpush1.bf16.msra.mxu0 %v4134
        %5103 = vmatprep.subr.bf16.mxu0 %v4143
        %5104 = vmatpush1.bf16.msra.mxu0 %v4142
        %5105 = vmatprep.subr.bf16.mxu0 %v4151
        %5106 = vmatpush1.bf16.msra.mxu0 %v4150
        %5107 = vmatprep.subr.bf16.mxu0 %v4159
        %5108 = vmatpush1.bf16.msra.mxu0 %v4158
        %5109 = vmatprep.subr.bf16.mxu0 %v4167
        %5110 = vmatpush1.bf16.msra.mxu0 %v4166
        %5111 = vmatprep.subr.bf16.mxu0 %v4175
        %5112 = vmatpush1.bf16.msra.mxu0 %v4174
        %5113 = vmatprep.subr.bf16.mxu0 %v4183
        %5114 = vmatpush1.bf16.msra.mxu0 %v4182
        %5115 = vmatprep.subr.bf16.mxu0 %v4191
        %5116 = vmatpush1.bf16.msra.mxu0 %v4190
        %5117 = vmatprep.subr.bf16.mxu0 %v4199
        %5118 = vmatpush1.bf16.msra.mxu0 %v4198
        %5119 = vmatprep.mubr.bf16.mxu0 %v1841
        %5120 = vmatmul.mubr.bf16.gmra.mrb[0].mxu0 %v1840
        %v5121 = vpop.f32.mrb[0].mxu0
        %v5122 = vadd.f32 %v5009, %v5121
        %v5123 = vpop.f32.mrb[0].mxu0
        %v5124 = vadd.f32 %v5011, %v5123
        %v5125 = vpop.f32.mrb[0].mxu0
        %v5126 = vadd.f32 %v5013, %v5125
        %v5127 = vpop.f32.mrb[0].mxu0
        %v5128 = vadd.f32 %v5015, %v5127
        %5129 = vmatprep.mubr.bf16.mxu0 %v1849
        %5130 = vmatmul.mubr.bf16.gmra.mrb[0].mxu0 %v1848
        %v5131 = vpop.f32.mrb[0].mxu0
        %v5132 = vadd.f32 %v5019, %v5131
        %v5133 = vpop.f32.mrb[0].mxu0
        %v5134 = vadd.f32 %v5021, %v5133
        %v5135 = vpop.f32.mrb[0].mxu0
        %v5136 = vadd.f32 %v5023, %v5135
        %v5137 = vpop.f32.mrb[0].mxu0
        %v5138 = vadd.f32 %v5025, %v5137
        %5139 = vmatprep.mubr.bf16.mxu0 %v1857
        %5140 = vmatmul.mubr.bf16.gmra.mrb[0].mxu0 %v1856
        %v5141 = vpop.f32.mrb[0].mxu0
        %v5142 = vadd.f32 %v5029, %v5141
        %v5143 = vpop.f32.mrb[0].mxu0
        %v5144 = vadd.f32 %v5031, %v5143
        %v5145 = vpop.f32.mrb[0].mxu0
        %v5146 = vadd.f32 %v5033, %v5145
        %v5147 = vpop.f32.mrb[0].mxu0
        %v5148 = vadd.f32 %v5035, %v5147
        %5149 = vmatprep.mubr.bf16.mxu0 %v1865
        %5150 = vmatmul.mubr.bf16.gmra.mrb[0].mxu0 %v1864
        %v5151 = vpop.f32.mrb[0].mxu0
        %v5152 = vadd.f32 %v5039, %v5151
        %v5153 = vpop.f32.mrb[0].mxu0
        %v5154 = vadd.f32 %v5041, %v5153
        %v5155 = vpop.f32.mrb[0].mxu0
        %v5156 = vadd.f32 %v5043, %v5155
        %v5157 = vpop.f32.mrb[0].mxu0
        %v5158 = vadd.f32 %v5045, %v5157
        %5159 = vmatprep.mubr.bf16.mxu0 %v1873
        %5160 = vmatmul.mubr.bf16.gmra.mrb[0].mxu0 %v1872
        %v5161 = vpop.f32.mrb[0].mxu0
        %v5162 = vadd.f32 %v5049, %v5161
        %v5163 = vpop.f32.mrb[0].mxu0
        %v5164 = vadd.f32 %v5051, %v5163
        %v5165 = vpop.f32.mrb[0].mxu0
        %v5166 = vadd.f32 %v5053, %v5165
        %v5167 = vpop.f32.mrb[0].mxu0
        %v5168 = vadd.f32 %v5055, %v5167
        %5169 = vmatprep.mubr.bf16.mxu0 %v1881
        %5170 = vmatmul.mubr.bf16.gmra.mrb[0].mxu0 %v1880
        %v5171 = vpop.f32.mrb[0].mxu0
        %v5172 = vadd.f32 %v5059, %v5171
        %v5173 = vpop.f32.mrb[0].mxu0
        %v5174 = vadd.f32 %v5061, %v5173
        %v5175 = vpop.f32.mrb[0].mxu0
        %v5176 = vadd.f32 %v5063, %v5175
        %v5177 = vpop.f32.mrb[0].mxu0
        %v5178 = vadd.f32 %v5065, %v5177
        %5179 = vmatprep.mubr.bf16.mxu0 %v1889
        %5180 = vmatmul.mubr.bf16.gmra.mrb[0].mxu0 %v1888
        %v5181 = vpop.f32.mrb[0].mxu0
        %v5182 = vadd.f32 %v5069, %v5181
        %v5183 = vpop.f32.mrb[0].mxu0
        %v5184 = vadd.f32 %v5071, %v5183
        %v5185 = vpop.f32.mrb[0].mxu0
        %v5186 = vadd.f32 %v5073, %v5185
        %v5187 = vpop.f32.mrb[0].mxu0
        %v5188 = vadd.f32 %v5075, %v5187
        %5189 = vmatprep.mubr.bf16.mxu0 %v1897
        %5190 = vmatmul.mubr.bf16.gmra.mrb[0].mxu0 %v1896
        %v5191 = vpop.f32.mrb[0].mxu0
        %v5192 = vadd.f32 %v5079, %v5191
        %v5193 = vpop.f32.mrb[0].mxu0
        %v5194 = vadd.f32 %v5081, %v5193
        %v5195 = vpop.f32.mrb[0].mxu0
        %v5196 = vadd.f32 %v5083, %v5195
        %v5197 = vpop.f32.mrb[0].mxu0
        %v5198 = vadd.f32 %v5085, %v5197
        %5199 = vdwg.mxu0
        %5200 = vmatprep.subr.bf16.mxu0 %v4207
        %5201 = vmatpush1.bf16.msra.mxu0 %v4206
        %5202 = vmatprep.subr.bf16.mxu0 %v4215
        %5203 = vmatpush1.bf16.msra.mxu0 %v4214
        %5204 = vmatprep.subr.bf16.mxu0 %v4223
        %5205 = vmatpush1.bf16.msra.mxu0 %v4222
        %5206 = vmatprep.subr.bf16.mxu0 %v4231
        %5207 = vmatpush1.bf16.msra.mxu0 %v4230
        %5208 = vmatprep.subr.bf16.mxu0 %v4239
        %5209 = vmatpush1.bf16.msra.mxu0 %v4238
        %5210 = vmatprep.subr.bf16.mxu0 %v4247
        %5211 = vmatpush1.bf16.msra.mxu0 %v4246
        %5212 = vmatprep.subr.bf16.mxu0 %v4255
        %5213 = vmatpush1.bf16.msra.mxu0 %v4254
        %5214 = vmatprep.subr.bf16.mxu0 %v4263
        %5215 = vmatpush1.bf16.msra.mxu0 %v4262
        %5216 = vmatprep.subr.bf16.mxu0 %v4271
        %5217 = vmatpush1.bf16.msra.mxu0 %v4270
        %5218 = vmatprep.subr.bf16.mxu0 %v4279
        %5219 = vmatpush1.bf16.msra.mxu0 %v4278
        %5220 = vmatprep.subr.bf16.mxu0 %v4287
        %5221 = vmatpush1.bf16.msra.mxu0 %v4286
        %5222 = vmatprep.subr.bf16.mxu0 %v4295
        %5223 = vmatpush1.bf16.msra.mxu0 %v4294
        %5224 = vmatprep.subr.bf16.mxu0 %v4303
        %5225 = vmatpush1.bf16.msra.mxu0 %v4302
        %5226 = vmatprep.subr.bf16.mxu0 %v4311
        %5227 = vmatpush1.bf16.msra.mxu0 %v4310
        %5228 = vmatprep.subr.bf16.mxu0 %v4319
        %5229 = vmatpush1.bf16.msra.mxu0 %v4318
        %5230 = vmatprep.subr.bf16.mxu0 %v4327
        %5231 = vmatpush1.bf16.msra.mxu0 %v4326
        %5232 = vmatprep.mubr.bf16.mxu0 %v1843
        %5233 = vmatmul.mubr.bf16.gmra.mrb[0].mxu0 %v1842
        %v5234 = vpop.f32.mrb[0].mxu0
        %v5235 = vadd.f32 %v5122, %v5234
        %v5236 = vpop.f32.mrb[0].mxu0
        %v5237 = vadd.f32 %v5124, %v5236
        %v5238 = vpop.f32.mrb[0].mxu0
        %v5239 = vadd.f32 %v5126, %v5238
        %v5240 = vpop.f32.mrb[0].mxu0
        %v5241 = vadd.f32 %v5128, %v5240
        %5242 = vmatprep.mubr.bf16.mxu0 %v1851
        %5243 = vmatmul.mubr.bf16.gmra.mrb[0].mxu0 %v1850
        %v5244 = vpop.f32.mrb[0].mxu0
        %v5245 = vadd.f32 %v5132, %v5244
        %v5246 = vpop.f32.mrb[0].mxu0
        %v5247 = vadd.f32 %v5134, %v5246
        %v5248 = vpop.f32.mrb[0].mxu0
        %v5249 = vadd.f32 %v5136, %v5248
        %v5250 = vpop.f32.mrb[0].mxu0
        %v5251 = vadd.f32 %v5138, %v5250
        %5252 = vmatprep.mubr.bf16.mxu0 %v1859
        %5253 = vmatmul.mubr.bf16.gmra.mrb[0].mxu0 %v1858
        %v5254 = vpop.f32.mrb[0].mxu0
        %v5255 = vadd.f32 %v5142, %v5254
        %v5256 = vpop.f32.mrb[0].mxu0
        %v5257 = vadd.f32 %v5144, %v5256
        %v5258 = vpop.f32.mrb[0].mxu0
        %v5259 = vadd.f32 %v5146, %v5258
        %v5260 = vpop.f32.mrb[0].mxu0
        %v5261 = vadd.f32 %v5148, %v5260
        %5262 = vmatprep.mubr.bf16.mxu0 %v1867
        %5263 = vmatmul.mubr.bf16.gmra.mrb[0].mxu0 %v1866
        %v5264 = vpop.f32.mrb[0].mxu0
        %v5265 = vadd.f32 %v5152, %v5264
        %v5266 = vpop.f32.mrb[0].mxu0
        %v5267 = vadd.f32 %v5154, %v5266
        %v5268 = vpop.f32.mrb[0].mxu0
        %v5269 = vadd.f32 %v5156, %v5268
        %v5270 = vpop.f32.mrb[0].mxu0
        %v5271 = vadd.f32 %v5158, %v5270
        %5272 = vmatprep.mubr.bf16.mxu0 %v1875
        %5273 = vmatmul.mubr.bf16.gmra.mrb[0].mxu0 %v1874
        %v5274 = vpop.f32.mrb[0].mxu0
        %v5275 = vadd.f32 %v5162, %v5274
        %v5276 = vpop.f32.mrb[0].mxu0
        %v5277 = vadd.f32 %v5164, %v5276
        %v5278 = vpop.f32.mrb[0].mxu0
        %v5279 = vadd.f32 %v5166, %v5278
        %v5280 = vpop.f32.mrb[0].mxu0
        %v5281 = vadd.f32 %v5168, %v5280
        %5282 = vmatprep.mubr.bf16.mxu0 %v1883
        %5283 = vmatmul.mubr.bf16.gmra.mrb[0].mxu0 %v1882
        %v5284 = vpop.f32.mrb[0].mxu0
        %v5285 = vadd.f32 %v5172, %v5284
        %v5286 = vpop.f32.mrb[0].mxu0
        %v5287 = vadd.f32 %v5174, %v5286
        %v5288 = vpop.f32.mrb[0].mxu0
        %v5289 = vadd.f32 %v5176, %v5288
        %v5290 = vpop.f32.mrb[0].mxu0
        %v5291 = vadd.f32 %v5178, %v5290
        %5292 = vmatprep.mubr.bf16.mxu0 %v1891
        %5293 = vmatmul.mubr.bf16.gmra.mrb[0].mxu0 %v1890
        %v5294 = vpop.f32.mrb[0].mxu0
        %v5295 = vadd.f32 %v5182, %v5294
        %v5296 = vpop.f32.mrb[0].mxu0
        %v5297 = vadd.f32 %v5184, %v5296
        %v5298 = vpop.f32.mrb[0].mxu0
        %v5299 = vadd.f32 %v5186, %v5298
        %v5300 = vpop.f32.mrb[0].mxu0
        %v5301 = vadd.f32 %v5188, %v5300
        %5302 = vmatprep.mubr.bf16.mxu0 %v1899
        %5303 = vmatmul.mubr.bf16.gmra.mrb[0].mxu0 %v1898
        %v5304 = vpop.f32.mrb[0].mxu0
        %v5305 = vadd.f32 %v5192, %v5304
        %v5306 = vpop.f32.mrb[0].mxu0
        %v5307 = vadd.f32 %v5194, %v5306
        %v5308 = vpop.f32.mrb[0].mxu0
        %v5309 = vadd.f32 %v5196, %v5308
        %v5310 = vpop.f32.mrb[0].mxu0
        %v5311 = vadd.f32 %v5198, %v5310
        %5312 = vdwg.mxu0
        %5313 = vmatprep.subr.bf16.mxu0 %v4335
        %5314 = vmatpush1.bf16.msra.mxu0 %v4334
        %5315 = vmatprep.subr.bf16.mxu0 %v4343
        %5316 = vmatpush1.bf16.msra.mxu0 %v4342
        %5317 = vmatprep.subr.bf16.mxu0 %v4351
        %5318 = vmatpush1.bf16.msra.mxu0 %v4350
        %5319 = vmatprep.subr.bf16.mxu0 %v4359
        %5320 = vmatpush1.bf16.msra.mxu0 %v4358
        %5321 = vmatprep.subr.bf16.mxu0 %v4367
        %5322 = vmatpush1.bf16.msra.mxu0 %v4366
        %5323 = vmatprep.subr.bf16.mxu0 %v4375
        %5324 = vmatpush1.bf16.msra.mxu0 %v4374
        %5325 = vmatprep.subr.bf16.mxu0 %v4383
        %5326 = vmatpush1.bf16.msra.mxu0 %v4382
        %5327 = vmatprep.subr.bf16.mxu0 %v4391
        %5328 = vmatpush1.bf16.msra.mxu0 %v4390
        %5329 = vmatprep.subr.bf16.mxu0 %v4399
        %5330 = vmatpush1.bf16.msra.mxu0 %v4398
        %5331 = vmatprep.subr.bf16.mxu0 %v4407
        %5332 = vmatpush1.bf16.msra.mxu0 %v4406
        %5333 = vmatprep.subr.bf16.mxu0 %v4415
        %5334 = vmatpush1.bf16.msra.mxu0 %v4414
        %5335 = vmatprep.subr.bf16.mxu0 %v4423
        %5336 = vmatpush1.bf16.msra.mxu0 %v4422
        %5337 = vmatprep.subr.bf16.mxu0 %v4431
        %5338 = vmatpush1.bf16.msra.mxu0 %v4430
        %5339 = vmatprep.subr.bf16.mxu0 %v4439
        %5340 = vmatpush1.bf16.msra.mxu0 %v4438
        %5341 = vmatprep.subr.bf16.mxu0 %v4447
        %5342 = vmatpush1.bf16.msra.mxu0 %v4446
        %5343 = vmatprep.subr.bf16.mxu0 %v4455
        %5344 = vmatpush1.bf16.msra.mxu0 %v4454
        %5345 = vmatprep.mubr.bf16.mxu0 %v1845
        %5346 = vmatmul.mubr.bf16.gmra.mrb[0].mxu0 %v1844
        %v5347 = vpop.f32.mrb[0].mxu0
        %v5348 = vadd.f32 %v5235, %v5347
        %v5349 = vpop.f32.mrb[0].mxu0
        %v5350 = vadd.f32 %v5237, %v5349
        %v5351 = vpop.f32.mrb[0].mxu0
        %v5352 = vadd.f32 %v5239, %v5351
        %v5353 = vpop.f32.mrb[0].mxu0
        %v5354 = vadd.f32 %v5241, %v5353
        %5355 = vmatprep.mubr.bf16.mxu0 %v1853
        %5356 = vmatmul.mubr.bf16.gmra.mrb[0].mxu0 %v1852
        %v5357 = vpop.f32.mrb[0].mxu0
        %v5358 = vadd.f32 %v5245, %v5357
        %v5359 = vpop.f32.mrb[0].mxu0
        %v5360 = vadd.f32 %v5247, %v5359
        %v5361 = vpop.f32.mrb[0].mxu0
        %v5362 = vadd.f32 %v5249, %v5361
        %v5363 = vpop.f32.mrb[0].mxu0
        %v5364 = vadd.f32 %v5251, %v5363
        %5365 = vmatprep.mubr.bf16.mxu0 %v1861
        %5366 = vmatmul.mubr.bf16.gmra.mrb[0].mxu0 %v1860
        %v5367 = vpop.f32.mrb[0].mxu0
        %v5368 = vadd.f32 %v5255, %v5367
        %v5369 = vpop.f32.mrb[0].mxu0
        %v5370 = vadd.f32 %v5257, %v5369
        %v5371 = vpop.f32.mrb[0].mxu0
        %v5372 = vadd.f32 %v5259, %v5371
        %v5373 = vpop.f32.mrb[0].mxu0
        %v5374 = vadd.f32 %v5261, %v5373
        %5375 = vmatprep.mubr.bf16.mxu0 %v1869
        %5376 = vmatmul.mubr.bf16.gmra.mrb[0].mxu0 %v1868
        %v5377 = vpop.f32.mrb[0].mxu0
        %v5378 = vadd.f32 %v5265, %v5377
        %v5379 = vpop.f32.mrb[0].mxu0
        %v5380 = vadd.f32 %v5267, %v5379
        %v5381 = vpop.f32.mrb[0].mxu0
        %v5382 = vadd.f32 %v5269, %v5381
        %v5383 = vpop.f32.mrb[0].mxu0
        %v5384 = vadd.f32 %v5271, %v5383
        %5385 = vmatprep.mubr.bf16.mxu0 %v1877
        %5386 = vmatmul.mubr.bf16.gmra.mrb[0].mxu0 %v1876
        %v5387 = vpop.f32.mrb[0].mxu0
        %v5388 = vadd.f32 %v5275, %v5387
        %v5389 = vpop.f32.mrb[0].mxu0
        %v5390 = vadd.f32 %v5277, %v5389
        %v5391 = vpop.f32.mrb[0].mxu0
        %v5392 = vadd.f32 %v5279, %v5391
        %v5393 = vpop.f32.mrb[0].mxu0
        %v5394 = vadd.f32 %v5281, %v5393
        %5395 = vmatprep.mubr.bf16.mxu0 %v1885
        %5396 = vmatmul.mubr.bf16.gmra.mrb[0].mxu0 %v1884
        %v5397 = vpop.f32.mrb[0].mxu0
        %v5398 = vadd.f32 %v5285, %v5397
        %v5399 = vpop.f32.mrb[0].mxu0
        %v5400 = vadd.f32 %v5287, %v5399
        %v5401 = vpop.f32.mrb[0].mxu0
        %v5402 = vadd.f32 %v5289, %v5401
        %v5403 = vpop.f32.mrb[0].mxu0
        %v5404 = vadd.f32 %v5291, %v5403
        %5405 = vmatprep.mubr.bf16.mxu0 %v1893
        %5406 = vmatmul.mubr.bf16.gmra.mrb[0].mxu0 %v1892
        %v5407 = vpop.f32.mrb[0].mxu0
        %v5408 = vadd.f32 %v5295, %v5407
        %v5409 = vpop.f32.mrb[0].mxu0
        %v5410 = vadd.f32 %v5297, %v5409
        %v5411 = vpop.f32.mrb[0].mxu0
        %v5412 = vadd.f32 %v5299, %v5411
        %v5413 = vpop.f32.mrb[0].mxu0
        %v5414 = vadd.f32 %v5301, %v5413
        %5415 = vmatprep.mubr.bf16.mxu0 %v1901
        %5416 = vmatmul.mubr.bf16.gmra.mrb[0].mxu0 %v1900
        %v5417 = vpop.f32.mrb[0].mxu0
        %v5418 = vadd.f32 %v5305, %v5417
        %v5419 = vpop.f32.mrb[0].mxu0
        %v5420 = vadd.f32 %v5307, %v5419
        %v5421 = vpop.f32.mrb[0].mxu0
        %v5422 = vadd.f32 %v5309, %v5421
        %v5423 = vpop.f32.mrb[0].mxu0
        %v5424 = vadd.f32 %v5311, %v5423
        %5425 = vdwg.mxu0
        %5426 = vmatprep.subr.bf16.mxu0 %v3953
        %5427 = vmatpush1.bf16.msra.mxu0 %v3952
        %5428 = vmatprep.subr.bf16.mxu0 %v3961
        %5429 = vmatpush1.bf16.msra.mxu0 %v3960
        %5430 = vmatprep.subr.bf16.mxu0 %v3969
        %5431 = vmatpush1.bf16.msra.mxu0 %v3968
        %5432 = vmatprep.subr.bf16.mxu0 %v3977
        %5433 = vmatpush1.bf16.msra.mxu0 %v3976
        %5434 = vmatprep.subr.bf16.mxu0 %v3985
        %5435 = vmatpush1.bf16.msra.mxu0 %v3984
        %5436 = vmatprep.subr.bf16.mxu0 %v3993
        %5437 = vmatpush1.bf16.msra.mxu0 %v3992
        %5438 = vmatprep.subr.bf16.mxu0 %v4001
        %5439 = vmatpush1.bf16.msra.mxu0 %v4000
        %5440 = vmatprep.subr.bf16.mxu0 %v4009
        %5441 = vmatpush1.bf16.msra.mxu0 %v4008
        %5442 = vmatprep.subr.bf16.mxu0 %v4017
        %5443 = vmatpush1.bf16.msra.mxu0 %v4016
        %5444 = vmatprep.subr.bf16.mxu0 %v4025
        %5445 = vmatpush1.bf16.msra.mxu0 %v4024
        %5446 = vmatprep.subr.bf16.mxu0 %v4033
        %5447 = vmatpush1.bf16.msra.mxu0 %v4032
        %5448 = vmatprep.subr.bf16.mxu0 %v4041
        %5449 = vmatpush1.bf16.msra.mxu0 %v4040
        %5450 = vmatprep.subr.bf16.mxu0 %v4049
        %5451 = vmatpush1.bf16.msra.mxu0 %v4048
        %5452 = vmatprep.subr.bf16.mxu0 %v4057
        %5453 = vmatpush1.bf16.msra.mxu0 %v4056
        %5454 = vmatprep.subr.bf16.mxu0 %v4065
        %5455 = vmatpush1.bf16.msra.mxu0 %v4064
        %5456 = vmatprep.subr.bf16.mxu0 %v4073
        %5457 = vmatpush1.bf16.msra.mxu0 %v4072
        %5458 = vmatprep.mubr.bf16.mxu0 %v1839
        %5459 = vmatmul.mubr.bf16.gmra.mrb[0].mxu0 %v1838
        %v5460 = vpop.f32.mrb[0].mxu0
        %v5461 = vadd.f32 0.0, %v5460
        %v5462 = vpop.f32.mrb[0].mxu0
        %v5463 = vadd.f32 0.0, %v5462
        %v5464 = vpop.f32.mrb[0].mxu0
        %v5465 = vadd.f32 0.0, %v5464
        %v5466 = vpop.f32.mrb[0].mxu0
        %v5467 = vadd.f32 0.0, %v5466
        %5468 = vmatprep.mubr.bf16.mxu0 %v1847
        %5469 = vmatmul.mubr.bf16.gmra.mrb[0].mxu0 %v1846
        %v5470 = vpop.f32.mrb[0].mxu0
        %v5471 = vadd.f32 0.0, %v5470
        %v5472 = vpop.f32.mrb[0].mxu0
        %v5473 = vadd.f32 0.0, %v5472
        %v5474 = vpop.f32.mrb[0].mxu0
        %v5475 = vadd.f32 0.0, %v5474
        %v5476 = vpop.f32.mrb[0].mxu0
        %v5477 = vadd.f32 0.0, %v5476
        %5478 = vmatprep.mubr.bf16.mxu0 %v1855
        %5479 = vmatmul.mubr.bf16.gmra.mrb[0].mxu0 %v1854
        %v5480 = vpop.f32.mrb[0].mxu0
        %v5481 = vadd.f32 0.0, %v5480
        %v5482 = vpop.f32.mrb[0].mxu0
        %v5483 = vadd.f32 0.0, %v5482
        %v5484 = vpop.f32.mrb[0].mxu0
        %v5485 = vadd.f32 0.0, %v5484
        %v5486 = vpop.f32.mrb[0].mxu0
        %v5487 = vadd.f32 0.0, %v5486
        %5488 = vmatprep.mubr.bf16.mxu0 %v1863
        %5489 = vmatmul.mubr.bf16.gmra.mrb[0].mxu0 %v1862
        %v5490 = vpop.f32.mrb[0].mxu0
        %v5491 = vadd.f32 0.0, %v5490
        %v5492 = vpop.f32.mrb[0].mxu0
        %v5493 = vadd.f32 0.0, %v5492
        %v5494 = vpop.f32.mrb[0].mxu0
        %v5495 = vadd.f32 0.0, %v5494
        %v5496 = vpop.f32.mrb[0].mxu0
        %v5497 = vadd.f32 0.0, %v5496
        %5498 = vmatprep.mubr.bf16.mxu0 %v1871
        %5499 = vmatmul.mubr.bf16.gmra.mrb[0].mxu0 %v1870
        %v5500 = vpop.f32.mrb[0].mxu0
        %v5501 = vadd.f32 0.0, %v5500
        %v5502 = vpop.f32.mrb[0].mxu0
        %v5503 = vadd.f32 0.0, %v5502
        %v5504 = vpop.f32.mrb[0].mxu0
        %v5505 = vadd.f32 0.0, %v5504
        %v5506 = vpop.f32.mrb[0].mxu0
        %v5507 = vadd.f32 0.0, %v5506
        %5508 = vmatprep.mubr.bf16.mxu0 %v1879
        %5509 = vmatmul.mubr.bf16.gmra.mrb[0].mxu0 %v1878
        %v5510 = vpop.f32.mrb[0].mxu0
        %v5511 = vadd.f32 0.0, %v5510
        %v5512 = vpop.f32.mrb[0].mxu0
        %v5513 = vadd.f32 0.0, %v5512
        %v5514 = vpop.f32.mrb[0].mxu0
        %v5515 = vadd.f32 0.0, %v5514
        %v5516 = vpop.f32.mrb[0].mxu0
        %v5517 = vadd.f32 0.0, %v5516
        %5518 = vmatprep.mubr.bf16.mxu0 %v1887
        %5519 = vmatmul.mubr.bf16.gmra.mrb[0].mxu0 %v1886
        %v5520 = vpop.f32.mrb[0].mxu0
        %v5521 = vadd.f32 0.0, %v5520
        %v5522 = vpop.f32.mrb[0].mxu0
        %v5523 = vadd.f32 0.0, %v5522
        %v5524 = vpop.f32.mrb[0].mxu0
        %v5525 = vadd.f32 0.0, %v5524
        %v5526 = vpop.f32.mrb[0].mxu0
        %v5527 = vadd.f32 0.0, %v5526
        %5528 = vmatprep.mubr.bf16.mxu0 %v1895
        %5529 = vmatmul.mubr.bf16.gmra.mrb[0].mxu0 %v1894
        %v5530 = vpop.f32.mrb[0].mxu0
        %v5531 = vadd.f32 0.0, %v5530
        %v5532 = vpop.f32.mrb[0].mxu0
        %v5533 = vadd.f32 0.0, %v5532
        %v5534 = vpop.f32.mrb[0].mxu0
        %v5535 = vadd.f32 0.0, %v5534
        %v5536 = vpop.f32.mrb[0].mxu0
        %v5537 = vadd.f32 0.0, %v5536
        %5538 = vdwg.mxu0
        %5539 = vmatprep.subr.bf16.mxu0 %v4081
        %5540 = vmatpush1.bf16.msra.mxu0 %v4080
        %5541 = vmatprep.subr.bf16.mxu0 %v4089
        %5542 = vmatpush1.bf16.msra.mxu0 %v4088
        %5543 = vmatprep.subr.bf16.mxu0 %v4097
        %5544 = vmatpush1.bf16.msra.mxu0 %v4096
        %5545 = vmatprep.subr.bf16.mxu0 %v4105
        %5546 = vmatpush1.bf16.msra.mxu0 %v4104
        %5547 = vmatprep.subr.bf16.mxu0 %v4113
        %5548 = vmatpush1.bf16.msra.mxu0 %v4112
        %5549 = vmatprep.subr.bf16.mxu0 %v4121
        %5550 = vmatpush1.bf16.msra.mxu0 %v4120
        %5551 = vmatprep.subr.bf16.mxu0 %v4129
        %5552 = vmatpush1.bf16.msra.mxu0 %v4128
        %5553 = vmatprep.subr.bf16.mxu0 %v4137
        %5554 = vmatpush1.bf16.msra.mxu0 %v4136
        %5555 = vmatprep.subr.bf16.mxu0 %v4145
        %5556 = vmatpush1.bf16.msra.mxu0 %v4144
        %5557 = vmatprep.subr.bf16.mxu0 %v4153
        %5558 = vmatpush1.bf16.msra.mxu0 %v4152
        %5559 = vmatprep.subr.bf16.mxu0 %v4161
        %5560 = vmatpush1.bf16.msra.mxu0 %v4160
        %5561 = vmatprep.subr.bf16.mxu0 %v4169
        %5562 = vmatpush1.bf16.msra.mxu0 %v4168
        %5563 = vmatprep.subr.bf16.mxu0 %v4177
        %5564 = vmatpush1.bf16.msra.mxu0 %v4176
        %5565 = vmatprep.subr.bf16.mxu0 %v4185
        %5566 = vmatpush1.bf16.msra.mxu0 %v4184
        %5567 = vmatprep.subr.bf16.mxu0 %v4193
        %5568 = vmatpush1.bf16.msra.mxu0 %v4192
        %5569 = vmatprep.subr.bf16.mxu0 %v4201
        %5570 = vmatpush1.bf16.msra.mxu0 %v4200
        %5571 = vmatprep.mubr.bf16.mxu0 %v1841
        %5572 = vmatmul.mubr.bf16.gmra.mrb[0].mxu0 %v1840
        %v5573 = vpop.f32.mrb[0].mxu0
        %v5574 = vadd.f32 %v5461, %v5573
        %v5575 = vpop.f32.mrb[0].mxu0
        %v5576 = vadd.f32 %v5463, %v5575
        %v5577 = vpop.f32.mrb[0].mxu0
        %v5578 = vadd.f32 %v5465, %v5577
        %v5579 = vpop.f32.mrb[0].mxu0
        %v5580 = vadd.f32 %v5467, %v5579
        %5581 = vmatprep.mubr.bf16.mxu0 %v1849
        %5582 = vmatmul.mubr.bf16.gmra.mrb[0].mxu0 %v1848
        %v5583 = vpop.f32.mrb[0].mxu0
        %v5584 = vadd.f32 %v5471, %v5583
        %v5585 = vpop.f32.mrb[0].mxu0
        %v5586 = vadd.f32 %v5473, %v5585
        %v5587 = vpop.f32.mrb[0].mxu0
        %v5588 = vadd.f32 %v5475, %v5587
        %v5589 = vpop.f32.mrb[0].mxu0
        %v5590 = vadd.f32 %v5477, %v5589
        %5591 = vmatprep.mubr.bf16.mxu0 %v1857
        %5592 = vmatmul.mubr.bf16.gmra.mrb[0].mxu0 %v1856
        %v5593 = vpop.f32.mrb[0].mxu0
        %v5594 = vadd.f32 %v5481, %v5593
        %v5595 = vpop.f32.mrb[0].mxu0
        %v5596 = vadd.f32 %v5483, %v5595
        %v5597 = vpop.f32.mrb[0].mxu0
        %v5598 = vadd.f32 %v5485, %v5597
        %v5599 = vpop.f32.mrb[0].mxu0
        %v5600 = vadd.f32 %v5487, %v5599
        %5601 = vmatprep.mubr.bf16.mxu0 %v1865
        %5602 = vmatmul.mubr.bf16.gmra.mrb[0].mxu0 %v1864
        %v5603 = vpop.f32.mrb[0].mxu0
        %v5604 = vadd.f32 %v5491, %v5603
        %v5605 = vpop.f32.mrb[0].mxu0
        %v5606 = vadd.f32 %v5493, %v5605
        %v5607 = vpop.f32.mrb[0].mxu0
        %v5608 = vadd.f32 %v5495, %v5607
        %v5609 = vpop.f32.mrb[0].mxu0
        %v5610 = vadd.f32 %v5497, %v5609
        %5611 = vmatprep.mubr.bf16.mxu0 %v1873
        %5612 = vmatmul.mubr.bf16.gmra.mrb[0].mxu0 %v1872
        %v5613 = vpop.f32.mrb[0].mxu0
        %v5614 = vadd.f32 %v5501, %v5613
        %v5615 = vpop.f32.mrb[0].mxu0
        %v5616 = vadd.f32 %v5503, %v5615
        %v5617 = vpop.f32.mrb[0].mxu0
        %v5618 = vadd.f32 %v5505, %v5617
        %v5619 = vpop.f32.mrb[0].mxu0
        %v5620 = vadd.f32 %v5507, %v5619
        %5621 = vmatprep.mubr.bf16.mxu0 %v1881
        %5622 = vmatmul.mubr.bf16.gmra.mrb[0].mxu0 %v1880
        %v5623 = vpop.f32.mrb[0].mxu0
        %v5624 = vadd.f32 %v5511, %v5623
        %v5625 = vpop.f32.mrb[0].mxu0
        %v5626 = vadd.f32 %v5513, %v5625
        %v5627 = vpop.f32.mrb[0].mxu0
        %v5628 = vadd.f32 %v5515, %v5627
        %v5629 = vpop.f32.mrb[0].mxu0
        %v5630 = vadd.f32 %v5517, %v5629
        %5631 = vmatprep.mubr.bf16.mxu0 %v1889
        %5632 = vmatmul.mubr.bf16.gmra.mrb[0].mxu0 %v1888
        %v5633 = vpop.f32.mrb[0].mxu0
        %v5634 = vadd.f32 %v5521, %v5633
        %v5635 = vpop.f32.mrb[0].mxu0
        %v5636 = vadd.f32 %v5523, %v5635
        %v5637 = vpop.f32.mrb[0].mxu0
        %v5638 = vadd.f32 %v5525, %v5637
        %v5639 = vpop.f32.mrb[0].mxu0
        %v5640 = vadd.f32 %v5527, %v5639
        %5641 = vmatprep.mubr.bf16.mxu0 %v1897
        %5642 = vmatmul.mubr.bf16.gmra.mrb[0].mxu0 %v1896
        %v5643 = vpop.f32.mrb[0].mxu0
        %v5644 = vadd.f32 %v5531, %v5643
        %v5645 = vpop.f32.mrb[0].mxu0
        %v5646 = vadd.f32 %v5533, %v5645
        %v5647 = vpop.f32.mrb[0].mxu0
        %v5648 = vadd.f32 %v5535, %v5647
        %v5649 = vpop.f32.mrb[0].mxu0
        %v5650 = vadd.f32 %v5537, %v5649
        %5651 = vdwg.mxu0
        %5652 = vmatprep.subr.bf16.mxu0 %v4209
        %5653 = vmatpush1.bf16.msra.mxu0 %v4208
        %5654 = vmatprep.subr.bf16.mxu0 %v4217
        %5655 = vmatpush1.bf16.msra.mxu0 %v4216
        %5656 = vmatprep.subr.bf16.mxu0 %v4225
        %5657 = vmatpush1.bf16.msra.mxu0 %v4224
        %5658 = vmatprep.subr.bf16.mxu0 %v4233
        %5659 = vmatpush1.bf16.msra.mxu0 %v4232
        %5660 = vmatprep.subr.bf16.mxu0 %v4241
        %5661 = vmatpush1.bf16.msra.mxu0 %v4240
        %5662 = vmatprep.subr.bf16.mxu0 %v4249
        %5663 = vmatpush1.bf16.msra.mxu0 %v4248
        %5664 = vmatprep.subr.bf16.mxu0 %v4257
        %5665 = vmatpush1.bf16.msra.mxu0 %v4256
        %5666 = vmatprep.subr.bf16.mxu0 %v4265
        %5667 = vmatpush1.bf16.msra.mxu0 %v4264
        %5668 = vmatprep.subr.bf16.mxu0 %v4273
        %5669 = vmatpush1.bf16.msra.mxu0 %v4272
        %5670 = vmatprep.subr.bf16.mxu0 %v4281
        %5671 = vmatpush1.bf16.msra.mxu0 %v4280
        %5672 = vmatprep.subr.bf16.mxu0 %v4289
        %5673 = vmatpush1.bf16.msra.mxu0 %v4288
        %5674 = vmatprep.subr.bf16.mxu0 %v4297
        %5675 = vmatpush1.bf16.msra.mxu0 %v4296
        %5676 = vmatprep.subr.bf16.mxu0 %v4305
        %5677 = vmatpush1.bf16.msra.mxu0 %v4304
        %5678 = vmatprep.subr.bf16.mxu0 %v4313
        %5679 = vmatpush1.bf16.msra.mxu0 %v4312
        %5680 = vmatprep.subr.bf16.mxu0 %v4321
        %5681 = vmatpush1.bf16.msra.mxu0 %v4320
        %5682 = vmatprep.subr.bf16.mxu0 %v4329
        %5683 = vmatpush1.bf16.msra.mxu0 %v4328
        %5684 = vmatprep.mubr.bf16.mxu0 %v1843
        %5685 = vmatmul.mubr.bf16.gmra.mrb[0].mxu0 %v1842
        %v5686 = vpop.f32.mrb[0].mxu0
        %v5687 = vadd.f32 %v5574, %v5686
        %v5688 = vpop.f32.mrb[0].mxu0
        %v5689 = vadd.f32 %v5576, %v5688
        %v5690 = vpop.f32.mrb[0].mxu0
        %v5691 = vadd.f32 %v5578, %v5690
        %v5692 = vpop.f32.mrb[0].mxu0
        %v5693 = vadd.f32 %v5580, %v5692
        %5694 = vmatprep.mubr.bf16.mxu0 %v1851
        %5695 = vmatmul.mubr.bf16.gmra.mrb[0].mxu0 %v1850
        %v5696 = vpop.f32.mrb[0].mxu0
        %v5697 = vadd.f32 %v5584, %v5696
        %v5698 = vpop.f32.mrb[0].mxu0
        %v5699 = vadd.f32 %v5586, %v5698
        %v5700 = vpop.f32.mrb[0].mxu0
        %v5701 = vadd.f32 %v5588, %v5700
        %v5702 = vpop.f32.mrb[0].mxu0
        %v5703 = vadd.f32 %v5590, %v5702
        %5704 = vmatprep.mubr.bf16.mxu0 %v1859
        %5705 = vmatmul.mubr.bf16.gmra.mrb[0].mxu0 %v1858
        %v5706 = vpop.f32.mrb[0].mxu0
        %v5707 = vadd.f32 %v5594, %v5706
        %v5708 = vpop.f32.mrb[0].mxu0
        %v5709 = vadd.f32 %v5596, %v5708
        %v5710 = vpop.f32.mrb[0].mxu0
        %v5711 = vadd.f32 %v5598, %v5710
        %v5712 = vpop.f32.mrb[0].mxu0
        %v5713 = vadd.f32 %v5600, %v5712
        %5714 = vmatprep.mubr.bf16.mxu0 %v1867
        %5715 = vmatmul.mubr.bf16.gmra.mrb[0].mxu0 %v1866
        %v5716 = vpop.f32.mrb[0].mxu0
        %v5717 = vadd.f32 %v5604, %v5716
        %v5718 = vpop.f32.mrb[0].mxu0
        %v5719 = vadd.f32 %v5606, %v5718
        %v5720 = vpop.f32.mrb[0].mxu0
        %v5721 = vadd.f32 %v5608, %v5720
        %v5722 = vpop.f32.mrb[0].mxu0
        %v5723 = vadd.f32 %v5610, %v5722
        %5724 = vmatprep.mubr.bf16.mxu0 %v1875
        %5725 = vmatmul.mubr.bf16.gmra.mrb[0].mxu0 %v1874
        %v5726 = vpop.f32.mrb[0].mxu0
        %v5727 = vadd.f32 %v5614, %v5726
        %v5728 = vpop.f32.mrb[0].mxu0
        %v5729 = vadd.f32 %v5616, %v5728
        %v5730 = vpop.f32.mrb[0].mxu0
        %v5731 = vadd.f32 %v5618, %v5730
        %v5732 = vpop.f32.mrb[0].mxu0
        %v5733 = vadd.f32 %v5620, %v5732
        %5734 = vmatprep.mubr.bf16.mxu0 %v1883
        %5735 = vmatmul.mubr.bf16.gmra.mrb[0].mxu0 %v1882
        %v5736 = vpop.f32.mrb[0].mxu0
        %v5737 = vadd.f32 %v5624, %v5736
        %v5738 = vpop.f32.mrb[0].mxu0
        %v5739 = vadd.f32 %v5626, %v5738
        %v5740 = vpop.f32.mrb[0].mxu0
        %v5741 = vadd.f32 %v5628, %v5740
        %v5742 = vpop.f32.mrb[0].mxu0
        %v5743 = vadd.f32 %v5630, %v5742
        %5744 = vmatprep.mubr.bf16.mxu0 %v1891
        %5745 = vmatmul.mubr.bf16.gmra.mrb[0].mxu0 %v1890
        %v5746 = vpop.f32.mrb[0].mxu0
        %v5747 = vadd.f32 %v5634, %v5746
        %v5748 = vpop.f32.mrb[0].mxu0
        %v5749 = vadd.f32 %v5636, %v5748
        %v5750 = vpop.f32.mrb[0].mxu0
        %v5751 = vadd.f32 %v5638, %v5750
        %v5752 = vpop.f32.mrb[0].mxu0
        %v5753 = vadd.f32 %v5640, %v5752
        %5754 = vmatprep.mubr.bf16.mxu0 %v1899
        %5755 = vmatmul.mubr.bf16.gmra.mrb[0].mxu0 %v1898
        %v5756 = vpop.f32.mrb[0].mxu0
        %v5757 = vadd.f32 %v5644, %v5756
        %v5758 = vpop.f32.mrb[0].mxu0
        %v5759 = vadd.f32 %v5646, %v5758
        %v5760 = vpop.f32.mrb[0].mxu0
        %v5761 = vadd.f32 %v5648, %v5760
        %v5762 = vpop.f32.mrb[0].mxu0
        %v5763 = vadd.f32 %v5650, %v5762
        %5764 = vdwg.mxu0
        %5765 = vmatprep.subr.bf16.mxu0 %v4337
        %5766 = vmatpush1.bf16.msra.mxu0 %v4336
        %5767 = vmatprep.subr.bf16.mxu0 %v4345
        %5768 = vmatpush1.bf16.msra.mxu0 %v4344
        %5769 = vmatprep.subr.bf16.mxu0 %v4353
        %5770 = vmatpush1.bf16.msra.mxu0 %v4352
        %5771 = vmatprep.subr.bf16.mxu0 %v4361
        %5772 = vmatpush1.bf16.msra.mxu0 %v4360
        %5773 = vmatprep.subr.bf16.mxu0 %v4369
        %5774 = vmatpush1.bf16.msra.mxu0 %v4368
        %5775 = vmatprep.subr.bf16.mxu0 %v4377
        %5776 = vmatpush1.bf16.msra.mxu0 %v4376
        %5777 = vmatprep.subr.bf16.mxu0 %v4385
        %5778 = vmatpush1.bf16.msra.mxu0 %v4384
        %5779 = vmatprep.subr.bf16.mxu0 %v4393
        %5780 = vmatpush1.bf16.msra.mxu0 %v4392
        %5781 = vmatprep.subr.bf16.mxu0 %v4401
        %5782 = vmatpush1.bf16.msra.mxu0 %v4400
        %5783 = vmatprep.subr.bf16.mxu0 %v4409
        %5784 = vmatpush1.bf16.msra.mxu0 %v4408
        %5785 = vmatprep.subr.bf16.mxu0 %v4417
        %5786 = vmatpush1.bf16.msra.mxu0 %v4416
        %5787 = vmatprep.subr.bf16.mxu0 %v4425
        %5788 = vmatpush1.bf16.msra.mxu0 %v4424
        %5789 = vmatprep.subr.bf16.mxu0 %v4433
        %5790 = vmatpush1.bf16.msra.mxu0 %v4432
        %5791 = vmatprep.subr.bf16.mxu0 %v4441
        %5792 = vmatpush1.bf16.msra.mxu0 %v4440
        %5793 = vmatprep.subr.bf16.mxu0 %v4449
        %5794 = vmatpush1.bf16.msra.mxu0 %v4448
        %5795 = vmatprep.subr.bf16.mxu0 %v4457
        %5796 = vmatpush1.bf16.msra.mxu0 %v4456
        %5797 = vmatprep.mubr.bf16.mxu0 %v1845
        %5798 = vmatmul.mubr.bf16.gmra.mrb[0].mxu0 %v1844
        %v5799 = vpop.f32.mrb[0].mxu0
        %v5800 = vadd.f32 %v5687, %v5799
        %v5801 = vpop.f32.mrb[0].mxu0
        %v5802 = vadd.f32 %v5689, %v5801
        %v5803 = vpop.f32.mrb[0].mxu0
        %v5804 = vadd.f32 %v5691, %v5803
        %v5805 = vpop.f32.mrb[0].mxu0
        %v5806 = vadd.f32 %v5693, %v5805
        %5807 = vmatprep.mubr.bf16.mxu0 %v1853
        %5808 = vmatmul.mubr.bf16.gmra.mrb[0].mxu0 %v1852
        %v5809 = vpop.f32.mrb[0].mxu0
        %v5810 = vadd.f32 %v5697, %v5809
        %v5811 = vpop.f32.mrb[0].mxu0
        %v5812 = vadd.f32 %v5699, %v5811
        %v5813 = vpop.f32.mrb[0].mxu0
        %v5814 = vadd.f32 %v5701, %v5813
        %v5815 = vpop.f32.mrb[0].mxu0
        %v5816 = vadd.f32 %v5703, %v5815
        %5817 = vmatprep.mubr.bf16.mxu0 %v1861
        %5818 = vmatmul.mubr.bf16.gmra.mrb[0].mxu0 %v1860
        %v5819 = vpop.f32.mrb[0].mxu0
        %v5820 = vadd.f32 %v5707, %v5819
        %v5821 = vpop.f32.mrb[0].mxu0
        %v5822 = vadd.f32 %v5709, %v5821
        %v5823 = vpop.f32.mrb[0].mxu0
        %v5824 = vadd.f32 %v5711, %v5823
        %v5825 = vpop.f32.mrb[0].mxu0
        %v5826 = vadd.f32 %v5713, %v5825
        %5827 = vmatprep.mubr.bf16.mxu0 %v1869
        %5828 = vmatmul.mubr.bf16.gmra.mrb[0].mxu0 %v1868
        %v5829 = vpop.f32.mrb[0].mxu0
        %v5830 = vadd.f32 %v5717, %v5829
        %v5831 = vpop.f32.mrb[0].mxu0
        %v5832 = vadd.f32 %v5719, %v5831
        %v5833 = vpop.f32.mrb[0].mxu0
        %v5834 = vadd.f32 %v5721, %v5833
        %v5835 = vpop.f32.mrb[0].mxu0
        %v5836 = vadd.f32 %v5723, %v5835
        %5837 = vmatprep.mubr.bf16.mxu0 %v1877
        %5838 = vmatmul.mubr.bf16.gmra.mrb[0].mxu0 %v1876
        %v5839 = vpop.f32.mrb[0].mxu0
        %v5840 = vadd.f32 %v5727, %v5839
        %v5841 = vpop.f32.mrb[0].mxu0
        %v5842 = vadd.f32 %v5729, %v5841
        %v5843 = vpop.f32.mrb[0].mxu0
        %v5844 = vadd.f32 %v5731, %v5843
        %v5845 = vpop.f32.mrb[0].mxu0
        %v5846 = vadd.f32 %v5733, %v5845
        %5847 = vmatprep.mubr.bf16.mxu0 %v1885
        %5848 = vmatmul.mubr.bf16.gmra.mrb[0].mxu0 %v1884
        %v5849 = vpop.f32.mrb[0].mxu0
        %v5850 = vadd.f32 %v5737, %v5849
        %v5851 = vpop.f32.mrb[0].mxu0
        %v5852 = vadd.f32 %v5739, %v5851
        %v5853 = vpop.f32.mrb[0].mxu0
        %v5854 = vadd.f32 %v5741, %v5853
        %v5855 = vpop.f32.mrb[0].mxu0
        %v5856 = vadd.f32 %v5743, %v5855
        %5857 = vmatprep.mubr.bf16.mxu0 %v1893
        %5858 = vmatmul.mubr.bf16.gmra.mrb[0].mxu0 %v1892
        %v5859 = vpop.f32.mrb[0].mxu0
        %v5860 = vadd.f32 %v5747, %v5859
        %v5861 = vpop.f32.mrb[0].mxu0
        %v5862 = vadd.f32 %v5749, %v5861
        %v5863 = vpop.f32.mrb[0].mxu0
        %v5864 = vadd.f32 %v5751, %v5863
        %v5865 = vpop.f32.mrb[0].mxu0
        %v5866 = vadd.f32 %v5753, %v5865
        %5867 = vmatprep.mubr.bf16.mxu0 %v1901
        %5868 = vmatmul.mubr.bf16.gmra.mrb[0].mxu0 %v1900
        %v5869 = vpop.f32.mrb[0].mxu0
        %v5870 = vadd.f32 %v5757, %v5869
        %v5871 = vpop.f32.mrb[0].mxu0
        %v5872 = vadd.f32 %v5759, %v5871
        %v5873 = vpop.f32.mrb[0].mxu0
        %v5874 = vadd.f32 %v5761, %v5873
        %v5875 = vpop.f32.mrb[0].mxu0
        %v5876 = vadd.f32 %v5763, %v5875
        %5877 = vdwg.mxu0
        %5878 = vmatprep.subr.bf16.mxu0 %v3955
        %5879 = vmatpush1.bf16.msra.mxu0 %v3954
        %5880 = vmatprep.subr.bf16.mxu0 %v3963
        %5881 = vmatpush1.bf16.msra.mxu0 %v3962
        %5882 = vmatprep.subr.bf16.mxu0 %v3971
        %5883 = vmatpush1.bf16.msra.mxu0 %v3970
        %5884 = vmatprep.subr.bf16.mxu0 %v3979
        %5885 = vmatpush1.bf16.msra.mxu0 %v3978
        %5886 = vmatprep.subr.bf16.mxu0 %v3987
        %5887 = vmatpush1.bf16.msra.mxu0 %v3986
        %5888 = vmatprep.subr.bf16.mxu0 %v3995
        %5889 = vmatpush1.bf16.msra.mxu0 %v3994
        %5890 = vmatprep.subr.bf16.mxu0 %v4003
        %5891 = vmatpush1.bf16.msra.mxu0 %v4002
        %5892 = vmatprep.subr.bf16.mxu0 %v4011
        %5893 = vmatpush1.bf16.msra.mxu0 %v4010
        %5894 = vmatprep.subr.bf16.mxu0 %v4019
        %5895 = vmatpush1.bf16.msra.mxu0 %v4018
        %5896 = vmatprep.subr.bf16.mxu0 %v4027
        %5897 = vmatpush1.bf16.msra.mxu0 %v4026
        %5898 = vmatprep.subr.bf16.mxu0 %v4035
        %5899 = vmatpush1.bf16.msra.mxu0 %v4034
        %5900 = vmatprep.subr.bf16.mxu0 %v4043
        %5901 = vmatpush1.bf16.msra.mxu0 %v4042
        %5902 = vmatprep.subr.bf16.mxu0 %v4051
        %5903 = vmatpush1.bf16.msra.mxu0 %v4050
        %5904 = vmatprep.subr.bf16.mxu0 %v4059
        %5905 = vmatpush1.bf16.msra.mxu0 %v4058
        %5906 = vmatprep.subr.bf16.mxu0 %v4067
        %5907 = vmatpush1.bf16.msra.mxu0 %v4066
        %5908 = vmatprep.subr.bf16.mxu0 %v4075
        %5909 = vmatpush1.bf16.msra.mxu0 %v4074
        %5910 = vmatprep.mubr.bf16.mxu0 %v1839
        %5911 = vmatmul.mubr.bf16.gmra.mrb[0].mxu0 %v1838
        %v5912 = vpop.f32.mrb[0].mxu0
        %v5913 = vadd.f32 0.0, %v5912
        %v5914 = vpop.f32.mrb[0].mxu0
        %v5915 = vadd.f32 0.0, %v5914
        %v5916 = vpop.f32.mrb[0].mxu0
        %v5917 = vadd.f32 0.0, %v5916
        %v5918 = vpop.f32.mrb[0].mxu0
        %v5919 = vadd.f32 0.0, %v5918
        %5920 = vmatprep.mubr.bf16.mxu0 %v1847
        %5921 = vmatmul.mubr.bf16.gmra.mrb[0].mxu0 %v1846
        %v5922 = vpop.f32.mrb[0].mxu0
        %v5923 = vadd.f32 0.0, %v5922
        %v5924 = vpop.f32.mrb[0].mxu0
        %v5925 = vadd.f32 0.0, %v5924
        %v5926 = vpop.f32.mrb[0].mxu0
        %v5927 = vadd.f32 0.0, %v5926
        %v5928 = vpop.f32.mrb[0].mxu0
        %v5929 = vadd.f32 0.0, %v5928
        %5930 = vmatprep.mubr.bf16.mxu0 %v1855
        %5931 = vmatmul.mubr.bf16.gmra.mrb[0].mxu0 %v1854
        %v5932 = vpop.f32.mrb[0].mxu0
        %v5933 = vadd.f32 0.0, %v5932
        %v5934 = vpop.f32.mrb[0].mxu0
        %v5935 = vadd.f32 0.0, %v5934
        %v5936 = vpop.f32.mrb[0].mxu0
        %v5937 = vadd.f32 0.0, %v5936
        %v5938 = vpop.f32.mrb[0].mxu0
        %v5939 = vadd.f32 0.0, %v5938
        %5940 = vmatprep.mubr.bf16.mxu0 %v1863
        %5941 = vmatmul.mubr.bf16.gmra.mrb[0].mxu0 %v1862
        %v5942 = vpop.f32.mrb[0].mxu0
        %v5943 = vadd.f32 0.0, %v5942
        %v5944 = vpop.f32.mrb[0].mxu0
        %v5945 = vadd.f32 0.0, %v5944
        %v5946 = vpop.f32.mrb[0].mxu0
        %v5947 = vadd.f32 0.0, %v5946
        %v5948 = vpop.f32.mrb[0].mxu0
        %v5949 = vadd.f32 0.0, %v5948
        %5950 = vmatprep.mubr.bf16.mxu0 %v1871
        %5951 = vmatmul.mubr.bf16.gmra.mrb[0].mxu0 %v1870
        %v5952 = vpop.f32.mrb[0].mxu0
        %v5953 = vadd.f32 0.0, %v5952
        %v5954 = vpop.f32.mrb[0].mxu0
        %v5955 = vadd.f32 0.0, %v5954
        %v5956 = vpop.f32.mrb[0].mxu0
        %v5957 = vadd.f32 0.0, %v5956
        %v5958 = vpop.f32.mrb[0].mxu0
        %v5959 = vadd.f32 0.0, %v5958
        %5960 = vmatprep.mubr.bf16.mxu0 %v1879
        %5961 = vmatmul.mubr.bf16.gmra.mrb[0].mxu0 %v1878
        %v5962 = vpop.f32.mrb[0].mxu0
        %v5963 = vadd.f32 0.0, %v5962
        %v5964 = vpop.f32.mrb[0].mxu0
        %v5965 = vadd.f32 0.0, %v5964
        %v5966 = vpop.f32.mrb[0].mxu0
        %v5967 = vadd.f32 0.0, %v5966
        %v5968 = vpop.f32.mrb[0].mxu0
        %v5969 = vadd.f32 0.0, %v5968
        %5970 = vmatprep.mubr.bf16.mxu0 %v1887
        %5971 = vmatmul.mubr.bf16.gmra.mrb[0].mxu0 %v1886
        %v5972 = vpop.f32.mrb[0].mxu0
        %v5973 = vadd.f32 0.0, %v5972
        %v5974 = vpop.f32.mrb[0].mxu0
        %v5975 = vadd.f32 0.0, %v5974
        %v5976 = vpop.f32.mrb[0].mxu0
        %v5977 = vadd.f32 0.0, %v5976
        %v5978 = vpop.f32.mrb[0].mxu0
        %v5979 = vadd.f32 0.0, %v5978
        %5980 = vmatprep.mubr.bf16.mxu0 %v1895
        %5981 = vmatmul.mubr.bf16.gmra.mrb[0].mxu0 %v1894
        %v5982 = vpop.f32.mrb[0].mxu0
        %v5983 = vadd.f32 0.0, %v5982
        %v5984 = vpop.f32.mrb[0].mxu0
        %v5985 = vadd.f32 0.0, %v5984
        %v5986 = vpop.f32.mrb[0].mxu0
        %v5987 = vadd.f32 0.0, %v5986
        %v5988 = vpop.f32.mrb[0].mxu0
        %v5989 = vadd.f32 0.0, %v5988
        %5990 = vdwg.mxu0
        %5991 = vmatprep.subr.bf16.mxu0 %v4083
        %5992 = vmatpush1.bf16.msra.mxu0 %v4082
        %5993 = vmatprep.subr.bf16.mxu0 %v4091
        %5994 = vmatpush1.bf16.msra.mxu0 %v4090
        %5995 = vmatprep.subr.bf16.mxu0 %v4099
        %5996 = vmatpush1.bf16.msra.mxu0 %v4098
        %5997 = vmatprep.subr.bf16.mxu0 %v4107
        %5998 = vmatpush1.bf16.msra.mxu0 %v4106
        %5999 = vmatprep.subr.bf16.mxu0 %v4115
        %6000 = vmatpush1.bf16.msra.mxu0 %v4114
        %6001 = vmatprep.subr.bf16.mxu0 %v4123
        %6002 = vmatpush1.bf16.msra.mxu0 %v4122
        %6003 = vmatprep.subr.bf16.mxu0 %v4131
        %6004 = vmatpush1.bf16.msra.mxu0 %v4130
        %6005 = vmatprep.subr.bf16.mxu0 %v4139
        %6006 = vmatpush1.bf16.msra.mxu0 %v4138
        %6007 = vmatprep.subr.bf16.mxu0 %v4147
        %6008 = vmatpush1.bf16.msra.mxu0 %v4146
        %6009 = vmatprep.subr.bf16.mxu0 %v4155
        %6010 = vmatpush1.bf16.msra.mxu0 %v4154
        %6011 = vmatprep.subr.bf16.mxu0 %v4163
        %6012 = vmatpush1.bf16.msra.mxu0 %v4162
        %6013 = vmatprep.subr.bf16.mxu0 %v4171
        %6014 = vmatpush1.bf16.msra.mxu0 %v4170
        %6015 = vmatprep.subr.bf16.mxu0 %v4179
        %6016 = vmatpush1.bf16.msra.mxu0 %v4178
        %6017 = vmatprep.subr.bf16.mxu0 %v4187
        %6018 = vmatpush1.bf16.msra.mxu0 %v4186
        %6019 = vmatprep.subr.bf16.mxu0 %v4195
        %6020 = vmatpush1.bf16.msra.mxu0 %v4194
        %6021 = vmatprep.subr.bf16.mxu0 %v4203
        %6022 = vmatpush1.bf16.msra.mxu0 %v4202
        %6023 = vmatprep.mubr.bf16.mxu0 %v1841
        %6024 = vmatmul.mubr.bf16.gmra.mrb[0].mxu0 %v1840
        %v6025 = vpop.f32.mrb[0].mxu0
        %v6026 = vadd.f32 %v5913, %v6025
        %v6027 = vpop.f32.mrb[0].mxu0
        %v6028 = vadd.f32 %v5915, %v6027
        %v6029 = vpop.f32.mrb[0].mxu0
        %v6030 = vadd.f32 %v5917, %v6029
        %v6031 = vpop.f32.mrb[0].mxu0
        %v6032 = vadd.f32 %v5919, %v6031
        %6033 = vmatprep.mubr.bf16.mxu0 %v1849
        %6034 = vmatmul.mubr.bf16.gmra.mrb[0].mxu0 %v1848
        %v6035 = vpop.f32.mrb[0].mxu0
        %v6036 = vadd.f32 %v5923, %v6035
        %v6037 = vpop.f32.mrb[0].mxu0
        %v6038 = vadd.f32 %v5925, %v6037
        %v6039 = vpop.f32.mrb[0].mxu0
        %v6040 = vadd.f32 %v5927, %v6039
        %v6041 = vpop.f32.mrb[0].mxu0
        %v6042 = vadd.f32 %v5929, %v6041
        %6043 = vmatprep.mubr.bf16.mxu0 %v1857
        %6044 = vmatmul.mubr.bf16.gmra.mrb[0].mxu0 %v1856
        %v6045 = vpop.f32.mrb[0].mxu0
        %v6046 = vadd.f32 %v5933, %v6045
        %v6047 = vpop.f32.mrb[0].mxu0
        %v6048 = vadd.f32 %v5935, %v6047
        %v6049 = vpop.f32.mrb[0].mxu0
        %v6050 = vadd.f32 %v5937, %v6049
        %v6051 = vpop.f32.mrb[0].mxu0
        %v6052 = vadd.f32 %v5939, %v6051
        %6053 = vmatprep.mubr.bf16.mxu0 %v1865
        %6054 = vmatmul.mubr.bf16.gmra.mrb[0].mxu0 %v1864
        %v6055 = vpop.f32.mrb[0].mxu0
        %v6056 = vadd.f32 %v5943, %v6055
        %v6057 = vpop.f32.mrb[0].mxu0
        %v6058 = vadd.f32 %v5945, %v6057
        %v6059 = vpop.f32.mrb[0].mxu0
        %v6060 = vadd.f32 %v5947, %v6059
        %v6061 = vpop.f32.mrb[0].mxu0
        %v6062 = vadd.f32 %v5949, %v6061
        %6063 = vmatprep.mubr.bf16.mxu0 %v1873
        %6064 = vmatmul.mubr.bf16.gmra.mrb[0].mxu0 %v1872
        %v6065 = vpop.f32.mrb[0].mxu0
        %v6066 = vadd.f32 %v5953, %v6065
        %v6067 = vpop.f32.mrb[0].mxu0
        %v6068 = vadd.f32 %v5955, %v6067
        %v6069 = vpop.f32.mrb[0].mxu0
        %v6070 = vadd.f32 %v5957, %v6069
        %v6071 = vpop.f32.mrb[0].mxu0
        %v6072 = vadd.f32 %v5959, %v6071
        %6073 = vmatprep.mubr.bf16.mxu0 %v1881
        %6074 = vmatmul.mubr.bf16.gmra.mrb[0].mxu0 %v1880
        %v6075 = vpop.f32.mrb[0].mxu0
        %v6076 = vadd.f32 %v5963, %v6075
        %v6077 = vpop.f32.mrb[0].mxu0
        %v6078 = vadd.f32 %v5965, %v6077
        %v6079 = vpop.f32.mrb[0].mxu0
        %v6080 = vadd.f32 %v5967, %v6079
        %v6081 = vpop.f32.mrb[0].mxu0
        %v6082 = vadd.f32 %v5969, %v6081
        %6083 = vmatprep.mubr.bf16.mxu0 %v1889
        %6084 = vmatmul.mubr.bf16.gmra.mrb[0].mxu0 %v1888
        %v6085 = vpop.f32.mrb[0].mxu0
        %v6086 = vadd.f32 %v5973, %v6085
        %v6087 = vpop.f32.mrb[0].mxu0
        %v6088 = vadd.f32 %v5975, %v6087
        %v6089 = vpop.f32.mrb[0].mxu0
        %v6090 = vadd.f32 %v5977, %v6089
        %v6091 = vpop.f32.mrb[0].mxu0
        %v6092 = vadd.f32 %v5979, %v6091
        %6093 = vmatprep.mubr.bf16.mxu0 %v1897
        %6094 = vmatmul.mubr.bf16.gmra.mrb[0].mxu0 %v1896
        %v6095 = vpop.f32.mrb[0].mxu0
        %v6096 = vadd.f32 %v5983, %v6095
        %v6097 = vpop.f32.mrb[0].mxu0
        %v6098 = vadd.f32 %v5985, %v6097
        %v6099 = vpop.f32.mrb[0].mxu0
        %v6100 = vadd.f32 %v5987, %v6099
        %v6101 = vpop.f32.mrb[0].mxu0
        %v6102 = vadd.f32 %v5989, %v6101
        %6103 = vdwg.mxu0
        %6104 = vmatprep.subr.bf16.mxu0 %v4211
        %6105 = vmatpush1.bf16.msra.mxu0 %v4210
        %6106 = vmatprep.subr.bf16.mxu0 %v4219
        %6107 = vmatpush1.bf16.msra.mxu0 %v4218
        %6108 = vmatprep.subr.bf16.mxu0 %v4227
        %6109 = vmatpush1.bf16.msra.mxu0 %v4226
        %6110 = vmatprep.subr.bf16.mxu0 %v4235
        %6111 = vmatpush1.bf16.msra.mxu0 %v4234
        %6112 = vmatprep.subr.bf16.mxu0 %v4243
        %6113 = vmatpush1.bf16.msra.mxu0 %v4242
        %6114 = vmatprep.subr.bf16.mxu0 %v4251
        %6115 = vmatpush1.bf16.msra.mxu0 %v4250
        %6116 = vmatprep.subr.bf16.mxu0 %v4259
        %6117 = vmatpush1.bf16.msra.mxu0 %v4258
        %6118 = vmatprep.subr.bf16.mxu0 %v4267
        %6119 = vmatpush1.bf16.msra.mxu0 %v4266
        %6120 = vmatprep.subr.bf16.mxu0 %v4275
        %6121 = vmatpush1.bf16.msra.mxu0 %v4274
        %6122 = vmatprep.subr.bf16.mxu0 %v4283
        %6123 = vmatpush1.bf16.msra.mxu0 %v4282
        %6124 = vmatprep.subr.bf16.mxu0 %v4291
        %6125 = vmatpush1.bf16.msra.mxu0 %v4290
        %6126 = vmatprep.subr.bf16.mxu0 %v4299
        %6127 = vmatpush1.bf16.msra.mxu0 %v4298
        %6128 = vmatprep.subr.bf16.mxu0 %v4307
        %6129 = vmatpush1.bf16.msra.mxu0 %v4306
        %6130 = vmatprep.subr.bf16.mxu0 %v4315
        %6131 = vmatpush1.bf16.msra.mxu0 %v4314
        %6132 = vmatprep.subr.bf16.mxu0 %v4323
        %6133 = vmatpush1.bf16.msra.mxu0 %v4322
        %6134 = vmatprep.subr.bf16.mxu0 %v4331
        %6135 = vmatpush1.bf16.msra.mxu0 %v4330
        %6136 = vmatprep.mubr.bf16.mxu0 %v1843
        %6137 = vmatmul.mubr.bf16.gmra.mrb[0].mxu0 %v1842
        %v6138 = vpop.f32.mrb[0].mxu0
        %v6139 = vadd.f32 %v6026, %v6138
        %v6140 = vpop.f32.mrb[0].mxu0
        %v6141 = vadd.f32 %v6028, %v6140
        %v6142 = vpop.f32.mrb[0].mxu0
        %v6143 = vadd.f32 %v6030, %v6142
        %v6144 = vpop.f32.mrb[0].mxu0
        %v6145 = vadd.f32 %v6032, %v6144
        %6146 = vmatprep.mubr.bf16.mxu0 %v1851
        %6147 = vmatmul.mubr.bf16.gmra.mrb[0].mxu0 %v1850
        %v6148 = vpop.f32.mrb[0].mxu0
        %v6149 = vadd.f32 %v6036, %v6148
        %v6150 = vpop.f32.mrb[0].mxu0
        %v6151 = vadd.f32 %v6038, %v6150
        %v6152 = vpop.f32.mrb[0].mxu0
        %v6153 = vadd.f32 %v6040, %v6152
        %v6154 = vpop.f32.mrb[0].mxu0
        %v6155 = vadd.f32 %v6042, %v6154
        %6156 = vmatprep.mubr.bf16.mxu0 %v1859
        %6157 = vmatmul.mubr.bf16.gmra.mrb[0].mxu0 %v1858
        %v6158 = vpop.f32.mrb[0].mxu0
        %v6159 = vadd.f32 %v6046, %v6158
        %v6160 = vpop.f32.mrb[0].mxu0
        %v6161 = vadd.f32 %v6048, %v6160
        %v6162 = vpop.f32.mrb[0].mxu0
        %v6163 = vadd.f32 %v6050, %v6162
        %v6164 = vpop.f32.mrb[0].mxu0
        %v6165 = vadd.f32 %v6052, %v6164
        %6166 = vmatprep.mubr.bf16.mxu0 %v1867
        %6167 = vmatmul.mubr.bf16.gmra.mrb[0].mxu0 %v1866
        %v6168 = vpop.f32.mrb[0].mxu0
        %v6169 = vadd.f32 %v6056, %v6168
        %v6170 = vpop.f32.mrb[0].mxu0
        %v6171 = vadd.f32 %v6058, %v6170
        %v6172 = vpop.f32.mrb[0].mxu0
        %v6173 = vadd.f32 %v6060, %v6172
        %v6174 = vpop.f32.mrb[0].mxu0
        %v6175 = vadd.f32 %v6062, %v6174
        %6176 = vmatprep.mubr.bf16.mxu0 %v1875
        %6177 = vmatmul.mubr.bf16.gmra.mrb[0].mxu0 %v1874
        %v6178 = vpop.f32.mrb[0].mxu0
        %v6179 = vadd.f32 %v6066, %v6178
        %v6180 = vpop.f32.mrb[0].mxu0
        %v6181 = vadd.f32 %v6068, %v6180
        %v6182 = vpop.f32.mrb[0].mxu0
        %v6183 = vadd.f32 %v6070, %v6182
        %v6184 = vpop.f32.mrb[0].mxu0
        %v6185 = vadd.f32 %v6072, %v6184
        %6186 = vmatprep.mubr.bf16.mxu0 %v1883
        %6187 = vmatmul.mubr.bf16.gmra.mrb[0].mxu0 %v1882
        %v6188 = vpop.f32.mrb[0].mxu0
        %v6189 = vadd.f32 %v6076, %v6188
        %v6190 = vpop.f32.mrb[0].mxu0
        %v6191 = vadd.f32 %v6078, %v6190
        %v6192 = vpop.f32.mrb[0].mxu0
        %v6193 = vadd.f32 %v6080, %v6192
        %v6194 = vpop.f32.mrb[0].mxu0
        %v6195 = vadd.f32 %v6082, %v6194
        %6196 = vmatprep.mubr.bf16.mxu0 %v1891
        %6197 = vmatmul.mubr.bf16.gmra.mrb[0].mxu0 %v1890
        %v6198 = vpop.f32.mrb[0].mxu0
        %v6199 = vadd.f32 %v6086, %v6198
        %v6200 = vpop.f32.mrb[0].mxu0
        %v6201 = vadd.f32 %v6088, %v6200
        %v6202 = vpop.f32.mrb[0].mxu0
        %v6203 = vadd.f32 %v6090, %v6202
        %v6204 = vpop.f32.mrb[0].mxu0
        %v6205 = vadd.f32 %v6092, %v6204
        %6206 = vmatprep.mubr.bf16.mxu0 %v1899
        %6207 = vmatmul.mubr.bf16.gmra.mrb[0].mxu0 %v1898
        %v6208 = vpop.f32.mrb[0].mxu0
        %v6209 = vadd.f32 %v6096, %v6208
        %v6210 = vpop.f32.mrb[0].mxu0
        %v6211 = vadd.f32 %v6098, %v6210
        %v6212 = vpop.f32.mrb[0].mxu0
        %v6213 = vadd.f32 %v6100, %v6212
        %v6214 = vpop.f32.mrb[0].mxu0
        %v6215 = vadd.f32 %v6102, %v6214
        %6216 = vdwg.mxu0
        %6217 = vmatprep.subr.bf16.mxu0 %v4339
        %6218 = vmatpush1.bf16.msra.mxu0 %v4338
        %6219 = vmatprep.subr.bf16.mxu0 %v4347
        %6220 = vmatpush1.bf16.msra.mxu0 %v4346
        %6221 = vmatprep.subr.bf16.mxu0 %v4355
        %6222 = vmatpush1.bf16.msra.mxu0 %v4354
        %6223 = vmatprep.subr.bf16.mxu0 %v4363
        %6224 = vmatpush1.bf16.msra.mxu0 %v4362
        %6225 = vmatprep.subr.bf16.mxu0 %v4371
        %6226 = vmatpush1.bf16.msra.mxu0 %v4370
        %6227 = vmatprep.subr.bf16.mxu0 %v4379
        %6228 = vmatpush1.bf16.msra.mxu0 %v4378
        %6229 = vmatprep.subr.bf16.mxu0 %v4387
        %6230 = vmatpush1.bf16.msra.mxu0 %v4386
        %6231 = vmatprep.subr.bf16.mxu0 %v4395
        %6232 = vmatpush1.bf16.msra.mxu0 %v4394
        %6233 = vmatprep.subr.bf16.mxu0 %v4403
        %6234 = vmatpush1.bf16.msra.mxu0 %v4402
        %6235 = vmatprep.subr.bf16.mxu0 %v4411
        %6236 = vmatpush1.bf16.msra.mxu0 %v4410
        %6237 = vmatprep.subr.bf16.mxu0 %v4419
        %6238 = vmatpush1.bf16.msra.mxu0 %v4418
        %6239 = vmatprep.subr.bf16.mxu0 %v4427
        %6240 = vmatpush1.bf16.msra.mxu0 %v4426
        %6241 = vmatprep.subr.bf16.mxu0 %v4435
        %6242 = vmatpush1.bf16.msra.mxu0 %v4434
        %6243 = vmatprep.subr.bf16.mxu0 %v4443
        %6244 = vmatpush1.bf16.msra.mxu0 %v4442
        %6245 = vmatprep.subr.bf16.mxu0 %v4451
        %6246 = vmatpush1.bf16.msra.mxu0 %v4450
        %6247 = vmatprep.subr.bf16.mxu0 %v4459
        %6248 = vmatpush1.bf16.msra.mxu0 %v4458
        %6249 = vmatprep.mubr.bf16.mxu0 %v1845
        %6250 = vmatmul.mubr.bf16.gmra.mrb[0].mxu0 %v1844
        %v6251 = vpop.f32.mrb[0].mxu0
        %v6252 = vadd.f32 %v6139, %v6251
        %v6253 = vpop.f32.mrb[0].mxu0
        %v6254 = vadd.f32 %v6141, %v6253
        %v6255 = vpop.f32.mrb[0].mxu0
        %v6256 = vadd.f32 %v6143, %v6255
        %v6257 = vpop.f32.mrb[0].mxu0
        %v6258 = vadd.f32 %v6145, %v6257
        %6259 = vmatprep.mubr.bf16.mxu0 %v1853
        %6260 = vmatmul.mubr.bf16.gmra.mrb[0].mxu0 %v1852
        %v6261 = vpop.f32.mrb[0].mxu0
        %v6262 = vadd.f32 %v6149, %v6261
        %v6263 = vpop.f32.mrb[0].mxu0
        %v6264 = vadd.f32 %v6151, %v6263
        %v6265 = vpop.f32.mrb[0].mxu0
        %v6266 = vadd.f32 %v6153, %v6265
        %v6267 = vpop.f32.mrb[0].mxu0
        %v6268 = vadd.f32 %v6155, %v6267
        %6269 = vmatprep.mubr.bf16.mxu0 %v1861
        %6270 = vmatmul.mubr.bf16.gmra.mrb[0].mxu0 %v1860
        %v6271 = vpop.f32.mrb[0].mxu0
        %v6272 = vadd.f32 %v6159, %v6271
        %v6273 = vpop.f32.mrb[0].mxu0
        %v6274 = vadd.f32 %v6161, %v6273
        %v6275 = vpop.f32.mrb[0].mxu0
        %v6276 = vadd.f32 %v6163, %v6275
        %v6277 = vpop.f32.mrb[0].mxu0
        %v6278 = vadd.f32 %v6165, %v6277
        %6279 = vmatprep.mubr.bf16.mxu0 %v1869
        %6280 = vmatmul.mubr.bf16.gmra.mrb[0].mxu0 %v1868
        %v6281 = vpop.f32.mrb[0].mxu0
        %v6282 = vadd.f32 %v6169, %v6281
        %v6283 = vpop.f32.mrb[0].mxu0
        %v6284 = vadd.f32 %v6171, %v6283
        %v6285 = vpop.f32.mrb[0].mxu0
        %v6286 = vadd.f32 %v6173, %v6285
        %v6287 = vpop.f32.mrb[0].mxu0
        %v6288 = vadd.f32 %v6175, %v6287
        %6289 = vmatprep.mubr.bf16.mxu0 %v1877
        %6290 = vmatmul.mubr.bf16.gmra.mrb[0].mxu0 %v1876
        %v6291 = vpop.f32.mrb[0].mxu0
        %v6292 = vadd.f32 %v6179, %v6291
        %v6293 = vpop.f32.mrb[0].mxu0
        %v6294 = vadd.f32 %v6181, %v6293
        %v6295 = vpop.f32.mrb[0].mxu0
        %v6296 = vadd.f32 %v6183, %v6295
        %v6297 = vpop.f32.mrb[0].mxu0
        %v6298 = vadd.f32 %v6185, %v6297
        %6299 = vmatprep.mubr.bf16.mxu0 %v1885
        %6300 = vmatmul.mubr.bf16.gmra.mrb[0].mxu0 %v1884
        %v6301 = vpop.f32.mrb[0].mxu0
        %v6302 = vadd.f32 %v6189, %v6301
        %v6303 = vpop.f32.mrb[0].mxu0
        %v6304 = vadd.f32 %v6191, %v6303
        %v6305 = vpop.f32.mrb[0].mxu0
        %v6306 = vadd.f32 %v6193, %v6305
        %v6307 = vpop.f32.mrb[0].mxu0
        %v6308 = vadd.f32 %v6195, %v6307
        %6309 = vmatprep.mubr.bf16.mxu0 %v1893
        %6310 = vmatmul.mubr.bf16.gmra.mrb[0].mxu0 %v1892
        %v6311 = vpop.f32.mrb[0].mxu0
        %v6312 = vadd.f32 %v6199, %v6311
        %v6313 = vpop.f32.mrb[0].mxu0
        %v6314 = vadd.f32 %v6201, %v6313
        %v6315 = vpop.f32.mrb[0].mxu0
        %v6316 = vadd.f32 %v6203, %v6315
        %v6317 = vpop.f32.mrb[0].mxu0
        %v6318 = vadd.f32 %v6205, %v6317
        %6319 = vmatprep.mubr.bf16.mxu0 %v1901
        %6320 = vmatmul.mubr.bf16.gmra.mrb[0].mxu0 %v1900
        %v6321 = vpop.f32.mrb[0].mxu0
        %v6322 = vadd.f32 %v6209, %v6321
        %v6323 = vpop.f32.mrb[0].mxu0
        %v6324 = vadd.f32 %v6211, %v6323
        %v6325 = vpop.f32.mrb[0].mxu0
        %v6326 = vadd.f32 %v6213, %v6325
        %v6327 = vpop.f32.mrb[0].mxu0
        %v6328 = vadd.f32 %v6215, %v6327
        %6329 = vdwg.mxu0
        %6330 = vmatprep.subr.bf16.mxu0 %v3957
        %6331 = vmatpush1.bf16.msra.mxu0 %v3956
        %6332 = vmatprep.subr.bf16.mxu0 %v3965
        %6333 = vmatpush1.bf16.msra.mxu0 %v3964
        %6334 = vmatprep.subr.bf16.mxu0 %v3973
        %6335 = vmatpush1.bf16.msra.mxu0 %v3972
        %6336 = vmatprep.subr.bf16.mxu0 %v3981
        %6337 = vmatpush1.bf16.msra.mxu0 %v3980
        %6338 = vmatprep.subr.bf16.mxu0 %v3989
        %6339 = vmatpush1.bf16.msra.mxu0 %v3988
        %6340 = vmatprep.subr.bf16.mxu0 %v3997
        %6341 = vmatpush1.bf16.msra.mxu0 %v3996
        %6342 = vmatprep.subr.bf16.mxu0 %v4005
        %6343 = vmatpush1.bf16.msra.mxu0 %v4004
        %6344 = vmatprep.subr.bf16.mxu0 %v4013
        %6345 = vmatpush1.bf16.msra.mxu0 %v4012
        %6346 = vmatprep.subr.bf16.mxu0 %v4021
        %6347 = vmatpush1.bf16.msra.mxu0 %v4020
        %6348 = vmatprep.subr.bf16.mxu0 %v4029
        %6349 = vmatpush1.bf16.msra.mxu0 %v4028
        %6350 = vmatprep.subr.bf16.mxu0 %v4037
        %6351 = vmatpush1.bf16.msra.mxu0 %v4036
        %6352 = vmatprep.subr.bf16.mxu0 %v4045
        %6353 = vmatpush1.bf16.msra.mxu0 %v4044
        %6354 = vmatprep.subr.bf16.mxu0 %v4053
        %6355 = vmatpush1.bf16.msra.mxu0 %v4052
        %6356 = vmatprep.subr.bf16.mxu0 %v4061
        %6357 = vmatpush1.bf16.msra.mxu0 %v4060
        %6358 = vmatprep.subr.bf16.mxu0 %v4069
        %6359 = vmatpush1.bf16.msra.mxu0 %v4068
        %6360 = vmatprep.subr.bf16.mxu0 %v4077
        %6361 = vmatpush1.bf16.msra.mxu0 %v4076
        %6362 = vmatprep.mubr.bf16.mxu0 %v1839
        %6363 = vmatmul.mubr.bf16.gmra.mrb[0].mxu0 %v1838
        %v6364 = vpop.f32.mrb[0].mxu0
        %v6365 = vadd.f32 0.0, %v6364
        %v6366 = vpop.f32.mrb[0].mxu0
        %v6367 = vadd.f32 0.0, %v6366
        %v6368 = vpop.f32.mrb[0].mxu0
        %v6369 = vadd.f32 0.0, %v6368
        %v6370 = vpop.f32.mrb[0].mxu0
        %v6371 = vadd.f32 0.0, %v6370
        %6372 = vmatprep.mubr.bf16.mxu0 %v1847
        %6373 = vmatmul.mubr.bf16.gmra.mrb[0].mxu0 %v1846
        %v6374 = vpop.f32.mrb[0].mxu0
        %v6375 = vadd.f32 0.0, %v6374
        %v6376 = vpop.f32.mrb[0].mxu0
        %v6377 = vadd.f32 0.0, %v6376
        %v6378 = vpop.f32.mrb[0].mxu0
        %v6379 = vadd.f32 0.0, %v6378
        %v6380 = vpop.f32.mrb[0].mxu0
        %v6381 = vadd.f32 0.0, %v6380
        %6382 = vmatprep.mubr.bf16.mxu0 %v1855
        %6383 = vmatmul.mubr.bf16.gmra.mrb[0].mxu0 %v1854
        %v6384 = vpop.f32.mrb[0].mxu0
        %v6385 = vadd.f32 0.0, %v6384
        %v6386 = vpop.f32.mrb[0].mxu0
        %v6387 = vadd.f32 0.0, %v6386
        %v6388 = vpop.f32.mrb[0].mxu0
        %v6389 = vadd.f32 0.0, %v6388
        %v6390 = vpop.f32.mrb[0].mxu0
        %v6391 = vadd.f32 0.0, %v6390
        %6392 = vmatprep.mubr.bf16.mxu0 %v1863
        %6393 = vmatmul.mubr.bf16.gmra.mrb[0].mxu0 %v1862
        %v6394 = vpop.f32.mrb[0].mxu0
        %v6395 = vadd.f32 0.0, %v6394
        %v6396 = vpop.f32.mrb[0].mxu0
        %v6397 = vadd.f32 0.0, %v6396
        %v6398 = vpop.f32.mrb[0].mxu0
        %v6399 = vadd.f32 0.0, %v6398
        %v6400 = vpop.f32.mrb[0].mxu0
        %v6401 = vadd.f32 0.0, %v6400
        %6402 = vmatprep.mubr.bf16.mxu0 %v1871
        %6403 = vmatmul.mubr.bf16.gmra.mrb[0].mxu0 %v1870
        %v6404 = vpop.f32.mrb[0].mxu0
        %v6405 = vadd.f32 0.0, %v6404
        %v6406 = vpop.f32.mrb[0].mxu0
        %v6407 = vadd.f32 0.0, %v6406
        %v6408 = vpop.f32.mrb[0].mxu0
        %v6409 = vadd.f32 0.0, %v6408
        %v6410 = vpop.f32.mrb[0].mxu0
        %v6411 = vadd.f32 0.0, %v6410
        %6412 = vmatprep.mubr.bf16.mxu0 %v1879
        %6413 = vmatmul.mubr.bf16.gmra.mrb[0].mxu0 %v1878
        %v6414 = vpop.f32.mrb[0].mxu0
        %v6415 = vadd.f32 0.0, %v6414
        %v6416 = vpop.f32.mrb[0].mxu0
        %v6417 = vadd.f32 0.0, %v6416
        %v6418 = vpop.f32.mrb[0].mxu0
        %v6419 = vadd.f32 0.0, %v6418
        %v6420 = vpop.f32.mrb[0].mxu0
        %v6421 = vadd.f32 0.0, %v6420
        %6422 = vmatprep.mubr.bf16.mxu0 %v1887
        %6423 = vmatmul.mubr.bf16.gmra.mrb[0].mxu0 %v1886
        %v6424 = vpop.f32.mrb[0].mxu0
        %v6425 = vadd.f32 0.0, %v6424
        %v6426 = vpop.f32.mrb[0].mxu0
        %v6427 = vadd.f32 0.0, %v6426
        %v6428 = vpop.f32.mrb[0].mxu0
        %v6429 = vadd.f32 0.0, %v6428
        %v6430 = vpop.f32.mrb[0].mxu0
        %v6431 = vadd.f32 0.0, %v6430
        %6432 = vmatprep.mubr.bf16.mxu0 %v1895
        %6433 = vmatmul.mubr.bf16.gmra.mrb[0].mxu0 %v1894
        %v6434 = vpop.f32.mrb[0].mxu0
        %v6435 = vadd.f32 0.0, %v6434
        %v6436 = vpop.f32.mrb[0].mxu0
        %v6437 = vadd.f32 0.0, %v6436
        %v6438 = vpop.f32.mrb[0].mxu0
        %v6439 = vadd.f32 0.0, %v6438
        %v6440 = vpop.f32.mrb[0].mxu0
        %v6441 = vadd.f32 0.0, %v6440
        %6442 = vdwg.mxu0
        %6443 = vmatprep.subr.bf16.mxu0 %v4085
        %6444 = vmatpush1.bf16.msra.mxu0 %v4084
        %6445 = vmatprep.subr.bf16.mxu0 %v4093
        %6446 = vmatpush1.bf16.msra.mxu0 %v4092
        %6447 = vmatprep.subr.bf16.mxu0 %v4101
        %6448 = vmatpush1.bf16.msra.mxu0 %v4100
        %6449 = vmatprep.subr.bf16.mxu0 %v4109
        %6450 = vmatpush1.bf16.msra.mxu0 %v4108
        %6451 = vmatprep.subr.bf16.mxu0 %v4117
        %6452 = vmatpush1.bf16.msra.mxu0 %v4116
        %6453 = vmatprep.subr.bf16.mxu0 %v4125
        %6454 = vmatpush1.bf16.msra.mxu0 %v4124
        %6455 = vmatprep.subr.bf16.mxu0 %v4133
        %6456 = vmatpush1.bf16.msra.mxu0 %v4132
        %6457 = vmatprep.subr.bf16.mxu0 %v4141
        %6458 = vmatpush1.bf16.msra.mxu0 %v4140
        %6459 = vmatprep.subr.bf16.mxu0 %v4149
        %6460 = vmatpush1.bf16.msra.mxu0 %v4148
        %6461 = vmatprep.subr.bf16.mxu0 %v4157
        %6462 = vmatpush1.bf16.msra.mxu0 %v4156
        %6463 = vmatprep.subr.bf16.mxu0 %v4165
        %6464 = vmatpush1.bf16.msra.mxu0 %v4164
        %6465 = vmatprep.subr.bf16.mxu0 %v4173
        %6466 = vmatpush1.bf16.msra.mxu0 %v4172
        %6467 = vmatprep.subr.bf16.mxu0 %v4181
        %6468 = vmatpush1.bf16.msra.mxu0 %v4180
        %6469 = vmatprep.subr.bf16.mxu0 %v4189
        %6470 = vmatpush1.bf16.msra.mxu0 %v4188
        %6471 = vmatprep.subr.bf16.mxu0 %v4197
        %6472 = vmatpush1.bf16.msra.mxu0 %v4196
        %6473 = vmatprep.subr.bf16.mxu0 %v4205
        %6474 = vmatpush1.bf16.msra.mxu0 %v4204
        %6475 = vmatprep.mubr.bf16.mxu0 %v1841
        %6476 = vmatmul.mubr.bf16.gmra.mrb[0].mxu0 %v1840
        %v6477 = vpop.f32.mrb[0].mxu0
        %v6478 = vadd.f32 %v6365, %v6477
        %v6479 = vpop.f32.mrb[0].mxu0
        %v6480 = vadd.f32 %v6367, %v6479
        %v6481 = vpop.f32.mrb[0].mxu0
        %v6482 = vadd.f32 %v6369, %v6481
        %v6483 = vpop.f32.mrb[0].mxu0
        %v6484 = vadd.f32 %v6371, %v6483
        %6485 = vmatprep.mubr.bf16.mxu0 %v1849
        %6486 = vmatmul.mubr.bf16.gmra.mrb[0].mxu0 %v1848
        %v6487 = vpop.f32.mrb[0].mxu0
        %v6488 = vadd.f32 %v6375, %v6487
        %v6489 = vpop.f32.mrb[0].mxu0
        %v6490 = vadd.f32 %v6377, %v6489
        %v6491 = vpop.f32.mrb[0].mxu0
        %v6492 = vadd.f32 %v6379, %v6491
        %v6493 = vpop.f32.mrb[0].mxu0
        %v6494 = vadd.f32 %v6381, %v6493
        %6495 = vmatprep.mubr.bf16.mxu0 %v1857
        %6496 = vmatmul.mubr.bf16.gmra.mrb[0].mxu0 %v1856
        %v6497 = vpop.f32.mrb[0].mxu0
        %v6498 = vadd.f32 %v6385, %v6497
        %v6499 = vpop.f32.mrb[0].mxu0
        %v6500 = vadd.f32 %v6387, %v6499
        %v6501 = vpop.f32.mrb[0].mxu0
        %v6502 = vadd.f32 %v6389, %v6501
        %v6503 = vpop.f32.mrb[0].mxu0
        %v6504 = vadd.f32 %v6391, %v6503
        %6505 = vmatprep.mubr.bf16.mxu0 %v1865
        %6506 = vmatmul.mubr.bf16.gmra.mrb[0].mxu0 %v1864
        %v6507 = vpop.f32.mrb[0].mxu0
        %v6508 = vadd.f32 %v6395, %v6507
        %v6509 = vpop.f32.mrb[0].mxu0
        %v6510 = vadd.f32 %v6397, %v6509
        %v6511 = vpop.f32.mrb[0].mxu0
        %v6512 = vadd.f32 %v6399, %v6511
        %v6513 = vpop.f32.mrb[0].mxu0
        %v6514 = vadd.f32 %v6401, %v6513
        %6515 = vmatprep.mubr.bf16.mxu0 %v1873
        %6516 = vmatmul.mubr.bf16.gmra.mrb[0].mxu0 %v1872
        %v6517 = vpop.f32.mrb[0].mxu0
        %v6518 = vadd.f32 %v6405, %v6517
        %v6519 = vpop.f32.mrb[0].mxu0
        %v6520 = vadd.f32 %v6407, %v6519
        %v6521 = vpop.f32.mrb[0].mxu0
        %v6522 = vadd.f32 %v6409, %v6521
        %v6523 = vpop.f32.mrb[0].mxu0
        %v6524 = vadd.f32 %v6411, %v6523
        %6525 = vmatprep.mubr.bf16.mxu0 %v1881
        %6526 = vmatmul.mubr.bf16.gmra.mrb[0].mxu0 %v1880
        %v6527 = vpop.f32.mrb[0].mxu0
        %v6528 = vadd.f32 %v6415, %v6527
        %v6529 = vpop.f32.mrb[0].mxu0
        %v6530 = vadd.f32 %v6417, %v6529
        %v6531 = vpop.f32.mrb[0].mxu0
        %v6532 = vadd.f32 %v6419, %v6531
        %v6533 = vpop.f32.mrb[0].mxu0
        %v6534 = vadd.f32 %v6421, %v6533
        %6535 = vmatprep.mubr.bf16.mxu0 %v1889
        %6536 = vmatmul.mubr.bf16.gmra.mrb[0].mxu0 %v1888
        %v6537 = vpop.f32.mrb[0].mxu0
        %v6538 = vadd.f32 %v6425, %v6537
        %v6539 = vpop.f32.mrb[0].mxu0
        %v6540 = vadd.f32 %v6427, %v6539
        %v6541 = vpop.f32.mrb[0].mxu0
        %v6542 = vadd.f32 %v6429, %v6541
        %v6543 = vpop.f32.mrb[0].mxu0
        %v6544 = vadd.f32 %v6431, %v6543
        %6545 = vmatprep.mubr.bf16.mxu0 %v1897
        %6546 = vmatmul.mubr.bf16.gmra.mrb[0].mxu0 %v1896
        %v6547 = vpop.f32.mrb[0].mxu0
        %v6548 = vadd.f32 %v6435, %v6547
        %v6549 = vpop.f32.mrb[0].mxu0
        %v6550 = vadd.f32 %v6437, %v6549
        %v6551 = vpop.f32.mrb[0].mxu0
        %v6552 = vadd.f32 %v6439, %v6551
        %v6553 = vpop.f32.mrb[0].mxu0
        %v6554 = vadd.f32 %v6441, %v6553
        %6555 = vdwg.mxu0
        %6556 = vmatprep.subr.bf16.mxu0 %v4213
        %6557 = vmatpush1.bf16.msra.mxu0 %v4212
        %6558 = vmatprep.subr.bf16.mxu0 %v4221
        %6559 = vmatpush1.bf16.msra.mxu0 %v4220
        %6560 = vmatprep.subr.bf16.mxu0 %v4229
        %6561 = vmatpush1.bf16.msra.mxu0 %v4228
        %6562 = vmatprep.subr.bf16.mxu0 %v4237
        %6563 = vmatpush1.bf16.msra.mxu0 %v4236
        %6564 = vmatprep.subr.bf16.mxu0 %v4245
        %6565 = vmatpush1.bf16.msra.mxu0 %v4244
        %6566 = vmatprep.subr.bf16.mxu0 %v4253
        %6567 = vmatpush1.bf16.msra.mxu0 %v4252
        %6568 = vmatprep.subr.bf16.mxu0 %v4261
        %6569 = vmatpush1.bf16.msra.mxu0 %v4260
        %6570 = vmatprep.subr.bf16.mxu0 %v4269
        %6571 = vmatpush1.bf16.msra.mxu0 %v4268
        %6572 = vmatprep.subr.bf16.mxu0 %v4277
        %6573 = vmatpush1.bf16.msra.mxu0 %v4276
        %6574 = vmatprep.subr.bf16.mxu0 %v4285
        %6575 = vmatpush1.bf16.msra.mxu0 %v4284
        %6576 = vmatprep.subr.bf16.mxu0 %v4293
        %6577 = vmatpush1.bf16.msra.mxu0 %v4292
        %6578 = vmatprep.subr.bf16.mxu0 %v4301
        %6579 = vmatpush1.bf16.msra.mxu0 %v4300
        %6580 = vmatprep.subr.bf16.mxu0 %v4309
        %6581 = vmatpush1.bf16.msra.mxu0 %v4308
        %6582 = vmatprep.subr.bf16.mxu0 %v4317
        %6583 = vmatpush1.bf16.msra.mxu0 %v4316
        %6584 = vmatprep.subr.bf16.mxu0 %v4325
        %6585 = vmatpush1.bf16.msra.mxu0 %v4324
        %6586 = vmatprep.subr.bf16.mxu0 %v4333
        %6587 = vmatpush1.bf16.msra.mxu0 %v4332
        %6588 = vmatprep.mubr.bf16.mxu0 %v1843
        %6589 = vmatmul.mubr.bf16.gmra.mrb[0].mxu0 %v1842
        %v6590 = vpop.f32.mrb[0].mxu0
        %v6591 = vadd.f32 %v6478, %v6590
        %v6592 = vpop.f32.mrb[0].mxu0
        %v6593 = vadd.f32 %v6480, %v6592
        %v6594 = vpop.f32.mrb[0].mxu0
        %v6595 = vadd.f32 %v6482, %v6594
        %v6596 = vpop.f32.mrb[0].mxu0
        %v6597 = vadd.f32 %v6484, %v6596
        %6598 = vmatprep.mubr.bf16.mxu0 %v1851
        %6599 = vmatmul.mubr.bf16.gmra.mrb[0].mxu0 %v1850
        %v6600 = vpop.f32.mrb[0].mxu0
        %v6601 = vadd.f32 %v6488, %v6600
        %v6602 = vpop.f32.mrb[0].mxu0
        %v6603 = vadd.f32 %v6490, %v6602
        %v6604 = vpop.f32.mrb[0].mxu0
        %v6605 = vadd.f32 %v6492, %v6604
        %v6606 = vpop.f32.mrb[0].mxu0
        %v6607 = vadd.f32 %v6494, %v6606
        %6608 = vmatprep.mubr.bf16.mxu0 %v1859
        %6609 = vmatmul.mubr.bf16.gmra.mrb[0].mxu0 %v1858
        %v6610 = vpop.f32.mrb[0].mxu0
        %v6611 = vadd.f32 %v6498, %v6610
        %v6612 = vpop.f32.mrb[0].mxu0
        %v6613 = vadd.f32 %v6500, %v6612
        %v6614 = vpop.f32.mrb[0].mxu0
        %v6615 = vadd.f32 %v6502, %v6614
        %v6616 = vpop.f32.mrb[0].mxu0
        %v6617 = vadd.f32 %v6504, %v6616
        %6618 = vmatprep.mubr.bf16.mxu0 %v1867
        %6619 = vmatmul.mubr.bf16.gmra.mrb[0].mxu0 %v1866
        %v6620 = vpop.f32.mrb[0].mxu0
        %v6621 = vadd.f32 %v6508, %v6620
        %v6622 = vpop.f32.mrb[0].mxu0
        %v6623 = vadd.f32 %v6510, %v6622
        %v6624 = vpop.f32.mrb[0].mxu0
        %v6625 = vadd.f32 %v6512, %v6624
        %v6626 = vpop.f32.mrb[0].mxu0
        %v6627 = vadd.f32 %v6514, %v6626
        %6628 = vmatprep.mubr.bf16.mxu0 %v1875
        %6629 = vmatmul.mubr.bf16.gmra.mrb[0].mxu0 %v1874
        %v6630 = vpop.f32.mrb[0].mxu0
        %v6631 = vadd.f32 %v6518, %v6630
        %v6632 = vpop.f32.mrb[0].mxu0
        %v6633 = vadd.f32 %v6520, %v6632
        %v6634 = vpop.f32.mrb[0].mxu0
        %v6635 = vadd.f32 %v6522, %v6634
        %v6636 = vpop.f32.mrb[0].mxu0
        %v6637 = vadd.f32 %v6524, %v6636
        %6638 = vmatprep.mubr.bf16.mxu0 %v1883
        %6639 = vmatmul.mubr.bf16.gmra.mrb[0].mxu0 %v1882
        %v6640 = vpop.f32.mrb[0].mxu0
        %v6641 = vadd.f32 %v6528, %v6640
        %v6642 = vpop.f32.mrb[0].mxu0
        %v6643 = vadd.f32 %v6530, %v6642
        %v6644 = vpop.f32.mrb[0].mxu0
        %v6645 = vadd.f32 %v6532, %v6644
        %v6646 = vpop.f32.mrb[0].mxu0
        %v6647 = vadd.f32 %v6534, %v6646
        %6648 = vmatprep.mubr.bf16.mxu0 %v1891
        %6649 = vmatmul.mubr.bf16.gmra.mrb[0].mxu0 %v1890
        %v6650 = vpop.f32.mrb[0].mxu0
        %v6651 = vadd.f32 %v6538, %v6650
        %v6652 = vpop.f32.mrb[0].mxu0
        %v6653 = vadd.f32 %v6540, %v6652
        %v6654 = vpop.f32.mrb[0].mxu0
        %v6655 = vadd.f32 %v6542, %v6654
        %v6656 = vpop.f32.mrb[0].mxu0
        %v6657 = vadd.f32 %v6544, %v6656
        %6658 = vmatprep.mubr.bf16.mxu0 %v1899
        %6659 = vmatmul.mubr.bf16.gmra.mrb[0].mxu0 %v1898
        %v6660 = vpop.f32.mrb[0].mxu0
        %v6661 = vadd.f32 %v6548, %v6660
        %v6662 = vpop.f32.mrb[0].mxu0
        %v6663 = vadd.f32 %v6550, %v6662
        %v6664 = vpop.f32.mrb[0].mxu0
        %v6665 = vadd.f32 %v6552, %v6664
        %v6666 = vpop.f32.mrb[0].mxu0
        %v6667 = vadd.f32 %v6554, %v6666
        %6668 = vdwg.mxu0
        %6669 = vmatprep.subr.bf16.mxu0 %v4341
        %6670 = vmatpush1.bf16.msra.mxu0 %v4340
        %6671 = vmatprep.subr.bf16.mxu0 %v4349
        %6672 = vmatpush1.bf16.msra.mxu0 %v4348
        %6673 = vmatprep.subr.bf16.mxu0 %v4357
        %6674 = vmatpush1.bf16.msra.mxu0 %v4356
        %6675 = vmatprep.subr.bf16.mxu0 %v4365
        %6676 = vmatpush1.bf16.msra.mxu0 %v4364
        %6677 = vmatprep.subr.bf16.mxu0 %v4373
        %6678 = vmatpush1.bf16.msra.mxu0 %v4372
        %6679 = vmatprep.subr.bf16.mxu0 %v4381
        %6680 = vmatpush1.bf16.msra.mxu0 %v4380
        %6681 = vmatprep.subr.bf16.mxu0 %v4389
        %6682 = vmatpush1.bf16.msra.mxu0 %v4388
        %6683 = vmatprep.subr.bf16.mxu0 %v4397
        %6684 = vmatpush1.bf16.msra.mxu0 %v4396
        %6685 = vmatprep.subr.bf16.mxu0 %v4405
        %6686 = vmatpush1.bf16.msra.mxu0 %v4404
        %6687 = vmatprep.subr.bf16.mxu0 %v4413
        %6688 = vmatpush1.bf16.msra.mxu0 %v4412
        %6689 = vmatprep.subr.bf16.mxu0 %v4421
        %6690 = vmatpush1.bf16.msra.mxu0 %v4420
        %6691 = vmatprep.subr.bf16.mxu0 %v4429
        %6692 = vmatpush1.bf16.msra.mxu0 %v4428
        %6693 = vmatprep.subr.bf16.mxu0 %v4437
        %6694 = vmatpush1.bf16.msra.mxu0 %v4436
        %6695 = vmatprep.subr.bf16.mxu0 %v4445
        %6696 = vmatpush1.bf16.msra.mxu0 %v4444
        %6697 = vmatprep.subr.bf16.mxu0 %v4453
        %6698 = vmatpush1.bf16.msra.mxu0 %v4452
        %6699 = vmatprep.subr.bf16.mxu0 %v4461
        %6700 = vmatpush1.bf16.msra.mxu0 %v4460
        %6701 = vmatprep.mubr.bf16.mxu0 %v1845
        %6702 = vmatmul.mubr.bf16.gmra.mrb[0].mxu0 %v1844
        %v6703 = vpop.f32.mrb[0].mxu0
        %v6704 = vadd.f32 %v6591, %v6703
        %v6705 = vpop.f32.mrb[0].mxu0
        %v6706 = vadd.f32 %v6593, %v6705
        %v6707 = vpop.f32.mrb[0].mxu0
        %v6708 = vadd.f32 %v6595, %v6707
        %v6709 = vpop.f32.mrb[0].mxu0
        %v6710 = vadd.f32 %v6597, %v6709
        %6711 = vmatprep.mubr.bf16.mxu0 %v1853
        %6712 = vmatmul.mubr.bf16.gmra.mrb[0].mxu0 %v1852
        %v6713 = vpop.f32.mrb[0].mxu0
        %v6714 = vadd.f32 %v6601, %v6713
        %v6715 = vpop.f32.mrb[0].mxu0
        %v6716 = vadd.f32 %v6603, %v6715
        %v6717 = vpop.f32.mrb[0].mxu0
        %v6718 = vadd.f32 %v6605, %v6717
        %v6719 = vpop.f32.mrb[0].mxu0
        %v6720 = vadd.f32 %v6607, %v6719
        %6721 = vmatprep.mubr.bf16.mxu0 %v1861
        %6722 = vmatmul.mubr.bf16.gmra.mrb[0].mxu0 %v1860
        %v6723 = vpop.f32.mrb[0].mxu0
        %v6724 = vadd.f32 %v6611, %v6723
        %v6725 = vpop.f32.mrb[0].mxu0
        %v6726 = vadd.f32 %v6613, %v6725
        %v6727 = vpop.f32.mrb[0].mxu0
        %v6728 = vadd.f32 %v6615, %v6727
        %v6729 = vpop.f32.mrb[0].mxu0
        %v6730 = vadd.f32 %v6617, %v6729
        %6731 = vmatprep.mubr.bf16.mxu0 %v1869
        %6732 = vmatmul.mubr.bf16.gmra.mrb[0].mxu0 %v1868
        %v6733 = vpop.f32.mrb[0].mxu0
        %v6734 = vadd.f32 %v6621, %v6733
        %v6735 = vpop.f32.mrb[0].mxu0
        %v6736 = vadd.f32 %v6623, %v6735
        %v6737 = vpop.f32.mrb[0].mxu0
        %v6738 = vadd.f32 %v6625, %v6737
        %v6739 = vpop.f32.mrb[0].mxu0
        %v6740 = vadd.f32 %v6627, %v6739
        %6741 = vmatprep.mubr.bf16.mxu0 %v1877
        %6742 = vmatmul.mubr.bf16.gmra.mrb[0].mxu0 %v1876
        %v6743 = vpop.f32.mrb[0].mxu0
        %v6744 = vadd.f32 %v6631, %v6743
        %v6745 = vpop.f32.mrb[0].mxu0
        %v6746 = vadd.f32 %v6633, %v6745
        %v6747 = vpop.f32.mrb[0].mxu0
        %v6748 = vadd.f32 %v6635, %v6747
        %v6749 = vpop.f32.mrb[0].mxu0
        %v6750 = vadd.f32 %v6637, %v6749
        %6751 = vmatprep.mubr.bf16.mxu0 %v1885
        %6752 = vmatmul.mubr.bf16.gmra.mrb[0].mxu0 %v1884
        %v6753 = vpop.f32.mrb[0].mxu0
        %v6754 = vadd.f32 %v6641, %v6753
        %v6755 = vpop.f32.mrb[0].mxu0
        %v6756 = vadd.f32 %v6643, %v6755
        %v6757 = vpop.f32.mrb[0].mxu0
        %v6758 = vadd.f32 %v6645, %v6757
        %v6759 = vpop.f32.mrb[0].mxu0
        %v6760 = vadd.f32 %v6647, %v6759
        %6761 = vmatprep.mubr.bf16.mxu0 %v1893
        %6762 = vmatmul.mubr.bf16.gmra.mrb[0].mxu0 %v1892
        %v6763 = vpop.f32.mrb[0].mxu0
        %v6764 = vadd.f32 %v6651, %v6763
        %v6765 = vpop.f32.mrb[0].mxu0
        %v6766 = vadd.f32 %v6653, %v6765
        %v6767 = vpop.f32.mrb[0].mxu0
        %v6768 = vadd.f32 %v6655, %v6767
        %v6769 = vpop.f32.mrb[0].mxu0
        %v6770 = vadd.f32 %v6657, %v6769
        %6771 = vmatprep.mubr.bf16.mxu0 %v1901
        %6772 = vmatmul.mubr.bf16.gmra.mrb[0].mxu0 %v1900
        %v6773 = vpop.f32.mrb[0].mxu0
        %v6774 = vadd.f32 %v6661, %v6773
        %v6775 = vpop.f32.mrb[0].mxu0
        %v6776 = vadd.f32 %v6663, %v6775
        %v6777 = vpop.f32.mrb[0].mxu0
        %v6778 = vadd.f32 %v6665, %v6777
        %v6779 = vpop.f32.mrb[0].mxu0
        %v6780 = vadd.f32 %v6667, %v6779
        %6781 = vdwg.mxu0
        %6782 = vst [vmem:[%s348] sm:$0xff] %v5348
        %6783 = vst [vmem:[%s348 + $0x8] sm:$0xff] %v5350
        %6784 = vst [vmem:[%s348 + $0x10] sm:$0xff] %v5800
        %6785 = vst [vmem:[%s348 + $0x18] sm:$0xff] %v5802
        %6786 = vst [vmem:[%s348 + $0x20] sm:$0xff] %v6252
        %6787 = vst [vmem:[%s348 + $0x28] sm:$0xff] %v6254
        %6788 = vst [vmem:[%s348 + $0x30] sm:$0xff] %v6704
        %6789 = vst [vmem:[%s348 + $0x38] sm:$0xff] %v6706
        %6790 = vst [vmem:[%s348 + $0x40] sm:$0xff] %v5352
        %6791 = vst [vmem:[%s348 + $0x48] sm:$0xff] %v5354
        %6792 = vst [vmem:[%s348 + $0x50] sm:$0xff] %v5804
        %6793 = vst [vmem:[%s348 + $0x58] sm:$0xff] %v5806
        %6794 = vst [vmem:[%s348 + $0x60] sm:$0xff] %v6256
        %6795 = vst [vmem:[%s348 + $0x68] sm:$0xff] %v6258
        %6796 = vst [vmem:[%s348 + $0x70] sm:$0xff] %v6708
        %6797 = vst [vmem:[%s348 + $0x78] sm:$0xff] %v6710
        %6798 = vst [vmem:[%s348 + $0x80] sm:$0xff] %v5358
        %6799 = vst [vmem:[%s348 + $0x88] sm:$0xff] %v5360
        %6800 = vst [vmem:[%s348 + $0x90] sm:$0xff] %v5810
        %6801 = vst [vmem:[%s348 + $0x98] sm:$0xff] %v5812
        %6802 = vst [vmem:[%s348 + $0xa0] sm:$0xff] %v6262
        %6803 = vst [vmem:[%s348 + $0xa8] sm:$0xff] %v6264
        %6804 = vst [vmem:[%s348 + $0xb0] sm:$0xff] %v6714
        %6805 = vst [vmem:[%s348 + $0xb8] sm:$0xff] %v6716
        %6806 = vst [vmem:[%s348 + $0xc0] sm:$0xff] %v5362
        %6807 = vst [vmem:[%s348 + $0xc8] sm:$0xff] %v5364
        %6808 = vst [vmem:[%s348 + $0xd0] sm:$0xff] %v5814
        %6809 = vst [vmem:[%s348 + $0xd8] sm:$0xff] %v5816
        %6810 = vst [vmem:[%s348 + $0xe0] sm:$0xff] %v6266
        %6811 = vst [vmem:[%s348 + $0xe8] sm:$0xff] %v6268
        %6812 = vst [vmem:[%s348 + $0xf0] sm:$0xff] %v6718
        %6813 = vst [vmem:[%s348 + $0xf8] sm:$0xff] %v6720
        %6814 = vst [vmem:[%s348 + $0x100] sm:$0xff] %v5368
        %6815 = vst [vmem:[%s348 + $0x108] sm:$0xff] %v5370
        %6816 = vst [vmem:[%s348 + $0x110] sm:$0xff] %v5820
        %6817 = vst [vmem:[%s348 + $0x118] sm:$0xff] %v5822
        %6818 = vst [vmem:[%s348 + $0x120] sm:$0xff] %v6272
        %6819 = vst [vmem:[%s348 + $0x128] sm:$0xff] %v6274
        %6820 = vst [vmem:[%s348 + $0x130] sm:$0xff] %v6724
        %6821 = vst [vmem:[%s348 + $0x138] sm:$0xff] %v6726
        %6822 = vst [vmem:[%s348 + $0x140] sm:$0xff] %v5372
        %6823 = vst [vmem:[%s348 + $0x148] sm:$0xff] %v5374
        %6824 = vst [vmem:[%s348 + $0x150] sm:$0xff] %v5824
        %6825 = vst [vmem:[%s348 + $0x158] sm:$0xff] %v5826
        %6826 = vst [vmem:[%s348 + $0x160] sm:$0xff] %v6276
        %6827 = vst [vmem:[%s348 + $0x168] sm:$0xff] %v6278
        %6828 = vst [vmem:[%s348 + $0x170] sm:$0xff] %v6728
        %6829 = vst [vmem:[%s348 + $0x178] sm:$0xff] %v6730
        %6830 = vst [vmem:[%s348 + $0x180] sm:$0xff] %v5378
        %6831 = vst [vmem:[%s348 + $0x188] sm:$0xff] %v5380
        %6832 = vst [vmem:[%s348 + $0x190] sm:$0xff] %v5830
        %6833 = vst [vmem:[%s348 + $0x198] sm:$0xff] %v5832
        %6834 = vst [vmem:[%s348 + $0x1a0] sm:$0xff] %v6282
        %6835 = vst [vmem:[%s348 + $0x1a8] sm:$0xff] %v6284
        %6836 = vst [vmem:[%s348 + $0x1b0] sm:$0xff] %v6734
        %6837 = vst [vmem:[%s348 + $0x1b8] sm:$0xff] %v6736
        %6838 = vst [vmem:[%s348 + $0x1c0] sm:$0xff] %v5382
        %6839 = vst [vmem:[%s348 + $0x1c8] sm:$0xff] %v5384
        %6840 = vst [vmem:[%s348 + $0x1d0] sm:$0xff] %v5834
        %6841 = vst [vmem:[%s348 + $0x1d8] sm:$0xff] %v5836
        %6842 = vst [vmem:[%s348 + $0x1e0] sm:$0xff] %v6286
        %6843 = vst [vmem:[%s348 + $0x1e8] sm:$0xff] %v6288
        %6844 = vst [vmem:[%s348 + $0x1f0] sm:$0xff] %v6738
        %6845 = vst [vmem:[%s348 + $0x1f8] sm:$0xff] %v6740
        %6846 = vst [vmem:[%s348 + $0x200] sm:$0xff] %v5388
        %6847 = vst [vmem:[%s348 + $0x208] sm:$0xff] %v5390
        %6848 = vst [vmem:[%s348 + $0x210] sm:$0xff] %v5840
        %6849 = vst [vmem:[%s348 + $0x218] sm:$0xff] %v5842
        %6850 = vst [vmem:[%s348 + $0x220] sm:$0xff] %v6292
        %6851 = vst [vmem:[%s348 + $0x228] sm:$0xff] %v6294
        %6852 = vst [vmem:[%s348 + $0x230] sm:$0xff] %v6744
        %6853 = vst [vmem:[%s348 + $0x238] sm:$0xff] %v6746
        %6854 = vst [vmem:[%s348 + $0x240] sm:$0xff] %v5392
        %6855 = vst [vmem:[%s348 + $0x248] sm:$0xff] %v5394
        %6856 = vst [vmem:[%s348 + $0x250] sm:$0xff] %v5844
        %6857 = vst [vmem:[%s348 + $0x258] sm:$0xff] %v5846
        %6858 = vst [vmem:[%s348 + $0x260] sm:$0xff] %v6296
        %6859 = vst [vmem:[%s348 + $0x268] sm:$0xff] %v6298
        %6860 = vst [vmem:[%s348 + $0x270] sm:$0xff] %v6748
        %6861 = vst [vmem:[%s348 + $0x278] sm:$0xff] %v6750
        %6862 = vst [vmem:[%s348 + $0x280] sm:$0xff] %v5398
        %6863 = vst [vmem:[%s348 + $0x288] sm:$0xff] %v5400
        %6864 = vst [vmem:[%s348 + $0x290] sm:$0xff] %v5850
        %6865 = vst [vmem:[%s348 + $0x298] sm:$0xff] %v5852
        %6866 = vst [vmem:[%s348 + $0x2a0] sm:$0xff] %v6302
        %6867 = vst [vmem:[%s348 + $0x2a8] sm:$0xff] %v6304
        %6868 = vst [vmem:[%s348 + $0x2b0] sm:$0xff] %v6754
        %6869 = vst [vmem:[%s348 + $0x2b8] sm:$0xff] %v6756
        %6870 = vst [vmem:[%s348 + $0x2c0] sm:$0xff] %v5402
        %6871 = vst [vmem:[%s348 + $0x2c8] sm:$0xff] %v5404
        %6872 = vst [vmem:[%s348 + $0x2d0] sm:$0xff] %v5854
        %6873 = vst [vmem:[%s348 + $0x2d8] sm:$0xff] %v5856
        %6874 = vst [vmem:[%s348 + $0x2e0] sm:$0xff] %v6306
        %6875 = vst [vmem:[%s348 + $0x2e8] sm:$0xff] %v6308
        %6876 = vst [vmem:[%s348 + $0x2f0] sm:$0xff] %v6758
        %6877 = vst [vmem:[%s348 + $0x2f8] sm:$0xff] %v6760
        %6878 = vst [vmem:[%s348 + $0x300] sm:$0xff] %v5408
        %6879 = vst [vmem:[%s348 + $0x308] sm:$0xff] %v5410
        %6880 = vst [vmem:[%s348 + $0x310] sm:$0xff] %v5860
        %6881 = vst [vmem:[%s348 + $0x318] sm:$0xff] %v5862
        %6882 = vst [vmem:[%s348 + $0x320] sm:$0xff] %v6312
        %6883 = vst [vmem:[%s348 + $0x328] sm:$0xff] %v6314
        %6884 = vst [vmem:[%s348 + $0x330] sm:$0xff] %v6764
        %6885 = vst [vmem:[%s348 + $0x338] sm:$0xff] %v6766
        %6886 = vst [vmem:[%s348 + $0x340] sm:$0xff] %v5412
        %6887 = vst [vmem:[%s348 + $0x348] sm:$0xff] %v5414
        %6888 = vst [vmem:[%s348 + $0x350] sm:$0xff] %v5864
        %6889 = vst [vmem:[%s348 + $0x358] sm:$0xff] %v5866
        %6890 = vst [vmem:[%s348 + $0x360] sm:$0xff] %v6316
        %6891 = vst [vmem:[%s348 + $0x368] sm:$0xff] %v6318
        %6892 = vst [vmem:[%s348 + $0x370] sm:$0xff] %v6768
        %6893 = vst [vmem:[%s348 + $0x378] sm:$0xff] %v6770
        %6894 = vst [vmem:[%s348 + $0x380] sm:$0xff] %v5418
        %6895 = vst [vmem:[%s348 + $0x388] sm:$0xff] %v5420
        %6896 = vst [vmem:[%s348 + $0x390] sm:$0xff] %v5870
        %6897 = vst [vmem:[%s348 + $0x398] sm:$0xff] %v5872
        %6898 = vst [vmem:[%s348 + $0x3a0] sm:$0xff] %v6322
        %6899 = vst [vmem:[%s348 + $0x3a8] sm:$0xff] %v6324
        %6900 = vst [vmem:[%s348 + $0x3b0] sm:$0xff] %v6774
        %6901 = vst [vmem:[%s348 + $0x3b8] sm:$0xff] %v6776
        %6902 = vst [vmem:[%s348 + $0x3c0] sm:$0xff] %v5422
        %6903 = vst [vmem:[%s348 + $0x3c8] sm:$0xff] %v5424
        %6904 = vst [vmem:[%s348 + $0x3d0] sm:$0xff] %v5874
        %6905 = vst [vmem:[%s348 + $0x3d8] sm:$0xff] %v5876
        %6906 = vst [vmem:[%s348 + $0x3e0] sm:$0xff] %v6326
        %6907 = vst [vmem:[%s348 + $0x3e8] sm:$0xff] %v6328
        %6908 = vst [vmem:[%s348 + $0x3f0] sm:$0xff] %v6778
        %6909 = vst [vmem:[%s348 + $0x3f8] sm:$0xff] %v6780
        %s6910 = sand.u32 %s222, 1
        %s6911 = sand.u32 %s222, 1
        %s6912 = smul.addr %s6911, 1024
        %s6913 = scalar_lea.vmem [#allocation5], %s6912
        // Predicated region
        $region61: #{toc_forward.1} parent=51 // pred_check
          %p6914 = pneg %p232
        $region62: #{toc_forward.1} parent=51 // pred_check_branch
          %6916 = sbr.rel (%p6914) target = $region64
        $region63: #{toc_forward.1} parent=51 // pred_region
          %s6917 = smul.u32 8, %s27
          %s6918 = smul.addr %s26, 512
          %s6919 = sadd.s32 %s6917, %s6918
          %s6920 = smul.addr %s6919, 8
          %s6921 = scalar_lea.vmem %s8, %s6920
          // Predicated region
          $region65: #{toc_forward.1} parent=63 // pred_check
            _
          $region66: #{toc_forward.1} parent=63 // pred_check_branch
            %6923 = sbr.rel (0) target = $region68
          $region67: #{toc_forward.1} parent=63 // pred_region
            // Predicated region
            $region69: #{toc_forward.1} parent=67 // pred_check
              _
            $region70: #{toc_forward.1} parent=67 // pred_check_branch
              %6925 = sbr.rel (0) target = $region72
            $region71: #{toc_forward.1} parent=67 // pred_region
              loop: start=0, step=1, limit=1
              $region73: #{toc_forward.1} parent=71 // loop_pre_header
                _
              $region74: #{toc_forward.1} parent=71 // loop_header
                %s6927 = sphi 0, %s6931
                %p6928 = scmp.ge.s32.totalorder %s6927, 1
                %s6932 = sphi %s6913, %s6913
                %s6933 = sphi %s6921, %s6921
              $region75: #{toc_forward.1} parent=71 // loop_header_branch
                %6930 = sbr.rel (%p6928) target = $region79
              $region76: #{toc_forward.1} parent=71 // loop_body
                %v6934 = vld [vmem:[%s6932] sm:$0xff]
                %6935 = vst [vmem:[%s6933] sm:$0xff] %v6934
                %v6936 = vld [vmem:[%s6932 + $0x8] sm:$0xff]
                %6937 = vst [vmem:[%s6933 + $0x8] sm:$0xff] %v6936
                %v6938 = vld [vmem:[%s6932 + $0x10] sm:$0xff]
                %6939 = vst [vmem:[%s6933 + $0x10] sm:$0xff] %v6938
                %v6940 = vld [vmem:[%s6932 + $0x18] sm:$0xff]
                %6941 = vst [vmem:[%s6933 + $0x18] sm:$0xff] %v6940
                %v6942 = vld [vmem:[%s6932 + $0x20] sm:$0xff]
                %6943 = vst [vmem:[%s6933 + $0x20] sm:$0xff] %v6942
                %v6944 = vld [vmem:[%s6932 + $0x28] sm:$0xff]
                %6945 = vst [vmem:[%s6933 + $0x28] sm:$0xff] %v6944
                %v6946 = vld [vmem:[%s6932 + $0x30] sm:$0xff]
                %6947 = vst [vmem:[%s6933 + $0x30] sm:$0xff] %v6946
                %v6948 = vld [vmem:[%s6932 + $0x38] sm:$0xff]
                %6949 = vst [vmem:[%s6933 + $0x38] sm:$0xff] %v6948
                %v6950 = vld [vmem:[%s6932 + $0x40] sm:$0xff]
                %6951 = vst [vmem:[%s6933 + $0x100] sm:$0xff] %v6950
                %v6952 = vld [vmem:[%s6932 + $0x48] sm:$0xff]
                %6953 = vst [vmem:[%s6933 + $0x108] sm:$0xff] %v6952
                %v6954 = vld [vmem:[%s6932 + $0x50] sm:$0xff]
                %6955 = vst [vmem:[%s6933 + $0x110] sm:$0xff] %v6954
                %v6956 = vld [vmem:[%s6932 + $0x58] sm:$0xff]
                %6957 = vst [vmem:[%s6933 + $0x118] sm:$0xff] %v6956
                %v6958 = vld [vmem:[%s6932 + $0x60] sm:$0xff]
                %6959 = vst [vmem:[%s6933 + $0x120] sm:$0xff] %v6958
                %v6960 = vld [vmem:[%s6932 + $0x68] sm:$0xff]
                %6961 = vst [vmem:[%s6933 + $0x128] sm:$0xff] %v6960
                %v6962 = vld [vmem:[%s6932 + $0x70] sm:$0xff]
                %6963 = vst [vmem:[%s6933 + $0x130] sm:$0xff] %v6962
                %v6964 = vld [vmem:[%s6932 + $0x78] sm:$0xff]
                %6965 = vst [vmem:[%s6933 + $0x138] sm:$0xff] %v6964
                %v6966 = vld [vmem:[%s6932 + $0x80] sm:$0xff]
                %6967 = vst [vmem:[%s6933 + $0x200] sm:$0xff] %v6966
                %v6968 = vld [vmem:[%s6932 + $0x88] sm:$0xff]
                %6969 = vst [vmem:[%s6933 + $0x208] sm:$0xff] %v6968
                %v6970 = vld [vmem:[%s6932 + $0x90] sm:$0xff]
                %6971 = vst [vmem:[%s6933 + $0x210] sm:$0xff] %v6970
                %v6972 = vld [vmem:[%s6932 + $0x98] sm:$0xff]
                %6973 = vst [vmem:[%s6933 + $0x218] sm:$0xff] %v6972
                %v6974 = vld [vmem:[%s6932 + $0xa0] sm:$0xff]
                %6975 = vst [vmem:[%s6933 + $0x220] sm:$0xff] %v6974
                %v6976 = vld [vmem:[%s6932 + $0xa8] sm:$0xff]
                %6977 = vst [vmem:[%s6933 + $0x228] sm:$0xff] %v6976
                %v6978 = vld [vmem:[%s6932 + $0xb0] sm:$0xff]
                %6979 = vst [vmem:[%s6933 + $0x230] sm:$0xff] %v6978
                %v6980 = vld [vmem:[%s6932 + $0xb8] sm:$0xff]
                %6981 = vst [vmem:[%s6933 + $0x238] sm:$0xff] %v6980
                %v6982 = vld [vmem:[%s6932 + $0xc0] sm:$0xff]
                %6983 = vst [vmem:[%s6933 + $0x300] sm:$0xff] %v6982
                %v6984 = vld [vmem:[%s6932 + $0xc8] sm:$0xff]
                %6985 = vst [vmem:[%s6933 + $0x308] sm:$0xff] %v6984
                %v6986 = vld [vmem:[%s6932 + $0xd0] sm:$0xff]
                %6987 = vst [vmem:[%s6933 + $0x310] sm:$0xff] %v6986
                %v6988 = vld [vmem:[%s6932 + $0xd8] sm:$0xff]
                %6989 = vst [vmem:[%s6933 + $0x318] sm:$0xff] %v6988
                %v6990 = vld [vmem:[%s6932 + $0xe0] sm:$0xff]
                %6991 = vst [vmem:[%s6933 + $0x320] sm:$0xff] %v6990
                %v6992 = vld [vmem:[%s6932 + $0xe8] sm:$0xff]
                %6993 = vst [vmem:[%s6933 + $0x328] sm:$0xff] %v6992
                %v6994 = vld [vmem:[%s6932 + $0xf0] sm:$0xff]
                %6995 = vst [vmem:[%s6933 + $0x330] sm:$0xff] %v6994
                %v6996 = vld [vmem:[%s6932 + $0xf8] sm:$0xff]
                %6997 = vst [vmem:[%s6933 + $0x338] sm:$0xff] %v6996
                %v6998 = vld [vmem:[%s6932 + $0x100] sm:$0xff]
                %6999 = vst [vmem:[%s6933 + $0x400] sm:$0xff] %v6998
                %v7000 = vld [vmem:[%s6932 + $0x108] sm:$0xff]
                %7001 = vst [vmem:[%s6933 + $0x408] sm:$0xff] %v7000
                %v7002 = vld [vmem:[%s6932 + $0x110] sm:$0xff]
                %7003 = vst [vmem:[%s6933 + $0x410] sm:$0xff] %v7002
                %v7004 = vld [vmem:[%s6932 + $0x118] sm:$0xff]
                %7005 = vst [vmem:[%s6933 + $0x418] sm:$0xff] %v7004
                %v7006 = vld [vmem:[%s6932 + $0x120] sm:$0xff]
                %7007 = vst [vmem:[%s6933 + $0x420] sm:$0xff] %v7006
                %v7008 = vld [vmem:[%s6932 + $0x128] sm:$0xff]
                %7009 = vst [vmem:[%s6933 + $0x428] sm:$0xff] %v7008
                %v7010 = vld [vmem:[%s6932 + $0x130] sm:$0xff]
                %7011 = vst [vmem:[%s6933 + $0x430] sm:$0xff] %v7010
                %v7012 = vld [vmem:[%s6932 + $0x138] sm:$0xff]
                %7013 = vst [vmem:[%s6933 + $0x438] sm:$0xff] %v7012
                %v7014 = vld [vmem:[%s6932 + $0x140] sm:$0xff]
                %7015 = vst [vmem:[%s6933 + $0x500] sm:$0xff] %v7014
                %v7016 = vld [vmem:[%s6932 + $0x148] sm:$0xff]
                %7017 = vst [vmem:[%s6933 + $0x508] sm:$0xff] %v7016
                %v7018 = vld [vmem:[%s6932 + $0x150] sm:$0xff]
                %7019 = vst [vmem:[%s6933 + $0x510] sm:$0xff] %v7018
                %v7020 = vld [vmem:[%s6932 + $0x158] sm:$0xff]
                %7021 = vst [vmem:[%s6933 + $0x518] sm:$0xff] %v7020
                %v7022 = vld [vmem:[%s6932 + $0x160] sm:$0xff]
                %7023 = vst [vmem:[%s6933 + $0x520] sm:$0xff] %v7022
                %v7024 = vld [vmem:[%s6932 + $0x168] sm:$0xff]
                %7025 = vst [vmem:[%s6933 + $0x528] sm:$0xff] %v7024
                %v7026 = vld [vmem:[%s6932 + $0x170] sm:$0xff]
                %7027 = vst [vmem:[%s6933 + $0x530] sm:$0xff] %v7026
                %v7028 = vld [vmem:[%s6932 + $0x178] sm:$0xff]
                %7029 = vst [vmem:[%s6933 + $0x538] sm:$0xff] %v7028
                %v7030 = vld [vmem:[%s6932 + $0x180] sm:$0xff]
                %7031 = vst [vmem:[%s6933 + $0x600] sm:$0xff] %v7030
                %v7032 = vld [vmem:[%s6932 + $0x188] sm:$0xff]
                %7033 = vst [vmem:[%s6933 + $0x608] sm:$0xff] %v7032
                %v7034 = vld [vmem:[%s6932 + $0x190] sm:$0xff]
                %7035 = vst [vmem:[%s6933 + $0x610] sm:$0xff] %v7034
                %v7036 = vld [vmem:[%s6932 + $0x198] sm:$0xff]
                %7037 = vst [vmem:[%s6933 + $0x618] sm:$0xff] %v7036
                %v7038 = vld [vmem:[%s6932 + $0x1a0] sm:$0xff]
                %7039 = vst [vmem:[%s6933 + $0x620] sm:$0xff] %v7038
                %v7040 = vld [vmem:[%s6932 + $0x1a8] sm:$0xff]
                %7041 = vst [vmem:[%s6933 + $0x628] sm:$0xff] %v7040
                %v7042 = vld [vmem:[%s6932 + $0x1b0] sm:$0xff]
                %7043 = vst [vmem:[%s6933 + $0x630] sm:$0xff] %v7042
                %v7044 = vld [vmem:[%s6932 + $0x1b8] sm:$0xff]
                %7045 = vst [vmem:[%s6933 + $0x638] sm:$0xff] %v7044
                %v7046 = vld [vmem:[%s6932 + $0x1c0] sm:$0xff]
                %7047 = vst [vmem:[%s6933 + $0x700] sm:$0xff] %v7046
                %v7048 = vld [vmem:[%s6932 + $0x1c8] sm:$0xff]
                %7049 = vst [vmem:[%s6933 + $0x708] sm:$0xff] %v7048
                %v7050 = vld [vmem:[%s6932 + $0x1d0] sm:$0xff]
                %7051 = vst [vmem:[%s6933 + $0x710] sm:$0xff] %v7050
                %v7052 = vld [vmem:[%s6932 + $0x1d8] sm:$0xff]
                %7053 = vst [vmem:[%s6933 + $0x718] sm:$0xff] %v7052
                %v7054 = vld [vmem:[%s6932 + $0x1e0] sm:$0xff]
                %7055 = vst [vmem:[%s6933 + $0x720] sm:$0xff] %v7054
                %v7056 = vld [vmem:[%s6932 + $0x1e8] sm:$0xff]
                %7057 = vst [vmem:[%s6933 + $0x728] sm:$0xff] %v7056
                %v7058 = vld [vmem:[%s6932 + $0x1f0] sm:$0xff]
                %7059 = vst [vmem:[%s6933 + $0x730] sm:$0xff] %v7058
                %v7060 = vld [vmem:[%s6932 + $0x1f8] sm:$0xff]
                %7061 = vst [vmem:[%s6933 + $0x738] sm:$0xff] %v7060
                %v7062 = vld [vmem:[%s6932 + $0x200] sm:$0xff]
                %7063 = vst [vmem:[%s6933 + $0x800] sm:$0xff] %v7062
                %v7064 = vld [vmem:[%s6932 + $0x208] sm:$0xff]
                %7065 = vst [vmem:[%s6933 + $0x808] sm:$0xff] %v7064
                %v7066 = vld [vmem:[%s6932 + $0x210] sm:$0xff]
                %7067 = vst [vmem:[%s6933 + $0x810] sm:$0xff] %v7066
                %v7068 = vld [vmem:[%s6932 + $0x218] sm:$0xff]
                %7069 = vst [vmem:[%s6933 + $0x818] sm:$0xff] %v7068
                %v7070 = vld [vmem:[%s6932 + $0x220] sm:$0xff]
                %7071 = vst [vmem:[%s6933 + $0x820] sm:$0xff] %v7070
                %v7072 = vld [vmem:[%s6932 + $0x228] sm:$0xff]
                %7073 = vst [vmem:[%s6933 + $0x828] sm:$0xff] %v7072
                %v7074 = vld [vmem:[%s6932 + $0x230] sm:$0xff]
                %7075 = vst [vmem:[%s6933 + $0x830] sm:$0xff] %v7074
                %v7076 = vld [vmem:[%s6932 + $0x238] sm:$0xff]
                %7077 = vst [vmem:[%s6933 + $0x838] sm:$0xff] %v7076
                %v7078 = vld [vmem:[%s6932 + $0x240] sm:$0xff]
                %7079 = vst [vmem:[%s6933 + $0x900] sm:$0xff] %v7078
                %v7080 = vld [vmem:[%s6932 + $0x248] sm:$0xff]
                %7081 = vst [vmem:[%s6933 + $0x908] sm:$0xff] %v7080
                %v7082 = vld [vmem:[%s6932 + $0x250] sm:$0xff]
                %7083 = vst [vmem:[%s6933 + $0x910] sm:$0xff] %v7082
                %v7084 = vld [vmem:[%s6932 + $0x258] sm:$0xff]
                %7085 = vst [vmem:[%s6933 + $0x918] sm:$0xff] %v7084
                %v7086 = vld [vmem:[%s6932 + $0x260] sm:$0xff]
                %7087 = vst [vmem:[%s6933 + $0x920] sm:$0xff] %v7086
                %v7088 = vld [vmem:[%s6932 + $0x268] sm:$0xff]
                %7089 = vst [vmem:[%s6933 + $0x928] sm:$0xff] %v7088
                %v7090 = vld [vmem:[%s6932 + $0x270] sm:$0xff]
                %7091 = vst [vmem:[%s6933 + $0x930] sm:$0xff] %v7090
                %v7092 = vld [vmem:[%s6932 + $0x278] sm:$0xff]
                %7093 = vst [vmem:[%s6933 + $0x938] sm:$0xff] %v7092
                %v7094 = vld [vmem:[%s6932 + $0x280] sm:$0xff]
                %7095 = vst [vmem:[%s6933 + $0xa00] sm:$0xff] %v7094
                %v7096 = vld [vmem:[%s6932 + $0x288] sm:$0xff]
                %7097 = vst [vmem:[%s6933 + $0xa08] sm:$0xff] %v7096
                %v7098 = vld [vmem:[%s6932 + $0x290] sm:$0xff]
                %7099 = vst [vmem:[%s6933 + $0xa10] sm:$0xff] %v7098
                %v7100 = vld [vmem:[%s6932 + $0x298] sm:$0xff]
                %7101 = vst [vmem:[%s6933 + $0xa18] sm:$0xff] %v7100
                %v7102 = vld [vmem:[%s6932 + $0x2a0] sm:$0xff]
                %7103 = vst [vmem:[%s6933 + $0xa20] sm:$0xff] %v7102
                %v7104 = vld [vmem:[%s6932 + $0x2a8] sm:$0xff]
                %7105 = vst [vmem:[%s6933 + $0xa28] sm:$0xff] %v7104
                %v7106 = vld [vmem:[%s6932 + $0x2b0] sm:$0xff]
                %7107 = vst [vmem:[%s6933 + $0xa30] sm:$0xff] %v7106
                %v7108 = vld [vmem:[%s6932 + $0x2b8] sm:$0xff]
                %7109 = vst [vmem:[%s6933 + $0xa38] sm:$0xff] %v7108
                %v7110 = vld [vmem:[%s6932 + $0x2c0] sm:$0xff]
                %7111 = vst [vmem:[%s6933 + $0xb00] sm:$0xff] %v7110
                %v7112 = vld [vmem:[%s6932 + $0x2c8] sm:$0xff]
                %7113 = vst [vmem:[%s6933 + $0xb08] sm:$0xff] %v7112
                %v7114 = vld [vmem:[%s6932 + $0x2d0] sm:$0xff]
                %7115 = vst [vmem:[%s6933 + $0xb10] sm:$0xff] %v7114
                %v7116 = vld [vmem:[%s6932 + $0x2d8] sm:$0xff]
                %7117 = vst [vmem:[%s6933 + $0xb18] sm:$0xff] %v7116
                %v7118 = vld [vmem:[%s6932 + $0x2e0] sm:$0xff]
                %7119 = vst [vmem:[%s6933 + $0xb20] sm:$0xff] %v7118
                %v7120 = vld [vmem:[%s6932 + $0x2e8] sm:$0xff]
                %7121 = vst [vmem:[%s6933 + $0xb28] sm:$0xff] %v7120
                %v7122 = vld [vmem:[%s6932 + $0x2f0] sm:$0xff]
                %7123 = vst [vmem:[%s6933 + $0xb30] sm:$0xff] %v7122
                %v7124 = vld [vmem:[%s6932 + $0x2f8] sm:$0xff]
                %7125 = vst [vmem:[%s6933 + $0xb38] sm:$0xff] %v7124
                %v7126 = vld [vmem:[%s6932 + $0x300] sm:$0xff]
                %7127 = vst [vmem:[%s6933 + $0xc00] sm:$0xff] %v7126
                %v7128 = vld [vmem:[%s6932 + $0x308] sm:$0xff]
                %7129 = vst [vmem:[%s6933 + $0xc08] sm:$0xff] %v7128
                %v7130 = vld [vmem:[%s6932 + $0x310] sm:$0xff]
                %7131 = vst [vmem:[%s6933 + $0xc10] sm:$0xff] %v7130
                %v7132 = vld [vmem:[%s6932 + $0x318] sm:$0xff]
                %7133 = vst [vmem:[%s6933 + $0xc18] sm:$0xff] %v7132
                %v7134 = vld [vmem:[%s6932 + $0x320] sm:$0xff]
                %7135 = vst [vmem:[%s6933 + $0xc20] sm:$0xff] %v7134
                %v7136 = vld [vmem:[%s6932 + $0x328] sm:$0xff]
                %7137 = vst [vmem:[%s6933 + $0xc28] sm:$0xff] %v7136
                %v7138 = vld [vmem:[%s6932 + $0x330] sm:$0xff]
                %7139 = vst [vmem:[%s6933 + $0xc30] sm:$0xff] %v7138
                %v7140 = vld [vmem:[%s6932 + $0x338] sm:$0xff]
                %7141 = vst [vmem:[%s6933 + $0xc38] sm:$0xff] %v7140
                %v7142 = vld [vmem:[%s6932 + $0x340] sm:$0xff]
                %7143 = vst [vmem:[%s6933 + $0xd00] sm:$0xff] %v7142
                %v7144 = vld [vmem:[%s6932 + $0x348] sm:$0xff]
                %7145 = vst [vmem:[%s6933 + $0xd08] sm:$0xff] %v7144
                %v7146 = vld [vmem:[%s6932 + $0x350] sm:$0xff]
                %7147 = vst [vmem:[%s6933 + $0xd10] sm:$0xff] %v7146
                %v7148 = vld [vmem:[%s6932 + $0x358] sm:$0xff]
                %7149 = vst [vmem:[%s6933 + $0xd18] sm:$0xff] %v7148
                %v7150 = vld [vmem:[%s6932 + $0x360] sm:$0xff]
                %7151 = vst [vmem:[%s6933 + $0xd20] sm:$0xff] %v7150
                %v7152 = vld [vmem:[%s6932 + $0x368] sm:$0xff]
                %7153 = vst [vmem:[%s6933 + $0xd28] sm:$0xff] %v7152
                %v7154 = vld [vmem:[%s6932 + $0x370] sm:$0xff]
                %7155 = vst [vmem:[%s6933 + $0xd30] sm:$0xff] %v7154
                %v7156 = vld [vmem:[%s6932 + $0x378] sm:$0xff]
                %7157 = vst [vmem:[%s6933 + $0xd38] sm:$0xff] %v7156
                %v7158 = vld [vmem:[%s6932 + $0x380] sm:$0xff]
                %7159 = vst [vmem:[%s6933 + $0xe00] sm:$0xff] %v7158
                %v7160 = vld [vmem:[%s6932 + $0x388] sm:$0xff]
                %7161 = vst [vmem:[%s6933 + $0xe08] sm:$0xff] %v7160
                %v7162 = vld [vmem:[%s6932 + $0x390] sm:$0xff]
                %7163 = vst [vmem:[%s6933 + $0xe10] sm:$0xff] %v7162
                %v7164 = vld [vmem:[%s6932 + $0x398] sm:$0xff]
                %7165 = vst [vmem:[%s6933 + $0xe18] sm:$0xff] %v7164
                %v7166 = vld [vmem:[%s6932 + $0x3a0] sm:$0xff]
                %7167 = vst [vmem:[%s6933 + $0xe20] sm:$0xff] %v7166
                %v7168 = vld [vmem:[%s6932 + $0x3a8] sm:$0xff]
                %7169 = vst [vmem:[%s6933 + $0xe28] sm:$0xff] %v7168
                %v7170 = vld [vmem:[%s6932 + $0x3b0] sm:$0xff]
                %7171 = vst [vmem:[%s6933 + $0xe30] sm:$0xff] %v7170
                %v7172 = vld [vmem:[%s6932 + $0x3b8] sm:$0xff]
                %7173 = vst [vmem:[%s6933 + $0xe38] sm:$0xff] %v7172
                %v7174 = vld [vmem:[%s6932 + $0x3c0] sm:$0xff]
                %7175 = vst [vmem:[%s6933 + $0xf00] sm:$0xff] %v7174
                %v7176 = vld [vmem:[%s6932 + $0x3c8] sm:$0xff]
                %7177 = vst [vmem:[%s6933 + $0xf08] sm:$0xff] %v7176
                %v7178 = vld [vmem:[%s6932 + $0x3d0] sm:$0xff]
                %7179 = vst [vmem:[%s6933 + $0xf10] sm:$0xff] %v7178
                %v7180 = vld [vmem:[%s6932 + $0x3d8] sm:$0xff]
                %7181 = vst [vmem:[%s6933 + $0xf18] sm:$0xff] %v7180
                %v7182 = vld [vmem:[%s6932 + $0x3e0] sm:$0xff]
                %7183 = vst [vmem:[%s6933 + $0xf20] sm:$0xff] %v7182
                %v7184 = vld [vmem:[%s6932 + $0x3e8] sm:$0xff]
                %7185 = vst [vmem:[%s6933 + $0xf28] sm:$0xff] %v7184
                %v7186 = vld [vmem:[%s6932 + $0x3f0] sm:$0xff]
                %7187 = vst [vmem:[%s6933 + $0xf30] sm:$0xff] %v7186
                %v7188 = vld [vmem:[%s6932 + $0x3f8] sm:$0xff]
                %7189 = vst [vmem:[%s6933 + $0xf38] sm:$0xff] %v7188
              $region77: #{toc_forward.1} parent=71 // loop_footer
                %s6931 = sadd.s32 1, %s6927
              $region78: #{toc_forward.1} parent=71 // loop_footer_branch
                %6926 = sbr.rel target = $region74
              $region79: #{toc_forward.1} parent=71 // loop_exit
                _
            $region72: #{toc_forward.1} parent=67 // pred_fallthru
              _
            // Predicated region
            $region80: #{toc_forward.1} parent=67 // pred_check
              _
            $region81: #{toc_forward.1} parent=67 // pred_check_branch
              %7191 = sbr.rel target = $region83
            $region82: #{toc_forward.1} parent=67 // pred_region
              _
            $region83: #{toc_forward.1} parent=67 // pred_fallthru
              _
          $region68: #{toc_forward.1} parent=63 // pred_fallthru
            _
          %7192 = vnop
        $region64: #{toc_forward.1} parent=51 // pred_fallthru
          _
      $region52: #{toc_forward.1} parent=5 // pred_fallthru
        _
      %p7193 = scmp.le.s32.totalorder 2, %s17
      // Predicated region
      $region84: #{toc_forward.1} parent=5 // pred_check
        %p7194 = pneg %p7193
      $region85: #{toc_forward.1} parent=5 // pred_check_branch
        %7196 = sbr.rel (%p7194) target = $region87
      $region86: #{toc_forward.1} parent=5 // pred_region
        %s7197 = ssub.s32 %s17, 2
        // Predicated region
        $region88: #{toc_forward.1} parent=86 // pred_check
          %p7198 = pneg %p238
        $region89: #{toc_forward.1} parent=86 // pred_check_branch
          %7200 = sbr.rel (%p7198) target = $region91
        $region90: #{toc_forward.1} parent=86 // pred_region
          %s7201 = sand.u32 %s223, 1
          %s7202 = sand.u32 %s223, 1
          %s7203 = smul.addr %s7202, 1024
          %s7204 = scalar_lea.vmem [#allocation5], %s7203
        $region91: #{toc_forward.1} parent=86 // pred_fallthru
          _
      $region87: #{toc_forward.1} parent=5 // pred_fallthru
        _
    $region6: #{toc_forward.1} parent=1 // loop_footer
      %s21 = sadd.s32 1, %s17
    $region7: #{toc_forward.1} parent=1 // loop_footer_branch
      %16 = sbr.rel target = $region3
    $region8: #{toc_forward.1} parent=1 // loop_exit
      _
    %7205 = vsyncpa [#allocation4], 1
    %s7206 = scalar_lea.sflag [#allocation4], 1
    %7207 = vsyncpa %s7206, 1

</llo_original>
